<compile_context>
chip_gen: v7x
topology: tpu7x:2x2x1
jax: 0.10.0
libtpu: 0.0.40
codegen_flags: <defaults>
</compile_context>

<pallas_src>
import functools

import jax
import jax.numpy as jnp
from jax.experimental import pallas as pl
from jax.experimental.pallas import tpu as pltpu


COMPUTE_DTYPE = jnp.bfloat16   # MXU operand dtype (accumulation is always f32)
MAX_M_TILE = 2048              # cap on the lane-dim tile; with double buffering
                               # this keeps VMEM use well under v7x's 64 MiB


def _pick_m_tile(M):
    """Largest tile <= MAX_M_TILE that is a multiple of 128 and divides M.
    Falls back to the full M (legal as a full-dim block) otherwise."""
    if M <= MAX_M_TILE:
        return M
    for t in range(MAX_M_TILE, 127, -128):
        if M % t == 0:
            return t
    return M


# ----------------------------------------------------------------------------
# Pallas kernels
# ----------------------------------------------------------------------------
def _conv_gemm_kernel(xs_ref, w_ref, b_ref, o_ref, *, taps, relu):
    """o = act(sum_t w[t] @ xs[t] + b)  -> lane-dense (Cout, TM) output.

    xs: (taps, Cin, TM)   bf16  tap-shifted activations, flattened spatial in lanes
    w : (taps, Cout, Cin) bf16  weights (one (Cout, Cin) matrix per tap)
    b : (Cout, 1)         f32   bias
    o : (Cout, TM)              f32 accumulate, f32 epilogue, cast on store
    """
    acc = jnp.dot(w_ref[0], xs_ref[0], preferred_element_type=jnp.float32)
    for t in range(1, taps):            # static unroll: taps in {1, 9}
        acc = acc + jnp.dot(w_ref[t], xs_ref[t],
                            preferred_element_type=jnp.float32)
    acc = acc + b_ref[...]
    if relu:
        acc = jnp.maximum(acc, 0.0)
    o_ref[...] = acc.astype(o_ref.dtype)


def conv_gemm(xs, w, b, *, relu, out_dtype):
    taps, cin, M = xs.shape
    cout = w.shape[1]
    TM = _pick_m_tile(M)
    grid = (M // TM,)
    return pl.pallas_call(
        functools.partial(_conv_gemm_kernel, taps=taps, relu=relu),
        out_shape=jax.ShapeDtypeStruct((cout, M), out_dtype),
        grid=grid,
        in_specs=[
            pl.BlockSpec((taps, cin, TM), lambda i: (0, 0, i)),
            pl.BlockSpec((taps, cout, cin), lambda i: (0, 0, 0)),
            pl.BlockSpec((cout, 1), lambda i: (0, 0)),
        ],
        out_specs=pl.BlockSpec((cout, TM), lambda i: (0, i)),
        compiler_params=pltpu.CompilerParams(
            dimension_semantics=("parallel",)),
    )(xs, w, b)


def _maxpool_kernel(x_ref, o_ref):
    o_ref[...] = jnp.maximum(jnp.maximum(x_ref[0], x_ref[1]),
                             jnp.maximum(x_ref[2], x_ref[3]))


def maxpool2x2(x):
    """nn.MaxPool2d(2, 2) on a (C, N, H, W) activation -> (C, N, H//2, W//2)."""
    C, N, H, W = x.shape
    Ho, Wo = H // 2, W // 2
    Mo = N * Ho * Wo
    # Single stacked input (4, C, Mo): one fused XLA gather under jit instead of
    # four separate HBM arrays whose last dim would be a tiny C.
    xs = (x.reshape(C, N, Ho, 2, Wo, 2)
           .transpose(3, 5, 0, 1, 2, 4)
           .reshape(4, C, Mo))
    TM = _pick_m_tile(Mo)
    out = pl.pallas_call(
        _maxpool_kernel,
        out_shape=jax.ShapeDtypeStruct((C, Mo), x.dtype),
        grid=(Mo // TM,),
        in_specs=[pl.BlockSpec((4, C, TM), lambda i: (0, 0, i))],
        out_specs=pl.BlockSpec((C, TM), lambda i: (0, i)),
        compiler_params=pltpu.CompilerParams(
            dimension_semantics=("parallel",)),
    )(xs)
    return out.reshape(C, N, Ho, Wo)


# ----------------------------------------------------------------------------
# Conv wrappers (layout glue in JAX — fused under jit — matmul in Pallas)
# ----------------------------------------------------------------------------
def _im2tap_3x3(x):
    """(C, N, H, W) -> (9, C, N*H*W) tap stack for a 3x3 / stride=1 / pad=1 conv."""
    C, N, H, W = x.shape
    xp = jnp.pad(x, ((0, 0), (0, 0), (1, 1), (1, 1)))
    taps = [xp[:, :, dy:dy + H, dx:dx + W].reshape(C, N * H * W)
            for dy in range(3) for dx in range(3)]
    # TODO(synk): build these shifted views inside the kernel (shifted loads of a
    # single padded VMEM tile) to avoid the 9x activation write/read through HBM.
    return jnp.stack(taps, axis=0)


def conv3x3(x, w9, b, *, relu):
    """nn.Conv2d(k=3, s=1, p=1) (+ optional ReLU).  x:(C,N,H,W), w9:(9,Cout,Cin)."""
    C, N, H, W = x.shape
    cout = w9.shape[1]
    y = conv_gemm(_im2tap_3x3(x), w9, b, relu=relu, out_dtype=x.dtype)
    return y.reshape(cout, N, H, W)


def conv1x1(x, w1, b, *, out_dtype):
    """nn.Conv2d(k=1, s=1, p=0).  x:(C,N,H,W), w1:(1,Cout,Cin)."""
    C, N, H, W = x.shape
    cout = w1.shape[1]
    y = conv_gemm(x.reshape(1, C, N * H * W), w1, b, relu=False,
                  out_dtype=out_dtype)
    return y.reshape(cout, N, H, W)


def conv_transpose2x2(x, wt, bt):
    """nn.ConvTranspose2d(k=2, s=2, p=0).  x:(C,N,H,W), wt:(1,4*Cout,Cin)."""
    C, N, H, W = x.shape
    cout = wt.shape[1] // 4
    y = conv_gemm(x.reshape(1, C, N * H * W), wt, bt, relu=False,
                  out_dtype=x.dtype)                       # (4*Cout, M) lane-dense
    y = (y.reshape(2, 2, cout, N, H, W)
          .transpose(2, 3, 4, 0, 5, 1)
          .reshape(cout, N, 2 * H, 2 * W))
    # TODO(synk): fold this 2x2 pixel interleave into the kernel's store phase
    # (strided output scatter) instead of the XLA transpose round trip.
    return y


def center_crop_cnhw(img, out_hw):
    _, _, h, w = img.shape
    th, tw = out_hw
    i = int(round((h - th) / 2.0))   # matches PyTorch center_crop (round-based)
    j = int(round((w - tw) / 2.0))
    return img[:, :, i:i + th, j:j + tw]


# ----------------------------------------------------------------------------
# Parameter construction (PyTorch layouts) and one-time kernel-layout prep
# ----------------------------------------------------------------------------
def _init_conv(key, cout, cin, kh, kw):
    kw_, kb_ = jax.random.split(key)
    w = 0.1 * jax.random.normal(kw_, (cout, cin, kh, kw), jnp.float32)   # OIHW
    b = 0.1 * jax.random.normal(kb_, (cout,), jnp.float32)
    return w, b


def _init_convT(key, cin, cout, kh, kw):
    kw_, kb_ = jax.random.split(key)
    w = 0.1 * jax.random.normal(kw_, (cin, cout, kh, kw), jnp.float32)   # IOHW
    b = 0.1 * jax.random.normal(kb_, (cout,), jnp.float32)
    return w, b


def init_unet_params(key, dims, K, input_channels):
    params = {"encoder": [], "decoder": []}
    keys = iter(jax.random.split(key, 64))

    # Encoder: len(dims) - 1 ConvolutionalBlocks
    for i in range(len(dims) - 1):
        cin = input_channels if i == 0 else dims[i - 1]
        cout = dims[i]
        w1, b1 = _init_conv(next(keys), cout, cin, 3, 3)
        w2, b2 = _init_conv(next(keys), cout, cout, 3, 3)
        params["encoder"].append({"w1": w1, "b1": b1, "w2": w2, "b2": b2})

    # Decoder[0]: TransitionBlock(dims[-1], dims[-2])
    d_in, d_out = dims[-1], dims[-2]
    w1, b1 = _init_conv(next(keys), d_in, d_in // 2, 3, 3)
    w2, b2 = _init_conv(next(keys), d_in, d_in, 3, 3)
    wt, bt = _init_convT(next(keys), d_in, d_out, 2, 2)
    params["decoder"].append({"w1": w1, "b1": b1, "w2": w2, "b2": b2,
                              "wt": wt, "bt": bt})

    # Decoder[1..]: AtrousBlocks for i = len(dims)-2 ... 0 (last one is finalblock)
    for i in range(len(dims) - 2, -1, -1):
        d_in = dims[i]
        finalblock = (i == 0)
        w1, b1 = _init_conv(next(keys), d_in, 2 * d_in, 3, 3)
        w2, b2 = _init_conv(next(keys), d_in, d_in, 3, 3)
        blk = {"w1": w1, "b1": b1, "w2": w2, "b2": b2}
        if not finalblock:
            wt, bt = _init_convT(next(keys), d_in, dims[i - 1], 2, 2)
            blk["wt"] = wt
            blk["bt"] = bt
        params["decoder"].append(blk)

    params["final_w"], params["final_b"] = _init_conv(next(keys), K, dims[0], 1, 1)
    return params


def _prep_conv3x3(w_oihw, b):
    cout, cin, _, _ = w_oihw.shape
    w9 = (jnp.transpose(w_oihw, (2, 3, 0, 1))       # (3,3,Cout,Cin), tap = dy*3+dx
          .reshape(9, cout, cin).astype(COMPUTE_DTYPE))
    return w9, b.reshape(cout, 1).astype(jnp.float32)


def _prep_conv1x1(w_oihw, b):
    cout, cin, _, _ = w_oihw.shape
    w1 = w_oihw.reshape(cout, cin)[None].astype(COMPUTE_DTYPE)   # (1, Cout, Cin)
    return w1, b.reshape(cout, 1).astype(jnp.float32)


def _prep_convT2x2(w_iohw, b):
    cin, cout, _, _ = w_iohw.shape
    wm = (jnp.transpose(w_iohw, (2, 3, 1, 0))       # (2,2,Cout,Cin), row = (dy*2+dx)*Cout+co
          .reshape(4 * cout, cin)[None].astype(COMPUTE_DTYPE))   # (1, 4*Cout, Cin)
    bm = jnp.tile(b, 4).reshape(4 * cout, 1).astype(jnp.float32)
    return wm, bm


def prepare_params(raw):
    """One-time conversion of PyTorch-layout weights into kernel layout."""
    prep = {"encoder": [], "decoder": []}
    for blk in raw["encoder"]:
        w1, b1 = _prep_conv3x3(blk["w1"], blk["b1"])
        w2, b2 = _prep_conv3x3(blk["w2"], blk["b2"])
        prep["encoder"].append({"w1": w1, "b1": b1, "w2": w2, "b2": b2})
    for blk in raw["decoder"]:
        d = {}
        d["w1"], d["b1"] = _prep_conv3x3(blk["w1"], blk["b1"])
        d["w2"], d["b2"] = _prep_conv3x3(blk["w2"], blk["b2"])
        if "wt" in blk:
            d["wt"], d["bt"] = _prep_convT2x2(blk["wt"], blk["bt"])
        prep["decoder"].append(d)
    prep["final_w"], prep["final_b"] = _prep_conv1x1(raw["final_w"], raw["final_b"])
    return prep


# ----------------------------------------------------------------------------
# UNet forward (film=None, useBN=False, dropout=False, activation=None)
# ----------------------------------------------------------------------------
def unet_forward(x_nchw, params):
    # NCHW -> internal channels-first (C, N, H, W), bf16 operands for the MXU.
    x = jnp.transpose(x_nchw, (1, 0, 2, 3)).astype(COMPUTE_DTYPE)

    # ---- Encoder (ConvolutionalBlocks) ----
    to_cat_vector = []
    for blk in params["encoder"]:
        x = conv3x3(x, blk["w1"], blk["b1"], relu=True)
        to_cat = conv3x3(x, blk["w2"], blk["b2"], relu=True)
        to_cat_vector.append(to_cat)
        x = maxpool2x2(to_cat)

    # ---- Decoder ----
    # decoder[0]: TransitionBlock (no skip connection)
    tb = params["decoder"][0]
    x = conv3x3(x, tb["w1"], tb["b1"], relu=True)
    x = conv3x3(x, tb["w2"], tb["b2"], relu=True)
    x = conv_transpose2x2(x, tb["wt"], tb["bt"])

    # decoder[i], i >= 1: AtrousBlocks with skip = to_cat_vector[-i]
    for i in range(1, len(params["decoder"])):
        blk = params["decoder"][i]
        to_cat = center_crop_cnhw(to_cat_vector[-i], x.shape[2:4])
        x = jnp.concatenate([x, to_cat], axis=0)     # torch.cat((x, to_cat), dim=1)
        x = conv3x3(x, blk["w1"], blk["b1"], relu=True)
        x = conv3x3(x, blk["w2"], blk["b2"], relu=True)
        if "wt" in blk:                              # not finalblock
            x = conv_transpose2x2(x, blk["wt"], blk["bt"])

    # ---- final 1x1 conv, no activation (activation=None), f32 output ----
    y = conv1x1(x, params["final_w"], params["final_b"], out_dtype=jnp.float32)
    return jnp.transpose(y, (1, 0, 2, 3))            # (C,N,H,W) -> NCHW


unet_forward_jit = jax.jit(unet_forward)


# ----------------------------------------------------------------------------
# main
# ----------------------------------------------------------------------------
if __name__ == "__main__":
    # UNet([4, 8, 16], K=2, film=None, useBN=False, input_channels=1)
    dims = [4, 8, 16]
    K = 2
    input_channels = 1

    key = jax.random.PRNGKey(0)
    kp, kx = jax.random.split(key)
    raw_params = init_unet_params(kp, dims, K, input_channels)
    params = prepare_params(raw_params)              # one-time weight re-layout

    # PyTorch-style NCHW input
    x = jax.random.normal(kx, (2, input_channels, 16, 16), jnp.float32)

    out = unet_forward_jit(x, params)
    out = jax.block_until_ready(out)

    assert out.shape == (2, K, 16, 16), out.shape
    assert out.dtype == jnp.float32
    print("KERNEL_OK")
</pallas_src>

<mosaic_0001>
module attributes {stable_mosaic.version = 11 : i64} {
  func.func @_conv_gemm_kernel(%arg0: i32, %arg1: memref<9x1x512xbf16, #tpu.memory_space<vmem>>, %arg2: memref<9x4x1xbf16, #tpu.memory_space<vmem>>, %arg3: memref<4x1xf32, #tpu.memory_space<vmem>>, %arg4: memref<4x512xbf16, #tpu.memory_space<vmem>>) attributes {dimension_semantics = [#tpu.dimension_semantics<parallel>], iteration_bounds = array<i64: 1>, scalar_prefetch = 0 : i64, scratch_operands = 0 : i64, tpu.core_type = #tpu.core_type<tc>, window_params = [{transform_indices = @transform_0, window_bounds = array<i64: 9, 1, 512>}, {pipeline_mode = #tpu.pipeline_mode<synchronous>, transform_indices = @transform_1, window_bounds = array<i64: 9, 4, 1>}, {pipeline_mode = #tpu.pipeline_mode<synchronous>, transform_indices = @transform_2, window_bounds = array<i64: 4, 1>}, {transform_indices = @transform_3, window_bounds = array<i64: 4, 512>}]} {
    %c0 = arith.constant 0 : index
    %c0_0 = arith.constant 0 : index
    %c0_1 = arith.constant 0 : index
    %0 = vector.load %arg2[%c0, %c0_0, %c0_1] : memref<9x4x1xbf16, #tpu.memory_space<vmem>>, vector<1x4x1xbf16>
    %1 = vector.shape_cast %0 : vector<1x4x1xbf16> to vector<4x1xbf16>
    %c0_2 = arith.constant 0 : index
    %c0_3 = arith.constant 0 : index
    %c0_4 = arith.constant 0 : index
    %2 = vector.load %arg1[%c0_2, %c0_3, %c0_4] : memref<9x1x512xbf16, #tpu.memory_space<vmem>>, vector<1x1x512xbf16>
    %3 = vector.shape_cast %2 : vector<1x1x512xbf16> to vector<1x512xbf16>
    %cst = arith.constant dense<0.000000e+00> : vector<4x512xf32>
    %4 = tpu.matmul %1, %3, %cst {dimension_numbers = #tpu.dot_dimension_numbers<[1], [0], [0], [1], [0, 0, 1, 1], [], []>} : vector<4x1xbf16>, vector<1x512xbf16>, vector<4x512xf32> -> vector<4x512xf32>
    %c1 = arith.constant 1 : index
    %c0_5 = arith.constant 0 : index
    %c0_6 = arith.constant 0 : index
    %5 = vector.load %arg2[%c1, %c0_5, %c0_6] : memref<9x4x1xbf16, #tpu.memory_space<vmem>>, vector<1x4x1xbf16>
    %6 = vector.shape_cast %5 : vector<1x4x1xbf16> to vector<4x1xbf16>
    %c1_7 = arith.constant 1 : index
    %c0_8 = arith.constant 0 : index
    %c0_9 = arith.constant 0 : index
    %7 = vector.load %arg1[%c1_7, %c0_8, %c0_9] : memref<9x1x512xbf16, #tpu.memory_space<vmem>>, vector<1x1x512xbf16>
    %8 = vector.shape_cast %7 : vector<1x1x512xbf16> to vector<1x512xbf16>
    %cst_10 = arith.constant dense<0.000000e+00> : vector<4x512xf32>
    %9 = tpu.matmul %6, %8, %cst_10 {dimension_numbers = #tpu.dot_dimension_numbers<[1], [0], [0], [1], [0, 0, 1, 1], [], []>} : vector<4x1xbf16>, vector<1x512xbf16>, vector<4x512xf32> -> vector<4x512xf32>
    %10 = arith.addf %4, %9 : vector<4x512xf32>
    %c2 = arith.constant 2 : index
    %c0_11 = arith.constant 0 : index
    %c0_12 = arith.constant 0 : index
    %11 = vector.load %arg2[%c2, %c0_11, %c0_12] : memref<9x4x1xbf16, #tpu.memory_space<vmem>>, vector<1x4x1xbf16>
    %12 = vector.shape_cast %11 : vector<1x4x1xbf16> to vector<4x1xbf16>
    %c2_13 = arith.constant 2 : index
    %c0_14 = arith.constant 0 : index
    %c0_15 = arith.constant 0 : index
    %13 = vector.load %arg1[%c2_13, %c0_14, %c0_15] : memref<9x1x512xbf16, #tpu.memory_space<vmem>>, vector<1x1x512xbf16>
    %14 = vector.shape_cast %13 : vector<1x1x512xbf16> to vector<1x512xbf16>
    %cst_16 = arith.constant dense<0.000000e+00> : vector<4x512xf32>
    %15 = tpu.matmul %12, %14, %cst_16 {dimension_numbers = #tpu.dot_dimension_numbers<[1], [0], [0], [1], [0, 0, 1, 1], [], []>} : vector<4x1xbf16>, vector<1x512xbf16>, vector<4x512xf32> -> vector<4x512xf32>
    %16 = arith.addf %10, %15 : vector<4x512xf32>
    %c3 = arith.constant 3 : index
    %c0_17 = arith.constant 0 : index
    %c0_18 = arith.constant 0 : index
    %17 = vector.load %arg2[%c3, %c0_17, %c0_18] : memref<9x4x1xbf16, #tpu.memory_space<vmem>>, vector<1x4x1xbf16>
    %18 = vector.shape_cast %17 : vector<1x4x1xbf16> to vector<4x1xbf16>
    %c3_19 = arith.constant 3 : index
    %c0_20 = arith.constant 0 : index
    %c0_21 = arith.constant 0 : index
    %19 = vector.load %arg1[%c3_19, %c0_20, %c0_21] : memref<9x1x512xbf16, #tpu.memory_space<vmem>>, vector<1x1x512xbf16>
    %20 = vector.shape_cast %19 : vector<1x1x512xbf16> to vector<1x512xbf16>
    %cst_22 = arith.constant dense<0.000000e+00> : vector<4x512xf32>
    %21 = tpu.matmul %18, %20, %cst_22 {dimension_numbers = #tpu.dot_dimension_numbers<[1], [0], [0], [1], [0, 0, 1, 1], [], []>} : vector<4x1xbf16>, vector<1x512xbf16>, vector<4x512xf32> -> vector<4x512xf32>
    %22 = arith.addf %16, %21 : vector<4x512xf32>
    %c4 = arith.constant 4 : index
    %c0_23 = arith.constant 0 : index
    %c0_24 = arith.constant 0 : index
    %23 = vector.load %arg2[%c4, %c0_23, %c0_24] : memref<9x4x1xbf16, #tpu.memory_space<vmem>>, vector<1x4x1xbf16>
    %24 = vector.shape_cast %23 : vector<1x4x1xbf16> to vector<4x1xbf16>
    %c4_25 = arith.constant 4 : index
    %c0_26 = arith.constant 0 : index
    %c0_27 = arith.constant 0 : index
    %25 = vector.load %arg1[%c4_25, %c0_26, %c0_27] : memref<9x1x512xbf16, #tpu.memory_space<vmem>>, vector<1x1x512xbf16>
    %26 = vector.shape_cast %25 : vector<1x1x512xbf16> to vector<1x512xbf16>
    %cst_28 = arith.constant dense<0.000000e+00> : vector<4x512xf32>
    %27 = tpu.matmul %24, %26, %cst_28 {dimension_numbers = #tpu.dot_dimension_numbers<[1], [0], [0], [1], [0, 0, 1, 1], [], []>} : vector<4x1xbf16>, vector<1x512xbf16>, vector<4x512xf32> -> vector<4x512xf32>
    %28 = arith.addf %22, %27 : vector<4x512xf32>
    %c5 = arith.constant 5 : index
    %c0_29 = arith.constant 0 : index
    %c0_30 = arith.constant 0 : index
    %29 = vector.load %arg2[%c5, %c0_29, %c0_30] : memref<9x4x1xbf16, #tpu.memory_space<vmem>>, vector<1x4x1xbf16>
    %30 = vector.shape_cast %29 : vector<1x4x1xbf16> to vector<4x1xbf16>
    %c5_31 = arith.constant 5 : index
    %c0_32 = arith.constant 0 : index
    %c0_33 = arith.constant 0 : index
    %31 = vector.load %arg1[%c5_31, %c0_32, %c0_33] : memref<9x1x512xbf16, #tpu.memory_space<vmem>>, vector<1x1x512xbf16>
    %32 = vector.shape_cast %31 : vector<1x1x512xbf16> to vector<1x512xbf16>
    %cst_34 = arith.constant dense<0.000000e+00> : vector<4x512xf32>
    %33 = tpu.matmul %30, %32, %cst_34 {dimension_numbers = #tpu.dot_dimension_numbers<[1], [0], [0], [1], [0, 0, 1, 1], [], []>} : vector<4x1xbf16>, vector<1x512xbf16>, vector<4x512xf32> -> vector<4x512xf32>
    %34 = arith.addf %28, %33 : vector<4x512xf32>
    %c6 = arith.constant 6 : index
    %c0_35 = arith.constant 0 : index
    %c0_36 = arith.constant 0 : index
    %35 = vector.load %arg2[%c6, %c0_35, %c0_36] : memref<9x4x1xbf16, #tpu.memory_space<vmem>>, vector<1x4x1xbf16>
    %36 = vector.shape_cast %35 : vector<1x4x1xbf16> to vector<4x1xbf16>
    %c6_37 = arith.constant 6 : index
    %c0_38 = arith.constant 0 : index
    %c0_39 = arith.constant 0 : index
    %37 = vector.load %arg1[%c6_37, %c0_38, %c0_39] : memref<9x1x512xbf16, #tpu.memory_space<vmem>>, vector<1x1x512xbf16>
    %38 = vector.shape_cast %37 : vector<1x1x512xbf16> to vector<1x512xbf16>
    %cst_40 = arith.constant dense<0.000000e+00> : vector<4x512xf32>
    %39 = tpu.matmul %36, %38, %cst_40 {dimension_numbers = #tpu.dot_dimension_numbers<[1], [0], [0], [1], [0, 0, 1, 1], [], []>} : vector<4x1xbf16>, vector<1x512xbf16>, vector<4x512xf32> -> vector<4x512xf32>
    %40 = arith.addf %34, %39 : vector<4x512xf32>
    %c7 = arith.constant 7 : index
    %c0_41 = arith.constant 0 : index
    %c0_42 = arith.constant 0 : index
    %41 = vector.load %arg2[%c7, %c0_41, %c0_42] : memref<9x4x1xbf16, #tpu.memory_space<vmem>>, vector<1x4x1xbf16>
    %42 = vector.shape_cast %41 : vector<1x4x1xbf16> to vector<4x1xbf16>
    %c7_43 = arith.constant 7 : index
    %c0_44 = arith.constant 0 : index
    %c0_45 = arith.constant 0 : index
    %43 = vector.load %arg1[%c7_43, %c0_44, %c0_45] : memref<9x1x512xbf16, #tpu.memory_space<vmem>>, vector<1x1x512xbf16>
    %44 = vector.shape_cast %43 : vector<1x1x512xbf16> to vector<1x512xbf16>
    %cst_46 = arith.constant dense<0.000000e+00> : vector<4x512xf32>
    %45 = tpu.matmul %42, %44, %cst_46 {dimension_numbers = #tpu.dot_dimension_numbers<[1], [0], [0], [1], [0, 0, 1, 1], [], []>} : vector<4x1xbf16>, vector<1x512xbf16>, vector<4x512xf32> -> vector<4x512xf32>
    %46 = arith.addf %40, %45 : vector<4x512xf32>
    %c8 = arith.constant 8 : index
    %c0_47 = arith.constant 0 : index
    %c0_48 = arith.constant 0 : index
    %47 = vector.load %arg2[%c8, %c0_47, %c0_48] : memref<9x4x1xbf16, #tpu.memory_space<vmem>>, vector<1x4x1xbf16>
    %48 = vector.shape_cast %47 : vector<1x4x1xbf16> to vector<4x1xbf16>
    %c8_49 = arith.constant 8 : index
    %c0_50 = arith.constant 0 : index
    %c0_51 = arith.constant 0 : index
    %49 = vector.load %arg1[%c8_49, %c0_50, %c0_51] : memref<9x1x512xbf16, #tpu.memory_space<vmem>>, vector<1x1x512xbf16>
    %50 = vector.shape_cast %49 : vector<1x1x512xbf16> to vector<1x512xbf16>
    %cst_52 = arith.constant dense<0.000000e+00> : vector<4x512xf32>
    %51 = tpu.matmul %48, %50, %cst_52 {dimension_numbers = #tpu.dot_dimension_numbers<[1], [0], [0], [1], [0, 0, 1, 1], [], []>} : vector<4x1xbf16>, vector<1x512xbf16>, vector<4x512xf32> -> vector<4x512xf32>
    %52 = arith.addf %46, %51 : vector<4x512xf32>
    %c0_53 = arith.constant 0 : index
    %c0_54 = arith.constant 0 : index
    %53 = vector.load %arg3[%c0_53, %c0_54] : memref<4x1xf32, #tpu.memory_space<vmem>>, vector<4x1xf32>
    %54 = vector.broadcast %53 : vector<4x1xf32> to vector<4x512xf32>
    %55 = arith.addf %52, %54 : vector<4x512xf32>
    %cst_55 = arith.constant 0.000000e+00 : f32
    %56 = vector.broadcast %cst_55 : f32 to vector<4x512xf32>
    %57 = arith.maximumf %55, %56 : vector<4x512xf32>
    %58 = arith.truncf %57 : vector<4x512xf32> to vector<4x512xbf16>
    %c0_56 = arith.constant 0 : index
    %c0_57 = arith.constant 0 : index
    %59 = vector.load %arg4[%c0_56, %c0_57] : memref<4x512xbf16, #tpu.memory_space<vmem>>, vector<4x512xbf16>
    tpu.vector_store %arg4[%c0_56, %c0_57], %58 {strides = array<i32>} : memref<4x512xbf16, #tpu.memory_space<vmem>>, vector<4x512xbf16>,
    return
  }
  func.func @transform_0(%arg0: i32) -> (i32, i32, i32) {
    %c0_i32 = arith.constant 0 : i32
    %c0_i32_0 = arith.constant 0 : i32
    %c0_i32_1 = arith.constant 0 : i32
    return %c0_i32, %c0_i32_0, %arg0 : i32, i32, i32
  }
  func.func @transform_1(%arg0: i32) -> (i32, i32, i32) {
    %c0_i32 = arith.constant 0 : i32
    %c0_i32_0 = arith.constant 0 : i32
    %c0_i32_1 = arith.constant 0 : i32
    %c0_i32_2 = arith.constant 0 : i32
    return %c0_i32, %c0_i32_0, %c0_i32_1 : i32, i32, i32
  }
  func.func @transform_2(%arg0: i32) -> (i32, i32) {
    %c0_i32 = arith.constant 0 : i32
    %c0_i32_0 = arith.constant 0 : i32
    %c0_i32_1 = arith.constant 0 : i32
    return %c0_i32, %c0_i32_0 : i32, i32
  }
  func.func @transform_3(%arg0: i32) -> (i32, i32) {
    %c0_i32 = arith.constant 0 : i32
    %c0_i32_0 = arith.constant 0 : i32
    return %c0_i32, %arg0 : i32, i32
  }
}

module attributes {stable_mosaic.version = 11 : i64} {
  func.func @_conv_gemm_kernel(%arg0: i32, %arg1: memref<9x4x512xbf16, #tpu.memory_space<vmem>>, %arg2: memref<9x4x4xbf16, #tpu.memory_space<vmem>>, %arg3: memref<4x1xf32, #tpu.memory_space<vmem>>, %arg4: memref<4x512xbf16, #tpu.memory_space<vmem>>) attributes {dimension_semantics = [#tpu.dimension_semantics<parallel>], iteration_bounds = array<i64: 1>, scalar_prefetch = 0 : i64, scratch_operands = 0 : i64, tpu.core_type = #tpu.core_type<tc>, window_params = [{transform_indices = @transform_0, window_bounds = array<i64: 9, 4, 512>}, {pipeline_mode = #tpu.pipeline_mode<synchronous>, transform_indices = @transform_1, window_bounds = array<i64: 9, 4, 4>}, {pipeline_mode = #tpu.pipeline_mode<synchronous>, transform_indices = @transform_2, window_bounds = array<i64: 4, 1>}, {transform_indices = @transform_3, window_bounds = array<i64: 4, 512>}]} {
    %c0 = arith.constant 0 : index
    %c0_0 = arith.constant 0 : index
    %c0_1 = arith.constant 0 : index
    %0 = vector.load %arg2[%c0, %c0_0, %c0_1] : memref<9x4x4xbf16, #tpu.memory_space<vmem>>, vector<1x4x4xbf16>
    %1 = vector.shape_cast %0 : vector<1x4x4xbf16> to vector<4x4xbf16>
    %c0_2 = arith.constant 0 : index
    %c0_3 = arith.constant 0 : index
    %c0_4 = arith.constant 0 : index
    %2 = vector.load %arg1[%c0_2, %c0_3, %c0_4] : memref<9x4x512xbf16, #tpu.memory_space<vmem>>, vector<1x4x512xbf16>
    %3 = vector.shape_cast %2 : vector<1x4x512xbf16> to vector<4x512xbf16>
    %cst = arith.constant dense<0.000000e+00> : vector<4x512xf32>
    %4 = tpu.matmul %1, %3, %cst {dimension_numbers = #tpu.dot_dimension_numbers<[1], [0], [0], [1], [0, 0, 1, 1], [], []>} : vector<4x4xbf16>, vector<4x512xbf16>, vector<4x512xf32> -> vector<4x512xf32>
    %c1 = arith.constant 1 : index
    %c0_5 = arith.constant 0 : index
    %c0_6 = arith.constant 0 : index
    %5 = vector.load %arg2[%c1, %c0_5, %c0_6] : memref<9x4x4xbf16, #tpu.memory_space<vmem>>, vector<1x4x4xbf16>
    %6 = vector.shape_cast %5 : vector<1x4x4xbf16> to vector<4x4xbf16>
    %c1_7 = arith.constant 1 : index
    %c0_8 = arith.constant 0 : index
    %c0_9 = arith.constant 0 : index
    %7 = vector.load %arg1[%c1_7, %c0_8, %c0_9] : memref<9x4x512xbf16, #tpu.memory_space<vmem>>, vector<1x4x512xbf16>
    %8 = vector.shape_cast %7 : vector<1x4x512xbf16> to vector<4x512xbf16>
    %cst_10 = arith.constant dense<0.000000e+00> : vector<4x512xf32>
    %9 = tpu.matmul %6, %8, %cst_10 {dimension_numbers = #tpu.dot_dimension_numbers<[1], [0], [0], [1], [0, 0, 1, 1], [], []>} : vector<4x4xbf16>, vector<4x512xbf16>, vector<4x512xf32> -> vector<4x512xf32>
    %10 = arith.addf %4, %9 : vector<4x512xf32>
    %c2 = arith.constant 2 : index
    %c0_11 = arith.constant 0 : index
    %c0_12 = arith.constant 0 : index
    %11 = vector.load %arg2[%c2, %c0_11, %c0_12] : memref<9x4x4xbf16, #tpu.memory_space<vmem>>, vector<1x4x4xbf16>
    %12 = vector.shape_cast %11 : vector<1x4x4xbf16> to vector<4x4xbf16>
    %c2_13 = arith.constant 2 : index
    %c0_14 = arith.constant 0 : index
    %c0_15 = arith.constant 0 : index
    %13 = vector.load %arg1[%c2_13, %c0_14, %c0_15] : memref<9x4x512xbf16, #tpu.memory_space<vmem>>, vector<1x4x512xbf16>
    %14 = vector.shape_cast %13 : vector<1x4x512xbf16> to vector<4x512xbf16>
    %cst_16 = arith.constant dense<0.000000e+00> : vector<4x512xf32>
    %15 = tpu.matmul %12, %14, %cst_16 {dimension_numbers = #tpu.dot_dimension_numbers<[1], [0], [0], [1], [0, 0, 1, 1], [], []>} : vector<4x4xbf16>, vector<4x512xbf16>, vector<4x512xf32> -> vector<4x512xf32>
    %16 = arith.addf %10, %15 : vector<4x512xf32>
    %c3 = arith.constant 3 : index
    %c0_17 = arith.constant 0 : index
    %c0_18 = arith.constant 0 : index
    %17 = vector.load %arg2[%c3, %c0_17, %c0_18] : memref<9x4x4xbf16, #tpu.memory_space<vmem>>, vector<1x4x4xbf16>
    %18 = vector.shape_cast %17 : vector<1x4x4xbf16> to vector<4x4xbf16>
    %c3_19 = arith.constant 3 : index
    %c0_20 = arith.constant 0 : index
    %c0_21 = arith.constant 0 : index
    %19 = vector.load %arg1[%c3_19, %c0_20, %c0_21] : memref<9x4x512xbf16, #tpu.memory_space<vmem>>, vector<1x4x512xbf16>
    %20 = vector.shape_cast %19 : vector<1x4x512xbf16> to vector<4x512xbf16>
    %cst_22 = arith.constant dense<0.000000e+00> : vector<4x512xf32>
    %21 = tpu.matmul %18, %20, %cst_22 {dimension_numbers = #tpu.dot_dimension_numbers<[1], [0], [0], [1], [0, 0, 1, 1], [], []>} : vector<4x4xbf16>, vector<4x512xbf16>, vector<4x512xf32> -> vector<4x512xf32>
    %22 = arith.addf %16, %21 : vector<4x512xf32>
    %c4 = arith.constant 4 : index
    %c0_23 = arith.constant 0 : index
    %c0_24 = arith.constant 0 : index
    %23 = vector.load %arg2[%c4, %c0_23, %c0_24] : memref<9x4x4xbf16, #tpu.memory_space<vmem>>, vector<1x4x4xbf16>
    %24 = vector.shape_cast %23 : vector<1x4x4xbf16> to vector<4x4xbf16>
    %c4_25 = arith.constant 4 : index
    %c0_26 = arith.constant 0 : index
    %c0_27 = arith.constant 0 : index
    %25 = vector.load %arg1[%c4_25, %c0_26, %c0_27] : memref<9x4x512xbf16, #tpu.memory_space<vmem>>, vector<1x4x512xbf16>
    %26 = vector.shape_cast %25 : vector<1x4x512xbf16> to vector<4x512xbf16>
    %cst_28 = arith.constant dense<0.000000e+00> : vector<4x512xf32>
    %27 = tpu.matmul %24, %26, %cst_28 {dimension_numbers = #tpu.dot_dimension_numbers<[1], [0], [0], [1], [0, 0, 1, 1], [], []>} : vector<4x4xbf16>, vector<4x512xbf16>, vector<4x512xf32> -> vector<4x512xf32>
    %28 = arith.addf %22, %27 : vector<4x512xf32>
    %c5 = arith.constant 5 : index
    %c0_29 = arith.constant 0 : index
    %c0_30 = arith.constant 0 : index
    %29 = vector.load %arg2[%c5, %c0_29, %c0_30] : memref<9x4x4xbf16, #tpu.memory_space<vmem>>, vector<1x4x4xbf16>
    %30 = vector.shape_cast %29 : vector<1x4x4xbf16> to vector<4x4xbf16>
    %c5_31 = arith.constant 5 : index
    %c0_32 = arith.constant 0 : index
    %c0_33 = arith.constant 0 : index
    %31 = vector.load %arg1[%c5_31, %c0_32, %c0_33] : memref<9x4x512xbf16, #tpu.memory_space<vmem>>, vector<1x4x512xbf16>
    %32 = vector.shape_cast %31 : vector<1x4x512xbf16> to vector<4x512xbf16>
    %cst_34 = arith.constant dense<0.000000e+00> : vector<4x512xf32>
    %33 = tpu.matmul %30, %32, %cst_34 {dimension_numbers = #tpu.dot_dimension_numbers<[1], [0], [0], [1], [0, 0, 1, 1], [], []>} : vector<4x4xbf16>, vector<4x512xbf16>, vector<4x512xf32> -> vector<4x512xf32>
    %34 = arith.addf %28, %33 : vector<4x512xf32>
    %c6 = arith.constant 6 : index
    %c0_35 = arith.constant 0 : index
    %c0_36 = arith.constant 0 : index
    %35 = vector.load %arg2[%c6, %c0_35, %c0_36] : memref<9x4x4xbf16, #tpu.memory_space<vmem>>, vector<1x4x4xbf16>
    %36 = vector.shape_cast %35 : vector<1x4x4xbf16> to vector<4x4xbf16>
    %c6_37 = arith.constant 6 : index
    %c0_38 = arith.constant 0 : index
    %c0_39 = arith.constant 0 : index
    %37 = vector.load %arg1[%c6_37, %c0_38, %c0_39] : memref<9x4x512xbf16, #tpu.memory_space<vmem>>, vector<1x4x512xbf16>
    %38 = vector.shape_cast %37 : vector<1x4x512xbf16> to vector<4x512xbf16>
    %cst_40 = arith.constant dense<0.000000e+00> : vector<4x512xf32>
    %39 = tpu.matmul %36, %38, %cst_40 {dimension_numbers = #tpu.dot_dimension_numbers<[1], [0], [0], [1], [0, 0, 1, 1], [], []>} : vector<4x4xbf16>, vector<4x512xbf16>, vector<4x512xf32> -> vector<4x512xf32>
    %40 = arith.addf %34, %39 : vector<4x512xf32>
    %c7 = arith.constant 7 : index
    %c0_41 = arith.constant 0 : index
    %c0_42 = arith.constant 0 : index
    %41 = vector.load %arg2[%c7, %c0_41, %c0_42] : memref<9x4x4xbf16, #tpu.memory_space<vmem>>, vector<1x4x4xbf16>
    %42 = vector.shape_cast %41 : vector<1x4x4xbf16> to vector<4x4xbf16>
    %c7_43 = arith.constant 7 : index
    %c0_44 = arith.constant 0 : index
    %c0_45 = arith.constant 0 : index
    %43 = vector.load %arg1[%c7_43, %c0_44, %c0_45] : memref<9x4x512xbf16, #tpu.memory_space<vmem>>, vector<1x4x512xbf16>
    %44 = vector.shape_cast %43 : vector<1x4x512xbf16> to vector<4x512xbf16>
    %cst_46 = arith.constant dense<0.000000e+00> : vector<4x512xf32>
    %45 = tpu.matmul %42, %44, %cst_46 {dimension_numbers = #tpu.dot_dimension_numbers<[1], [0], [0], [1], [0, 0, 1, 1], [], []>} : vector<4x4xbf16>, vector<4x512xbf16>, vector<4x512xf32> -> vector<4x512xf32>
    %46 = arith.addf %40, %45 : vector<4x512xf32>
    %c8 = arith.constant 8 : index
    %c0_47 = arith.constant 0 : index
    %c0_48 = arith.constant 0 : index
    %47 = vector.load %arg2[%c8, %c0_47, %c0_48] : memref<9x4x4xbf16, #tpu.memory_space<vmem>>, vector<1x4x4xbf16>
    %48 = vector.shape_cast %47 : vector<1x4x4xbf16> to vector<4x4xbf16>
    %c8_49 = arith.constant 8 : index
    %c0_50 = arith.constant 0 : index
    %c0_51 = arith.constant 0 : index
    %49 = vector.load %arg1[%c8_49, %c0_50, %c0_51] : memref<9x4x512xbf16, #tpu.memory_space<vmem>>, vector<1x4x512xbf16>
    %50 = vector.shape_cast %49 : vector<1x4x512xbf16> to vector<4x512xbf16>
    %cst_52 = arith.constant dense<0.000000e+00> : vector<4x512xf32>
    %51 = tpu.matmul %48, %50, %cst_52 {dimension_numbers = #tpu.dot_dimension_numbers<[1], [0], [0], [1], [0, 0, 1, 1], [], []>} : vector<4x4xbf16>, vector<4x512xbf16>, vector<4x512xf32> -> vector<4x512xf32>
    %52 = arith.addf %46, %51 : vector<4x512xf32>
    %c0_53 = arith.constant 0 : index
    %c0_54 = arith.constant 0 : index
    %53 = vector.load %arg3[%c0_53, %c0_54] : memref<4x1xf32, #tpu.memory_space<vmem>>, vector<4x1xf32>
    %54 = vector.broadcast %53 : vector<4x1xf32> to vector<4x512xf32>
    %55 = arith.addf %52, %54 : vector<4x512xf32>
    %cst_55 = arith.constant 0.000000e+00 : f32
    %56 = vector.broadcast %cst_55 : f32 to vector<4x512xf32>
    %57 = arith.maximumf %55, %56 : vector<4x512xf32>
    %58 = arith.truncf %57 : vector<4x512xf32> to vector<4x512xbf16>
    %c0_56 = arith.constant 0 : index
    %c0_57 = arith.constant 0 : index
    %59 = vector.load %arg4[%c0_56, %c0_57] : memref<4x512xbf16, #tpu.memory_space<vmem>>, vector<4x512xbf16>
    tpu.vector_store %arg4[%c0_56, %c0_57], %58 {strides = array<i32>} : memref<4x512xbf16, #tpu.memory_space<vmem>>, vector<4x512xbf16>,
    return
  }
  func.func @transform_0(%arg0: i32) -> (i32, i32, i32) {
    %c0_i32 = arith.constant 0 : i32
    %c0_i32_0 = arith.constant 0 : i32
    %c0_i32_1 = arith.constant 0 : i32
    return %c0_i32, %c0_i32_0, %arg0 : i32, i32, i32
  }
  func.func @transform_1(%arg0: i32) -> (i32, i32, i32) {
    %c0_i32 = arith.constant 0 : i32
    %c0_i32_0 = arith.constant 0 : i32
    %c0_i32_1 = arith.constant 0 : i32
    %c0_i32_2 = arith.constant 0 : i32
    return %c0_i32, %c0_i32_0, %c0_i32_1 : i32, i32, i32
  }
  func.func @transform_2(%arg0: i32) -> (i32, i32) {
    %c0_i32 = arith.constant 0 : i32
    %c0_i32_0 = arith.constant 0 : i32
    %c0_i32_1 = arith.constant 0 : i32
    return %c0_i32, %c0_i32_0 : i32, i32
  }
  func.func @transform_3(%arg0: i32) -> (i32, i32) {
    %c0_i32 = arith.constant 0 : i32
    %c0_i32_0 = arith.constant 0 : i32
    return %c0_i32, %arg0 : i32, i32
  }
}

module attributes {stable_mosaic.version = 11 : i64} {
  func.func @_maxpool_kernel(%arg0: i32, %arg1: memref<4x4x128xbf16, #tpu.memory_space<vmem>>, %arg2: memref<4x128xbf16, #tpu.memory_space<vmem>>) attributes {dimension_semantics = [#tpu.dimension_semantics<parallel>], iteration_bounds = array<i64: 1>, scalar_prefetch = 0 : i64, scratch_operands = 0 : i64, tpu.core_type = #tpu.core_type<tc>, window_params = [{transform_indices = @transform_0, window_bounds = array<i64: 4, 4, 128>}, {transform_indices = @transform_1, window_bounds = array<i64: 4, 128>}]} {
    %c0 = arith.constant 0 : index
    %c0_0 = arith.constant 0 : index
    %c0_1 = arith.constant 0 : index
    %0 = vector.load %arg1[%c0, %c0_0, %c0_1] : memref<4x4x128xbf16, #tpu.memory_space<vmem>>, vector<1x4x128xbf16>
    %1 = vector.shape_cast %0 : vector<1x4x128xbf16> to vector<4x128xbf16>
    %c1 = arith.constant 1 : index
    %c0_2 = arith.constant 0 : index
    %c0_3 = arith.constant 0 : index
    %2 = vector.load %arg1[%c1, %c0_2, %c0_3] : memref<4x4x128xbf16, #tpu.memory_space<vmem>>, vector<1x4x128xbf16>
    %3 = vector.shape_cast %2 : vector<1x4x128xbf16> to vector<4x128xbf16>
    %4 = arith.maximumf %1, %3 : vector<4x128xbf16>
    %c2 = arith.constant 2 : index
    %c0_4 = arith.constant 0 : index
    %c0_5 = arith.constant 0 : index
    %5 = vector.load %arg1[%c2, %c0_4, %c0_5] : memref<4x4x128xbf16, #tpu.memory_space<vmem>>, vector<1x4x128xbf16>
    %6 = vector.shape_cast %5 : vector<1x4x128xbf16> to vector<4x128xbf16>
    %c3 = arith.constant 3 : index
    %c0_6 = arith.constant 0 : index
    %c0_7 = arith.constant 0 : index
    %7 = vector.load %arg1[%c3, %c0_6, %c0_7] : memref<4x4x128xbf16, #tpu.memory_space<vmem>>, vector<1x4x128xbf16>
    %8 = vector.shape_cast %7 : vector<1x4x128xbf16> to vector<4x128xbf16>
    %9 = arith.maximumf %6, %8 : vector<4x128xbf16>
    %10 = arith.maximumf %4, %9 : vector<4x128xbf16>
    %c0_8 = arith.constant 0 : index
    %c0_9 = arith.constant 0 : index
    %11 = vector.load %arg2[%c0_8, %c0_9] : memref<4x128xbf16, #tpu.memory_space<vmem>>, vector<4x128xbf16>
    tpu.vector_store %arg2[%c0_8, %c0_9], %10 {strides = array<i32>} : memref<4x128xbf16, #tpu.memory_space<vmem>>, vector<4x128xbf16>,
    return
  }
  func.func @transform_0(%arg0: i32) -> (i32, i32, i32) {
    %c0_i32 = arith.constant 0 : i32
    %c0_i32_0 = arith.constant 0 : i32
    %c0_i32_1 = arith.constant 0 : i32
    return %c0_i32, %c0_i32_0, %arg0 : i32, i32, i32
  }
  func.func @transform_1(%arg0: i32) -> (i32, i32) {
    %c0_i32 = arith.constant 0 : i32
    %c0_i32_0 = arith.constant 0 : i32
    return %c0_i32, %arg0 : i32, i32
  }
}

module attributes {stable_mosaic.version = 11 : i64} {
  func.func @_conv_gemm_kernel(%arg0: i32, %arg1: memref<9x4x128xbf16, #tpu.memory_space<vmem>>, %arg2: memref<9x8x4xbf16, #tpu.memory_space<vmem>>, %arg3: memref<8x1xf32, #tpu.memory_space<vmem>>, %arg4: memref<8x128xbf16, #tpu.memory_space<vmem>>) attributes {dimension_semantics = [#tpu.dimension_semantics<parallel>], iteration_bounds = array<i64: 1>, scalar_prefetch = 0 : i64, scratch_operands = 0 : i64, tpu.core_type = #tpu.core_type<tc>, window_params = [{transform_indices = @transform_0, window_bounds = array<i64: 9, 4, 128>}, {pipeline_mode = #tpu.pipeline_mode<synchronous>, transform_indices = @transform_1, window_bounds = array<i64: 9, 8, 4>}, {pipeline_mode = #tpu.pipeline_mode<synchronous>, transform_indices = @transform_2, window_bounds = array<i64: 8, 1>}, {transform_indices = @transform_3, window_bounds = array<i64: 8, 128>}]} {
    %c0 = arith.constant 0 : index
    %c0_0 = arith.constant 0 : index
    %c0_1 = arith.constant 0 : index
    %0 = vector.load %arg2[%c0, %c0_0, %c0_1] : memref<9x8x4xbf16, #tpu.memory_space<vmem>>, vector<1x8x4xbf16>
    %1 = vector.shape_cast %0 : vector<1x8x4xbf16> to vector<8x4xbf16>
    %c0_2 = arith.constant 0 : index
    %c0_3 = arith.constant 0 : index
    %c0_4 = arith.constant 0 : index
    %2 = vector.load %arg1[%c0_2, %c0_3, %c0_4] : memref<9x4x128xbf16, #tpu.memory_space<vmem>>, vector<1x4x128xbf16>
    %3 = vector.shape_cast %2 : vector<1x4x128xbf16> to vector<4x128xbf16>
    %cst = arith.constant dense<0.000000e+00> : vector<8x128xf32>
    %4 = tpu.matmul %1, %3, %cst {dimension_numbers = #tpu.dot_dimension_numbers<[1], [0], [0], [1], [0, 0, 1, 1], [], []>} : vector<8x4xbf16>, vector<4x128xbf16>, vector<8x128xf32> -> vector<8x128xf32>
    %c1 = arith.constant 1 : index
    %c0_5 = arith.constant 0 : index
    %c0_6 = arith.constant 0 : index
    %5 = vector.load %arg2[%c1, %c0_5, %c0_6] : memref<9x8x4xbf16, #tpu.memory_space<vmem>>, vector<1x8x4xbf16>
    %6 = vector.shape_cast %5 : vector<1x8x4xbf16> to vector<8x4xbf16>
    %c1_7 = arith.constant 1 : index
    %c0_8 = arith.constant 0 : index
    %c0_9 = arith.constant 0 : index
    %7 = vector.load %arg1[%c1_7, %c0_8, %c0_9] : memref<9x4x128xbf16, #tpu.memory_space<vmem>>, vector<1x4x128xbf16>
    %8 = vector.shape_cast %7 : vector<1x4x128xbf16> to vector<4x128xbf16>
    %cst_10 = arith.constant dense<0.000000e+00> : vector<8x128xf32>
    %9 = tpu.matmul %6, %8, %cst_10 {dimension_numbers = #tpu.dot_dimension_numbers<[1], [0], [0], [1], [0, 0, 1, 1], [], []>} : vector<8x4xbf16>, vector<4x128xbf16>, vector<8x128xf32> -> vector<8x128xf32>
    %10 = arith.addf %4, %9 : vector<8x128xf32>
    %c2 = arith.constant 2 : index
    %c0_11 = arith.constant 0 : index
    %c0_12 = arith.constant 0 : index
    %11 = vector.load %arg2[%c2, %c0_11, %c0_12] : memref<9x8x4xbf16, #tpu.memory_space<vmem>>, vector<1x8x4xbf16>
    %12 = vector.shape_cast %11 : vector<1x8x4xbf16> to vector<8x4xbf16>
    %c2_13 = arith.constant 2 : index
    %c0_14 = arith.constant 0 : index
    %c0_15 = arith.constant 0 : index
    %13 = vector.load %arg1[%c2_13, %c0_14, %c0_15] : memref<9x4x128xbf16, #tpu.memory_space<vmem>>, vector<1x4x128xbf16>
    %14 = vector.shape_cast %13 : vector<1x4x128xbf16> to vector<4x128xbf16>
    %cst_16 = arith.constant dense<0.000000e+00> : vector<8x128xf32>
    %15 = tpu.matmul %12, %14, %cst_16 {dimension_numbers = #tpu.dot_dimension_numbers<[1], [0], [0], [1], [0, 0, 1, 1], [], []>} : vector<8x4xbf16>, vector<4x128xbf16>, vector<8x128xf32> -> vector<8x128xf32>
    %16 = arith.addf %10, %15 : vector<8x128xf32>
    %c3 = arith.constant 3 : index
    %c0_17 = arith.constant 0 : index
    %c0_18 = arith.constant 0 : index
    %17 = vector.load %arg2[%c3, %c0_17, %c0_18] : memref<9x8x4xbf16, #tpu.memory_space<vmem>>, vector<1x8x4xbf16>
    %18 = vector.shape_cast %17 : vector<1x8x4xbf16> to vector<8x4xbf16>
    %c3_19 = arith.constant 3 : index
    %c0_20 = arith.constant 0 : index
    %c0_21 = arith.constant 0 : index
    %19 = vector.load %arg1[%c3_19, %c0_20, %c0_21] : memref<9x4x128xbf16, #tpu.memory_space<vmem>>, vector<1x4x128xbf16>
    %20 = vector.shape_cast %19 : vector<1x4x128xbf16> to vector<4x128xbf16>
    %cst_22 = arith.constant dense<0.000000e+00> : vector<8x128xf32>
    %21 = tpu.matmul %18, %20, %cst_22 {dimension_numbers = #tpu.dot_dimension_numbers<[1], [0], [0], [1], [0, 0, 1, 1], [], []>} : vector<8x4xbf16>, vector<4x128xbf16>, vector<8x128xf32> -> vector<8x128xf32>
    %22 = arith.addf %16, %21 : vector<8x128xf32>
    %c4 = arith.constant 4 : index
    %c0_23 = arith.constant 0 : index
    %c0_24 = arith.constant 0 : index
    %23 = vector.load %arg2[%c4, %c0_23, %c0_24] : memref<9x8x4xbf16, #tpu.memory_space<vmem>>, vector<1x8x4xbf16>
    %24 = vector.shape_cast %23 : vector<1x8x4xbf16> to vector<8x4xbf16>
    %c4_25 = arith.constant 4 : index
    %c0_26 = arith.constant 0 : index
    %c0_27 = arith.constant 0 : index
    %25 = vector.load %arg1[%c4_25, %c0_26, %c0_27] : memref<9x4x128xbf16, #tpu.memory_space<vmem>>, vector<1x4x128xbf16>
    %26 = vector.shape_cast %25 : vector<1x4x128xbf16> to vector<4x128xbf16>
    %cst_28 = arith.constant dense<0.000000e+00> : vector<8x128xf32>
    %27 = tpu.matmul %24, %26, %cst_28 {dimension_numbers = #tpu.dot_dimension_numbers<[1], [0], [0], [1], [0, 0, 1, 1], [], []>} : vector<8x4xbf16>, vector<4x128xbf16>, vector<8x128xf32> -> vector<8x128xf32>
    %28 = arith.addf %22, %27 : vector<8x128xf32>
    %c5 = arith.constant 5 : index
    %c0_29 = arith.constant 0 : index
    %c0_30 = arith.constant 0 : index
    %29 = vector.load %arg2[%c5, %c0_29, %c0_30] : memref<9x8x4xbf16, #tpu.memory_space<vmem>>, vector<1x8x4xbf16>
    %30 = vector.shape_cast %29 : vector<1x8x4xbf16> to vector<8x4xbf16>
    %c5_31 = arith.constant 5 : index
    %c0_32 = arith.constant 0 : index
    %c0_33 = arith.constant 0 : index
    %31 = vector.load %arg1[%c5_31, %c0_32, %c0_33] : memref<9x4x128xbf16, #tpu.memory_space<vmem>>, vector<1x4x128xbf16>
    %32 = vector.shape_cast %31 : vector<1x4x128xbf16> to vector<4x128xbf16>
    %cst_34 = arith.constant dense<0.000000e+00> : vector<8x128xf32>
    %33 = tpu.matmul %30, %32, %cst_34 {dimension_numbers = #tpu.dot_dimension_numbers<[1], [0], [0], [1], [0, 0, 1, 1], [], []>} : vector<8x4xbf16>, vector<4x128xbf16>, vector<8x128xf32> -> vector<8x128xf32>
    %34 = arith.addf %28, %33 : vector<8x128xf32>
    %c6 = arith.constant 6 : index
    %c0_35 = arith.constant 0 : index
    %c0_36 = arith.constant 0 : index
    %35 = vector.load %arg2[%c6, %c0_35, %c0_36] : memref<9x8x4xbf16, #tpu.memory_space<vmem>>, vector<1x8x4xbf16>
    %36 = vector.shape_cast %35 : vector<1x8x4xbf16> to vector<8x4xbf16>
    %c6_37 = arith.constant 6 : index
    %c0_38 = arith.constant 0 : index
    %c0_39 = arith.constant 0 : index
    %37 = vector.load %arg1[%c6_37, %c0_38, %c0_39] : memref<9x4x128xbf16, #tpu.memory_space<vmem>>, vector<1x4x128xbf16>
    %38 = vector.shape_cast %37 : vector<1x4x128xbf16> to vector<4x128xbf16>
    %cst_40 = arith.constant dense<0.000000e+00> : vector<8x128xf32>
    %39 = tpu.matmul %36, %38, %cst_40 {dimension_numbers = #tpu.dot_dimension_numbers<[1], [0], [0], [1], [0, 0, 1, 1], [], []>} : vector<8x4xbf16>, vector<4x128xbf16>, vector<8x128xf32> -> vector<8x128xf32>
    %40 = arith.addf %34, %39 : vector<8x128xf32>
    %c7 = arith.constant 7 : index
    %c0_41 = arith.constant 0 : index
    %c0_42 = arith.constant 0 : index
    %41 = vector.load %arg2[%c7, %c0_41, %c0_42] : memref<9x8x4xbf16, #tpu.memory_space<vmem>>, vector<1x8x4xbf16>
    %42 = vector.shape_cast %41 : vector<1x8x4xbf16> to vector<8x4xbf16>
    %c7_43 = arith.constant 7 : index
    %c0_44 = arith.constant 0 : index
    %c0_45 = arith.constant 0 : index
    %43 = vector.load %arg1[%c7_43, %c0_44, %c0_45] : memref<9x4x128xbf16, #tpu.memory_space<vmem>>, vector<1x4x128xbf16>
    %44 = vector.shape_cast %43 : vector<1x4x128xbf16> to vector<4x128xbf16>
    %cst_46 = arith.constant dense<0.000000e+00> : vector<8x128xf32>
    %45 = tpu.matmul %42, %44, %cst_46 {dimension_numbers = #tpu.dot_dimension_numbers<[1], [0], [0], [1], [0, 0, 1, 1], [], []>} : vector<8x4xbf16>, vector<4x128xbf16>, vector<8x128xf32> -> vector<8x128xf32>
    %46 = arith.addf %40, %45 : vector<8x128xf32>
    %c8 = arith.constant 8 : index
    %c0_47 = arith.constant 0 : index
    %c0_48 = arith.constant 0 : index
    %47 = vector.load %arg2[%c8, %c0_47, %c0_48] : memref<9x8x4xbf16, #tpu.memory_space<vmem>>, vector<1x8x4xbf16>
    %48 = vector.shape_cast %47 : vector<1x8x4xbf16> to vector<8x4xbf16>
    %c8_49 = arith.constant 8 : index
    %c0_50 = arith.constant 0 : index
    %c0_51 = arith.constant 0 : index
    %49 = vector.load %arg1[%c8_49, %c0_50, %c0_51] : memref<9x4x128xbf16, #tpu.memory_space<vmem>>, vector<1x4x128xbf16>
    %50 = vector.shape_cast %49 : vector<1x4x128xbf16> to vector<4x128xbf16>
    %cst_52 = arith.constant dense<0.000000e+00> : vector<8x128xf32>
    %51 = tpu.matmul %48, %50, %cst_52 {dimension_numbers = #tpu.dot_dimension_numbers<[1], [0], [0], [1], [0, 0, 1, 1], [], []>} : vector<8x4xbf16>, vector<4x128xbf16>, vector<8x128xf32> -> vector<8x128xf32>
    %52 = arith.addf %46, %51 : vector<8x128xf32>
    %c0_53 = arith.constant 0 : index
    %c0_54 = arith.constant 0 : index
    %53 = vector.load %arg3[%c0_53, %c0_54] : memref<8x1xf32, #tpu.memory_space<vmem>>, vector<8x1xf32>
    %54 = vector.broadcast %53 : vector<8x1xf32> to vector<8x128xf32>
    %55 = arith.addf %52, %54 : vector<8x128xf32>
    %cst_55 = arith.constant 0.000000e+00 : f32
    %56 = vector.broadcast %cst_55 : f32 to vector<8x128xf32>
    %57 = arith.maximumf %55, %56 : vector<8x128xf32>
    %58 = arith.truncf %57 : vector<8x128xf32> to vector<8x128xbf16>
    %c0_56 = arith.constant 0 : index
    %c0_57 = arith.constant 0 : index
    %59 = vector.load %arg4[%c0_56, %c0_57] : memref<8x128xbf16, #tpu.memory_space<vmem>>, vector<8x128xbf16>
    tpu.vector_store %arg4[%c0_56, %c0_57], %58 {strides = array<i32>} : memref<8x128xbf16, #tpu.memory_space<vmem>>, vector<8x128xbf16>,
    return
  }
  func.func @transform_0(%arg0: i32) -> (i32, i32, i32) {
    %c0_i32 = arith.constant 0 : i32
    %c0_i32_0 = arith.constant 0 : i32
    %c0_i32_1 = arith.constant 0 : i32
    return %c0_i32, %c0_i32_0, %arg0 : i32, i32, i32
  }
  func.func @transform_1(%arg0: i32) -> (i32, i32, i32) {
    %c0_i32 = arith.constant 0 : i32
    %c0_i32_0 = arith.constant 0 : i32
    %c0_i32_1 = arith.constant 0 : i32
    %c0_i32_2 = arith.constant 0 : i32
    return %c0_i32, %c0_i32_0, %c0_i32_1 : i32, i32, i32
  }
  func.func @transform_2(%arg0: i32) -> (i32, i32) {
    %c0_i32 = arith.constant 0 : i32
    %c0_i32_0 = arith.constant 0 : i32
    %c0_i32_1 = arith.constant 0 : i32
    return %c0_i32, %c0_i32_0 : i32, i32
  }
  func.func @transform_3(%arg0: i32) -> (i32, i32) {
    %c0_i32 = arith.constant 0 : i32
    %c0_i32_0 = arith.constant 0 : i32
    return %c0_i32, %arg0 : i32, i32
  }
}

module attributes {stable_mosaic.version = 11 : i64} {
  func.func @_conv_gemm_kernel(%arg0: i32, %arg1: memref<9x8x128xbf16, #tpu.memory_space<vmem>>, %arg2: memref<9x8x8xbf16, #tpu.memory_space<vmem>>, %arg3: memref<8x1xf32, #tpu.memory_space<vmem>>, %arg4: memref<8x128xbf16, #tpu.memory_space<vmem>>) attributes {dimension_semantics = [#tpu.dimension_semantics<parallel>], iteration_bounds = array<i64: 1>, scalar_prefetch = 0 : i64, scratch_operands = 0 : i64, tpu.core_type = #tpu.core_type<tc>, window_params = [{transform_indices = @transform_0, window_bounds = array<i64: 9, 8, 128>}, {pipeline_mode = #tpu.pipeline_mode<synchronous>, transform_indices = @transform_1, window_bounds = array<i64: 9, 8, 8>}, {pipeline_mode = #tpu.pipeline_mode<synchronous>, transform_indices = @transform_2, window_bounds = array<i64: 8, 1>}, {transform_indices = @transform_3, window_bounds = array<i64: 8, 128>}]} {
    %c0 = arith.constant 0 : index
    %c0_0 = arith.constant 0 : index
    %c0_1 = arith.constant 0 : index
    %0 = vector.load %arg2[%c0, %c0_0, %c0_1] : memref<9x8x8xbf16, #tpu.memory_space<vmem>>, vector<1x8x8xbf16>
    %1 = vector.shape_cast %0 : vector<1x8x8xbf16> to vector<8x8xbf16>
    %c0_2 = arith.constant 0 : index
    %c0_3 = arith.constant 0 : index
    %c0_4 = arith.constant 0 : index
    %2 = vector.load %arg1[%c0_2, %c0_3, %c0_4] : memref<9x8x128xbf16, #tpu.memory_space<vmem>>, vector<1x8x128xbf16>
    %3 = vector.shape_cast %2 : vector<1x8x128xbf16> to vector<8x128xbf16>
    %cst = arith.constant dense<0.000000e+00> : vector<8x128xf32>
    %4 = tpu.matmul %1, %3, %cst {dimension_numbers = #tpu.dot_dimension_numbers<[1], [0], [0], [1], [0, 0, 1, 1], [], []>} : vector<8x8xbf16>, vector<8x128xbf16>, vector<8x128xf32> -> vector<8x128xf32>
    %c1 = arith.constant 1 : index
    %c0_5 = arith.constant 0 : index
    %c0_6 = arith.constant 0 : index
    %5 = vector.load %arg2[%c1, %c0_5, %c0_6] : memref<9x8x8xbf16, #tpu.memory_space<vmem>>, vector<1x8x8xbf16>
    %6 = vector.shape_cast %5 : vector<1x8x8xbf16> to vector<8x8xbf16>
    %c1_7 = arith.constant 1 : index
    %c0_8 = arith.constant 0 : index
    %c0_9 = arith.constant 0 : index
    %7 = vector.load %arg1[%c1_7, %c0_8, %c0_9] : memref<9x8x128xbf16, #tpu.memory_space<vmem>>, vector<1x8x128xbf16>
    %8 = vector.shape_cast %7 : vector<1x8x128xbf16> to vector<8x128xbf16>
    %cst_10 = arith.constant dense<0.000000e+00> : vector<8x128xf32>
    %9 = tpu.matmul %6, %8, %cst_10 {dimension_numbers = #tpu.dot_dimension_numbers<[1], [0], [0], [1], [0, 0, 1, 1], [], []>} : vector<8x8xbf16>, vector<8x128xbf16>, vector<8x128xf32> -> vector<8x128xf32>
    %10 = arith.addf %4, %9 : vector<8x128xf32>
    %c2 = arith.constant 2 : index
    %c0_11 = arith.constant 0 : index
    %c0_12 = arith.constant 0 : index
    %11 = vector.load %arg2[%c2, %c0_11, %c0_12] : memref<9x8x8xbf16, #tpu.memory_space<vmem>>, vector<1x8x8xbf16>
    %12 = vector.shape_cast %11 : vector<1x8x8xbf16> to vector<8x8xbf16>
    %c2_13 = arith.constant 2 : index
    %c0_14 = arith.constant 0 : index
    %c0_15 = arith.constant 0 : index
    %13 = vector.load %arg1[%c2_13, %c0_14, %c0_15] : memref<9x8x128xbf16, #tpu.memory_space<vmem>>, vector<1x8x128xbf16>
    %14 = vector.shape_cast %13 : vector<1x8x128xbf16> to vector<8x128xbf16>
    %cst_16 = arith.constant dense<0.000000e+00> : vector<8x128xf32>
    %15 = tpu.matmul %12, %14, %cst_16 {dimension_numbers = #tpu.dot_dimension_numbers<[1], [0], [0], [1], [0, 0, 1, 1], [], []>} : vector<8x8xbf16>, vector<8x128xbf16>, vector<8x128xf32> -> vector<8x128xf32>
    %16 = arith.addf %10, %15 : vector<8x128xf32>
    %c3 = arith.constant 3 : index
    %c0_17 = arith.constant 0 : index
    %c0_18 = arith.constant 0 : index
    %17 = vector.load %arg2[%c3, %c0_17, %c0_18] : memref<9x8x8xbf16, #tpu.memory_space<vmem>>, vector<1x8x8xbf16>
    %18 = vector.shape_cast %17 : vector<1x8x8xbf16> to vector<8x8xbf16>
    %c3_19 = arith.constant 3 : index
    %c0_20 = arith.constant 0 : index
    %c0_21 = arith.constant 0 : index
    %19 = vector.load %arg1[%c3_19, %c0_20, %c0_21] : memref<9x8x128xbf16, #tpu.memory_space<vmem>>, vector<1x8x128xbf16>
    %20 = vector.shape_cast %19 : vector<1x8x128xbf16> to vector<8x128xbf16>
    %cst_22 = arith.constant dense<0.000000e+00> : vector<8x128xf32>
    %21 = tpu.matmul %18, %20, %cst_22 {dimension_numbers = #tpu.dot_dimension_numbers<[1], [0], [0], [1], [0, 0, 1, 1], [], []>} : vector<8x8xbf16>, vector<8x128xbf16>, vector<8x128xf32> -> vector<8x128xf32>
    %22 = arith.addf %16, %21 : vector<8x128xf32>
    %c4 = arith.constant 4 : index
    %c0_23 = arith.constant 0 : index
    %c0_24 = arith.constant 0 : index
    %23 = vector.load %arg2[%c4, %c0_23, %c0_24] : memref<9x8x8xbf16, #tpu.memory_space<vmem>>, vector<1x8x8xbf16>
    %24 = vector.shape_cast %23 : vector<1x8x8xbf16> to vector<8x8xbf16>
    %c4_25 = arith.constant 4 : index
    %c0_26 = arith.constant 0 : index
    %c0_27 = arith.constant 0 : index
    %25 = vector.load %arg1[%c4_25, %c0_26, %c0_27] : memref<9x8x128xbf16, #tpu.memory_space<vmem>>, vector<1x8x128xbf16>
    %26 = vector.shape_cast %25 : vector<1x8x128xbf16> to vector<8x128xbf16>
    %cst_28 = arith.constant dense<0.000000e+00> : vector<8x128xf32>
    %27 = tpu.matmul %24, %26, %cst_28 {dimension_numbers = #tpu.dot_dimension_numbers<[1], [0], [0], [1], [0, 0, 1, 1], [], []>} : vector<8x8xbf16>, vector<8x128xbf16>, vector<8x128xf32> -> vector<8x128xf32>
    %28 = arith.addf %22, %27 : vector<8x128xf32>
    %c5 = arith.constant 5 : index
    %c0_29 = arith.constant 0 : index
    %c0_30 = arith.constant 0 : index
    %29 = vector.load %arg2[%c5, %c0_29, %c0_30] : memref<9x8x8xbf16, #tpu.memory_space<vmem>>, vector<1x8x8xbf16>
    %30 = vector.shape_cast %29 : vector<1x8x8xbf16> to vector<8x8xbf16>
    %c5_31 = arith.constant 5 : index
    %c0_32 = arith.constant 0 : index
    %c0_33 = arith.constant 0 : index
    %31 = vector.load %arg1[%c5_31, %c0_32, %c0_33] : memref<9x8x128xbf16, #tpu.memory_space<vmem>>, vector<1x8x128xbf16>
    %32 = vector.shape_cast %31 : vector<1x8x128xbf16> to vector<8x128xbf16>
    %cst_34 = arith.constant dense<0.000000e+00> : vector<8x128xf32>
    %33 = tpu.matmul %30, %32, %cst_34 {dimension_numbers = #tpu.dot_dimension_numbers<[1], [0], [0], [1], [0, 0, 1, 1], [], []>} : vector<8x8xbf16>, vector<8x128xbf16>, vector<8x128xf32> -> vector<8x128xf32>
    %34 = arith.addf %28, %33 : vector<8x128xf32>
    %c6 = arith.constant 6 : index
    %c0_35 = arith.constant 0 : index
    %c0_36 = arith.constant 0 : index
    %35 = vector.load %arg2[%c6, %c0_35, %c0_36] : memref<9x8x8xbf16, #tpu.memory_space<vmem>>, vector<1x8x8xbf16>
    %36 = vector.shape_cast %35 : vector<1x8x8xbf16> to vector<8x8xbf16>
    %c6_37 = arith.constant 6 : index
    %c0_38 = arith.constant 0 : index
    %c0_39 = arith.constant 0 : index
    %37 = vector.load %arg1[%c6_37, %c0_38, %c0_39] : memref<9x8x128xbf16, #tpu.memory_space<vmem>>, vector<1x8x128xbf16>
    %38 = vector.shape_cast %37 : vector<1x8x128xbf16> to vector<8x128xbf16>
    %cst_40 = arith.constant dense<0.000000e+00> : vector<8x128xf32>
    %39 = tpu.matmul %36, %38, %cst_40 {dimension_numbers = #tpu.dot_dimension_numbers<[1], [0], [0], [1], [0, 0, 1, 1], [], []>} : vector<8x8xbf16>, vector<8x128xbf16>, vector<8x128xf32> -> vector<8x128xf32>
    %40 = arith.addf %34, %39 : vector<8x128xf32>
    %c7 = arith.constant 7 : index
    %c0_41 = arith.constant 0 : index
    %c0_42 = arith.constant 0 : index
    %41 = vector.load %arg2[%c7, %c0_41, %c0_42] : memref<9x8x8xbf16, #tpu.memory_space<vmem>>, vector<1x8x8xbf16>
    %42 = vector.shape_cast %41 : vector<1x8x8xbf16> to vector<8x8xbf16>
    %c7_43 = arith.constant 7 : index
    %c0_44 = arith.constant 0 : index
    %c0_45 = arith.constant 0 : index
    %43 = vector.load %arg1[%c7_43, %c0_44, %c0_45] : memref<9x8x128xbf16, #tpu.memory_space<vmem>>, vector<1x8x128xbf16>
    %44 = vector.shape_cast %43 : vector<1x8x128xbf16> to vector<8x128xbf16>
    %cst_46 = arith.constant dense<0.000000e+00> : vector<8x128xf32>
    %45 = tpu.matmul %42, %44, %cst_46 {dimension_numbers = #tpu.dot_dimension_numbers<[1], [0], [0], [1], [0, 0, 1, 1], [], []>} : vector<8x8xbf16>, vector<8x128xbf16>, vector<8x128xf32> -> vector<8x128xf32>
    %46 = arith.addf %40, %45 : vector<8x128xf32>
    %c8 = arith.constant 8 : index
    %c0_47 = arith.constant 0 : index
    %c0_48 = arith.constant 0 : index
    %47 = vector.load %arg2[%c8, %c0_47, %c0_48] : memref<9x8x8xbf16, #tpu.memory_space<vmem>>, vector<1x8x8xbf16>
    %48 = vector.shape_cast %47 : vector<1x8x8xbf16> to vector<8x8xbf16>
    %c8_49 = arith.constant 8 : index
    %c0_50 = arith.constant 0 : index
    %c0_51 = arith.constant 0 : index
    %49 = vector.load %arg1[%c8_49, %c0_50, %c0_51] : memref<9x8x128xbf16, #tpu.memory_space<vmem>>, vector<1x8x128xbf16>
    %50 = vector.shape_cast %49 : vector<1x8x128xbf16> to vector<8x128xbf16>
    %cst_52 = arith.constant dense<0.000000e+00> : vector<8x128xf32>
    %51 = tpu.matmul %48, %50, %cst_52 {dimension_numbers = #tpu.dot_dimension_numbers<[1], [0], [0], [1], [0, 0, 1, 1], [], []>} : vector<8x8xbf16>, vector<8x128xbf16>, vector<8x128xf32> -> vector<8x128xf32>
    %52 = arith.addf %46, %51 : vector<8x128xf32>
    %c0_53 = arith.constant 0 : index
    %c0_54 = arith.constant 0 : index
    %53 = vector.load %arg3[%c0_53, %c0_54] : memref<8x1xf32, #tpu.memory_space<vmem>>, vector<8x1xf32>
    %54 = vector.broadcast %53 : vector<8x1xf32> to vector<8x128xf32>
    %55 = arith.addf %52, %54 : vector<8x128xf32>
    %cst_55 = arith.constant 0.000000e+00 : f32
    %56 = vector.broadcast %cst_55 : f32 to vector<8x128xf32>
    %57 = arith.maximumf %55, %56 : vector<8x128xf32>
    %58 = arith.truncf %57 : vector<8x128xf32> to vector<8x128xbf16>
    %c0_56 = arith.constant 0 : index
    %c0_57 = arith.constant 0 : index
    %59 = vector.load %arg4[%c0_56, %c0_57] : memref<8x128xbf16, #tpu.memory_space<vmem>>, vector<8x128xbf16>
    tpu.vector_store %arg4[%c0_56, %c0_57], %58 {strides = array<i32>} : memref<8x128xbf16, #tpu.memory_space<vmem>>, vector<8x128xbf16>,
    return
  }
  func.func @transform_0(%arg0: i32) -> (i32, i32, i32) {
    %c0_i32 = arith.constant 0 : i32
    %c0_i32_0 = arith.constant 0 : i32
    %c0_i32_1 = arith.constant 0 : i32
    return %c0_i32, %c0_i32_0, %arg0 : i32, i32, i32
  }
  func.func @transform_1(%arg0: i32) -> (i32, i32, i32) {
    %c0_i32 = arith.constant 0 : i32
    %c0_i32_0 = arith.constant 0 : i32
    %c0_i32_1 = arith.constant 0 : i32
    %c0_i32_2 = arith.constant 0 : i32
    return %c0_i32, %c0_i32_0, %c0_i32_1 : i32, i32, i32
  }
  func.func @transform_2(%arg0: i32) -> (i32, i32) {
    %c0_i32 = arith.constant 0 : i32
    %c0_i32_0 = arith.constant 0 : i32
    %c0_i32_1 = arith.constant 0 : i32
    return %c0_i32, %c0_i32_0 : i32, i32
  }
  func.func @transform_3(%arg0: i32) -> (i32, i32) {
    %c0_i32 = arith.constant 0 : i32
    %c0_i32_0 = arith.constant 0 : i32
    return %c0_i32, %arg0 : i32, i32
  }
}

module attributes {stable_mosaic.version = 11 : i64} {
  func.func @_maxpool_kernel(%arg0: i32, %arg1: memref<4x8x32xbf16, #tpu.memory_space<vmem>>, %arg2: memref<8x32xbf16, #tpu.memory_space<vmem>>) attributes {dimension_semantics = [#tpu.dimension_semantics<parallel>], iteration_bounds = array<i64: 1>, scalar_prefetch = 0 : i64, scratch_operands = 0 : i64, tpu.core_type = #tpu.core_type<tc>, window_params = [{transform_indices = @transform_0, window_bounds = array<i64: 4, 8, 32>}, {transform_indices = @transform_1, window_bounds = array<i64: 8, 32>}]} {
    %c0 = arith.constant 0 : index
    %c0_0 = arith.constant 0 : index
    %c0_1 = arith.constant 0 : index
    %0 = vector.load %arg1[%c0, %c0_0, %c0_1] : memref<4x8x32xbf16, #tpu.memory_space<vmem>>, vector<1x8x32xbf16>
    %1 = vector.shape_cast %0 : vector<1x8x32xbf16> to vector<8x32xbf16>
    %c1 = arith.constant 1 : index
    %c0_2 = arith.constant 0 : index
    %c0_3 = arith.constant 0 : index
    %2 = vector.load %arg1[%c1, %c0_2, %c0_3] : memref<4x8x32xbf16, #tpu.memory_space<vmem>>, vector<1x8x32xbf16>
    %3 = vector.shape_cast %2 : vector<1x8x32xbf16> to vector<8x32xbf16>
    %4 = arith.maximumf %1, %3 : vector<8x32xbf16>
    %c2 = arith.constant 2 : index
    %c0_4 = arith.constant 0 : index
    %c0_5 = arith.constant 0 : index
    %5 = vector.load %arg1[%c2, %c0_4, %c0_5] : memref<4x8x32xbf16, #tpu.memory_space<vmem>>, vector<1x8x32xbf16>
    %6 = vector.shape_cast %5 : vector<1x8x32xbf16> to vector<8x32xbf16>
    %c3 = arith.constant 3 : index
    %c0_6 = arith.constant 0 : index
    %c0_7 = arith.constant 0 : index
    %7 = vector.load %arg1[%c3, %c0_6, %c0_7] : memref<4x8x32xbf16, #tpu.memory_space<vmem>>, vector<1x8x32xbf16>
    %8 = vector.shape_cast %7 : vector<1x8x32xbf16> to vector<8x32xbf16>
    %9 = arith.maximumf %6, %8 : vector<8x32xbf16>
    %10 = arith.maximumf %4, %9 : vector<8x32xbf16>
    %c0_8 = arith.constant 0 : index
    %c0_9 = arith.constant 0 : index
    %11 = vector.load %arg2[%c0_8, %c0_9] : memref<8x32xbf16, #tpu.memory_space<vmem>>, vector<8x32xbf16>
    tpu.vector_store %arg2[%c0_8, %c0_9], %10 {strides = array<i32>} : memref<8x32xbf16, #tpu.memory_space<vmem>>, vector<8x32xbf16>,
    return
  }
  func.func @transform_0(%arg0: i32) -> (i32, i32, i32) {
    %c0_i32 = arith.constant 0 : i32
    %c0_i32_0 = arith.constant 0 : i32
    %c0_i32_1 = arith.constant 0 : i32
    return %c0_i32, %c0_i32_0, %arg0 : i32, i32, i32
  }
  func.func @transform_1(%arg0: i32) -> (i32, i32) {
    %c0_i32 = arith.constant 0 : i32
    %c0_i32_0 = arith.constant 0 : i32
    return %c0_i32, %arg0 : i32, i32
  }
}

module attributes {stable_mosaic.version = 11 : i64} {
  func.func @_conv_gemm_kernel(%arg0: i32, %arg1: memref<9x8x32xbf16, #tpu.memory_space<vmem>>, %arg2: memref<9x16x8xbf16, #tpu.memory_space<vmem>>, %arg3: memref<16x1xf32, #tpu.memory_space<vmem>>, %arg4: memref<16x32xbf16, #tpu.memory_space<vmem>>) attributes {dimension_semantics = [#tpu.dimension_semantics<parallel>], iteration_bounds = array<i64: 1>, scalar_prefetch = 0 : i64, scratch_operands = 0 : i64, tpu.core_type = #tpu.core_type<tc>, window_params = [{transform_indices = @transform_0, window_bounds = array<i64: 9, 8, 32>}, {pipeline_mode = #tpu.pipeline_mode<synchronous>, transform_indices = @transform_1, window_bounds = array<i64: 9, 16, 8>}, {pipeline_mode = #tpu.pipeline_mode<synchronous>, transform_indices = @transform_2, window_bounds = array<i64: 16, 1>}, {transform_indices = @transform_3, window_bounds = array<i64: 16, 32>}]} {
    %c0 = arith.constant 0 : index
    %c0_0 = arith.constant 0 : index
    %c0_1 = arith.constant 0 : index
    %0 = vector.load %arg2[%c0, %c0_0, %c0_1] : memref<9x16x8xbf16, #tpu.memory_space<vmem>>, vector<1x16x8xbf16>
    %1 = vector.shape_cast %0 : vector<1x16x8xbf16> to vector<16x8xbf16>
    %c0_2 = arith.constant 0 : index
    %c0_3 = arith.constant 0 : index
    %c0_4 = arith.constant 0 : index
    %2 = vector.load %arg1[%c0_2, %c0_3, %c0_4] : memref<9x8x32xbf16, #tpu.memory_space<vmem>>, vector<1x8x32xbf16>
    %3 = vector.shape_cast %2 : vector<1x8x32xbf16> to vector<8x32xbf16>
    %cst = arith.constant dense<0.000000e+00> : vector<16x32xf32>
    %4 = tpu.matmul %1, %3, %cst {dimension_numbers = #tpu.dot_dimension_numbers<[1], [0], [0], [1], [0, 0, 1, 1], [], []>} : vector<16x8xbf16>, vector<8x32xbf16>, vector<16x32xf32> -> vector<16x32xf32>
    %c1 = arith.constant 1 : index
    %c0_5 = arith.constant 0 : index
    %c0_6 = arith.constant 0 : index
    %5 = vector.load %arg2[%c1, %c0_5, %c0_6] : memref<9x16x8xbf16, #tpu.memory_space<vmem>>, vector<1x16x8xbf16>
    %6 = vector.shape_cast %5 : vector<1x16x8xbf16> to vector<16x8xbf16>
    %c1_7 = arith.constant 1 : index
    %c0_8 = arith.constant 0 : index
    %c0_9 = arith.constant 0 : index
    %7 = vector.load %arg1[%c1_7, %c0_8, %c0_9] : memref<9x8x32xbf16, #tpu.memory_space<vmem>>, vector<1x8x32xbf16>
    %8 = vector.shape_cast %7 : vector<1x8x32xbf16> to vector<8x32xbf16>
    %cst_10 = arith.constant dense<0.000000e+00> : vector<16x32xf32>
    %9 = tpu.matmul %6, %8, %cst_10 {dimension_numbers = #tpu.dot_dimension_numbers<[1], [0], [0], [1], [0, 0, 1, 1], [], []>} : vector<16x8xbf16>, vector<8x32xbf16>, vector<16x32xf32> -> vector<16x32xf32>
    %10 = arith.addf %4, %9 : vector<16x32xf32>
    %c2 = arith.constant 2 : index
    %c0_11 = arith.constant 0 : index
    %c0_12 = arith.constant 0 : index
    %11 = vector.load %arg2[%c2, %c0_11, %c0_12] : memref<9x16x8xbf16, #tpu.memory_space<vmem>>, vector<1x16x8xbf16>
    %12 = vector.shape_cast %11 : vector<1x16x8xbf16> to vector<16x8xbf16>
    %c2_13 = arith.constant 2 : index
    %c0_14 = arith.constant 0 : index
    %c0_15 = arith.constant 0 : index
    %13 = vector.load %arg1[%c2_13, %c0_14, %c0_15] : memref<9x8x32xbf16, #tpu.memory_space<vmem>>, vector<1x8x32xbf16>
    %14 = vector.shape_cast %13 : vector<1x8x32xbf16> to vector<8x32xbf16>
    %cst_16 = arith.constant dense<0.000000e+00> : vector<16x32xf32>
    %15 = tpu.matmul %12, %14, %cst_16 {dimension_numbers = #tpu.dot_dimension_numbers<[1], [0], [0], [1], [0, 0, 1, 1], [], []>} : vector<16x8xbf16>, vector<8x32xbf16>, vector<16x32xf32> -> vector<16x32xf32>
    %16 = arith.addf %10, %15 : vector<16x32xf32>
    %c3 = arith.constant 3 : index
    %c0_17 = arith.constant 0 : index
    %c0_18 = arith.constant 0 : index
    %17 = vector.load %arg2[%c3, %c0_17, %c0_18] : memref<9x16x8xbf16, #tpu.memory_space<vmem>>, vector<1x16x8xbf16>
    %18 = vector.shape_cast %17 : vector<1x16x8xbf16> to vector<16x8xbf16>
    %c3_19 = arith.constant 3 : index
    %c0_20 = arith.constant 0 : index
    %c0_21 = arith.constant 0 : index
    %19 = vector.load %arg1[%c3_19, %c0_20, %c0_21] : memref<9x8x32xbf16, #tpu.memory_space<vmem>>, vector<1x8x32xbf16>
    %20 = vector.shape_cast %19 : vector<1x8x32xbf16> to vector<8x32xbf16>
    %cst_22 = arith.constant dense<0.000000e+00> : vector<16x32xf32>
    %21 = tpu.matmul %18, %20, %cst_22 {dimension_numbers = #tpu.dot_dimension_numbers<[1], [0], [0], [1], [0, 0, 1, 1], [], []>} : vector<16x8xbf16>, vector<8x32xbf16>, vector<16x32xf32> -> vector<16x32xf32>
    %22 = arith.addf %16, %21 : vector<16x32xf32>
    %c4 = arith.constant 4 : index
    %c0_23 = arith.constant 0 : index
    %c0_24 = arith.constant 0 : index
    %23 = vector.load %arg2[%c4, %c0_23, %c0_24] : memref<9x16x8xbf16, #tpu.memory_space<vmem>>, vector<1x16x8xbf16>
    %24 = vector.shape_cast %23 : vector<1x16x8xbf16> to vector<16x8xbf16>
    %c4_25 = arith.constant 4 : index
    %c0_26 = arith.constant 0 : index
    %c0_27 = arith.constant 0 : index
    %25 = vector.load %arg1[%c4_25, %c0_26, %c0_27] : memref<9x8x32xbf16, #tpu.memory_space<vmem>>, vector<1x8x32xbf16>
    %26 = vector.shape_cast %25 : vector<1x8x32xbf16> to vector<8x32xbf16>
    %cst_28 = arith.constant dense<0.000000e+00> : vector<16x32xf32>
    %27 = tpu.matmul %24, %26, %cst_28 {dimension_numbers = #tpu.dot_dimension_numbers<[1], [0], [0], [1], [0, 0, 1, 1], [], []>} : vector<16x8xbf16>, vector<8x32xbf16>, vector<16x32xf32> -> vector<16x32xf32>
    %28 = arith.addf %22, %27 : vector<16x32xf32>
    %c5 = arith.constant 5 : index
    %c0_29 = arith.constant 0 : index
    %c0_30 = arith.constant 0 : index
    %29 = vector.load %arg2[%c5, %c0_29, %c0_30] : memref<9x16x8xbf16, #tpu.memory_space<vmem>>, vector<1x16x8xbf16>
    %30 = vector.shape_cast %29 : vector<1x16x8xbf16> to vector<16x8xbf16>
    %c5_31 = arith.constant 5 : index
    %c0_32 = arith.constant 0 : index
    %c0_33 = arith.constant 0 : index
    %31 = vector.load %arg1[%c5_31, %c0_32, %c0_33] : memref<9x8x32xbf16, #tpu.memory_space<vmem>>, vector<1x8x32xbf16>
    %32 = vector.shape_cast %31 : vector<1x8x32xbf16> to vector<8x32xbf16>
    %cst_34 = arith.constant dense<0.000000e+00> : vector<16x32xf32>
    %33 = tpu.matmul %30, %32, %cst_34 {dimension_numbers = #tpu.dot_dimension_numbers<[1], [0], [0], [1], [0, 0, 1, 1], [], []>} : vector<16x8xbf16>, vector<8x32xbf16>, vector<16x32xf32> -> vector<16x32xf32>
    %34 = arith.addf %28, %33 : vector<16x32xf32>
    %c6 = arith.constant 6 : index
    %c0_35 = arith.constant 0 : index
    %c0_36 = arith.constant 0 : index
    %35 = vector.load %arg2[%c6, %c0_35, %c0_36] : memref<9x16x8xbf16, #tpu.memory_space<vmem>>, vector<1x16x8xbf16>
    %36 = vector.shape_cast %35 : vector<1x16x8xbf16> to vector<16x8xbf16>
    %c6_37 = arith.constant 6 : index
    %c0_38 = arith.constant 0 : index
    %c0_39 = arith.constant 0 : index
    %37 = vector.load %arg1[%c6_37, %c0_38, %c0_39] : memref<9x8x32xbf16, #tpu.memory_space<vmem>>, vector<1x8x32xbf16>
    %38 = vector.shape_cast %37 : vector<1x8x32xbf16> to vector<8x32xbf16>
    %cst_40 = arith.constant dense<0.000000e+00> : vector<16x32xf32>
    %39 = tpu.matmul %36, %38, %cst_40 {dimension_numbers = #tpu.dot_dimension_numbers<[1], [0], [0], [1], [0, 0, 1, 1], [], []>} : vector<16x8xbf16>, vector<8x32xbf16>, vector<16x32xf32> -> vector<16x32xf32>
    %40 = arith.addf %34, %39 : vector<16x32xf32>
    %c7 = arith.constant 7 : index
    %c0_41 = arith.constant 0 : index
    %c0_42 = arith.constant 0 : index
    %41 = vector.load %arg2[%c7, %c0_41, %c0_42] : memref<9x16x8xbf16, #tpu.memory_space<vmem>>, vector<1x16x8xbf16>
    %42 = vector.shape_cast %41 : vector<1x16x8xbf16> to vector<16x8xbf16>
    %c7_43 = arith.constant 7 : index
    %c0_44 = arith.constant 0 : index
    %c0_45 = arith.constant 0 : index
    %43 = vector.load %arg1[%c7_43, %c0_44, %c0_45] : memref<9x8x32xbf16, #tpu.memory_space<vmem>>, vector<1x8x32xbf16>
    %44 = vector.shape_cast %43 : vector<1x8x32xbf16> to vector<8x32xbf16>
    %cst_46 = arith.constant dense<0.000000e+00> : vector<16x32xf32>
    %45 = tpu.matmul %42, %44, %cst_46 {dimension_numbers = #tpu.dot_dimension_numbers<[1], [0], [0], [1], [0, 0, 1, 1], [], []>} : vector<16x8xbf16>, vector<8x32xbf16>, vector<16x32xf32> -> vector<16x32xf32>
    %46 = arith.addf %40, %45 : vector<16x32xf32>
    %c8 = arith.constant 8 : index
    %c0_47 = arith.constant 0 : index
    %c0_48 = arith.constant 0 : index
    %47 = vector.load %arg2[%c8, %c0_47, %c0_48] : memref<9x16x8xbf16, #tpu.memory_space<vmem>>, vector<1x16x8xbf16>
    %48 = vector.shape_cast %47 : vector<1x16x8xbf16> to vector<16x8xbf16>
    %c8_49 = arith.constant 8 : index
    %c0_50 = arith.constant 0 : index
    %c0_51 = arith.constant 0 : index
    %49 = vector.load %arg1[%c8_49, %c0_50, %c0_51] : memref<9x8x32xbf16, #tpu.memory_space<vmem>>, vector<1x8x32xbf16>
    %50 = vector.shape_cast %49 : vector<1x8x32xbf16> to vector<8x32xbf16>
    %cst_52 = arith.constant dense<0.000000e+00> : vector<16x32xf32>
    %51 = tpu.matmul %48, %50, %cst_52 {dimension_numbers = #tpu.dot_dimension_numbers<[1], [0], [0], [1], [0, 0, 1, 1], [], []>} : vector<16x8xbf16>, vector<8x32xbf16>, vector<16x32xf32> -> vector<16x32xf32>
    %52 = arith.addf %46, %51 : vector<16x32xf32>
    %c0_53 = arith.constant 0 : index
    %c0_54 = arith.constant 0 : index
    %53 = vector.load %arg3[%c0_53, %c0_54] : memref<16x1xf32, #tpu.memory_space<vmem>>, vector<16x1xf32>
    %54 = vector.broadcast %53 : vector<16x1xf32> to vector<16x32xf32>
    %55 = arith.addf %52, %54 : vector<16x32xf32>
    %cst_55 = arith.constant 0.000000e+00 : f32
    %56 = vector.broadcast %cst_55 : f32 to vector<16x32xf32>
    %57 = arith.maximumf %55, %56 : vector<16x32xf32>
    %58 = arith.truncf %57 : vector<16x32xf32> to vector<16x32xbf16>
    %c0_56 = arith.constant 0 : index
    %c0_57 = arith.constant 0 : index
    %59 = vector.load %arg4[%c0_56, %c0_57] : memref<16x32xbf16, #tpu.memory_space<vmem>>, vector<16x32xbf16>
    tpu.vector_store %arg4[%c0_56, %c0_57], %58 {strides = array<i32>} : memref<16x32xbf16, #tpu.memory_space<vmem>>, vector<16x32xbf16>,
    return
  }
  func.func @transform_0(%arg0: i32) -> (i32, i32, i32) {
    %c0_i32 = arith.constant 0 : i32
    %c0_i32_0 = arith.constant 0 : i32
    %c0_i32_1 = arith.constant 0 : i32
    return %c0_i32, %c0_i32_0, %arg0 : i32, i32, i32
  }
  func.func @transform_1(%arg0: i32) -> (i32, i32, i32) {
    %c0_i32 = arith.constant 0 : i32
    %c0_i32_0 = arith.constant 0 : i32
    %c0_i32_1 = arith.constant 0 : i32
    %c0_i32_2 = arith.constant 0 : i32
    return %c0_i32, %c0_i32_0, %c0_i32_1 : i32, i32, i32
  }
  func.func @transform_2(%arg0: i32) -> (i32, i32) {
    %c0_i32 = arith.constant 0 : i32
    %c0_i32_0 = arith.constant 0 : i32
    %c0_i32_1 = arith.constant 0 : i32
    return %c0_i32, %c0_i32_0 : i32, i32
  }
  func.func @transform_3(%arg0: i32) -> (i32, i32) {
    %c0_i32 = arith.constant 0 : i32
    %c0_i32_0 = arith.constant 0 : i32
    return %c0_i32, %arg0 : i32, i32
  }
}

module attributes {stable_mosaic.version = 11 : i64} {
  func.func @_conv_gemm_kernel(%arg0: i32, %arg1: memref<1x16x32xbf16, #tpu.memory_space<vmem>>, %arg2: memref<1x32x16xbf16, #tpu.memory_space<vmem>>, %arg3: memref<32x1xf32, #tpu.memory_space<vmem>>, %arg4: memref<32x32xbf16, #tpu.memory_space<vmem>>) attributes {dimension_semantics = [#tpu.dimension_semantics<parallel>], iteration_bounds = array<i64: 1>, scalar_prefetch = 0 : i64, scratch_operands = 0 : i64, tpu.core_type = #tpu.core_type<tc>, window_params = [{transform_indices = @transform_0, window_bounds = array<i64: 1, 16, 32>}, {pipeline_mode = #tpu.pipeline_mode<synchronous>, transform_indices = @transform_1, window_bounds = array<i64: 1, 32, 16>}, {pipeline_mode = #tpu.pipeline_mode<synchronous>, transform_indices = @transform_2, window_bounds = array<i64: 32, 1>}, {transform_indices = @transform_3, window_bounds = array<i64: 32, 32>}]} {
    %c0 = arith.constant 0 : index
    %c0_0 = arith.constant 0 : index
    %c0_1 = arith.constant 0 : index
    %0 = vector.load %arg2[%c0, %c0_0, %c0_1] : memref<1x32x16xbf16, #tpu.memory_space<vmem>>, vector<1x32x16xbf16>
    %1 = vector.shape_cast %0 : vector<1x32x16xbf16> to vector<32x16xbf16>
    %c0_2 = arith.constant 0 : index
    %c0_3 = arith.constant 0 : index
    %c0_4 = arith.constant 0 : index
    %2 = vector.load %arg1[%c0_2, %c0_3, %c0_4] : memref<1x16x32xbf16, #tpu.memory_space<vmem>>, vector<1x16x32xbf16>
    %3 = vector.shape_cast %2 : vector<1x16x32xbf16> to vector<16x32xbf16>
    %cst = arith.constant dense<0.000000e+00> : vector<32x32xf32>
    %4 = tpu.matmul %1, %3, %cst {dimension_numbers = #tpu.dot_dimension_numbers<[1], [0], [0], [1], [0, 0, 1, 1], [], []>} : vector<32x16xbf16>, vector<16x32xbf16>, vector<32x32xf32> -> vector<32x32xf32>
    %c0_5 = arith.constant 0 : index
    %c0_6 = arith.constant 0 : index
    %5 = vector.load %arg3[%c0_5, %c0_6] : memref<32x1xf32, #tpu.memory_space<vmem>>, vector<32x1xf32>
    %6 = vector.broadcast %5 : vector<32x1xf32> to vector<32x32xf32>
    %7 = arith.addf %4, %6 : vector<32x32xf32>
    %8 = arith.truncf %7 : vector<32x32xf32> to vector<32x32xbf16>
    %c0_7 = arith.constant 0 : index
    %c0_8 = arith.constant 0 : index
    %9 = vector.load %arg4[%c0_7, %c0_8] : memref<32x32xbf16, #tpu.memory_space<vmem>>, vector<32x32xbf16>
    tpu.vector_store %arg4[%c0_7, %c0_8], %8 {strides = array<i32>} : memref<32x32xbf16, #tpu.memory_space<vmem>>, vector<32x32xbf16>,
    return
  }
  func.func @transform_0(%arg0: i32) -> (i32, i32, i32) {
    %c0_i32 = arith.constant 0 : i32
    %c0_i32_0 = arith.constant 0 : i32
    %c0_i32_1 = arith.constant 0 : i32
    return %c0_i32, %c0_i32_0, %arg0 : i32, i32, i32
  }
  func.func @transform_1(%arg0: i32) -> (i32, i32, i32) {
    %c0_i32 = arith.constant 0 : i32
    %c0_i32_0 = arith.constant 0 : i32
    %c0_i32_1 = arith.constant 0 : i32
    %c0_i32_2 = arith.constant 0 : i32
    return %c0_i32, %c0_i32_0, %c0_i32_1 : i32, i32, i32
  }
  func.func @transform_2(%arg0: i32) -> (i32, i32) {
    %c0_i32 = arith.constant 0 : i32
    %c0_i32_0 = arith.constant 0 : i32
    %c0_i32_1 = arith.constant 0 : i32
    return %c0_i32, %c0_i32_0 : i32, i32
  }
  func.func @transform_3(%arg0: i32) -> (i32, i32) {
    %c0_i32 = arith.constant 0 : i32
    %c0_i32_0 = arith.constant 0 : i32
    return %c0_i32, %arg0 : i32, i32
  }
}

module attributes {stable_mosaic.version = 11 : i64} {
  func.func @_conv_gemm_kernel(%arg0: i32, %arg1: memref<9x16x32xbf16, #tpu.memory_space<vmem>>, %arg2: memref<9x16x16xbf16, #tpu.memory_space<vmem>>, %arg3: memref<16x1xf32, #tpu.memory_space<vmem>>, %arg4: memref<16x32xbf16, #tpu.memory_space<vmem>>) attributes {dimension_semantics = [#tpu.dimension_semantics<parallel>], iteration_bounds = array<i64: 1>, scalar_prefetch = 0 : i64, scratch_operands = 0 : i64, tpu.core_type = #tpu.core_type<tc>, window_params = [{transform_indices = @transform_0, window_bounds = array<i64: 9, 16, 32>}, {pipeline_mode = #tpu.pipeline_mode<synchronous>, transform_indices = @transform_1, window_bounds = array<i64: 9, 16, 16>}, {pipeline_mode = #tpu.pipeline_mode<synchronous>, transform_indices = @transform_2, window_bounds = array<i64: 16, 1>}, {transform_indices = @transform_3, window_bounds = array<i64: 16, 32>}]} {
    %c0 = arith.constant 0 : index
    %c0_0 = arith.constant 0 : index
    %c0_1 = arith.constant 0 : index
    %0 = vector.load %arg2[%c0, %c0_0, %c0_1] : memref<9x16x16xbf16, #tpu.memory_space<vmem>>, vector<1x16x16xbf16>
    %1 = vector.shape_cast %0 : vector<1x16x16xbf16> to vector<16x16xbf16>
    %c0_2 = arith.constant 0 : index
    %c0_3 = arith.constant 0 : index
    %c0_4 = arith.constant 0 : index
    %2 = vector.load %arg1[%c0_2, %c0_3, %c0_4] : memref<9x16x32xbf16, #tpu.memory_space<vmem>>, vector<1x16x32xbf16>
    %3 = vector.shape_cast %2 : vector<1x16x32xbf16> to vector<16x32xbf16>
    %cst = arith.constant dense<0.000000e+00> : vector<16x32xf32>
    %4 = tpu.matmul %1, %3, %cst {dimension_numbers = #tpu.dot_dimension_numbers<[1], [0], [0], [1], [0, 0, 1, 1], [], []>} : vector<16x16xbf16>, vector<16x32xbf16>, vector<16x32xf32> -> vector<16x32xf32>
    %c1 = arith.constant 1 : index
    %c0_5 = arith.constant 0 : index
    %c0_6 = arith.constant 0 : index
    %5 = vector.load %arg2[%c1, %c0_5, %c0_6] : memref<9x16x16xbf16, #tpu.memory_space<vmem>>, vector<1x16x16xbf16>
    %6 = vector.shape_cast %5 : vector<1x16x16xbf16> to vector<16x16xbf16>
    %c1_7 = arith.constant 1 : index
    %c0_8 = arith.constant 0 : index
    %c0_9 = arith.constant 0 : index
    %7 = vector.load %arg1[%c1_7, %c0_8, %c0_9] : memref<9x16x32xbf16, #tpu.memory_space<vmem>>, vector<1x16x32xbf16>
    %8 = vector.shape_cast %7 : vector<1x16x32xbf16> to vector<16x32xbf16>
    %cst_10 = arith.constant dense<0.000000e+00> : vector<16x32xf32>
    %9 = tpu.matmul %6, %8, %cst_10 {dimension_numbers = #tpu.dot_dimension_numbers<[1], [0], [0], [1], [0, 0, 1, 1], [], []>} : vector<16x16xbf16>, vector<16x32xbf16>, vector<16x32xf32> -> vector<16x32xf32>
    %10 = arith.addf %4, %9 : vector<16x32xf32>
    %c2 = arith.constant 2 : index
    %c0_11 = arith.constant 0 : index
    %c0_12 = arith.constant 0 : index
    %11 = vector.load %arg2[%c2, %c0_11, %c0_12] : memref<9x16x16xbf16, #tpu.memory_space<vmem>>, vector<1x16x16xbf16>
    %12 = vector.shape_cast %11 : vector<1x16x16xbf16> to vector<16x16xbf16>
    %c2_13 = arith.constant 2 : index
    %c0_14 = arith.constant 0 : index
    %c0_15 = arith.constant 0 : index
    %13 = vector.load %arg1[%c2_13, %c0_14, %c0_15] : memref<9x16x32xbf16, #tpu.memory_space<vmem>>, vector<1x16x32xbf16>
    %14 = vector.shape_cast %13 : vector<1x16x32xbf16> to vector<16x32xbf16>
    %cst_16 = arith.constant dense<0.000000e+00> : vector<16x32xf32>
    %15 = tpu.matmul %12, %14, %cst_16 {dimension_numbers = #tpu.dot_dimension_numbers<[1], [0], [0], [1], [0, 0, 1, 1], [], []>} : vector<16x16xbf16>, vector<16x32xbf16>, vector<16x32xf32> -> vector<16x32xf32>
    %16 = arith.addf %10, %15 : vector<16x32xf32>
    %c3 = arith.constant 3 : index
    %c0_17 = arith.constant 0 : index
    %c0_18 = arith.constant 0 : index
    %17 = vector.load %arg2[%c3, %c0_17, %c0_18] : memref<9x16x16xbf16, #tpu.memory_space<vmem>>, vector<1x16x16xbf16>
    %18 = vector.shape_cast %17 : vector<1x16x16xbf16> to vector<16x16xbf16>
    %c3_19 = arith.constant 3 : index
    %c0_20 = arith.constant 0 : index
    %c0_21 = arith.constant 0 : index
    %19 = vector.load %arg1[%c3_19, %c0_20, %c0_21] : memref<9x16x32xbf16, #tpu.memory_space<vmem>>, vector<1x16x32xbf16>
    %20 = vector.shape_cast %19 : vector<1x16x32xbf16> to vector<16x32xbf16>
    %cst_22 = arith.constant dense<0.000000e+00> : vector<16x32xf32>
    %21 = tpu.matmul %18, %20, %cst_22 {dimension_numbers = #tpu.dot_dimension_numbers<[1], [0], [0], [1], [0, 0, 1, 1], [], []>} : vector<16x16xbf16>, vector<16x32xbf16>, vector<16x32xf32> -> vector<16x32xf32>
    %22 = arith.addf %16, %21 : vector<16x32xf32>
    %c4 = arith.constant 4 : index
    %c0_23 = arith.constant 0 : index
    %c0_24 = arith.constant 0 : index
    %23 = vector.load %arg2[%c4, %c0_23, %c0_24] : memref<9x16x16xbf16, #tpu.memory_space<vmem>>, vector<1x16x16xbf16>
    %24 = vector.shape_cast %23 : vector<1x16x16xbf16> to vector<16x16xbf16>
    %c4_25 = arith.constant 4 : index
    %c0_26 = arith.constant 0 : index
    %c0_27 = arith.constant 0 : index
    %25 = vector.load %arg1[%c4_25, %c0_26, %c0_27] : memref<9x16x32xbf16, #tpu.memory_space<vmem>>, vector<1x16x32xbf16>
    %26 = vector.shape_cast %25 : vector<1x16x32xbf16> to vector<16x32xbf16>
    %cst_28 = arith.constant dense<0.000000e+00> : vector<16x32xf32>
    %27 = tpu.matmul %24, %26, %cst_28 {dimension_numbers = #tpu.dot_dimension_numbers<[1], [0], [0], [1], [0, 0, 1, 1], [], []>} : vector<16x16xbf16>, vector<16x32xbf16>, vector<16x32xf32> -> vector<16x32xf32>
    %28 = arith.addf %22, %27 : vector<16x32xf32>
    %c5 = arith.constant 5 : index
    %c0_29 = arith.constant 0 : index
    %c0_30 = arith.constant 0 : index
    %29 = vector.load %arg2[%c5, %c0_29, %c0_30] : memref<9x16x16xbf16, #tpu.memory_space<vmem>>, vector<1x16x16xbf16>
    %30 = vector.shape_cast %29 : vector<1x16x16xbf16> to vector<16x16xbf16>
    %c5_31 = arith.constant 5 : index
    %c0_32 = arith.constant 0 : index
    %c0_33 = arith.constant 0 : index
    %31 = vector.load %arg1[%c5_31, %c0_32, %c0_33] : memref<9x16x32xbf16, #tpu.memory_space<vmem>>, vector<1x16x32xbf16>
    %32 = vector.shape_cast %31 : vector<1x16x32xbf16> to vector<16x32xbf16>
    %cst_34 = arith.constant dense<0.000000e+00> : vector<16x32xf32>
    %33 = tpu.matmul %30, %32, %cst_34 {dimension_numbers = #tpu.dot_dimension_numbers<[1], [0], [0], [1], [0, 0, 1, 1], [], []>} : vector<16x16xbf16>, vector<16x32xbf16>, vector<16x32xf32> -> vector<16x32xf32>
    %34 = arith.addf %28, %33 : vector<16x32xf32>
    %c6 = arith.constant 6 : index
    %c0_35 = arith.constant 0 : index
    %c0_36 = arith.constant 0 : index
    %35 = vector.load %arg2[%c6, %c0_35, %c0_36] : memref<9x16x16xbf16, #tpu.memory_space<vmem>>, vector<1x16x16xbf16>
    %36 = vector.shape_cast %35 : vector<1x16x16xbf16> to vector<16x16xbf16>
    %c6_37 = arith.constant 6 : index
    %c0_38 = arith.constant 0 : index
    %c0_39 = arith.constant 0 : index
    %37 = vector.load %arg1[%c6_37, %c0_38, %c0_39] : memref<9x16x32xbf16, #tpu.memory_space<vmem>>, vector<1x16x32xbf16>
    %38 = vector.shape_cast %37 : vector<1x16x32xbf16> to vector<16x32xbf16>
    %cst_40 = arith.constant dense<0.000000e+00> : vector<16x32xf32>
    %39 = tpu.matmul %36, %38, %cst_40 {dimension_numbers = #tpu.dot_dimension_numbers<[1], [0], [0], [1], [0, 0, 1, 1], [], []>} : vector<16x16xbf16>, vector<16x32xbf16>, vector<16x32xf32> -> vector<16x32xf32>
    %40 = arith.addf %34, %39 : vector<16x32xf32>
    %c7 = arith.constant 7 : index
    %c0_41 = arith.constant 0 : index
    %c0_42 = arith.constant 0 : index
    %41 = vector.load %arg2[%c7, %c0_41, %c0_42] : memref<9x16x16xbf16, #tpu.memory_space<vmem>>, vector<1x16x16xbf16>
    %42 = vector.shape_cast %41 : vector<1x16x16xbf16> to vector<16x16xbf16>
    %c7_43 = arith.constant 7 : index
    %c0_44 = arith.constant 0 : index
    %c0_45 = arith.constant 0 : index
    %43 = vector.load %arg1[%c7_43, %c0_44, %c0_45] : memref<9x16x32xbf16, #tpu.memory_space<vmem>>, vector<1x16x32xbf16>
    %44 = vector.shape_cast %43 : vector<1x16x32xbf16> to vector<16x32xbf16>
    %cst_46 = arith.constant dense<0.000000e+00> : vector<16x32xf32>
    %45 = tpu.matmul %42, %44, %cst_46 {dimension_numbers = #tpu.dot_dimension_numbers<[1], [0], [0], [1], [0, 0, 1, 1], [], []>} : vector<16x16xbf16>, vector<16x32xbf16>, vector<16x32xf32> -> vector<16x32xf32>
    %46 = arith.addf %40, %45 : vector<16x32xf32>
    %c8 = arith.constant 8 : index
    %c0_47 = arith.constant 0 : index
    %c0_48 = arith.constant 0 : index
    %47 = vector.load %arg2[%c8, %c0_47, %c0_48] : memref<9x16x16xbf16, #tpu.memory_space<vmem>>, vector<1x16x16xbf16>
    %48 = vector.shape_cast %47 : vector<1x16x16xbf16> to vector<16x16xbf16>
    %c8_49 = arith.constant 8 : index
    %c0_50 = arith.constant 0 : index
    %c0_51 = arith.constant 0 : index
    %49 = vector.load %arg1[%c8_49, %c0_50, %c0_51] : memref<9x16x32xbf16, #tpu.memory_space<vmem>>, vector<1x16x32xbf16>
    %50 = vector.shape_cast %49 : vector<1x16x32xbf16> to vector<16x32xbf16>
    %cst_52 = arith.constant dense<0.000000e+00> : vector<16x32xf32>
    %51 = tpu.matmul %48, %50, %cst_52 {dimension_numbers = #tpu.dot_dimension_numbers<[1], [0], [0], [1], [0, 0, 1, 1], [], []>} : vector<16x16xbf16>, vector<16x32xbf16>, vector<16x32xf32> -> vector<16x32xf32>
    %52 = arith.addf %46, %51 : vector<16x32xf32>
    %c0_53 = arith.constant 0 : index
    %c0_54 = arith.constant 0 : index
    %53 = vector.load %arg3[%c0_53, %c0_54] : memref<16x1xf32, #tpu.memory_space<vmem>>, vector<16x1xf32>
    %54 = vector.broadcast %53 : vector<16x1xf32> to vector<16x32xf32>
    %55 = arith.addf %52, %54 : vector<16x32xf32>
    %cst_55 = arith.constant 0.000000e+00 : f32
    %56 = vector.broadcast %cst_55 : f32 to vector<16x32xf32>
    %57 = arith.maximumf %55, %56 : vector<16x32xf32>
    %58 = arith.truncf %57 : vector<16x32xf32> to vector<16x32xbf16>
    %c0_56 = arith.constant 0 : index
    %c0_57 = arith.constant 0 : index
    %59 = vector.load %arg4[%c0_56, %c0_57] : memref<16x32xbf16, #tpu.memory_space<vmem>>, vector<16x32xbf16>
    tpu.vector_store %arg4[%c0_56, %c0_57], %58 {strides = array<i32>} : memref<16x32xbf16, #tpu.memory_space<vmem>>, vector<16x32xbf16>,
    return
  }
  func.func @transform_0(%arg0: i32) -> (i32, i32, i32) {
    %c0_i32 = arith.constant 0 : i32
    %c0_i32_0 = arith.constant 0 : i32
    %c0_i32_1 = arith.constant 0 : i32
    return %c0_i32, %c0_i32_0, %arg0 : i32, i32, i32
  }
  func.func @transform_1(%arg0: i32) -> (i32, i32, i32) {
    %c0_i32 = arith.constant 0 : i32
    %c0_i32_0 = arith.constant 0 : i32
    %c0_i32_1 = arith.constant 0 : i32
    %c0_i32_2 = arith.constant 0 : i32
    return %c0_i32, %c0_i32_0, %c0_i32_1 : i32, i32, i32
  }
  func.func @transform_2(%arg0: i32) -> (i32, i32) {
    %c0_i32 = arith.constant 0 : i32
    %c0_i32_0 = arith.constant 0 : i32
    %c0_i32_1 = arith.constant 0 : i32
    return %c0_i32, %c0_i32_0 : i32, i32
  }
  func.func @transform_3(%arg0: i32) -> (i32, i32) {
    %c0_i32 = arith.constant 0 : i32
    %c0_i32_0 = arith.constant 0 : i32
    return %c0_i32, %arg0 : i32, i32
  }
}

module attributes {stable_mosaic.version = 11 : i64} {
  func.func @_conv_gemm_kernel(%arg0: i32, %arg1: memref<1x8x128xbf16, #tpu.memory_space<vmem>>, %arg2: memref<1x16x8xbf16, #tpu.memory_space<vmem>>, %arg3: memref<16x1xf32, #tpu.memory_space<vmem>>, %arg4: memref<16x128xbf16, #tpu.memory_space<vmem>>) attributes {dimension_semantics = [#tpu.dimension_semantics<parallel>], iteration_bounds = array<i64: 1>, scalar_prefetch = 0 : i64, scratch_operands = 0 : i64, tpu.core_type = #tpu.core_type<tc>, window_params = [{transform_indices = @transform_0, window_bounds = array<i64: 1, 8, 128>}, {pipeline_mode = #tpu.pipeline_mode<synchronous>, transform_indices = @transform_1, window_bounds = array<i64: 1, 16, 8>}, {pipeline_mode = #tpu.pipeline_mode<synchronous>, transform_indices = @transform_2, window_bounds = array<i64: 16, 1>}, {transform_indices = @transform_3, window_bounds = array<i64: 16, 128>}]} {
    %c0 = arith.constant 0 : index
    %c0_0 = arith.constant 0 : index
    %c0_1 = arith.constant 0 : index
    %0 = vector.load %arg2[%c0, %c0_0, %c0_1] : memref<1x16x8xbf16, #tpu.memory_space<vmem>>, vector<1x16x8xbf16>
    %1 = vector.shape_cast %0 : vector<1x16x8xbf16> to vector<16x8xbf16>
    %c0_2 = arith.constant 0 : index
    %c0_3 = arith.constant 0 : index
    %c0_4 = arith.constant 0 : index
    %2 = vector.load %arg1[%c0_2, %c0_3, %c0_4] : memref<1x8x128xbf16, #tpu.memory_space<vmem>>, vector<1x8x128xbf16>
    %3 = vector.shape_cast %2 : vector<1x8x128xbf16> to vector<8x128xbf16>
    %cst = arith.constant dense<0.000000e+00> : vector<16x128xf32>
    %4 = tpu.matmul %1, %3, %cst {dimension_numbers = #tpu.dot_dimension_numbers<[1], [0], [0], [1], [0, 0, 1, 1], [], []>} : vector<16x8xbf16>, vector<8x128xbf16>, vector<16x128xf32> -> vector<16x128xf32>
    %c0_5 = arith.constant 0 : index
    %c0_6 = arith.constant 0 : index
    %5 = vector.load %arg3[%c0_5, %c0_6] : memref<16x1xf32, #tpu.memory_space<vmem>>, vector<16x1xf32>
    %6 = vector.broadcast %5 : vector<16x1xf32> to vector<16x128xf32>
    %7 = arith.addf %4, %6 : vector<16x128xf32>
    %8 = arith.truncf %7 : vector<16x128xf32> to vector<16x128xbf16>
    %c0_7 = arith.constant 0 : index
    %c0_8 = arith.constant 0 : index
    %9 = vector.load %arg4[%c0_7, %c0_8] : memref<16x128xbf16, #tpu.memory_space<vmem>>, vector<16x128xbf16>
    tpu.vector_store %arg4[%c0_7, %c0_8], %8 {strides = array<i32>} : memref<16x128xbf16, #tpu.memory_space<vmem>>, vector<16x128xbf16>,
    return
  }
  func.func @transform_0(%arg0: i32) -> (i32, i32, i32) {
    %c0_i32 = arith.constant 0 : i32
    %c0_i32_0 = arith.constant 0 : i32
    %c0_i32_1 = arith.constant 0 : i32
    return %c0_i32, %c0_i32_0, %arg0 : i32, i32, i32
  }
  func.func @transform_1(%arg0: i32) -> (i32, i32, i32) {
    %c0_i32 = arith.constant 0 : i32
    %c0_i32_0 = arith.constant 0 : i32
    %c0_i32_1 = arith.constant 0 : i32
    %c0_i32_2 = arith.constant 0 : i32
    return %c0_i32, %c0_i32_0, %c0_i32_1 : i32, i32, i32
  }
  func.func @transform_2(%arg0: i32) -> (i32, i32) {
    %c0_i32 = arith.constant 0 : i32
    %c0_i32_0 = arith.constant 0 : i32
    %c0_i32_1 = arith.constant 0 : i32
    return %c0_i32, %c0_i32_0 : i32, i32
  }
  func.func @transform_3(%arg0: i32) -> (i32, i32) {
    %c0_i32 = arith.constant 0 : i32
    %c0_i32_0 = arith.constant 0 : i32
    return %c0_i32, %arg0 : i32, i32
  }
}

module attributes {stable_mosaic.version = 11 : i64} {
  func.func @_conv_gemm_kernel(%arg0: i32, %arg1: memref<9x16x128xbf16, #tpu.memory_space<vmem>>, %arg2: memref<9x8x16xbf16, #tpu.memory_space<vmem>>, %arg3: memref<8x1xf32, #tpu.memory_space<vmem>>, %arg4: memref<8x128xbf16, #tpu.memory_space<vmem>>) attributes {dimension_semantics = [#tpu.dimension_semantics<parallel>], iteration_bounds = array<i64: 1>, scalar_prefetch = 0 : i64, scratch_operands = 0 : i64, tpu.core_type = #tpu.core_type<tc>, window_params = [{transform_indices = @transform_0, window_bounds = array<i64: 9, 16, 128>}, {pipeline_mode = #tpu.pipeline_mode<synchronous>, transform_indices = @transform_1, window_bounds = array<i64: 9, 8, 16>}, {pipeline_mode = #tpu.pipeline_mode<synchronous>, transform_indices = @transform_2, window_bounds = array<i64: 8, 1>}, {transform_indices = @transform_3, window_bounds = array<i64: 8, 128>}]} {
    %c0 = arith.constant 0 : index
    %c0_0 = arith.constant 0 : index
    %c0_1 = arith.constant 0 : index
    %0 = vector.load %arg2[%c0, %c0_0, %c0_1] : memref<9x8x16xbf16, #tpu.memory_space<vmem>>, vector<1x8x16xbf16>
    %1 = vector.shape_cast %0 : vector<1x8x16xbf16> to vector<8x16xbf16>
    %c0_2 = arith.constant 0 : index
    %c0_3 = arith.constant 0 : index
    %c0_4 = arith.constant 0 : index
    %2 = vector.load %arg1[%c0_2, %c0_3, %c0_4] : memref<9x16x128xbf16, #tpu.memory_space<vmem>>, vector<1x16x128xbf16>
    %3 = vector.shape_cast %2 : vector<1x16x128xbf16> to vector<16x128xbf16>
    %cst = arith.constant dense<0.000000e+00> : vector<8x128xf32>
    %4 = tpu.matmul %1, %3, %cst {dimension_numbers = #tpu.dot_dimension_numbers<[1], [0], [0], [1], [0, 0, 1, 1], [], []>} : vector<8x16xbf16>, vector<16x128xbf16>, vector<8x128xf32> -> vector<8x128xf32>
    %c1 = arith.constant 1 : index
    %c0_5 = arith.constant 0 : index
    %c0_6 = arith.constant 0 : index
    %5 = vector.load %arg2[%c1, %c0_5, %c0_6] : memref<9x8x16xbf16, #tpu.memory_space<vmem>>, vector<1x8x16xbf16>
    %6 = vector.shape_cast %5 : vector<1x8x16xbf16> to vector<8x16xbf16>
    %c1_7 = arith.constant 1 : index
    %c0_8 = arith.constant 0 : index
    %c0_9 = arith.constant 0 : index
    %7 = vector.load %arg1[%c1_7, %c0_8, %c0_9] : memref<9x16x128xbf16, #tpu.memory_space<vmem>>, vector<1x16x128xbf16>
    %8 = vector.shape_cast %7 : vector<1x16x128xbf16> to vector<16x128xbf16>
    %cst_10 = arith.constant dense<0.000000e+00> : vector<8x128xf32>
    %9 = tpu.matmul %6, %8, %cst_10 {dimension_numbers = #tpu.dot_dimension_numbers<[1], [0], [0], [1], [0, 0, 1, 1], [], []>} : vector<8x16xbf16>, vector<16x128xbf16>, vector<8x128xf32> -> vector<8x128xf32>
    %10 = arith.addf %4, %9 : vector<8x128xf32>
    %c2 = arith.constant 2 : index
    %c0_11 = arith.constant 0 : index
    %c0_12 = arith.constant 0 : index
    %11 = vector.load %arg2[%c2, %c0_11, %c0_12] : memref<9x8x16xbf16, #tpu.memory_space<vmem>>, vector<1x8x16xbf16>
    %12 = vector.shape_cast %11 : vector<1x8x16xbf16> to vector<8x16xbf16>
    %c2_13 = arith.constant 2 : index
    %c0_14 = arith.constant 0 : index
    %c0_15 = arith.constant 0 : index
    %13 = vector.load %arg1[%c2_13, %c0_14, %c0_15] : memref<9x16x128xbf16, #tpu.memory_space<vmem>>, vector<1x16x128xbf16>
    %14 = vector.shape_cast %13 : vector<1x16x128xbf16> to vector<16x128xbf16>
    %cst_16 = arith.constant dense<0.000000e+00> : vector<8x128xf32>
    %15 = tpu.matmul %12, %14, %cst_16 {dimension_numbers = #tpu.dot_dimension_numbers<[1], [0], [0], [1], [0, 0, 1, 1], [], []>} : vector<8x16xbf16>, vector<16x128xbf16>, vector<8x128xf32> -> vector<8x128xf32>
    %16 = arith.addf %10, %15 : vector<8x128xf32>
    %c3 = arith.constant 3 : index
    %c0_17 = arith.constant 0 : index
    %c0_18 = arith.constant 0 : index
    %17 = vector.load %arg2[%c3, %c0_17, %c0_18] : memref<9x8x16xbf16, #tpu.memory_space<vmem>>, vector<1x8x16xbf16>
    %18 = vector.shape_cast %17 : vector<1x8x16xbf16> to vector<8x16xbf16>
    %c3_19 = arith.constant 3 : index
    %c0_20 = arith.constant 0 : index
    %c0_21 = arith.constant 0 : index
    %19 = vector.load %arg1[%c3_19, %c0_20, %c0_21] : memref<9x16x128xbf16, #tpu.memory_space<vmem>>, vector<1x16x128xbf16>
    %20 = vector.shape_cast %19 : vector<1x16x128xbf16> to vector<16x128xbf16>
    %cst_22 = arith.constant dense<0.000000e+00> : vector<8x128xf32>
    %21 = tpu.matmul %18, %20, %cst_22 {dimension_numbers = #tpu.dot_dimension_numbers<[1], [0], [0], [1], [0, 0, 1, 1], [], []>} : vector<8x16xbf16>, vector<16x128xbf16>, vector<8x128xf32> -> vector<8x128xf32>
    %22 = arith.addf %16, %21 : vector<8x128xf32>
    %c4 = arith.constant 4 : index
    %c0_23 = arith.constant 0 : index
    %c0_24 = arith.constant 0 : index
    %23 = vector.load %arg2[%c4, %c0_23, %c0_24] : memref<9x8x16xbf16, #tpu.memory_space<vmem>>, vector<1x8x16xbf16>
    %24 = vector.shape_cast %23 : vector<1x8x16xbf16> to vector<8x16xbf16>
    %c4_25 = arith.constant 4 : index
    %c0_26 = arith.constant 0 : index
    %c0_27 = arith.constant 0 : index
    %25 = vector.load %arg1[%c4_25, %c0_26, %c0_27] : memref<9x16x128xbf16, #tpu.memory_space<vmem>>, vector<1x16x128xbf16>
    %26 = vector.shape_cast %25 : vector<1x16x128xbf16> to vector<16x128xbf16>
    %cst_28 = arith.constant dense<0.000000e+00> : vector<8x128xf32>
    %27 = tpu.matmul %24, %26, %cst_28 {dimension_numbers = #tpu.dot_dimension_numbers<[1], [0], [0], [1], [0, 0, 1, 1], [], []>} : vector<8x16xbf16>, vector<16x128xbf16>, vector<8x128xf32> -> vector<8x128xf32>
    %28 = arith.addf %22, %27 : vector<8x128xf32>
    %c5 = arith.constant 5 : index
    %c0_29 = arith.constant 0 : index
    %c0_30 = arith.constant 0 : index
    %29 = vector.load %arg2[%c5, %c0_29, %c0_30] : memref<9x8x16xbf16, #tpu.memory_space<vmem>>, vector<1x8x16xbf16>
    %30 = vector.shape_cast %29 : vector<1x8x16xbf16> to vector<8x16xbf16>
    %c5_31 = arith.constant 5 : index
    %c0_32 = arith.constant 0 : index
    %c0_33 = arith.constant 0 : index
    %31 = vector.load %arg1[%c5_31, %c0_32, %c0_33] : memref<9x16x128xbf16, #tpu.memory_space<vmem>>, vector<1x16x128xbf16>
    %32 = vector.shape_cast %31 : vector<1x16x128xbf16> to vector<16x128xbf16>
    %cst_34 = arith.constant dense<0.000000e+00> : vector<8x128xf32>
    %33 = tpu.matmul %30, %32, %cst_34 {dimension_numbers = #tpu.dot_dimension_numbers<[1], [0], [0], [1], [0, 0, 1, 1], [], []>} : vector<8x16xbf16>, vector<16x128xbf16>, vector<8x128xf32> -> vector<8x128xf32>
    %34 = arith.addf %28, %33 : vector<8x128xf32>
    %c6 = arith.constant 6 : index
    %c0_35 = arith.constant 0 : index
    %c0_36 = arith.constant 0 : index
    %35 = vector.load %arg2[%c6, %c0_35, %c0_36] : memref<9x8x16xbf16, #tpu.memory_space<vmem>>, vector<1x8x16xbf16>
    %36 = vector.shape_cast %35 : vector<1x8x16xbf16> to vector<8x16xbf16>
    %c6_37 = arith.constant 6 : index
    %c0_38 = arith.constant 0 : index
    %c0_39 = arith.constant 0 : index
    %37 = vector.load %arg1[%c6_37, %c0_38, %c0_39] : memref<9x16x128xbf16, #tpu.memory_space<vmem>>, vector<1x16x128xbf16>
    %38 = vector.shape_cast %37 : vector<1x16x128xbf16> to vector<16x128xbf16>
    %cst_40 = arith.constant dense<0.000000e+00> : vector<8x128xf32>
    %39 = tpu.matmul %36, %38, %cst_40 {dimension_numbers = #tpu.dot_dimension_numbers<[1], [0], [0], [1], [0, 0, 1, 1], [], []>} : vector<8x16xbf16>, vector<16x128xbf16>, vector<8x128xf32> -> vector<8x128xf32>
    %40 = arith.addf %34, %39 : vector<8x128xf32>
    %c7 = arith.constant 7 : index
    %c0_41 = arith.constant 0 : index
    %c0_42 = arith.constant 0 : index
    %41 = vector.load %arg2[%c7, %c0_41, %c0_42] : memref<9x8x16xbf16, #tpu.memory_space<vmem>>, vector<1x8x16xbf16>
    %42 = vector.shape_cast %41 : vector<1x8x16xbf16> to vector<8x16xbf16>
    %c7_43 = arith.constant 7 : index
    %c0_44 = arith.constant 0 : index
    %c0_45 = arith.constant 0 : index
    %43 = vector.load %arg1[%c7_43, %c0_44, %c0_45] : memref<9x16x128xbf16, #tpu.memory_space<vmem>>, vector<1x16x128xbf16>
    %44 = vector.shape_cast %43 : vector<1x16x128xbf16> to vector<16x128xbf16>
    %cst_46 = arith.constant dense<0.000000e+00> : vector<8x128xf32>
    %45 = tpu.matmul %42, %44, %cst_46 {dimension_numbers = #tpu.dot_dimension_numbers<[1], [0], [0], [1], [0, 0, 1, 1], [], []>} : vector<8x16xbf16>, vector<16x128xbf16>, vector<8x128xf32> -> vector<8x128xf32>
    %46 = arith.addf %40, %45 : vector<8x128xf32>
    %c8 = arith.constant 8 : index
    %c0_47 = arith.constant 0 : index
    %c0_48 = arith.constant 0 : index
    %47 = vector.load %arg2[%c8, %c0_47, %c0_48] : memref<9x8x16xbf16, #tpu.memory_space<vmem>>, vector<1x8x16xbf16>
    %48 = vector.shape_cast %47 : vector<1x8x16xbf16> to vector<8x16xbf16>
    %c8_49 = arith.constant 8 : index
    %c0_50 = arith.constant 0 : index
    %c0_51 = arith.constant 0 : index
    %49 = vector.load %arg1[%c8_49, %c0_50, %c0_51] : memref<9x16x128xbf16, #tpu.memory_space<vmem>>, vector<1x16x128xbf16>
    %50 = vector.shape_cast %49 : vector<1x16x128xbf16> to vector<16x128xbf16>
    %cst_52 = arith.constant dense<0.000000e+00> : vector<8x128xf32>
    %51 = tpu.matmul %48, %50, %cst_52 {dimension_numbers = #tpu.dot_dimension_numbers<[1], [0], [0], [1], [0, 0, 1, 1], [], []>} : vector<8x16xbf16>, vector<16x128xbf16>, vector<8x128xf32> -> vector<8x128xf32>
    %52 = arith.addf %46, %51 : vector<8x128xf32>
    %c0_53 = arith.constant 0 : index
    %c0_54 = arith.constant 0 : index
    %53 = vector.load %arg3[%c0_53, %c0_54] : memref<8x1xf32, #tpu.memory_space<vmem>>, vector<8x1xf32>
    %54 = vector.broadcast %53 : vector<8x1xf32> to vector<8x128xf32>
    %55 = arith.addf %52, %54 : vector<8x128xf32>
    %cst_55 = arith.constant 0.000000e+00 : f32
    %56 = vector.broadcast %cst_55 : f32 to vector<8x128xf32>
    %57 = arith.maximumf %55, %56 : vector<8x128xf32>
    %58 = arith.truncf %57 : vector<8x128xf32> to vector<8x128xbf16>
    %c0_56 = arith.constant 0 : index
    %c0_57 = arith.constant 0 : index
    %59 = vector.load %arg4[%c0_56, %c0_57] : memref<8x128xbf16, #tpu.memory_space<vmem>>, vector<8x128xbf16>
    tpu.vector_store %arg4[%c0_56, %c0_57], %58 {strides = array<i32>} : memref<8x128xbf16, #tpu.memory_space<vmem>>, vector<8x128xbf16>,
    return
  }
  func.func @transform_0(%arg0: i32) -> (i32, i32, i32) {
    %c0_i32 = arith.constant 0 : i32
    %c0_i32_0 = arith.constant 0 : i32
    %c0_i32_1 = arith.constant 0 : i32
    return %c0_i32, %c0_i32_0, %arg0 : i32, i32, i32
  }
  func.func @transform_1(%arg0: i32) -> (i32, i32, i32) {
    %c0_i32 = arith.constant 0 : i32
    %c0_i32_0 = arith.constant 0 : i32
    %c0_i32_1 = arith.constant 0 : i32
    %c0_i32_2 = arith.constant 0 : i32
    return %c0_i32, %c0_i32_0, %c0_i32_1 : i32, i32, i32
  }
  func.func @transform_2(%arg0: i32) -> (i32, i32) {
    %c0_i32 = arith.constant 0 : i32
    %c0_i32_0 = arith.constant 0 : i32
    %c0_i32_1 = arith.constant 0 : i32
    return %c0_i32, %c0_i32_0 : i32, i32
  }
  func.func @transform_3(%arg0: i32) -> (i32, i32) {
    %c0_i32 = arith.constant 0 : i32
    %c0_i32_0 = arith.constant 0 : i32
    return %c0_i32, %arg0 : i32, i32
  }
}

module attributes {stable_mosaic.version = 11 : i64} {
  func.func @_conv_gemm_kernel(%arg0: i32, %arg1: memref<9x8x512xbf16, #tpu.memory_space<vmem>>, %arg2: memref<9x4x8xbf16, #tpu.memory_space<vmem>>, %arg3: memref<4x1xf32, #tpu.memory_space<vmem>>, %arg4: memref<4x512xbf16, #tpu.memory_space<vmem>>) attributes {dimension_semantics = [#tpu.dimension_semantics<parallel>], iteration_bounds = array<i64: 1>, scalar_prefetch = 0 : i64, scratch_operands = 0 : i64, tpu.core_type = #tpu.core_type<tc>, window_params = [{transform_indices = @transform_0, window_bounds = array<i64: 9, 8, 512>}, {pipeline_mode = #tpu.pipeline_mode<synchronous>, transform_indices = @transform_1, window_bounds = array<i64: 9, 4, 8>}, {pipeline_mode = #tpu.pipeline_mode<synchronous>, transform_indices = @transform_2, window_bounds = array<i64: 4, 1>}, {transform_indices = @transform_3, window_bounds = array<i64: 4, 512>}]} {
    %c0 = arith.constant 0 : index
    %c0_0 = arith.constant 0 : index
    %c0_1 = arith.constant 0 : index
    %0 = vector.load %arg2[%c0, %c0_0, %c0_1] : memref<9x4x8xbf16, #tpu.memory_space<vmem>>, vector<1x4x8xbf16>
    %1 = vector.shape_cast %0 : vector<1x4x8xbf16> to vector<4x8xbf16>
    %c0_2 = arith.constant 0 : index
    %c0_3 = arith.constant 0 : index
    %c0_4 = arith.constant 0 : index
    %2 = vector.load %arg1[%c0_2, %c0_3, %c0_4] : memref<9x8x512xbf16, #tpu.memory_space<vmem>>, vector<1x8x512xbf16>
    %3 = vector.shape_cast %2 : vector<1x8x512xbf16> to vector<8x512xbf16>
    %cst = arith.constant dense<0.000000e+00> : vector<4x512xf32>
    %4 = tpu.matmul %1, %3, %cst {dimension_numbers = #tpu.dot_dimension_numbers<[1], [0], [0], [1], [0, 0, 1, 1], [], []>} : vector<4x8xbf16>, vector<8x512xbf16>, vector<4x512xf32> -> vector<4x512xf32>
    %c1 = arith.constant 1 : index
    %c0_5 = arith.constant 0 : index
    %c0_6 = arith.constant 0 : index
    %5 = vector.load %arg2[%c1, %c0_5, %c0_6] : memref<9x4x8xbf16, #tpu.memory_space<vmem>>, vector<1x4x8xbf16>
    %6 = vector.shape_cast %5 : vector<1x4x8xbf16> to vector<4x8xbf16>
    %c1_7 = arith.constant 1 : index
    %c0_8 = arith.constant 0 : index
    %c0_9 = arith.constant 0 : index
    %7 = vector.load %arg1[%c1_7, %c0_8, %c0_9] : memref<9x8x512xbf16, #tpu.memory_space<vmem>>, vector<1x8x512xbf16>
    %8 = vector.shape_cast %7 : vector<1x8x512xbf16> to vector<8x512xbf16>
    %cst_10 = arith.constant dense<0.000000e+00> : vector<4x512xf32>
    %9 = tpu.matmul %6, %8, %cst_10 {dimension_numbers = #tpu.dot_dimension_numbers<[1], [0], [0], [1], [0, 0, 1, 1], [], []>} : vector<4x8xbf16>, vector<8x512xbf16>, vector<4x512xf32> -> vector<4x512xf32>
    %10 = arith.addf %4, %9 : vector<4x512xf32>
    %c2 = arith.constant 2 : index
    %c0_11 = arith.constant 0 : index
    %c0_12 = arith.constant 0 : index
    %11 = vector.load %arg2[%c2, %c0_11, %c0_12] : memref<9x4x8xbf16, #tpu.memory_space<vmem>>, vector<1x4x8xbf16>
    %12 = vector.shape_cast %11 : vector<1x4x8xbf16> to vector<4x8xbf16>
    %c2_13 = arith.constant 2 : index
    %c0_14 = arith.constant 0 : index
    %c0_15 = arith.constant 0 : index
    %13 = vector.load %arg1[%c2_13, %c0_14, %c0_15] : memref<9x8x512xbf16, #tpu.memory_space<vmem>>, vector<1x8x512xbf16>
    %14 = vector.shape_cast %13 : vector<1x8x512xbf16> to vector<8x512xbf16>
    %cst_16 = arith.constant dense<0.000000e+00> : vector<4x512xf32>
    %15 = tpu.matmul %12, %14, %cst_16 {dimension_numbers = #tpu.dot_dimension_numbers<[1], [0], [0], [1], [0, 0, 1, 1], [], []>} : vector<4x8xbf16>, vector<8x512xbf16>, vector<4x512xf32> -> vector<4x512xf32>
    %16 = arith.addf %10, %15 : vector<4x512xf32>
    %c3 = arith.constant 3 : index
    %c0_17 = arith.constant 0 : index
    %c0_18 = arith.constant 0 : index
    %17 = vector.load %arg2[%c3, %c0_17, %c0_18] : memref<9x4x8xbf16, #tpu.memory_space<vmem>>, vector<1x4x8xbf16>
    %18 = vector.shape_cast %17 : vector<1x4x8xbf16> to vector<4x8xbf16>
    %c3_19 = arith.constant 3 : index
    %c0_20 = arith.constant 0 : index
    %c0_21 = arith.constant 0 : index
    %19 = vector.load %arg1[%c3_19, %c0_20, %c0_21] : memref<9x8x512xbf16, #tpu.memory_space<vmem>>, vector<1x8x512xbf16>
    %20 = vector.shape_cast %19 : vector<1x8x512xbf16> to vector<8x512xbf16>
    %cst_22 = arith.constant dense<0.000000e+00> : vector<4x512xf32>
    %21 = tpu.matmul %18, %20, %cst_22 {dimension_numbers = #tpu.dot_dimension_numbers<[1], [0], [0], [1], [0, 0, 1, 1], [], []>} : vector<4x8xbf16>, vector<8x512xbf16>, vector<4x512xf32> -> vector<4x512xf32>
    %22 = arith.addf %16, %21 : vector<4x512xf32>
    %c4 = arith.constant 4 : index
    %c0_23 = arith.constant 0 : index
    %c0_24 = arith.constant 0 : index
    %23 = vector.load %arg2[%c4, %c0_23, %c0_24] : memref<9x4x8xbf16, #tpu.memory_space<vmem>>, vector<1x4x8xbf16>
    %24 = vector.shape_cast %23 : vector<1x4x8xbf16> to vector<4x8xbf16>
    %c4_25 = arith.constant 4 : index
    %c0_26 = arith.constant 0 : index
    %c0_27 = arith.constant 0 : index
    %25 = vector.load %arg1[%c4_25, %c0_26, %c0_27] : memref<9x8x512xbf16, #tpu.memory_space<vmem>>, vector<1x8x512xbf16>
    %26 = vector.shape_cast %25 : vector<1x8x512xbf16> to vector<8x512xbf16>
    %cst_28 = arith.constant dense<0.000000e+00> : vector<4x512xf32>
    %27 = tpu.matmul %24, %26, %cst_28 {dimension_numbers = #tpu.dot_dimension_numbers<[1], [0], [0], [1], [0, 0, 1, 1], [], []>} : vector<4x8xbf16>, vector<8x512xbf16>, vector<4x512xf32> -> vector<4x512xf32>
    %28 = arith.addf %22, %27 : vector<4x512xf32>
    %c5 = arith.constant 5 : index
    %c0_29 = arith.constant 0 : index
    %c0_30 = arith.constant 0 : index
    %29 = vector.load %arg2[%c5, %c0_29, %c0_30] : memref<9x4x8xbf16, #tpu.memory_space<vmem>>, vector<1x4x8xbf16>
    %30 = vector.shape_cast %29 : vector<1x4x8xbf16> to vector<4x8xbf16>
    %c5_31 = arith.constant 5 : index
    %c0_32 = arith.constant 0 : index
    %c0_33 = arith.constant 0 : index
    %31 = vector.load %arg1[%c5_31, %c0_32, %c0_33] : memref<9x8x512xbf16, #tpu.memory_space<vmem>>, vector<1x8x512xbf16>
    %32 = vector.shape_cast %31 : vector<1x8x512xbf16> to vector<8x512xbf16>
    %cst_34 = arith.constant dense<0.000000e+00> : vector<4x512xf32>
    %33 = tpu.matmul %30, %32, %cst_34 {dimension_numbers = #tpu.dot_dimension_numbers<[1], [0], [0], [1], [0, 0, 1, 1], [], []>} : vector<4x8xbf16>, vector<8x512xbf16>, vector<4x512xf32> -> vector<4x512xf32>
    %34 = arith.addf %28, %33 : vector<4x512xf32>
    %c6 = arith.constant 6 : index
    %c0_35 = arith.constant 0 : index
    %c0_36 = arith.constant 0 : index
    %35 = vector.load %arg2[%c6, %c0_35, %c0_36] : memref<9x4x8xbf16, #tpu.memory_space<vmem>>, vector<1x4x8xbf16>
    %36 = vector.shape_cast %35 : vector<1x4x8xbf16> to vector<4x8xbf16>
    %c6_37 = arith.constant 6 : index
    %c0_38 = arith.constant 0 : index
    %c0_39 = arith.constant 0 : index
    %37 = vector.load %arg1[%c6_37, %c0_38, %c0_39] : memref<9x8x512xbf16, #tpu.memory_space<vmem>>, vector<1x8x512xbf16>
    %38 = vector.shape_cast %37 : vector<1x8x512xbf16> to vector<8x512xbf16>
    %cst_40 = arith.constant dense<0.000000e+00> : vector<4x512xf32>
    %39 = tpu.matmul %36, %38, %cst_40 {dimension_numbers = #tpu.dot_dimension_numbers<[1], [0], [0], [1], [0, 0, 1, 1], [], []>} : vector<4x8xbf16>, vector<8x512xbf16>, vector<4x512xf32> -> vector<4x512xf32>
    %40 = arith.addf %34, %39 : vector<4x512xf32>
    %c7 = arith.constant 7 : index
    %c0_41 = arith.constant 0 : index
    %c0_42 = arith.constant 0 : index
    %41 = vector.load %arg2[%c7, %c0_41, %c0_42] : memref<9x4x8xbf16, #tpu.memory_space<vmem>>, vector<1x4x8xbf16>
    %42 = vector.shape_cast %41 : vector<1x4x8xbf16> to vector<4x8xbf16>
    %c7_43 = arith.constant 7 : index
    %c0_44 = arith.constant 0 : index
    %c0_45 = arith.constant 0 : index
    %43 = vector.load %arg1[%c7_43, %c0_44, %c0_45] : memref<9x8x512xbf16, #tpu.memory_space<vmem>>, vector<1x8x512xbf16>
    %44 = vector.shape_cast %43 : vector<1x8x512xbf16> to vector<8x512xbf16>
    %cst_46 = arith.constant dense<0.000000e+00> : vector<4x512xf32>
    %45 = tpu.matmul %42, %44, %cst_46 {dimension_numbers = #tpu.dot_dimension_numbers<[1], [0], [0], [1], [0, 0, 1, 1], [], []>} : vector<4x8xbf16>, vector<8x512xbf16>, vector<4x512xf32> -> vector<4x512xf32>
    %46 = arith.addf %40, %45 : vector<4x512xf32>
    %c8 = arith.constant 8 : index
    %c0_47 = arith.constant 0 : index
    %c0_48 = arith.constant 0 : index
    %47 = vector.load %arg2[%c8, %c0_47, %c0_48] : memref<9x4x8xbf16, #tpu.memory_space<vmem>>, vector<1x4x8xbf16>
    %48 = vector.shape_cast %47 : vector<1x4x8xbf16> to vector<4x8xbf16>
    %c8_49 = arith.constant 8 : index
    %c0_50 = arith.constant 0 : index
    %c0_51 = arith.constant 0 : index
    %49 = vector.load %arg1[%c8_49, %c0_50, %c0_51] : memref<9x8x512xbf16, #tpu.memory_space<vmem>>, vector<1x8x512xbf16>
    %50 = vector.shape_cast %49 : vector<1x8x512xbf16> to vector<8x512xbf16>
    %cst_52 = arith.constant dense<0.000000e+00> : vector<4x512xf32>
    %51 = tpu.matmul %48, %50, %cst_52 {dimension_numbers = #tpu.dot_dimension_numbers<[1], [0], [0], [1], [0, 0, 1, 1], [], []>} : vector<4x8xbf16>, vector<8x512xbf16>, vector<4x512xf32> -> vector<4x512xf32>
    %52 = arith.addf %46, %51 : vector<4x512xf32>
    %c0_53 = arith.constant 0 : index
    %c0_54 = arith.constant 0 : index
    %53 = vector.load %arg3[%c0_53, %c0_54] : memref<4x1xf32, #tpu.memory_space<vmem>>, vector<4x1xf32>
    %54 = vector.broadcast %53 : vector<4x1xf32> to vector<4x512xf32>
    %55 = arith.addf %52, %54 : vector<4x512xf32>
    %cst_55 = arith.constant 0.000000e+00 : f32
    %56 = vector.broadcast %cst_55 : f32 to vector<4x512xf32>
    %57 = arith.maximumf %55, %56 : vector<4x512xf32>
    %58 = arith.truncf %57 : vector<4x512xf32> to vector<4x512xbf16>
    %c0_56 = arith.constant 0 : index
    %c0_57 = arith.constant 0 : index
    %59 = vector.load %arg4[%c0_56, %c0_57] : memref<4x512xbf16, #tpu.memory_space<vmem>>, vector<4x512xbf16>
    tpu.vector_store %arg4[%c0_56, %c0_57], %58 {strides = array<i32>} : memref<4x512xbf16, #tpu.memory_space<vmem>>, vector<4x512xbf16>,
    return
  }
  func.func @transform_0(%arg0: i32) -> (i32, i32, i32) {
    %c0_i32 = arith.constant 0 : i32
    %c0_i32_0 = arith.constant 0 : i32
    %c0_i32_1 = arith.constant 0 : i32
    return %c0_i32, %c0_i32_0, %arg0 : i32, i32, i32
  }
  func.func @transform_1(%arg0: i32) -> (i32, i32, i32) {
    %c0_i32 = arith.constant 0 : i32
    %c0_i32_0 = arith.constant 0 : i32
    %c0_i32_1 = arith.constant 0 : i32
    %c0_i32_2 = arith.constant 0 : i32
    return %c0_i32, %c0_i32_0, %c0_i32_1 : i32, i32, i32
  }
  func.func @transform_2(%arg0: i32) -> (i32, i32) {
    %c0_i32 = arith.constant 0 : i32
    %c0_i32_0 = arith.constant 0 : i32
    %c0_i32_1 = arith.constant 0 : i32
    return %c0_i32, %c0_i32_0 : i32, i32
  }
  func.func @transform_3(%arg0: i32) -> (i32, i32) {
    %c0_i32 = arith.constant 0 : i32
    %c0_i32_0 = arith.constant 0 : i32
    return %c0_i32, %arg0 : i32, i32
  }
}

module attributes {stable_mosaic.version = 11 : i64} {
  func.func @_conv_gemm_kernel(%arg0: i32, %arg1: memref<1x4x512xbf16, #tpu.memory_space<vmem>>, %arg2: memref<1x2x4xbf16, #tpu.memory_space<vmem>>, %arg3: memref<2x1xf32, #tpu.memory_space<vmem>>, %arg4: memref<2x512xf32, #tpu.memory_space<vmem>>) attributes {dimension_semantics = [#tpu.dimension_semantics<parallel>], iteration_bounds = array<i64: 1>, scalar_prefetch = 0 : i64, scratch_operands = 0 : i64, tpu.core_type = #tpu.core_type<tc>, window_params = [{transform_indices = @transform_0, window_bounds = array<i64: 1, 4, 512>}, {pipeline_mode = #tpu.pipeline_mode<synchronous>, transform_indices = @transform_1, window_bounds = array<i64: 1, 2, 4>}, {pipeline_mode = #tpu.pipeline_mode<synchronous>, transform_indices = @transform_2, window_bounds = array<i64: 2, 1>}, {transform_indices = @transform_3, window_bounds = array<i64: 2, 512>}]} {
    %c0 = arith.constant 0 : index
    %c0_0 = arith.constant 0 : index
    %c0_1 = arith.constant 0 : index
    %0 = vector.load %arg2[%c0, %c0_0, %c0_1] : memref<1x2x4xbf16, #tpu.memory_space<vmem>>, vector<1x2x4xbf16>
    %1 = vector.shape_cast %0 : vector<1x2x4xbf16> to vector<2x4xbf16>
    %c0_2 = arith.constant 0 : index
    %c0_3 = arith.constant 0 : index
    %c0_4 = arith.constant 0 : index
    %2 = vector.load %arg1[%c0_2, %c0_3, %c0_4] : memref<1x4x512xbf16, #tpu.memory_space<vmem>>, vector<1x4x512xbf16>
    %3 = vector.shape_cast %2 : vector<1x4x512xbf16> to vector<4x512xbf16>
    %cst = arith.constant dense<0.000000e+00> : vector<2x512xf32>
    %4 = tpu.matmul %1, %3, %cst {dimension_numbers = #tpu.dot_dimension_numbers<[1], [0], [0], [1], [0, 0, 1, 1], [], []>} : vector<2x4xbf16>, vector<4x512xbf16>, vector<2x512xf32> -> vector<2x512xf32>
    %c0_5 = arith.constant 0 : index
    %c0_6 = arith.constant 0 : index
    %5 = vector.load %arg3[%c0_5, %c0_6] : memref<2x1xf32, #tpu.memory_space<vmem>>, vector<2x1xf32>
    %6 = vector.broadcast %5 : vector<2x1xf32> to vector<2x512xf32>
    %7 = arith.addf %4, %6 : vector<2x512xf32>
    %c0_7 = arith.constant 0 : index
    %c0_8 = arith.constant 0 : index
    %8 = vector.load %arg4[%c0_7, %c0_8] : memref<2x512xf32, #tpu.memory_space<vmem>>, vector<2x512xf32>
    tpu.vector_store %arg4[%c0_7, %c0_8], %7 {strides = array<i32>} : memref<2x512xf32, #tpu.memory_space<vmem>>, vector<2x512xf32>,
    return
  }
  func.func @transform_0(%arg0: i32) -> (i32, i32, i32) {
    %c0_i32 = arith.constant 0 : i32
    %c0_i32_0 = arith.constant 0 : i32
    %c0_i32_1 = arith.constant 0 : i32
    return %c0_i32, %c0_i32_0, %arg0 : i32, i32, i32
  }
  func.func @transform_1(%arg0: i32) -> (i32, i32, i32) {
    %c0_i32 = arith.constant 0 : i32
    %c0_i32_0 = arith.constant 0 : i32
    %c0_i32_1 = arith.constant 0 : i32
    %c0_i32_2 = arith.constant 0 : i32
    return %c0_i32, %c0_i32_0, %c0_i32_1 : i32, i32, i32
  }
  func.func @transform_2(%arg0: i32) -> (i32, i32) {
    %c0_i32 = arith.constant 0 : i32
    %c0_i32_0 = arith.constant 0 : i32
    %c0_i32_1 = arith.constant 0 : i32
    return %c0_i32, %c0_i32_0 : i32, i32
  }
  func.func @transform_3(%arg0: i32) -> (i32, i32) {
    %c0_i32 = arith.constant 0 : i32
    %c0_i32_0 = arith.constant 0 : i32
    return %c0_i32, %arg0 : i32, i32
  }
}

</mosaic_0001>

<llo_original>
// kernel: unet_forward.15
$region0: #{unet_forward.15}
  #allocation0 [shape = 'u32[]', space=smem, size = 0x4, offset = 0x4, fixed_abs, tag = 'smem constant byte address 0x4 - core index']
  #allocation1 [shape = 'u32[144,128]{1,0:T(1,128)}', space=vmem, size = 0x12000, scoped, tag = 'internal scratch']
  %s0 = inlined_call_operand.vmem [shape: bf16[9,1,512], index: 0, kind: input, shape index: {}]
  %s1 = inlined_call_operand.vmem [shape: bf16[9,4,1], index: 1, kind: input, shape index: {}]
  %s2 = inlined_call_operand.vmem [shape: f32[4,1], index: 2, kind: input, shape index: {}]
  %s3 = inlined_call_operand.vmem [shape: bf16[4,512], index: 3, kind: output, shape index: {}]
  %s4 = sld [smem:[#allocation0]]
  $region22: #{unet_forward.15} parent=0
    _
  %s6 = ssub.s32 1, %s4
  %s7 = scalar_select 0, %s6, %s4
  // Predicated region
  $region2: #{unet_forward.15} parent=0 // pred_check
    _
  $region3: #{unet_forward.15} parent=0 // pred_check_branch
    %9 = sbr.rel (0) target = $region5
  $region4: #{unet_forward.15} parent=0 // pred_region
    _
  $region5: #{unet_forward.15} parent=0 // pred_fallthru
    _
  // Predicated region
  $region6: #{unet_forward.15} parent=0 // pred_check
    _
  $region7: #{unet_forward.15} parent=0 // pred_check_branch
    %11 = sbr.rel (0) target = $region9
  $region8: #{unet_forward.15} parent=0 // pred_region
    _
  $region9: #{unet_forward.15} parent=0 // pred_fallthru
    _
  // Predicated region
  $region10: #{unet_forward.15} parent=0 // pred_check
    _
  $region11: #{unet_forward.15} parent=0 // pred_check_branch
    %13 = sbr.rel (0) target = $region13
  $region12: #{unet_forward.15} parent=0 // pred_region
    _
  $region13: #{unet_forward.15} parent=0 // pred_fallthru
    _
  %v15 = vld [vmem:[%s1] sm:$0x3]
  %v16 = vld [vmem:[%s0] sm:$0xf]
  %s17 = scalar_lea.vmem %s1, 2
  %v18 = vld [vmem:[%s17] sm:$0x3]
  %s19 = scalar_lea.vmem %s0, 4
  %v20 = vld [vmem:[%s19] sm:$0xf]
  %v23 = vunpack.c.l.s4 1966171168
  %v24 = vunpack.c.0.s8 %v23
  %v25 = vlaneseq
  %v26 = vshrl.u32 %v25, 7
  %v27 = vsub.s32 %v24, %v26
  %v28 = vrot.slane %v20, %v27
  %v29 = vcombine.high %v28, %v28
  %v31 = vunpack.c.l.s4 1966171168
  %v32 = vunpack.c.0.s8 %v31
  %v33 = vlaneseq
  %v34 = vshrl.u32 %v33, 7
  %v35 = vsub.s32 %v32, %v34
  %v36 = vrot.slane %v28, %v35
  %v38 = vunpack.c.l.s4 1966171168
  %v39 = vunpack.c.0.s8 %v38
  %v40 = vlaneseq
  %v41 = vshrl.u32 %v40, 7
  %v42 = vsub.s32 %v39, %v41
  %v43 = vrot.slane %v29, %v42
  %v44 = vcombine.high %v36, %v36
  %v45 = vcombine.high %v43, %v43
  %vm46 = vcmask 7168
  %v48 = vsel %vm46, %v18, 0
  %vm50 = vcmask 1040384
  %v51 = vsel 0, 4294967295, 65535
  %v52 = vsel %vm50, %v51, 0
  %v54 = vand.u32 %v36, %v52
  %v57 = vand.u32 %v43, %v52
  %v60 = vand.u32 %v44, %v52
  %v63 = vand.u32 %v45, %v52
  %65 = vmatprep.subr.bf16.mxu0 %v57
  %66 = vmatpush1.bf16.msra.mxu0 %v54
  %67 = vmatprep.subr.bf16.mxu0 0
  %68 = vmatpush1.bf16.msra.mxu0 0
  %69 = vmatprep.subr.bf16.mxu0 0
  %70 = vmatpush1.bf16.msra.mxu0 0
  %71 = vmatprep.subr.bf16.mxu0 0
  %72 = vmatpush1.bf16.msra.mxu0 0
  %73 = vmatprep.subr.bf16.mxu0 0
  %74 = vmatpush1.bf16.msra.mxu0 0
  %75 = vmatprep.subr.bf16.mxu0 0
  %76 = vmatpush1.bf16.msra.mxu0 0
  %77 = vmatprep.subr.bf16.mxu0 0
  %78 = vmatpush1.bf16.msra.mxu0 0
  %79 = vmatprep.subr.bf16.mxu0 0
  %80 = vmatpush1.bf16.msra.mxu0 0
  %81 = vmatprep.subr.bf16.mxu0 0
  %82 = vmatpush1.bf16.msra.mxu0 0
  %83 = vmatprep.subr.bf16.mxu0 0
  %84 = vmatpush1.bf16.msra.mxu0 0
  %85 = vmatprep.subr.bf16.mxu0 0
  %86 = vmatpush1.bf16.msra.mxu0 0
  %87 = vmatprep.subr.bf16.mxu0 0
  %88 = vmatpush1.bf16.msra.mxu0 0
  %89 = vmatprep.subr.bf16.mxu0 0
  %90 = vmatpush1.bf16.msra.mxu0 0
  %91 = vmatprep.subr.bf16.mxu0 0
  %92 = vmatpush1.bf16.msra.mxu0 0
  %93 = vmatprep.subr.bf16.mxu0 0
  %94 = vmatpush1.bf16.msra.mxu0 0
  %95 = vmatprep.subr.bf16.mxu0 0
  %96 = vmatpush1.bf16.msra.mxu0 0
  %97 = vmatprep.mubr.bf16.mxu0 0
  %98 = vmatmul.mubr.bf16.gmra.mrb[0].mxu0 %v48
  %v99 = vpop.f32.mrb[0].mxu0
  %v100 = vadd.f32 0.0, %v99
  %v101 = vpop.f32.mrb[0].mxu0
  %v102 = vadd.f32 0.0, %v101
  %v103 = vpop.f32.mrb[0].mxu0
  %v104 = vpop.f32.mrb[0].mxu0
  %105 = vdwg.mxu0
  %106 = vmatprep.subr.bf16.mxu0 %v63
  %107 = vmatpush1.bf16.msra.mxu0 %v60
  %108 = vmatprep.subr.bf16.mxu0 0
  %109 = vmatpush1.bf16.msra.mxu0 0
  %110 = vmatprep.subr.bf16.mxu0 0
  %111 = vmatpush1.bf16.msra.mxu0 0
  %112 = vmatprep.subr.bf16.mxu0 0
  %113 = vmatpush1.bf16.msra.mxu0 0
  %114 = vmatprep.subr.bf16.mxu0 0
  %115 = vmatpush1.bf16.msra.mxu0 0
  %116 = vmatprep.subr.bf16.mxu0 0
  %117 = vmatpush1.bf16.msra.mxu0 0
  %118 = vmatprep.subr.bf16.mxu0 0
  %119 = vmatpush1.bf16.msra.mxu0 0
  %120 = vmatprep.subr.bf16.mxu0 0
  %121 = vmatpush1.bf16.msra.mxu0 0
  %122 = vmatprep.subr.bf16.mxu0 0
  %123 = vmatpush1.bf16.msra.mxu0 0
  %124 = vmatprep.subr.bf16.mxu0 0
  %125 = vmatpush1.bf16.msra.mxu0 0
  %126 = vmatprep.subr.bf16.mxu0 0
  %127 = vmatpush1.bf16.msra.mxu0 0
  %128 = vmatprep.subr.bf16.mxu0 0
  %129 = vmatpush1.bf16.msra.mxu0 0
  %130 = vmatprep.subr.bf16.mxu0 0
  %131 = vmatpush1.bf16.msra.mxu0 0
  %132 = vmatprep.subr.bf16.mxu0 0
  %133 = vmatpush1.bf16.msra.mxu0 0
  %134 = vmatprep.subr.bf16.mxu0 0
  %135 = vmatpush1.bf16.msra.mxu0 0
  %136 = vmatprep.subr.bf16.mxu0 0
  %137 = vmatpush1.bf16.msra.mxu0 0
  %138 = vmatprep.mubr.bf16.mxu0 0
  %139 = vmatmul.mubr.bf16.gmra.mrb[0].mxu0 %v48
  %v140 = vpop.f32.mrb[0].mxu0
  %v141 = vadd.f32 0.0, %v140
  %v142 = vpop.f32.mrb[0].mxu0
  %v143 = vadd.f32 0.0, %v142
  %v144 = vpop.f32.mrb[0].mxu0
  %v145 = vpop.f32.mrb[0].mxu0
  %146 = vdwg.mxu0
  %v149 = vunpack.c.l.s4 1966171168
  %v150 = vunpack.c.0.s8 %v149
  %v151 = vlaneseq
  %v152 = vshrl.u32 %v151, 7
  %v153 = vsub.s32 %v150, %v152
  %v154 = vrot.slane %v16, %v153
  %v155 = vcombine.high %v154, %v154
  %v157 = vunpack.c.l.s4 1966171168
  %v158 = vunpack.c.0.s8 %v157
  %v159 = vlaneseq
  %v160 = vshrl.u32 %v159, 7
  %v161 = vsub.s32 %v158, %v160
  %v162 = vrot.slane %v154, %v161
  %v164 = vunpack.c.l.s4 1966171168
  %v165 = vunpack.c.0.s8 %v164
  %v166 = vlaneseq
  %v167 = vshrl.u32 %v166, 7
  %v168 = vsub.s32 %v165, %v167
  %v169 = vrot.slane %v155, %v168
  %v170 = vcombine.high %v162, %v162
  %v171 = vcombine.high %v169, %v169
  %v173 = vsel %vm46, %v15, 0
  %v176 = vand.u32 %v162, %v52
  %v179 = vand.u32 %v169, %v52
  %v182 = vand.u32 %v170, %v52
  %v185 = vand.u32 %v171, %v52
  %187 = vmatprep.subr.bf16.mxu0 %v179
  %188 = vmatpush1.bf16.msra.mxu0 %v176
  %189 = vmatprep.subr.bf16.mxu0 0
  %190 = vmatpush1.bf16.msra.mxu0 0
  %191 = vmatprep.subr.bf16.mxu0 0
  %192 = vmatpush1.bf16.msra.mxu0 0
  %193 = vmatprep.subr.bf16.mxu0 0
  %194 = vmatpush1.bf16.msra.mxu0 0
  %195 = vmatprep.subr.bf16.mxu0 0
  %196 = vmatpush1.bf16.msra.mxu0 0
  %197 = vmatprep.subr.bf16.mxu0 0
  %198 = vmatpush1.bf16.msra.mxu0 0
  %199 = vmatprep.subr.bf16.mxu0 0
  %200 = vmatpush1.bf16.msra.mxu0 0
  %201 = vmatprep.subr.bf16.mxu0 0
  %202 = vmatpush1.bf16.msra.mxu0 0
  %203 = vmatprep.subr.bf16.mxu0 0
  %204 = vmatpush1.bf16.msra.mxu0 0
  %205 = vmatprep.subr.bf16.mxu0 0
  %206 = vmatpush1.bf16.msra.mxu0 0
  %207 = vmatprep.subr.bf16.mxu0 0
  %208 = vmatpush1.bf16.msra.mxu0 0
  %209 = vmatprep.subr.bf16.mxu0 0
  %210 = vmatpush1.bf16.msra.mxu0 0
  %211 = vmatprep.subr.bf16.mxu0 0
  %212 = vmatpush1.bf16.msra.mxu0 0
  %213 = vmatprep.subr.bf16.mxu0 0
  %214 = vmatpush1.bf16.msra.mxu0 0
  %215 = vmatprep.subr.bf16.mxu0 0
  %216 = vmatpush1.bf16.msra.mxu0 0
  %217 = vmatprep.subr.bf16.mxu0 0
  %218 = vmatpush1.bf16.msra.mxu0 0
  %219 = vmatprep.mubr.bf16.mxu0 0
  %220 = vmatmul.mubr.bf16.gmra.mrb[0].mxu0 %v173
  %v221 = vpop.f32.mrb[0].mxu0
  %v222 = vadd.f32 %v100, %v221
  %v223 = vpop.f32.mrb[0].mxu0
  %v224 = vadd.f32 %v102, %v223
  %v225 = vpop.f32.mrb[0].mxu0
  %v226 = vpop.f32.mrb[0].mxu0
  %227 = vdwg.mxu0
  %228 = vmatprep.subr.bf16.mxu0 %v185
  %229 = vmatpush1.bf16.msra.mxu0 %v182
  %230 = vmatprep.subr.bf16.mxu0 0
  %231 = vmatpush1.bf16.msra.mxu0 0
  %232 = vmatprep.subr.bf16.mxu0 0
  %233 = vmatpush1.bf16.msra.mxu0 0
  %234 = vmatprep.subr.bf16.mxu0 0
  %235 = vmatpush1.bf16.msra.mxu0 0
  %236 = vmatprep.subr.bf16.mxu0 0
  %237 = vmatpush1.bf16.msra.mxu0 0
  %238 = vmatprep.subr.bf16.mxu0 0
  %239 = vmatpush1.bf16.msra.mxu0 0
  %240 = vmatprep.subr.bf16.mxu0 0
  %241 = vmatpush1.bf16.msra.mxu0 0
  %242 = vmatprep.subr.bf16.mxu0 0
  %243 = vmatpush1.bf16.msra.mxu0 0
  %244 = vmatprep.subr.bf16.mxu0 0
  %245 = vmatpush1.bf16.msra.mxu0 0
  %246 = vmatprep.subr.bf16.mxu0 0
  %247 = vmatpush1.bf16.msra.mxu0 0
  %248 = vmatprep.subr.bf16.mxu0 0
  %249 = vmatpush1.bf16.msra.mxu0 0
  %250 = vmatprep.subr.bf16.mxu0 0
  %251 = vmatpush1.bf16.msra.mxu0 0
  %252 = vmatprep.subr.bf16.mxu0 0
  %253 = vmatpush1.bf16.msra.mxu0 0
  %254 = vmatprep.subr.bf16.mxu0 0
  %255 = vmatpush1.bf16.msra.mxu0 0
  %256 = vmatprep.subr.bf16.mxu0 0
  %257 = vmatpush1.bf16.msra.mxu0 0
  %258 = vmatprep.subr.bf16.mxu0 0
  %259 = vmatpush1.bf16.msra.mxu0 0
  %260 = vmatprep.mubr.bf16.mxu0 0
  %261 = vmatmul.mubr.bf16.gmra.mrb[0].mxu0 %v173
  %v262 = vpop.f32.mrb[0].mxu0
  %v263 = vadd.f32 %v141, %v262
  %v264 = vpop.f32.mrb[0].mxu0
  %v265 = vadd.f32 %v143, %v264
  %v266 = vpop.f32.mrb[0].mxu0
  %v267 = vpop.f32.mrb[0].mxu0
  %268 = vdwg.mxu0
  %s269 = scalar_lea.vmem %s1, 4
  %v270 = vld [vmem:[%s269] sm:$0x3]
  %s271 = scalar_lea.vmem %s0, 8
  %v272 = vld [vmem:[%s271] sm:$0xf]
  %v275 = vunpack.c.l.s4 1966171168
  %v276 = vunpack.c.0.s8 %v275
  %v277 = vlaneseq
  %v278 = vshrl.u32 %v277, 7
  %v279 = vsub.s32 %v276, %v278
  %v280 = vrot.slane %v272, %v279
  %v281 = vcombine.high %v280, %v280
  %v283 = vunpack.c.l.s4 1966171168
  %v284 = vunpack.c.0.s8 %v283
  %v285 = vlaneseq
  %v286 = vshrl.u32 %v285, 7
  %v287 = vsub.s32 %v284, %v286
  %v288 = vrot.slane %v280, %v287
  %v290 = vunpack.c.l.s4 1966171168
  %v291 = vunpack.c.0.s8 %v290
  %v292 = vlaneseq
  %v293 = vshrl.u32 %v292, 7
  %v294 = vsub.s32 %v291, %v293
  %v295 = vrot.slane %v281, %v294
  %v296 = vcombine.high %v288, %v288
  %v297 = vcombine.high %v295, %v295
  %v299 = vsel %vm46, %v270, 0
  %v302 = vand.u32 %v288, %v52
  %v305 = vand.u32 %v295, %v52
  %v308 = vand.u32 %v296, %v52
  %v311 = vand.u32 %v297, %v52
  %313 = vmatprep.subr.bf16.mxu0 %v305
  %314 = vmatpush1.bf16.msra.mxu0 %v302
  %315 = vmatprep.subr.bf16.mxu0 0
  %316 = vmatpush1.bf16.msra.mxu0 0
  %317 = vmatprep.subr.bf16.mxu0 0
  %318 = vmatpush1.bf16.msra.mxu0 0
  %319 = vmatprep.subr.bf16.mxu0 0
  %320 = vmatpush1.bf16.msra.mxu0 0
  %321 = vmatprep.subr.bf16.mxu0 0
  %322 = vmatpush1.bf16.msra.mxu0 0
  %323 = vmatprep.subr.bf16.mxu0 0
  %324 = vmatpush1.bf16.msra.mxu0 0
  %325 = vmatprep.subr.bf16.mxu0 0
  %326 = vmatpush1.bf16.msra.mxu0 0
  %327 = vmatprep.subr.bf16.mxu0 0
  %328 = vmatpush1.bf16.msra.mxu0 0
  %329 = vmatprep.subr.bf16.mxu0 0
  %330 = vmatpush1.bf16.msra.mxu0 0
  %331 = vmatprep.subr.bf16.mxu0 0
  %332 = vmatpush1.bf16.msra.mxu0 0
  %333 = vmatprep.subr.bf16.mxu0 0
  %334 = vmatpush1.bf16.msra.mxu0 0
  %335 = vmatprep.subr.bf16.mxu0 0
  %336 = vmatpush1.bf16.msra.mxu0 0
  %337 = vmatprep.subr.bf16.mxu0 0
  %338 = vmatpush1.bf16.msra.mxu0 0
  %339 = vmatprep.subr.bf16.mxu0 0
  %340 = vmatpush1.bf16.msra.mxu0 0
  %341 = vmatprep.subr.bf16.mxu0 0
  %342 = vmatpush1.bf16.msra.mxu0 0
  %343 = vmatprep.subr.bf16.mxu0 0
  %344 = vmatpush1.bf16.msra.mxu0 0
  %345 = vmatprep.mubr.bf16.mxu0 0
  %346 = vmatmul.mubr.bf16.gmra.mrb[0].mxu0 %v299
  %v347 = vpop.f32.mrb[0].mxu0
  %v348 = vadd.f32 0.0, %v347
  %v349 = vpop.f32.mrb[0].mxu0
  %v350 = vadd.f32 0.0, %v349
  %v351 = vpop.f32.mrb[0].mxu0
  %v352 = vpop.f32.mrb[0].mxu0
  %353 = vdwg.mxu0
  %354 = vmatprep.subr.bf16.mxu0 %v311
  %355 = vmatpush1.bf16.msra.mxu0 %v308
  %356 = vmatprep.subr.bf16.mxu0 0
  %357 = vmatpush1.bf16.msra.mxu0 0
  %358 = vmatprep.subr.bf16.mxu0 0
  %359 = vmatpush1.bf16.msra.mxu0 0
  %360 = vmatprep.subr.bf16.mxu0 0
  %361 = vmatpush1.bf16.msra.mxu0 0
  %362 = vmatprep.subr.bf16.mxu0 0
  %363 = vmatpush1.bf16.msra.mxu0 0
  %364 = vmatprep.subr.bf16.mxu0 0
  %365 = vmatpush1.bf16.msra.mxu0 0
  %366 = vmatprep.subr.bf16.mxu0 0
  %367 = vmatpush1.bf16.msra.mxu0 0
  %368 = vmatprep.subr.bf16.mxu0 0
  %369 = vmatpush1.bf16.msra.mxu0 0
  %370 = vmatprep.subr.bf16.mxu0 0
  %371 = vmatpush1.bf16.msra.mxu0 0
  %372 = vmatprep.subr.bf16.mxu0 0
  %373 = vmatpush1.bf16.msra.mxu0 0
  %374 = vmatprep.subr.bf16.mxu0 0
  %375 = vmatpush1.bf16.msra.mxu0 0
  %376 = vmatprep.subr.bf16.mxu0 0
  %377 = vmatpush1.bf16.msra.mxu0 0
  %378 = vmatprep.subr.bf16.mxu0 0
  %379 = vmatpush1.bf16.msra.mxu0 0
  %380 = vmatprep.subr.bf16.mxu0 0
  %381 = vmatpush1.bf16.msra.mxu0 0
  %382 = vmatprep.subr.bf16.mxu0 0
  %383 = vmatpush1.bf16.msra.mxu0 0
  %384 = vmatprep.subr.bf16.mxu0 0
  %385 = vmatpush1.bf16.msra.mxu0 0
  %386 = vmatprep.mubr.bf16.mxu0 0
  %387 = vmatmul.mubr.bf16.gmra.mrb[0].mxu0 %v299
  %v388 = vpop.f32.mrb[0].mxu0
  %v389 = vadd.f32 0.0, %v388
  %v390 = vpop.f32.mrb[0].mxu0
  %v391 = vadd.f32 0.0, %v390
  %v392 = vpop.f32.mrb[0].mxu0
  %v393 = vpop.f32.mrb[0].mxu0
  %394 = vdwg.mxu0
  %v395 = vadd.f32 %v222, %v348
  %v396 = vadd.f32 %v224, %v350
  %v397 = vadd.f32 %v263, %v389
  %v398 = vadd.f32 %v265, %v391
  %s399 = scalar_lea.vmem %s1, 6
  %v400 = vld [vmem:[%s399] sm:$0x3]
  %s401 = scalar_lea.vmem %s0, 12
  %v402 = vld [vmem:[%s401] sm:$0xf]
  %v405 = vunpack.c.l.s4 1966171168
  %v406 = vunpack.c.0.s8 %v405
  %v407 = vlaneseq
  %v408 = vshrl.u32 %v407, 7
  %v409 = vsub.s32 %v406, %v408
  %v410 = vrot.slane %v402, %v409
  %v411 = vcombine.high %v410, %v410
  %v413 = vunpack.c.l.s4 1966171168
  %v414 = vunpack.c.0.s8 %v413
  %v415 = vlaneseq
  %v416 = vshrl.u32 %v415, 7
  %v417 = vsub.s32 %v414, %v416
  %v418 = vrot.slane %v410, %v417
  %v420 = vunpack.c.l.s4 1966171168
  %v421 = vunpack.c.0.s8 %v420
  %v422 = vlaneseq
  %v423 = vshrl.u32 %v422, 7
  %v424 = vsub.s32 %v421, %v423
  %v425 = vrot.slane %v411, %v424
  %v426 = vcombine.high %v418, %v418
  %v427 = vcombine.high %v425, %v425
  %v429 = vsel %vm46, %v400, 0
  %v432 = vand.u32 %v418, %v52
  %v435 = vand.u32 %v425, %v52
  %v438 = vand.u32 %v426, %v52
  %v441 = vand.u32 %v427, %v52
  %443 = vmatprep.subr.bf16.mxu0 %v435
  %444 = vmatpush1.bf16.msra.mxu0 %v432
  %445 = vmatprep.subr.bf16.mxu0 0
  %446 = vmatpush1.bf16.msra.mxu0 0
  %447 = vmatprep.subr.bf16.mxu0 0
  %448 = vmatpush1.bf16.msra.mxu0 0
  %449 = vmatprep.subr.bf16.mxu0 0
  %450 = vmatpush1.bf16.msra.mxu0 0
  %451 = vmatprep.subr.bf16.mxu0 0
  %452 = vmatpush1.bf16.msra.mxu0 0
  %453 = vmatprep.subr.bf16.mxu0 0
  %454 = vmatpush1.bf16.msra.mxu0 0
  %455 = vmatprep.subr.bf16.mxu0 0
  %456 = vmatpush1.bf16.msra.mxu0 0
  %457 = vmatprep.subr.bf16.mxu0 0
  %458 = vmatpush1.bf16.msra.mxu0 0
  %459 = vmatprep.subr.bf16.mxu0 0
  %460 = vmatpush1.bf16.msra.mxu0 0
  %461 = vmatprep.subr.bf16.mxu0 0
  %462 = vmatpush1.bf16.msra.mxu0 0
  %463 = vmatprep.subr.bf16.mxu0 0
  %464 = vmatpush1.bf16.msra.mxu0 0
  %465 = vmatprep.subr.bf16.mxu0 0
  %466 = vmatpush1.bf16.msra.mxu0 0
  %467 = vmatprep.subr.bf16.mxu0 0
  %468 = vmatpush1.bf16.msra.mxu0 0
  %469 = vmatprep.subr.bf16.mxu0 0
  %470 = vmatpush1.bf16.msra.mxu0 0
  %471 = vmatprep.subr.bf16.mxu0 0
  %472 = vmatpush1.bf16.msra.mxu0 0
  %473 = vmatprep.subr.bf16.mxu0 0
  %474 = vmatpush1.bf16.msra.mxu0 0
  %475 = vmatprep.mubr.bf16.mxu0 0
  %476 = vmatmul.mubr.bf16.gmra.mrb[0].mxu0 %v429
  %v477 = vpop.f32.mrb[0].mxu0
  %v478 = vadd.f32 0.0, %v477
  %v479 = vpop.f32.mrb[0].mxu0
  %v480 = vadd.f32 0.0, %v479
  %v481 = vpop.f32.mrb[0].mxu0
  %v482 = vpop.f32.mrb[0].mxu0
  %483 = vdwg.mxu0
  %484 = vmatprep.subr.bf16.mxu0 %v441
  %485 = vmatpush1.bf16.msra.mxu0 %v438
  %486 = vmatprep.subr.bf16.mxu0 0
  %487 = vmatpush1.bf16.msra.mxu0 0
  %488 = vmatprep.subr.bf16.mxu0 0
  %489 = vmatpush1.bf16.msra.mxu0 0
  %490 = vmatprep.subr.bf16.mxu0 0
  %491 = vmatpush1.bf16.msra.mxu0 0
  %492 = vmatprep.subr.bf16.mxu0 0
  %493 = vmatpush1.bf16.msra.mxu0 0
  %494 = vmatprep.subr.bf16.mxu0 0
  %495 = vmatpush1.bf16.msra.mxu0 0
  %496 = vmatprep.subr.bf16.mxu0 0
  %497 = vmatpush1.bf16.msra.mxu0 0
  %498 = vmatprep.subr.bf16.mxu0 0
  %499 = vmatpush1.bf16.msra.mxu0 0
  %500 = vmatprep.subr.bf16.mxu0 0
  %501 = vmatpush1.bf16.msra.mxu0 0
  %502 = vmatprep.subr.bf16.mxu0 0
  %503 = vmatpush1.bf16.msra.mxu0 0
  %504 = vmatprep.subr.bf16.mxu0 0
  %505 = vmatpush1.bf16.msra.mxu0 0
  %506 = vmatprep.subr.bf16.mxu0 0
  %507 = vmatpush1.bf16.msra.mxu0 0
  %508 = vmatprep.subr.bf16.mxu0 0
  %509 = vmatpush1.bf16.msra.mxu0 0
  %510 = vmatprep.subr.bf16.mxu0 0
  %511 = vmatpush1.bf16.msra.mxu0 0
  %512 = vmatprep.subr.bf16.mxu0 0
  %513 = vmatpush1.bf16.msra.mxu0 0
  %514 = vmatprep.subr.bf16.mxu0 0
  %515 = vmatpush1.bf16.msra.mxu0 0
  %516 = vmatprep.mubr.bf16.mxu0 0
  %517 = vmatmul.mubr.bf16.gmra.mrb[0].mxu0 %v429
  %v518 = vpop.f32.mrb[0].mxu0
  %v519 = vadd.f32 0.0, %v518
  %v520 = vpop.f32.mrb[0].mxu0
  %v521 = vadd.f32 0.0, %v520
  %v522 = vpop.f32.mrb[0].mxu0
  %v523 = vpop.f32.mrb[0].mxu0
  %524 = vdwg.mxu0
  %v525 = vadd.f32 %v395, %v478
  %v526 = vadd.f32 %v396, %v480
  %v527 = vadd.f32 %v397, %v519
  %v528 = vadd.f32 %v398, %v521
  %s529 = scalar_lea.vmem %s1, 8
  %v530 = vld [vmem:[%s529] sm:$0x3]
  %s531 = scalar_lea.vmem %s0, 16
  %v532 = vld [vmem:[%s531] sm:$0xf]
  %v535 = vunpack.c.l.s4 1966171168
  %v536 = vunpack.c.0.s8 %v535
  %v537 = vlaneseq
  %v538 = vshrl.u32 %v537, 7
  %v539 = vsub.s32 %v536, %v538
  %v540 = vrot.slane %v532, %v539
  %v541 = vcombine.high %v540, %v540
  %v543 = vunpack.c.l.s4 1966171168
  %v544 = vunpack.c.0.s8 %v543
  %v545 = vlaneseq
  %v546 = vshrl.u32 %v545, 7
  %v547 = vsub.s32 %v544, %v546
  %v548 = vrot.slane %v540, %v547
  %v550 = vunpack.c.l.s4 1966171168
  %v551 = vunpack.c.0.s8 %v550
  %v552 = vlaneseq
  %v553 = vshrl.u32 %v552, 7
  %v554 = vsub.s32 %v551, %v553
  %v555 = vrot.slane %v541, %v554
  %v556 = vcombine.high %v548, %v548
  %v557 = vcombine.high %v555, %v555
  %v559 = vsel %vm46, %v530, 0
  %v562 = vand.u32 %v548, %v52
  %v565 = vand.u32 %v555, %v52
  %v568 = vand.u32 %v556, %v52
  %v571 = vand.u32 %v557, %v52
  %573 = vmatprep.subr.bf16.mxu0 %v565
  %574 = vmatpush1.bf16.msra.mxu0 %v562
  %575 = vmatprep.subr.bf16.mxu0 0
  %576 = vmatpush1.bf16.msra.mxu0 0
  %577 = vmatprep.subr.bf16.mxu0 0
  %578 = vmatpush1.bf16.msra.mxu0 0
  %579 = vmatprep.subr.bf16.mxu0 0
  %580 = vmatpush1.bf16.msra.mxu0 0
  %581 = vmatprep.subr.bf16.mxu0 0
  %582 = vmatpush1.bf16.msra.mxu0 0
  %583 = vmatprep.subr.bf16.mxu0 0
  %584 = vmatpush1.bf16.msra.mxu0 0
  %585 = vmatprep.subr.bf16.mxu0 0
  %586 = vmatpush1.bf16.msra.mxu0 0
  %587 = vmatprep.subr.bf16.mxu0 0
  %588 = vmatpush1.bf16.msra.mxu0 0
  %589 = vmatprep.subr.bf16.mxu0 0
  %590 = vmatpush1.bf16.msra.mxu0 0
  %591 = vmatprep.subr.bf16.mxu0 0
  %592 = vmatpush1.bf16.msra.mxu0 0
  %593 = vmatprep.subr.bf16.mxu0 0
  %594 = vmatpush1.bf16.msra.mxu0 0
  %595 = vmatprep.subr.bf16.mxu0 0
  %596 = vmatpush1.bf16.msra.mxu0 0
  %597 = vmatprep.subr.bf16.mxu0 0
  %598 = vmatpush1.bf16.msra.mxu0 0
  %599 = vmatprep.subr.bf16.mxu0 0
  %600 = vmatpush1.bf16.msra.mxu0 0
  %601 = vmatprep.subr.bf16.mxu0 0
  %602 = vmatpush1.bf16.msra.mxu0 0
  %603 = vmatprep.subr.bf16.mxu0 0
  %604 = vmatpush1.bf16.msra.mxu0 0
  %605 = vmatprep.mubr.bf16.mxu0 0
  %606 = vmatmul.mubr.bf16.gmra.mrb[0].mxu0 %v559
  %v607 = vpop.f32.mrb[0].mxu0
  %v608 = vadd.f32 0.0, %v607
  %v609 = vpop.f32.mrb[0].mxu0
  %v610 = vadd.f32 0.0, %v609
  %v611 = vpop.f32.mrb[0].mxu0
  %v612 = vpop.f32.mrb[0].mxu0
  %613 = vdwg.mxu0
  %614 = vmatprep.subr.bf16.mxu0 %v571
  %615 = vmatpush1.bf16.msra.mxu0 %v568
  %616 = vmatprep.subr.bf16.mxu0 0
  %617 = vmatpush1.bf16.msra.mxu0 0
  %618 = vmatprep.subr.bf16.mxu0 0
  %619 = vmatpush1.bf16.msra.mxu0 0
  %620 = vmatprep.subr.bf16.mxu0 0
  %621 = vmatpush1.bf16.msra.mxu0 0
  %622 = vmatprep.subr.bf16.mxu0 0
  %623 = vmatpush1.bf16.msra.mxu0 0
  %624 = vmatprep.subr.bf16.mxu0 0
  %625 = vmatpush1.bf16.msra.mxu0 0
  %626 = vmatprep.subr.bf16.mxu0 0
  %627 = vmatpush1.bf16.msra.mxu0 0
  %628 = vmatprep.subr.bf16.mxu0 0
  %629 = vmatpush1.bf16.msra.mxu0 0
  %630 = vmatprep.subr.bf16.mxu0 0
  %631 = vmatpush1.bf16.msra.mxu0 0
  %632 = vmatprep.subr.bf16.mxu0 0
  %633 = vmatpush1.bf16.msra.mxu0 0
  %634 = vmatprep.subr.bf16.mxu0 0
  %635 = vmatpush1.bf16.msra.mxu0 0
  %636 = vmatprep.subr.bf16.mxu0 0
  %637 = vmatpush1.bf16.msra.mxu0 0
  %638 = vmatprep.subr.bf16.mxu0 0
  %639 = vmatpush1.bf16.msra.mxu0 0
  %640 = vmatprep.subr.bf16.mxu0 0
  %641 = vmatpush1.bf16.msra.mxu0 0
  %642 = vmatprep.subr.bf16.mxu0 0
  %643 = vmatpush1.bf16.msra.mxu0 0
  %644 = vmatprep.subr.bf16.mxu0 0
  %645 = vmatpush1.bf16.msra.mxu0 0
  %646 = vmatprep.mubr.bf16.mxu0 0
  %647 = vmatmul.mubr.bf16.gmra.mrb[0].mxu0 %v559
  %v648 = vpop.f32.mrb[0].mxu0
  %v649 = vadd.f32 0.0, %v648
  %v650 = vpop.f32.mrb[0].mxu0
  %v651 = vadd.f32 0.0, %v650
  %v652 = vpop.f32.mrb[0].mxu0
  %v653 = vpop.f32.mrb[0].mxu0
  %654 = vdwg.mxu0
  %v655 = vadd.f32 %v525, %v608
  %v656 = vadd.f32 %v526, %v610
  %v657 = vadd.f32 %v527, %v649
  %v658 = vadd.f32 %v528, %v651
  %s659 = scalar_lea.vmem %s1, 10
  %v660 = vld [vmem:[%s659] sm:$0x3]
  %s661 = scalar_lea.vmem %s0, 20
  %v662 = vld [vmem:[%s661] sm:$0xf]
  %v665 = vunpack.c.l.s4 1966171168
  %v666 = vunpack.c.0.s8 %v665
  %v667 = vlaneseq
  %v668 = vshrl.u32 %v667, 7
  %v669 = vsub.s32 %v666, %v668
  %v670 = vrot.slane %v662, %v669
  %v671 = vcombine.high %v670, %v670
  %v673 = vunpack.c.l.s4 1966171168
  %v674 = vunpack.c.0.s8 %v673
  %v675 = vlaneseq
  %v676 = vshrl.u32 %v675, 7
  %v677 = vsub.s32 %v674, %v676
  %v678 = vrot.slane %v670, %v677
  %v680 = vunpack.c.l.s4 1966171168
  %v681 = vunpack.c.0.s8 %v680
  %v682 = vlaneseq
  %v683 = vshrl.u32 %v682, 7
  %v684 = vsub.s32 %v681, %v683
  %v685 = vrot.slane %v671, %v684
  %v686 = vcombine.high %v678, %v678
  %v687 = vcombine.high %v685, %v685
  %v689 = vsel %vm46, %v660, 0
  %v692 = vand.u32 %v678, %v52
  %v695 = vand.u32 %v685, %v52
  %v698 = vand.u32 %v686, %v52
  %v701 = vand.u32 %v687, %v52
  %703 = vmatprep.subr.bf16.mxu0 %v695
  %704 = vmatpush1.bf16.msra.mxu0 %v692
  %705 = vmatprep.subr.bf16.mxu0 0
  %706 = vmatpush1.bf16.msra.mxu0 0
  %707 = vmatprep.subr.bf16.mxu0 0
  %708 = vmatpush1.bf16.msra.mxu0 0
  %709 = vmatprep.subr.bf16.mxu0 0
  %710 = vmatpush1.bf16.msra.mxu0 0
  %711 = vmatprep.subr.bf16.mxu0 0
  %712 = vmatpush1.bf16.msra.mxu0 0
  %713 = vmatprep.subr.bf16.mxu0 0
  %714 = vmatpush1.bf16.msra.mxu0 0
  %715 = vmatprep.subr.bf16.mxu0 0
  %716 = vmatpush1.bf16.msra.mxu0 0
  %717 = vmatprep.subr.bf16.mxu0 0
  %718 = vmatpush1.bf16.msra.mxu0 0
  %719 = vmatprep.subr.bf16.mxu0 0
  %720 = vmatpush1.bf16.msra.mxu0 0
  %721 = vmatprep.subr.bf16.mxu0 0
  %722 = vmatpush1.bf16.msra.mxu0 0
  %723 = vmatprep.subr.bf16.mxu0 0
  %724 = vmatpush1.bf16.msra.mxu0 0
  %725 = vmatprep.subr.bf16.mxu0 0
  %726 = vmatpush1.bf16.msra.mxu0 0
  %727 = vmatprep.subr.bf16.mxu0 0
  %728 = vmatpush1.bf16.msra.mxu0 0
  %729 = vmatprep.subr.bf16.mxu0 0
  %730 = vmatpush1.bf16.msra.mxu0 0
  %731 = vmatprep.subr.bf16.mxu0 0
  %732 = vmatpush1.bf16.msra.mxu0 0
  %733 = vmatprep.subr.bf16.mxu0 0
  %734 = vmatpush1.bf16.msra.mxu0 0
  %735 = vmatprep.mubr.bf16.mxu0 0
  %736 = vmatmul.mubr.bf16.gmra.mrb[0].mxu0 %v689
  %v737 = vpop.f32.mrb[0].mxu0
  %v738 = vadd.f32 0.0, %v737
  %v739 = vpop.f32.mrb[0].mxu0
  %v740 = vadd.f32 0.0, %v739
  %v741 = vpop.f32.mrb[0].mxu0
  %v742 = vpop.f32.mrb[0].mxu0
  %743 = vdwg.mxu0
  %744 = vmatprep.subr.bf16.mxu0 %v701
  %745 = vmatpush1.bf16.msra.mxu0 %v698
  %746 = vmatprep.subr.bf16.mxu0 0
  %747 = vmatpush1.bf16.msra.mxu0 0
  %748 = vmatprep.subr.bf16.mxu0 0
  %749 = vmatpush1.bf16.msra.mxu0 0
  %750 = vmatprep.subr.bf16.mxu0 0
  %751 = vmatpush1.bf16.msra.mxu0 0
  %752 = vmatprep.subr.bf16.mxu0 0
  %753 = vmatpush1.bf16.msra.mxu0 0
  %754 = vmatprep.subr.bf16.mxu0 0
  %755 = vmatpush1.bf16.msra.mxu0 0
  %756 = vmatprep.subr.bf16.mxu0 0
  %757 = vmatpush1.bf16.msra.mxu0 0
  %758 = vmatprep.subr.bf16.mxu0 0
  %759 = vmatpush1.bf16.msra.mxu0 0
  %760 = vmatprep.subr.bf16.mxu0 0
  %761 = vmatpush1.bf16.msra.mxu0 0
  %762 = vmatprep.subr.bf16.mxu0 0
  %763 = vmatpush1.bf16.msra.mxu0 0
  %764 = vmatprep.subr.bf16.mxu0 0
  %765 = vmatpush1.bf16.msra.mxu0 0
  %766 = vmatprep.subr.bf16.mxu0 0
  %767 = vmatpush1.bf16.msra.mxu0 0
  %768 = vmatprep.subr.bf16.mxu0 0
  %769 = vmatpush1.bf16.msra.mxu0 0
  %770 = vmatprep.subr.bf16.mxu0 0
  %771 = vmatpush1.bf16.msra.mxu0 0
  %772 = vmatprep.subr.bf16.mxu0 0
  %773 = vmatpush1.bf16.msra.mxu0 0
  %774 = vmatprep.subr.bf16.mxu0 0
  %775 = vmatpush1.bf16.msra.mxu0 0
  %776 = vmatprep.mubr.bf16.mxu0 0
  %777 = vmatmul.mubr.bf16.gmra.mrb[0].mxu0 %v689
  %v778 = vpop.f32.mrb[0].mxu0
  %v779 = vadd.f32 0.0, %v778
  %v780 = vpop.f32.mrb[0].mxu0
  %v781 = vadd.f32 0.0, %v780
  %v782 = vpop.f32.mrb[0].mxu0
  %v783 = vpop.f32.mrb[0].mxu0
  %784 = vdwg.mxu0
  %v785 = vadd.f32 %v655, %v738
  %v786 = vadd.f32 %v656, %v740
  %v787 = vadd.f32 %v657, %v779
  %v788 = vadd.f32 %v658, %v781
  %s789 = scalar_lea.vmem %s1, 12
  %v790 = vld [vmem:[%s789] sm:$0x3]
  %s791 = scalar_lea.vmem %s0, 24
  %v792 = vld [vmem:[%s791] sm:$0xf]
  %v795 = vunpack.c.l.s4 1966171168
  %v796 = vunpack.c.0.s8 %v795
  %v797 = vlaneseq
  %v798 = vshrl.u32 %v797, 7
  %v799 = vsub.s32 %v796, %v798
  %v800 = vrot.slane %v792, %v799
  %v801 = vcombine.high %v800, %v800
  %v803 = vunpack.c.l.s4 1966171168
  %v804 = vunpack.c.0.s8 %v803
  %v805 = vlaneseq
  %v806 = vshrl.u32 %v805, 7
  %v807 = vsub.s32 %v804, %v806
  %v808 = vrot.slane %v800, %v807
  %v810 = vunpack.c.l.s4 1966171168
  %v811 = vunpack.c.0.s8 %v810
  %v812 = vlaneseq
  %v813 = vshrl.u32 %v812, 7
  %v814 = vsub.s32 %v811, %v813
  %v815 = vrot.slane %v801, %v814
  %v816 = vcombine.high %v808, %v808
  %v817 = vcombine.high %v815, %v815
  %v819 = vsel %vm46, %v790, 0
  %v822 = vand.u32 %v808, %v52
  %v825 = vand.u32 %v815, %v52
  %v828 = vand.u32 %v816, %v52
  %v831 = vand.u32 %v817, %v52
  %833 = vmatprep.subr.bf16.mxu0 %v825
  %834 = vmatpush1.bf16.msra.mxu0 %v822
  %835 = vmatprep.subr.bf16.mxu0 0
  %836 = vmatpush1.bf16.msra.mxu0 0
  %837 = vmatprep.subr.bf16.mxu0 0
  %838 = vmatpush1.bf16.msra.mxu0 0
  %839 = vmatprep.subr.bf16.mxu0 0
  %840 = vmatpush1.bf16.msra.mxu0 0
  %841 = vmatprep.subr.bf16.mxu0 0
  %842 = vmatpush1.bf16.msra.mxu0 0
  %843 = vmatprep.subr.bf16.mxu0 0
  %844 = vmatpush1.bf16.msra.mxu0 0
  %845 = vmatprep.subr.bf16.mxu0 0
  %846 = vmatpush1.bf16.msra.mxu0 0
  %847 = vmatprep.subr.bf16.mxu0 0
  %848 = vmatpush1.bf16.msra.mxu0 0
  %849 = vmatprep.subr.bf16.mxu0 0
  %850 = vmatpush1.bf16.msra.mxu0 0
  %851 = vmatprep.subr.bf16.mxu0 0
  %852 = vmatpush1.bf16.msra.mxu0 0
  %853 = vmatprep.subr.bf16.mxu0 0
  %854 = vmatpush1.bf16.msra.mxu0 0
  %855 = vmatprep.subr.bf16.mxu0 0
  %856 = vmatpush1.bf16.msra.mxu0 0
  %857 = vmatprep.subr.bf16.mxu0 0
  %858 = vmatpush1.bf16.msra.mxu0 0
  %859 = vmatprep.subr.bf16.mxu0 0
  %860 = vmatpush1.bf16.msra.mxu0 0
  %861 = vmatprep.subr.bf16.mxu0 0
  %862 = vmatpush1.bf16.msra.mxu0 0
  %863 = vmatprep.subr.bf16.mxu0 0
  %864 = vmatpush1.bf16.msra.mxu0 0
  %865 = vmatprep.mubr.bf16.mxu0 0
  %866 = vmatmul.mubr.bf16.gmra.mrb[0].mxu0 %v819
  %v867 = vpop.f32.mrb[0].mxu0
  %v868 = vadd.f32 0.0, %v867
  %v869 = vpop.f32.mrb[0].mxu0
  %v870 = vadd.f32 0.0, %v869
  %v871 = vpop.f32.mrb[0].mxu0
  %v872 = vpop.f32.mrb[0].mxu0
  %873 = vdwg.mxu0
  %874 = vmatprep.subr.bf16.mxu0 %v831
  %875 = vmatpush1.bf16.msra.mxu0 %v828
  %876 = vmatprep.subr.bf16.mxu0 0
  %877 = vmatpush1.bf16.msra.mxu0 0
  %878 = vmatprep.subr.bf16.mxu0 0
  %879 = vmatpush1.bf16.msra.mxu0 0
  %880 = vmatprep.subr.bf16.mxu0 0
  %881 = vmatpush1.bf16.msra.mxu0 0
  %882 = vmatprep.subr.bf16.mxu0 0
  %883 = vmatpush1.bf16.msra.mxu0 0
  %884 = vmatprep.subr.bf16.mxu0 0
  %885 = vmatpush1.bf16.msra.mxu0 0
  %886 = vmatprep.subr.bf16.mxu0 0
  %887 = vmatpush1.bf16.msra.mxu0 0
  %888 = vmatprep.subr.bf16.mxu0 0
  %889 = vmatpush1.bf16.msra.mxu0 0
  %890 = vmatprep.subr.bf16.mxu0 0
  %891 = vmatpush1.bf16.msra.mxu0 0
  %892 = vmatprep.subr.bf16.mxu0 0
  %893 = vmatpush1.bf16.msra.mxu0 0
  %894 = vmatprep.subr.bf16.mxu0 0
  %895 = vmatpush1.bf16.msra.mxu0 0
  %896 = vmatprep.subr.bf16.mxu0 0
  %897 = vmatpush1.bf16.msra.mxu0 0
  %898 = vmatprep.subr.bf16.mxu0 0
  %899 = vmatpush1.bf16.msra.mxu0 0
  %900 = vmatprep.subr.bf16.mxu0 0
  %901 = vmatpush1.bf16.msra.mxu0 0
  %902 = vmatprep.subr.bf16.mxu0 0
  %903 = vmatpush1.bf16.msra.mxu0 0
  %904 = vmatprep.subr.bf16.mxu0 0
  %905 = vmatpush1.bf16.msra.mxu0 0
  %906 = vmatprep.mubr.bf16.mxu0 0
  %907 = vmatmul.mubr.bf16.gmra.mrb[0].mxu0 %v819
  %v908 = vpop.f32.mrb[0].mxu0
  %v909 = vadd.f32 0.0, %v908
  %v910 = vpop.f32.mrb[0].mxu0
  %v911 = vadd.f32 0.0, %v910
  %v912 = vpop.f32.mrb[0].mxu0
  %v913 = vpop.f32.mrb[0].mxu0
  %914 = vdwg.mxu0
  %v915 = vadd.f32 %v785, %v868
  %v916 = vadd.f32 %v786, %v870
  %v917 = vadd.f32 %v787, %v909
  %v918 = vadd.f32 %v788, %v911
  %s919 = scalar_lea.vmem %s1, 14
  %v920 = vld [vmem:[%s919] sm:$0x3]
  %s921 = scalar_lea.vmem %s0, 28
  %v922 = vld [vmem:[%s921] sm:$0xf]
  %v925 = vunpack.c.l.s4 1966171168
  %v926 = vunpack.c.0.s8 %v925
  %v927 = vlaneseq
  %v928 = vshrl.u32 %v927, 7
  %v929 = vsub.s32 %v926, %v928
  %v930 = vrot.slane %v922, %v929
  %v931 = vcombine.high %v930, %v930
  %v933 = vunpack.c.l.s4 1966171168
  %v934 = vunpack.c.0.s8 %v933
  %v935 = vlaneseq
  %v936 = vshrl.u32 %v935, 7
  %v937 = vsub.s32 %v934, %v936
  %v938 = vrot.slane %v930, %v937
  %v940 = vunpack.c.l.s4 1966171168
  %v941 = vunpack.c.0.s8 %v940
  %v942 = vlaneseq
  %v943 = vshrl.u32 %v942, 7
  %v944 = vsub.s32 %v941, %v943
  %v945 = vrot.slane %v931, %v944
  %v946 = vcombine.high %v938, %v938
  %v947 = vcombine.high %v945, %v945
  %v949 = vsel %vm46, %v920, 0
  %v952 = vand.u32 %v938, %v52
  %v955 = vand.u32 %v945, %v52
  %v958 = vand.u32 %v946, %v52
  %v961 = vand.u32 %v947, %v52
  %963 = vmatprep.subr.bf16.mxu0 %v955
  %964 = vmatpush1.bf16.msra.mxu0 %v952
  %965 = vmatprep.subr.bf16.mxu0 0
  %966 = vmatpush1.bf16.msra.mxu0 0
  %967 = vmatprep.subr.bf16.mxu0 0
  %968 = vmatpush1.bf16.msra.mxu0 0
  %969 = vmatprep.subr.bf16.mxu0 0
  %970 = vmatpush1.bf16.msra.mxu0 0
  %971 = vmatprep.subr.bf16.mxu0 0
  %972 = vmatpush1.bf16.msra.mxu0 0
  %973 = vmatprep.subr.bf16.mxu0 0
  %974 = vmatpush1.bf16.msra.mxu0 0
  %975 = vmatprep.subr.bf16.mxu0 0
  %976 = vmatpush1.bf16.msra.mxu0 0
  %977 = vmatprep.subr.bf16.mxu0 0
  %978 = vmatpush1.bf16.msra.mxu0 0
  %979 = vmatprep.subr.bf16.mxu0 0
  %980 = vmatpush1.bf16.msra.mxu0 0
  %981 = vmatprep.subr.bf16.mxu0 0
  %982 = vmatpush1.bf16.msra.mxu0 0
  %983 = vmatprep.subr.bf16.mxu0 0
  %984 = vmatpush1.bf16.msra.mxu0 0
  %985 = vmatprep.subr.bf16.mxu0 0
  %986 = vmatpush1.bf16.msra.mxu0 0
  %987 = vmatprep.subr.bf16.mxu0 0
  %988 = vmatpush1.bf16.msra.mxu0 0
  %989 = vmatprep.subr.bf16.mxu0 0
  %990 = vmatpush1.bf16.msra.mxu0 0
  %991 = vmatprep.subr.bf16.mxu0 0
  %992 = vmatpush1.bf16.msra.mxu0 0
  %993 = vmatprep.subr.bf16.mxu0 0
  %994 = vmatpush1.bf16.msra.mxu0 0
  %995 = vmatprep.mubr.bf16.mxu0 0
  %996 = vmatmul.mubr.bf16.gmra.mrb[0].mxu0 %v949
  %v997 = vpop.f32.mrb[0].mxu0
  %v998 = vadd.f32 0.0, %v997
  %v999 = vpop.f32.mrb[0].mxu0
  %v1000 = vadd.f32 0.0, %v999
  %v1001 = vpop.f32.mrb[0].mxu0
  %v1002 = vpop.f32.mrb[0].mxu0
  %1003 = vdwg.mxu0
  %1004 = vmatprep.subr.bf16.mxu0 %v961
  %1005 = vmatpush1.bf16.msra.mxu0 %v958
  %1006 = vmatprep.subr.bf16.mxu0 0
  %1007 = vmatpush1.bf16.msra.mxu0 0
  %1008 = vmatprep.subr.bf16.mxu0 0
  %1009 = vmatpush1.bf16.msra.mxu0 0
  %1010 = vmatprep.subr.bf16.mxu0 0
  %1011 = vmatpush1.bf16.msra.mxu0 0
  %1012 = vmatprep.subr.bf16.mxu0 0
  %1013 = vmatpush1.bf16.msra.mxu0 0
  %1014 = vmatprep.subr.bf16.mxu0 0
  %1015 = vmatpush1.bf16.msra.mxu0 0
  %1016 = vmatprep.subr.bf16.mxu0 0
  %1017 = vmatpush1.bf16.msra.mxu0 0
  %1018 = vmatprep.subr.bf16.mxu0 0
  %1019 = vmatpush1.bf16.msra.mxu0 0
  %1020 = vmatprep.subr.bf16.mxu0 0
  %1021 = vmatpush1.bf16.msra.mxu0 0
  %1022 = vmatprep.subr.bf16.mxu0 0
  %1023 = vmatpush1.bf16.msra.mxu0 0
  %1024 = vmatprep.subr.bf16.mxu0 0
  %1025 = vmatpush1.bf16.msra.mxu0 0
  %1026 = vmatprep.subr.bf16.mxu0 0
  %1027 = vmatpush1.bf16.msra.mxu0 0
  %1028 = vmatprep.subr.bf16.mxu0 0
  %1029 = vmatpush1.bf16.msra.mxu0 0
  %1030 = vmatprep.subr.bf16.mxu0 0
  %1031 = vmatpush1.bf16.msra.mxu0 0
  %1032 = vmatprep.subr.bf16.mxu0 0
  %1033 = vmatpush1.bf16.msra.mxu0 0
  %1034 = vmatprep.subr.bf16.mxu0 0
  %1035 = vmatpush1.bf16.msra.mxu0 0
  %1036 = vmatprep.mubr.bf16.mxu0 0
  %1037 = vmatmul.mubr.bf16.gmra.mrb[0].mxu0 %v949
  %v1038 = vpop.f32.mrb[0].mxu0
  %v1039 = vadd.f32 0.0, %v1038
  %v1040 = vpop.f32.mrb[0].mxu0
  %v1041 = vadd.f32 0.0, %v1040
  %v1042 = vpop.f32.mrb[0].mxu0
  %v1043 = vpop.f32.mrb[0].mxu0
  %1044 = vdwg.mxu0
  %v1045 = vadd.f32 %v915, %v998
  %v1046 = vadd.f32 %v916, %v1000
  %v1047 = vadd.f32 %v917, %v1039
  %v1048 = vadd.f32 %v918, %v1041
  %s1049 = scalar_lea.vmem %s1, 16
  %v1050 = vld [vmem:[%s1049] sm:$0x3]
  %s1051 = scalar_lea.vmem %s0, 32
  %v1052 = vld [vmem:[%s1051] sm:$0xf]
  %v1055 = vunpack.c.l.s4 1966171168
  %v1056 = vunpack.c.0.s8 %v1055
  %v1057 = vlaneseq
  %v1058 = vshrl.u32 %v1057, 7
  %v1059 = vsub.s32 %v1056, %v1058
  %v1060 = vrot.slane %v1052, %v1059
  %v1061 = vcombine.high %v1060, %v1060
  %v1063 = vunpack.c.l.s4 1966171168
  %v1064 = vunpack.c.0.s8 %v1063
  %v1065 = vlaneseq
  %v1066 = vshrl.u32 %v1065, 7
  %v1067 = vsub.s32 %v1064, %v1066
  %v1068 = vrot.slane %v1060, %v1067
  %v1070 = vunpack.c.l.s4 1966171168
  %v1071 = vunpack.c.0.s8 %v1070
  %v1072 = vlaneseq
  %v1073 = vshrl.u32 %v1072, 7
  %v1074 = vsub.s32 %v1071, %v1073
  %v1075 = vrot.slane %v1061, %v1074
  %v1076 = vcombine.high %v1068, %v1068
  %v1077 = vcombine.high %v1075, %v1075
  %v1079 = vsel %vm46, %v1050, 0
  %v1082 = vand.u32 %v1068, %v52
  %v1085 = vand.u32 %v1075, %v52
  %v1088 = vand.u32 %v1076, %v52
  %v1091 = vand.u32 %v1077, %v52
  %1093 = vmatprep.subr.bf16.mxu0 %v1085
  %1094 = vmatpush1.bf16.msra.mxu0 %v1082
  %1095 = vmatprep.subr.bf16.mxu0 0
  %1096 = vmatpush1.bf16.msra.mxu0 0
  %1097 = vmatprep.subr.bf16.mxu0 0
  %1098 = vmatpush1.bf16.msra.mxu0 0
  %1099 = vmatprep.subr.bf16.mxu0 0
  %1100 = vmatpush1.bf16.msra.mxu0 0
  %1101 = vmatprep.subr.bf16.mxu0 0
  %1102 = vmatpush1.bf16.msra.mxu0 0
  %1103 = vmatprep.subr.bf16.mxu0 0
  %1104 = vmatpush1.bf16.msra.mxu0 0
  %1105 = vmatprep.subr.bf16.mxu0 0
  %1106 = vmatpush1.bf16.msra.mxu0 0
  %1107 = vmatprep.subr.bf16.mxu0 0
  %1108 = vmatpush1.bf16.msra.mxu0 0
  %1109 = vmatprep.subr.bf16.mxu0 0
  %1110 = vmatpush1.bf16.msra.mxu0 0
  %1111 = vmatprep.subr.bf16.mxu0 0
  %1112 = vmatpush1.bf16.msra.mxu0 0
  %1113 = vmatprep.subr.bf16.mxu0 0
  %1114 = vmatpush1.bf16.msra.mxu0 0
  %1115 = vmatprep.subr.bf16.mxu0 0
  %1116 = vmatpush1.bf16.msra.mxu0 0
  %1117 = vmatprep.subr.bf16.mxu0 0
  %1118 = vmatpush1.bf16.msra.mxu0 0
  %1119 = vmatprep.subr.bf16.mxu0 0
  %1120 = vmatpush1.bf16.msra.mxu0 0
  %1121 = vmatprep.subr.bf16.mxu0 0
  %1122 = vmatpush1.bf16.msra.mxu0 0
  %1123 = vmatprep.subr.bf16.mxu0 0
  %1124 = vmatpush1.bf16.msra.mxu0 0
  %1125 = vmatprep.mubr.bf16.mxu0 0
  %1126 = vmatmul.mubr.bf16.gmra.mrb[0].mxu0 %v1079
  %v1127 = vpop.f32.mrb[0].mxu0
  %v1128 = vadd.f32 0.0, %v1127
  %v1129 = vpop.f32.mrb[0].mxu0
  %v1130 = vadd.f32 0.0, %v1129
  %v1131 = vpop.f32.mrb[0].mxu0
  %v1132 = vpop.f32.mrb[0].mxu0
  %1133 = vdwg.mxu0
  %1134 = vmatprep.subr.bf16.mxu0 %v1091
  %1135 = vmatpush1.bf16.msra.mxu0 %v1088
  %1136 = vmatprep.subr.bf16.mxu0 0
  %1137 = vmatpush1.bf16.msra.mxu0 0
  %1138 = vmatprep.subr.bf16.mxu0 0
  %1139 = vmatpush1.bf16.msra.mxu0 0
  %1140 = vmatprep.subr.bf16.mxu0 0
  %1141 = vmatpush1.bf16.msra.mxu0 0
  %1142 = vmatprep.subr.bf16.mxu0 0
  %1143 = vmatpush1.bf16.msra.mxu0 0
  %1144 = vmatprep.subr.bf16.mxu0 0
  %1145 = vmatpush1.bf16.msra.mxu0 0
  %1146 = vmatprep.subr.bf16.mxu0 0
  %1147 = vmatpush1.bf16.msra.mxu0 0
  %1148 = vmatprep.subr.bf16.mxu0 0
  %1149 = vmatpush1.bf16.msra.mxu0 0
  %1150 = vmatprep.subr.bf16.mxu0 0
  %1151 = vmatpush1.bf16.msra.mxu0 0
  %1152 = vmatprep.subr.bf16.mxu0 0
  %1153 = vmatpush1.bf16.msra.mxu0 0
  %1154 = vmatprep.subr.bf16.mxu0 0
  %1155 = vmatpush1.bf16.msra.mxu0 0
  %1156 = vmatprep.subr.bf16.mxu0 0
  %1157 = vmatpush1.bf16.msra.mxu0 0
  %1158 = vmatprep.subr.bf16.mxu0 0
  %1159 = vmatpush1.bf16.msra.mxu0 0
  %1160 = vmatprep.subr.bf16.mxu0 0
  %1161 = vmatpush1.bf16.msra.mxu0 0
  %1162 = vmatprep.subr.bf16.mxu0 0
  %1163 = vmatpush1.bf16.msra.mxu0 0
  %1164 = vmatprep.subr.bf16.mxu0 0
  %1165 = vmatpush1.bf16.msra.mxu0 0
  %1166 = vmatprep.mubr.bf16.mxu0 0
  %1167 = vmatmul.mubr.bf16.gmra.mrb[0].mxu0 %v1079
  %v1168 = vpop.f32.mrb[0].mxu0
  %v1169 = vadd.f32 0.0, %v1168
  %v1170 = vpop.f32.mrb[0].mxu0
  %v1171 = vadd.f32 0.0, %v1170
  %v1172 = vpop.f32.mrb[0].mxu0
  %v1173 = vpop.f32.mrb[0].mxu0
  %1174 = vdwg.mxu0
  %v1175 = vadd.f32 %v1045, %v1128
  %v1176 = vadd.f32 %v1046, %v1130
  %v1177 = vadd.f32 %v1047, %v1169
  %v1178 = vadd.f32 %v1048, %v1171
  %v1179 = vld [vmem:[%s2] sm:$0xf]
  %1181 = vset.pattern.permute.xlu0 0
  %1182 = vperm.xlu0 %1181, %v1179
  %v1183 = vpop.permute.xlu0 %1182
  %v1185 = vadd.f32 %v1175, %v1183
  %v1186 = vadd.f32 %v1176, %v1183
  %v1187 = vadd.f32 %v1177, %v1183
  %v1188 = vadd.f32 %v1178, %v1183
  %v1189 = vmax.f32 %v1185, 0.0
  %v1190 = vmax.f32 %v1186, 0.0
  %v1191 = vmax.f32 %v1187, 0.0
  %v1192 = vmax.f32 %v1188, 0.0
  %v1193 = vpack.c.bf16 %v1189, %v1189
  %v1194 = vpack.c.bf16 %v1190, %v1190
  %v1195 = vpack.c.bf16 %v1191, %v1191
  %v1196 = vpack.c.bf16 %v1192, %v1192
  %v1201 = vcombine.low %v1193, %v1194
  %v1202 = vcombine.low %v1195, %v1196
  %v1204 = vunpack.c.l.s4 1983009808
  %v1205 = vunpack.c.0.s8 %v1204
  %v1206 = vlaneseq
  %v1207 = vshrl.u32 %v1206, 7
  %v1208 = vsub.s32 %v1205, %v1207
  %v1209 = vrot.slane %v1201, %v1208
  %v1211 = vunpack.c.l.s4 1983009808
  %v1212 = vunpack.c.0.s8 %v1211
  %v1213 = vlaneseq
  %v1214 = vshrl.u32 %v1213, 7
  %v1215 = vsub.s32 %v1212, %v1214
  %v1216 = vrot.slane %v1202, %v1215
  %v1217 = vcombine.low %v1209, %v1216
  %1219 = vst [vmem:[%s3] sm:$0xff] %v1217
  // Predicated region
  $region14: #{unet_forward.15} parent=0 // pred_check
    _
  $region15: #{unet_forward.15} parent=0 // pred_check_branch
    %1221 = sbr.rel (0) target = $region17
  $region16: #{unet_forward.15} parent=0 // pred_region
    _
  $region17: #{unet_forward.15} parent=0 // pred_fallthru
    _
  // Predicated region
  $region18: #{unet_forward.15} parent=0 // pred_check
    _
  $region19: #{unet_forward.15} parent=0 // pred_check_branch
    %1223 = sbr.rel (0) target = $region21
  $region20: #{unet_forward.15} parent=0 // pred_region
    _
  $region21: #{unet_forward.15} parent=0 // pred_fallthru
    _

// kernel: unet_forward.16
$region0: #{unet_forward.16}
  #allocation0 [shape = 'u32[]', space=smem, size = 0x4, offset = 0x4, fixed_abs, tag = 'smem constant byte address 0x4 - core index']
  #allocation1 [shape = 'u32[144,128]{1,0:T(1,128)}', space=vmem, size = 0x12000, scoped, tag = 'internal scratch']
  %s0 = inlined_call_operand.vmem [shape: bf16[9,4,512], index: 0, kind: input, shape index: {}]
  %s1 = inlined_call_operand.vmem [shape: bf16[9,4,4], index: 1, kind: input, shape index: {}]
  %s2 = inlined_call_operand.vmem [shape: f32[4,1], index: 2, kind: input, shape index: {}]
  %s3 = inlined_call_operand.vmem [shape: bf16[4,512], index: 3, kind: output, shape index: {}]
  %s4 = sld [smem:[#allocation0]]
  $region22: #{unet_forward.16} parent=0
    _
  %s6 = ssub.s32 1, %s4
  %s7 = scalar_select 0, %s6, %s4
  // Predicated region
  $region2: #{unet_forward.16} parent=0 // pred_check
    _
  $region3: #{unet_forward.16} parent=0 // pred_check_branch
    %9 = sbr.rel (0) target = $region5
  $region4: #{unet_forward.16} parent=0 // pred_region
    _
  $region5: #{unet_forward.16} parent=0 // pred_fallthru
    _
  // Predicated region
  $region6: #{unet_forward.16} parent=0 // pred_check
    _
  $region7: #{unet_forward.16} parent=0 // pred_check_branch
    %11 = sbr.rel (0) target = $region9
  $region8: #{unet_forward.16} parent=0 // pred_region
    _
  $region9: #{unet_forward.16} parent=0 // pred_fallthru
    _
  // Predicated region
  $region10: #{unet_forward.16} parent=0 // pred_check
    _
  $region11: #{unet_forward.16} parent=0 // pred_check_branch
    %13 = sbr.rel (0) target = $region13
  $region12: #{unet_forward.16} parent=0 // pred_region
    _
  $region13: #{unet_forward.16} parent=0 // pred_fallthru
    _
  %v15 = vld [vmem:[%s1] sm:$0x3]
  %v16 = vld [vmem:[%s0] sm:$0xff]
  %s17 = scalar_lea.vmem %s1, 2
  %v18 = vld [vmem:[%s17] sm:$0x3]
  %s19 = scalar_lea.vmem %s0, 8
  %v20 = vld [vmem:[%s19] sm:$0xff]
  %v22 = vcombine.high %v20, %v20
  %v24 = vunpack.c.l.s4 1983009808
  %v25 = vunpack.c.0.s8 %v24
  %v26 = vlaneseq
  %v27 = vshrl.u32 %v26, 7
  %v28 = vsub.s32 %v25, %v27
  %v29 = vrot.slane %v20, %v28
  %v31 = vunpack.c.l.s4 1983009808
  %v32 = vunpack.c.0.s8 %v31
  %v33 = vlaneseq
  %v34 = vshrl.u32 %v33, 7
  %v35 = vsub.s32 %v32, %v34
  %v36 = vrot.slane %v22, %v35
  %v37 = vcombine.high %v29, %v29
  %v38 = vcombine.high %v36, %v36
  %vm39 = vcmask 31744
  %v41 = vsel %vm39, %v18, 0
  %vm43 = vcmask 1041408
  %v45 = vsel %vm43, %v29, 0
  %v48 = vsel %vm43, %v37, 0
  %v51 = vsel %vm43, %v36, 0
  %v54 = vsel %vm43, %v38, 0
  %56 = vmatprep.subr.bf16.mxu0 %v48
  %57 = vmatpush1.bf16.msra.mxu0 %v45
  %58 = vmatprep.subr.bf16.mxu0 0
  %59 = vmatpush1.bf16.msra.mxu0 0
  %60 = vmatprep.subr.bf16.mxu0 0
  %61 = vmatpush1.bf16.msra.mxu0 0
  %62 = vmatprep.subr.bf16.mxu0 0
  %63 = vmatpush1.bf16.msra.mxu0 0
  %64 = vmatprep.subr.bf16.mxu0 0
  %65 = vmatpush1.bf16.msra.mxu0 0
  %66 = vmatprep.subr.bf16.mxu0 0
  %67 = vmatpush1.bf16.msra.mxu0 0
  %68 = vmatprep.subr.bf16.mxu0 0
  %69 = vmatpush1.bf16.msra.mxu0 0
  %70 = vmatprep.subr.bf16.mxu0 0
  %71 = vmatpush1.bf16.msra.mxu0 0
  %72 = vmatprep.subr.bf16.mxu0 0
  %73 = vmatpush1.bf16.msra.mxu0 0
  %74 = vmatprep.subr.bf16.mxu0 0
  %75 = vmatpush1.bf16.msra.mxu0 0
  %76 = vmatprep.subr.bf16.mxu0 0
  %77 = vmatpush1.bf16.msra.mxu0 0
  %78 = vmatprep.subr.bf16.mxu0 0
  %79 = vmatpush1.bf16.msra.mxu0 0
  %80 = vmatprep.subr.bf16.mxu0 0
  %81 = vmatpush1.bf16.msra.mxu0 0
  %82 = vmatprep.subr.bf16.mxu0 0
  %83 = vmatpush1.bf16.msra.mxu0 0
  %84 = vmatprep.subr.bf16.mxu0 0
  %85 = vmatpush1.bf16.msra.mxu0 0
  %86 = vmatprep.subr.bf16.mxu0 0
  %87 = vmatpush1.bf16.msra.mxu0 0
  %88 = vmatprep.mubr.bf16.mxu0 0
  %89 = vmatmul.mubr.bf16.gmra.mrb[0].mxu0 %v41
  %v90 = vpop.f32.mrb[0].mxu0
  %v91 = vadd.f32 0.0, %v90
  %v92 = vpop.f32.mrb[0].mxu0
  %v93 = vadd.f32 0.0, %v92
  %v94 = vpop.f32.mrb[0].mxu0
  %v95 = vpop.f32.mrb[0].mxu0
  %96 = vdwg.mxu0
  %97 = vmatprep.subr.bf16.mxu0 %v54
  %98 = vmatpush1.bf16.msra.mxu0 %v51
  %99 = vmatprep.subr.bf16.mxu0 0
  %100 = vmatpush1.bf16.msra.mxu0 0
  %101 = vmatprep.subr.bf16.mxu0 0
  %102 = vmatpush1.bf16.msra.mxu0 0
  %103 = vmatprep.subr.bf16.mxu0 0
  %104 = vmatpush1.bf16.msra.mxu0 0
  %105 = vmatprep.subr.bf16.mxu0 0
  %106 = vmatpush1.bf16.msra.mxu0 0
  %107 = vmatprep.subr.bf16.mxu0 0
  %108 = vmatpush1.bf16.msra.mxu0 0
  %109 = vmatprep.subr.bf16.mxu0 0
  %110 = vmatpush1.bf16.msra.mxu0 0
  %111 = vmatprep.subr.bf16.mxu0 0
  %112 = vmatpush1.bf16.msra.mxu0 0
  %113 = vmatprep.subr.bf16.mxu0 0
  %114 = vmatpush1.bf16.msra.mxu0 0
  %115 = vmatprep.subr.bf16.mxu0 0
  %116 = vmatpush1.bf16.msra.mxu0 0
  %117 = vmatprep.subr.bf16.mxu0 0
  %118 = vmatpush1.bf16.msra.mxu0 0
  %119 = vmatprep.subr.bf16.mxu0 0
  %120 = vmatpush1.bf16.msra.mxu0 0
  %121 = vmatprep.subr.bf16.mxu0 0
  %122 = vmatpush1.bf16.msra.mxu0 0
  %123 = vmatprep.subr.bf16.mxu0 0
  %124 = vmatpush1.bf16.msra.mxu0 0
  %125 = vmatprep.subr.bf16.mxu0 0
  %126 = vmatpush1.bf16.msra.mxu0 0
  %127 = vmatprep.subr.bf16.mxu0 0
  %128 = vmatpush1.bf16.msra.mxu0 0
  %129 = vmatprep.mubr.bf16.mxu0 0
  %130 = vmatmul.mubr.bf16.gmra.mrb[0].mxu0 %v41
  %v131 = vpop.f32.mrb[0].mxu0
  %v132 = vadd.f32 0.0, %v131
  %v133 = vpop.f32.mrb[0].mxu0
  %v134 = vadd.f32 0.0, %v133
  %v135 = vpop.f32.mrb[0].mxu0
  %v136 = vpop.f32.mrb[0].mxu0
  %137 = vdwg.mxu0
  %v139 = vcombine.high %v16, %v16
  %v141 = vunpack.c.l.s4 1983009808
  %v142 = vunpack.c.0.s8 %v141
  %v143 = vlaneseq
  %v144 = vshrl.u32 %v143, 7
  %v145 = vsub.s32 %v142, %v144
  %v146 = vrot.slane %v16, %v145
  %v148 = vunpack.c.l.s4 1983009808
  %v149 = vunpack.c.0.s8 %v148
  %v150 = vlaneseq
  %v151 = vshrl.u32 %v150, 7
  %v152 = vsub.s32 %v149, %v151
  %v153 = vrot.slane %v139, %v152
  %v154 = vcombine.high %v146, %v146
  %v155 = vcombine.high %v153, %v153
  %v157 = vsel %vm39, %v15, 0
  %v160 = vsel %vm43, %v146, 0
  %v163 = vsel %vm43, %v154, 0
  %v166 = vsel %vm43, %v153, 0
  %v169 = vsel %vm43, %v155, 0
  %171 = vmatprep.subr.bf16.mxu0 %v163
  %172 = vmatpush1.bf16.msra.mxu0 %v160
  %173 = vmatprep.subr.bf16.mxu0 0
  %174 = vmatpush1.bf16.msra.mxu0 0
  %175 = vmatprep.subr.bf16.mxu0 0
  %176 = vmatpush1.bf16.msra.mxu0 0
  %177 = vmatprep.subr.bf16.mxu0 0
  %178 = vmatpush1.bf16.msra.mxu0 0
  %179 = vmatprep.subr.bf16.mxu0 0
  %180 = vmatpush1.bf16.msra.mxu0 0
  %181 = vmatprep.subr.bf16.mxu0 0
  %182 = vmatpush1.bf16.msra.mxu0 0
  %183 = vmatprep.subr.bf16.mxu0 0
  %184 = vmatpush1.bf16.msra.mxu0 0
  %185 = vmatprep.subr.bf16.mxu0 0
  %186 = vmatpush1.bf16.msra.mxu0 0
  %187 = vmatprep.subr.bf16.mxu0 0
  %188 = vmatpush1.bf16.msra.mxu0 0
  %189 = vmatprep.subr.bf16.mxu0 0
  %190 = vmatpush1.bf16.msra.mxu0 0
  %191 = vmatprep.subr.bf16.mxu0 0
  %192 = vmatpush1.bf16.msra.mxu0 0
  %193 = vmatprep.subr.bf16.mxu0 0
  %194 = vmatpush1.bf16.msra.mxu0 0
  %195 = vmatprep.subr.bf16.mxu0 0
  %196 = vmatpush1.bf16.msra.mxu0 0
  %197 = vmatprep.subr.bf16.mxu0 0
  %198 = vmatpush1.bf16.msra.mxu0 0
  %199 = vmatprep.subr.bf16.mxu0 0
  %200 = vmatpush1.bf16.msra.mxu0 0
  %201 = vmatprep.subr.bf16.mxu0 0
  %202 = vmatpush1.bf16.msra.mxu0 0
  %203 = vmatprep.mubr.bf16.mxu0 0
  %204 = vmatmul.mubr.bf16.gmra.mrb[0].mxu0 %v157
  %v205 = vpop.f32.mrb[0].mxu0
  %v206 = vadd.f32 %v91, %v205
  %v207 = vpop.f32.mrb[0].mxu0
  %v208 = vadd.f32 %v93, %v207
  %v209 = vpop.f32.mrb[0].mxu0
  %v210 = vpop.f32.mrb[0].mxu0
  %211 = vdwg.mxu0
  %212 = vmatprep.subr.bf16.mxu0 %v169
  %213 = vmatpush1.bf16.msra.mxu0 %v166
  %214 = vmatprep.subr.bf16.mxu0 0
  %215 = vmatpush1.bf16.msra.mxu0 0
  %216 = vmatprep.subr.bf16.mxu0 0
  %217 = vmatpush1.bf16.msra.mxu0 0
  %218 = vmatprep.subr.bf16.mxu0 0
  %219 = vmatpush1.bf16.msra.mxu0 0
  %220 = vmatprep.subr.bf16.mxu0 0
  %221 = vmatpush1.bf16.msra.mxu0 0
  %222 = vmatprep.subr.bf16.mxu0 0
  %223 = vmatpush1.bf16.msra.mxu0 0
  %224 = vmatprep.subr.bf16.mxu0 0
  %225 = vmatpush1.bf16.msra.mxu0 0
  %226 = vmatprep.subr.bf16.mxu0 0
  %227 = vmatpush1.bf16.msra.mxu0 0
  %228 = vmatprep.subr.bf16.mxu0 0
  %229 = vmatpush1.bf16.msra.mxu0 0
  %230 = vmatprep.subr.bf16.mxu0 0
  %231 = vmatpush1.bf16.msra.mxu0 0
  %232 = vmatprep.subr.bf16.mxu0 0
  %233 = vmatpush1.bf16.msra.mxu0 0
  %234 = vmatprep.subr.bf16.mxu0 0
  %235 = vmatpush1.bf16.msra.mxu0 0
  %236 = vmatprep.subr.bf16.mxu0 0
  %237 = vmatpush1.bf16.msra.mxu0 0
  %238 = vmatprep.subr.bf16.mxu0 0
  %239 = vmatpush1.bf16.msra.mxu0 0
  %240 = vmatprep.subr.bf16.mxu0 0
  %241 = vmatpush1.bf16.msra.mxu0 0
  %242 = vmatprep.subr.bf16.mxu0 0
  %243 = vmatpush1.bf16.msra.mxu0 0
  %244 = vmatprep.mubr.bf16.mxu0 0
  %245 = vmatmul.mubr.bf16.gmra.mrb[0].mxu0 %v157
  %v246 = vpop.f32.mrb[0].mxu0
  %v247 = vadd.f32 %v132, %v246
  %v248 = vpop.f32.mrb[0].mxu0
  %v249 = vadd.f32 %v134, %v248
  %v250 = vpop.f32.mrb[0].mxu0
  %v251 = vpop.f32.mrb[0].mxu0
  %252 = vdwg.mxu0
  %s253 = scalar_lea.vmem %s1, 4
  %v254 = vld [vmem:[%s253] sm:$0x3]
  %s255 = scalar_lea.vmem %s0, 16
  %v256 = vld [vmem:[%s255] sm:$0xff]
  %v258 = vcombine.high %v256, %v256
  %v260 = vunpack.c.l.s4 1983009808
  %v261 = vunpack.c.0.s8 %v260
  %v262 = vlaneseq
  %v263 = vshrl.u32 %v262, 7
  %v264 = vsub.s32 %v261, %v263
  %v265 = vrot.slane %v256, %v264
  %v267 = vunpack.c.l.s4 1983009808
  %v268 = vunpack.c.0.s8 %v267
  %v269 = vlaneseq
  %v270 = vshrl.u32 %v269, 7
  %v271 = vsub.s32 %v268, %v270
  %v272 = vrot.slane %v258, %v271
  %v273 = vcombine.high %v265, %v265
  %v274 = vcombine.high %v272, %v272
  %v276 = vsel %vm39, %v254, 0
  %v279 = vsel %vm43, %v265, 0
  %v282 = vsel %vm43, %v273, 0
  %v285 = vsel %vm43, %v272, 0
  %v288 = vsel %vm43, %v274, 0
  %290 = vmatprep.subr.bf16.mxu0 %v282
  %291 = vmatpush1.bf16.msra.mxu0 %v279
  %292 = vmatprep.subr.bf16.mxu0 0
  %293 = vmatpush1.bf16.msra.mxu0 0
  %294 = vmatprep.subr.bf16.mxu0 0
  %295 = vmatpush1.bf16.msra.mxu0 0
  %296 = vmatprep.subr.bf16.mxu0 0
  %297 = vmatpush1.bf16.msra.mxu0 0
  %298 = vmatprep.subr.bf16.mxu0 0
  %299 = vmatpush1.bf16.msra.mxu0 0
  %300 = vmatprep.subr.bf16.mxu0 0
  %301 = vmatpush1.bf16.msra.mxu0 0
  %302 = vmatprep.subr.bf16.mxu0 0
  %303 = vmatpush1.bf16.msra.mxu0 0
  %304 = vmatprep.subr.bf16.mxu0 0
  %305 = vmatpush1.bf16.msra.mxu0 0
  %306 = vmatprep.subr.bf16.mxu0 0
  %307 = vmatpush1.bf16.msra.mxu0 0
  %308 = vmatprep.subr.bf16.mxu0 0
  %309 = vmatpush1.bf16.msra.mxu0 0
  %310 = vmatprep.subr.bf16.mxu0 0
  %311 = vmatpush1.bf16.msra.mxu0 0
  %312 = vmatprep.subr.bf16.mxu0 0
  %313 = vmatpush1.bf16.msra.mxu0 0
  %314 = vmatprep.subr.bf16.mxu0 0
  %315 = vmatpush1.bf16.msra.mxu0 0
  %316 = vmatprep.subr.bf16.mxu0 0
  %317 = vmatpush1.bf16.msra.mxu0 0
  %318 = vmatprep.subr.bf16.mxu0 0
  %319 = vmatpush1.bf16.msra.mxu0 0
  %320 = vmatprep.subr.bf16.mxu0 0
  %321 = vmatpush1.bf16.msra.mxu0 0
  %322 = vmatprep.mubr.bf16.mxu0 0
  %323 = vmatmul.mubr.bf16.gmra.mrb[0].mxu0 %v276
  %v324 = vpop.f32.mrb[0].mxu0
  %v325 = vadd.f32 0.0, %v324
  %v326 = vpop.f32.mrb[0].mxu0
  %v327 = vadd.f32 0.0, %v326
  %v328 = vpop.f32.mrb[0].mxu0
  %v329 = vpop.f32.mrb[0].mxu0
  %330 = vdwg.mxu0
  %331 = vmatprep.subr.bf16.mxu0 %v288
  %332 = vmatpush1.bf16.msra.mxu0 %v285
  %333 = vmatprep.subr.bf16.mxu0 0
  %334 = vmatpush1.bf16.msra.mxu0 0
  %335 = vmatprep.subr.bf16.mxu0 0
  %336 = vmatpush1.bf16.msra.mxu0 0
  %337 = vmatprep.subr.bf16.mxu0 0
  %338 = vmatpush1.bf16.msra.mxu0 0
  %339 = vmatprep.subr.bf16.mxu0 0
  %340 = vmatpush1.bf16.msra.mxu0 0
  %341 = vmatprep.subr.bf16.mxu0 0
  %342 = vmatpush1.bf16.msra.mxu0 0
  %343 = vmatprep.subr.bf16.mxu0 0
  %344 = vmatpush1.bf16.msra.mxu0 0
  %345 = vmatprep.subr.bf16.mxu0 0
  %346 = vmatpush1.bf16.msra.mxu0 0
  %347 = vmatprep.subr.bf16.mxu0 0
  %348 = vmatpush1.bf16.msra.mxu0 0
  %349 = vmatprep.subr.bf16.mxu0 0
  %350 = vmatpush1.bf16.msra.mxu0 0
  %351 = vmatprep.subr.bf16.mxu0 0
  %352 = vmatpush1.bf16.msra.mxu0 0
  %353 = vmatprep.subr.bf16.mxu0 0
  %354 = vmatpush1.bf16.msra.mxu0 0
  %355 = vmatprep.subr.bf16.mxu0 0
  %356 = vmatpush1.bf16.msra.mxu0 0
  %357 = vmatprep.subr.bf16.mxu0 0
  %358 = vmatpush1.bf16.msra.mxu0 0
  %359 = vmatprep.subr.bf16.mxu0 0
  %360 = vmatpush1.bf16.msra.mxu0 0
  %361 = vmatprep.subr.bf16.mxu0 0
  %362 = vmatpush1.bf16.msra.mxu0 0
  %363 = vmatprep.mubr.bf16.mxu0 0
  %364 = vmatmul.mubr.bf16.gmra.mrb[0].mxu0 %v276
  %v365 = vpop.f32.mrb[0].mxu0
  %v366 = vadd.f32 0.0, %v365
  %v367 = vpop.f32.mrb[0].mxu0
  %v368 = vadd.f32 0.0, %v367
  %v369 = vpop.f32.mrb[0].mxu0
  %v370 = vpop.f32.mrb[0].mxu0
  %371 = vdwg.mxu0
  %v372 = vadd.f32 %v206, %v325
  %v373 = vadd.f32 %v208, %v327
  %v374 = vadd.f32 %v247, %v366
  %v375 = vadd.f32 %v249, %v368
  %s376 = scalar_lea.vmem %s1, 6
  %v377 = vld [vmem:[%s376] sm:$0x3]
  %s378 = scalar_lea.vmem %s0, 24
  %v379 = vld [vmem:[%s378] sm:$0xff]
  %v381 = vcombine.high %v379, %v379
  %v383 = vunpack.c.l.s4 1983009808
  %v384 = vunpack.c.0.s8 %v383
  %v385 = vlaneseq
  %v386 = vshrl.u32 %v385, 7
  %v387 = vsub.s32 %v384, %v386
  %v388 = vrot.slane %v379, %v387
  %v390 = vunpack.c.l.s4 1983009808
  %v391 = vunpack.c.0.s8 %v390
  %v392 = vlaneseq
  %v393 = vshrl.u32 %v392, 7
  %v394 = vsub.s32 %v391, %v393
  %v395 = vrot.slane %v381, %v394
  %v396 = vcombine.high %v388, %v388
  %v397 = vcombine.high %v395, %v395
  %v399 = vsel %vm39, %v377, 0
  %v402 = vsel %vm43, %v388, 0
  %v405 = vsel %vm43, %v396, 0
  %v408 = vsel %vm43, %v395, 0
  %v411 = vsel %vm43, %v397, 0
  %413 = vmatprep.subr.bf16.mxu0 %v405
  %414 = vmatpush1.bf16.msra.mxu0 %v402
  %415 = vmatprep.subr.bf16.mxu0 0
  %416 = vmatpush1.bf16.msra.mxu0 0
  %417 = vmatprep.subr.bf16.mxu0 0
  %418 = vmatpush1.bf16.msra.mxu0 0
  %419 = vmatprep.subr.bf16.mxu0 0
  %420 = vmatpush1.bf16.msra.mxu0 0
  %421 = vmatprep.subr.bf16.mxu0 0
  %422 = vmatpush1.bf16.msra.mxu0 0
  %423 = vmatprep.subr.bf16.mxu0 0
  %424 = vmatpush1.bf16.msra.mxu0 0
  %425 = vmatprep.subr.bf16.mxu0 0
  %426 = vmatpush1.bf16.msra.mxu0 0
  %427 = vmatprep.subr.bf16.mxu0 0
  %428 = vmatpush1.bf16.msra.mxu0 0
  %429 = vmatprep.subr.bf16.mxu0 0
  %430 = vmatpush1.bf16.msra.mxu0 0
  %431 = vmatprep.subr.bf16.mxu0 0
  %432 = vmatpush1.bf16.msra.mxu0 0
  %433 = vmatprep.subr.bf16.mxu0 0
  %434 = vmatpush1.bf16.msra.mxu0 0
  %435 = vmatprep.subr.bf16.mxu0 0
  %436 = vmatpush1.bf16.msra.mxu0 0
  %437 = vmatprep.subr.bf16.mxu0 0
  %438 = vmatpush1.bf16.msra.mxu0 0
  %439 = vmatprep.subr.bf16.mxu0 0
  %440 = vmatpush1.bf16.msra.mxu0 0
  %441 = vmatprep.subr.bf16.mxu0 0
  %442 = vmatpush1.bf16.msra.mxu0 0
  %443 = vmatprep.subr.bf16.mxu0 0
  %444 = vmatpush1.bf16.msra.mxu0 0
  %445 = vmatprep.mubr.bf16.mxu0 0
  %446 = vmatmul.mubr.bf16.gmra.mrb[0].mxu0 %v399
  %v447 = vpop.f32.mrb[0].mxu0
  %v448 = vadd.f32 0.0, %v447
  %v449 = vpop.f32.mrb[0].mxu0
  %v450 = vadd.f32 0.0, %v449
  %v451 = vpop.f32.mrb[0].mxu0
  %v452 = vpop.f32.mrb[0].mxu0
  %453 = vdwg.mxu0
  %454 = vmatprep.subr.bf16.mxu0 %v411
  %455 = vmatpush1.bf16.msra.mxu0 %v408
  %456 = vmatprep.subr.bf16.mxu0 0
  %457 = vmatpush1.bf16.msra.mxu0 0
  %458 = vmatprep.subr.bf16.mxu0 0
  %459 = vmatpush1.bf16.msra.mxu0 0
  %460 = vmatprep.subr.bf16.mxu0 0
  %461 = vmatpush1.bf16.msra.mxu0 0
  %462 = vmatprep.subr.bf16.mxu0 0
  %463 = vmatpush1.bf16.msra.mxu0 0
  %464 = vmatprep.subr.bf16.mxu0 0
  %465 = vmatpush1.bf16.msra.mxu0 0
  %466 = vmatprep.subr.bf16.mxu0 0
  %467 = vmatpush1.bf16.msra.mxu0 0
  %468 = vmatprep.subr.bf16.mxu0 0
  %469 = vmatpush1.bf16.msra.mxu0 0
  %470 = vmatprep.subr.bf16.mxu0 0
  %471 = vmatpush1.bf16.msra.mxu0 0
  %472 = vmatprep.subr.bf16.mxu0 0
  %473 = vmatpush1.bf16.msra.mxu0 0
  %474 = vmatprep.subr.bf16.mxu0 0
  %475 = vmatpush1.bf16.msra.mxu0 0
  %476 = vmatprep.subr.bf16.mxu0 0
  %477 = vmatpush1.bf16.msra.mxu0 0
  %478 = vmatprep.subr.bf16.mxu0 0
  %479 = vmatpush1.bf16.msra.mxu0 0
  %480 = vmatprep.subr.bf16.mxu0 0
  %481 = vmatpush1.bf16.msra.mxu0 0
  %482 = vmatprep.subr.bf16.mxu0 0
  %483 = vmatpush1.bf16.msra.mxu0 0
  %484 = vmatprep.subr.bf16.mxu0 0
  %485 = vmatpush1.bf16.msra.mxu0 0
  %486 = vmatprep.mubr.bf16.mxu0 0
  %487 = vmatmul.mubr.bf16.gmra.mrb[0].mxu0 %v399
  %v488 = vpop.f32.mrb[0].mxu0
  %v489 = vadd.f32 0.0, %v488
  %v490 = vpop.f32.mrb[0].mxu0
  %v491 = vadd.f32 0.0, %v490
  %v492 = vpop.f32.mrb[0].mxu0
  %v493 = vpop.f32.mrb[0].mxu0
  %494 = vdwg.mxu0
  %v495 = vadd.f32 %v372, %v448
  %v496 = vadd.f32 %v373, %v450
  %v497 = vadd.f32 %v374, %v489
  %v498 = vadd.f32 %v375, %v491
  %s499 = scalar_lea.vmem %s1, 8
  %v500 = vld [vmem:[%s499] sm:$0x3]
  %s501 = scalar_lea.vmem %s0, 32
  %v502 = vld [vmem:[%s501] sm:$0xff]
  %v504 = vcombine.high %v502, %v502
  %v506 = vunpack.c.l.s4 1983009808
  %v507 = vunpack.c.0.s8 %v506
  %v508 = vlaneseq
  %v509 = vshrl.u32 %v508, 7
  %v510 = vsub.s32 %v507, %v509
  %v511 = vrot.slane %v502, %v510
  %v513 = vunpack.c.l.s4 1983009808
  %v514 = vunpack.c.0.s8 %v513
  %v515 = vlaneseq
  %v516 = vshrl.u32 %v515, 7
  %v517 = vsub.s32 %v514, %v516
  %v518 = vrot.slane %v504, %v517
  %v519 = vcombine.high %v511, %v511
  %v520 = vcombine.high %v518, %v518
  %v522 = vsel %vm39, %v500, 0
  %v525 = vsel %vm43, %v511, 0
  %v528 = vsel %vm43, %v519, 0
  %v531 = vsel %vm43, %v518, 0
  %v534 = vsel %vm43, %v520, 0
  %536 = vmatprep.subr.bf16.mxu0 %v528
  %537 = vmatpush1.bf16.msra.mxu0 %v525
  %538 = vmatprep.subr.bf16.mxu0 0
  %539 = vmatpush1.bf16.msra.mxu0 0
  %540 = vmatprep.subr.bf16.mxu0 0
  %541 = vmatpush1.bf16.msra.mxu0 0
  %542 = vmatprep.subr.bf16.mxu0 0
  %543 = vmatpush1.bf16.msra.mxu0 0
  %544 = vmatprep.subr.bf16.mxu0 0
  %545 = vmatpush1.bf16.msra.mxu0 0
  %546 = vmatprep.subr.bf16.mxu0 0
  %547 = vmatpush1.bf16.msra.mxu0 0
  %548 = vmatprep.subr.bf16.mxu0 0
  %549 = vmatpush1.bf16.msra.mxu0 0
  %550 = vmatprep.subr.bf16.mxu0 0
  %551 = vmatpush1.bf16.msra.mxu0 0
  %552 = vmatprep.subr.bf16.mxu0 0
  %553 = vmatpush1.bf16.msra.mxu0 0
  %554 = vmatprep.subr.bf16.mxu0 0
  %555 = vmatpush1.bf16.msra.mxu0 0
  %556 = vmatprep.subr.bf16.mxu0 0
  %557 = vmatpush1.bf16.msra.mxu0 0
  %558 = vmatprep.subr.bf16.mxu0 0
  %559 = vmatpush1.bf16.msra.mxu0 0
  %560 = vmatprep.subr.bf16.mxu0 0
  %561 = vmatpush1.bf16.msra.mxu0 0
  %562 = vmatprep.subr.bf16.mxu0 0
  %563 = vmatpush1.bf16.msra.mxu0 0
  %564 = vmatprep.subr.bf16.mxu0 0
  %565 = vmatpush1.bf16.msra.mxu0 0
  %566 = vmatprep.subr.bf16.mxu0 0
  %567 = vmatpush1.bf16.msra.mxu0 0
  %568 = vmatprep.mubr.bf16.mxu0 0
  %569 = vmatmul.mubr.bf16.gmra.mrb[0].mxu0 %v522
  %v570 = vpop.f32.mrb[0].mxu0
  %v571 = vadd.f32 0.0, %v570
  %v572 = vpop.f32.mrb[0].mxu0
  %v573 = vadd.f32 0.0, %v572
  %v574 = vpop.f32.mrb[0].mxu0
  %v575 = vpop.f32.mrb[0].mxu0
  %576 = vdwg.mxu0
  %577 = vmatprep.subr.bf16.mxu0 %v534
  %578 = vmatpush1.bf16.msra.mxu0 %v531
  %579 = vmatprep.subr.bf16.mxu0 0
  %580 = vmatpush1.bf16.msra.mxu0 0
  %581 = vmatprep.subr.bf16.mxu0 0
  %582 = vmatpush1.bf16.msra.mxu0 0
  %583 = vmatprep.subr.bf16.mxu0 0
  %584 = vmatpush1.bf16.msra.mxu0 0
  %585 = vmatprep.subr.bf16.mxu0 0
  %586 = vmatpush1.bf16.msra.mxu0 0
  %587 = vmatprep.subr.bf16.mxu0 0
  %588 = vmatpush1.bf16.msra.mxu0 0
  %589 = vmatprep.subr.bf16.mxu0 0
  %590 = vmatpush1.bf16.msra.mxu0 0
  %591 = vmatprep.subr.bf16.mxu0 0
  %592 = vmatpush1.bf16.msra.mxu0 0
  %593 = vmatprep.subr.bf16.mxu0 0
  %594 = vmatpush1.bf16.msra.mxu0 0
  %595 = vmatprep.subr.bf16.mxu0 0
  %596 = vmatpush1.bf16.msra.mxu0 0
  %597 = vmatprep.subr.bf16.mxu0 0
  %598 = vmatpush1.bf16.msra.mxu0 0
  %599 = vmatprep.subr.bf16.mxu0 0
  %600 = vmatpush1.bf16.msra.mxu0 0
  %601 = vmatprep.subr.bf16.mxu0 0
  %602 = vmatpush1.bf16.msra.mxu0 0
  %603 = vmatprep.subr.bf16.mxu0 0
  %604 = vmatpush1.bf16.msra.mxu0 0
  %605 = vmatprep.subr.bf16.mxu0 0
  %606 = vmatpush1.bf16.msra.mxu0 0
  %607 = vmatprep.subr.bf16.mxu0 0
  %608 = vmatpush1.bf16.msra.mxu0 0
  %609 = vmatprep.mubr.bf16.mxu0 0
  %610 = vmatmul.mubr.bf16.gmra.mrb[0].mxu0 %v522
  %v611 = vpop.f32.mrb[0].mxu0
  %v612 = vadd.f32 0.0, %v611
  %v613 = vpop.f32.mrb[0].mxu0
  %v614 = vadd.f32 0.0, %v613
  %v615 = vpop.f32.mrb[0].mxu0
  %v616 = vpop.f32.mrb[0].mxu0
  %617 = vdwg.mxu0
  %v618 = vadd.f32 %v495, %v571
  %v619 = vadd.f32 %v496, %v573
  %v620 = vadd.f32 %v497, %v612
  %v621 = vadd.f32 %v498, %v614
  %s622 = scalar_lea.vmem %s1, 10
  %v623 = vld [vmem:[%s622] sm:$0x3]
  %s624 = scalar_lea.vmem %s0, 40
  %v625 = vld [vmem:[%s624] sm:$0xff]
  %v627 = vcombine.high %v625, %v625
  %v629 = vunpack.c.l.s4 1983009808
  %v630 = vunpack.c.0.s8 %v629
  %v631 = vlaneseq
  %v632 = vshrl.u32 %v631, 7
  %v633 = vsub.s32 %v630, %v632
  %v634 = vrot.slane %v625, %v633
  %v636 = vunpack.c.l.s4 1983009808
  %v637 = vunpack.c.0.s8 %v636
  %v638 = vlaneseq
  %v639 = vshrl.u32 %v638, 7
  %v640 = vsub.s32 %v637, %v639
  %v641 = vrot.slane %v627, %v640
  %v642 = vcombine.high %v634, %v634
  %v643 = vcombine.high %v641, %v641
  %v645 = vsel %vm39, %v623, 0
  %v648 = vsel %vm43, %v634, 0
  %v651 = vsel %vm43, %v642, 0
  %v654 = vsel %vm43, %v641, 0
  %v657 = vsel %vm43, %v643, 0
  %659 = vmatprep.subr.bf16.mxu0 %v651
  %660 = vmatpush1.bf16.msra.mxu0 %v648
  %661 = vmatprep.subr.bf16.mxu0 0
  %662 = vmatpush1.bf16.msra.mxu0 0
  %663 = vmatprep.subr.bf16.mxu0 0
  %664 = vmatpush1.bf16.msra.mxu0 0
  %665 = vmatprep.subr.bf16.mxu0 0
  %666 = vmatpush1.bf16.msra.mxu0 0
  %667 = vmatprep.subr.bf16.mxu0 0
  %668 = vmatpush1.bf16.msra.mxu0 0
  %669 = vmatprep.subr.bf16.mxu0 0
  %670 = vmatpush1.bf16.msra.mxu0 0
  %671 = vmatprep.subr.bf16.mxu0 0
  %672 = vmatpush1.bf16.msra.mxu0 0
  %673 = vmatprep.subr.bf16.mxu0 0
  %674 = vmatpush1.bf16.msra.mxu0 0
  %675 = vmatprep.subr.bf16.mxu0 0
  %676 = vmatpush1.bf16.msra.mxu0 0
  %677 = vmatprep.subr.bf16.mxu0 0
  %678 = vmatpush1.bf16.msra.mxu0 0
  %679 = vmatprep.subr.bf16.mxu0 0
  %680 = vmatpush1.bf16.msra.mxu0 0
  %681 = vmatprep.subr.bf16.mxu0 0
  %682 = vmatpush1.bf16.msra.mxu0 0
  %683 = vmatprep.subr.bf16.mxu0 0
  %684 = vmatpush1.bf16.msra.mxu0 0
  %685 = vmatprep.subr.bf16.mxu0 0
  %686 = vmatpush1.bf16.msra.mxu0 0
  %687 = vmatprep.subr.bf16.mxu0 0
  %688 = vmatpush1.bf16.msra.mxu0 0
  %689 = vmatprep.subr.bf16.mxu0 0
  %690 = vmatpush1.bf16.msra.mxu0 0
  %691 = vmatprep.mubr.bf16.mxu0 0
  %692 = vmatmul.mubr.bf16.gmra.mrb[0].mxu0 %v645
  %v693 = vpop.f32.mrb[0].mxu0
  %v694 = vadd.f32 0.0, %v693
  %v695 = vpop.f32.mrb[0].mxu0
  %v696 = vadd.f32 0.0, %v695
  %v697 = vpop.f32.mrb[0].mxu0
  %v698 = vpop.f32.mrb[0].mxu0
  %699 = vdwg.mxu0
  %700 = vmatprep.subr.bf16.mxu0 %v657
  %701 = vmatpush1.bf16.msra.mxu0 %v654
  %702 = vmatprep.subr.bf16.mxu0 0
  %703 = vmatpush1.bf16.msra.mxu0 0
  %704 = vmatprep.subr.bf16.mxu0 0
  %705 = vmatpush1.bf16.msra.mxu0 0
  %706 = vmatprep.subr.bf16.mxu0 0
  %707 = vmatpush1.bf16.msra.mxu0 0
  %708 = vmatprep.subr.bf16.mxu0 0
  %709 = vmatpush1.bf16.msra.mxu0 0
  %710 = vmatprep.subr.bf16.mxu0 0
  %711 = vmatpush1.bf16.msra.mxu0 0
  %712 = vmatprep.subr.bf16.mxu0 0
  %713 = vmatpush1.bf16.msra.mxu0 0
  %714 = vmatprep.subr.bf16.mxu0 0
  %715 = vmatpush1.bf16.msra.mxu0 0
  %716 = vmatprep.subr.bf16.mxu0 0
  %717 = vmatpush1.bf16.msra.mxu0 0
  %718 = vmatprep.subr.bf16.mxu0 0
  %719 = vmatpush1.bf16.msra.mxu0 0
  %720 = vmatprep.subr.bf16.mxu0 0
  %721 = vmatpush1.bf16.msra.mxu0 0
  %722 = vmatprep.subr.bf16.mxu0 0
  %723 = vmatpush1.bf16.msra.mxu0 0
  %724 = vmatprep.subr.bf16.mxu0 0
  %725 = vmatpush1.bf16.msra.mxu0 0
  %726 = vmatprep.subr.bf16.mxu0 0
  %727 = vmatpush1.bf16.msra.mxu0 0
  %728 = vmatprep.subr.bf16.mxu0 0
  %729 = vmatpush1.bf16.msra.mxu0 0
  %730 = vmatprep.subr.bf16.mxu0 0
  %731 = vmatpush1.bf16.msra.mxu0 0
  %732 = vmatprep.mubr.bf16.mxu0 0
  %733 = vmatmul.mubr.bf16.gmra.mrb[0].mxu0 %v645
  %v734 = vpop.f32.mrb[0].mxu0
  %v735 = vadd.f32 0.0, %v734
  %v736 = vpop.f32.mrb[0].mxu0
  %v737 = vadd.f32 0.0, %v736
  %v738 = vpop.f32.mrb[0].mxu0
  %v739 = vpop.f32.mrb[0].mxu0
  %740 = vdwg.mxu0
  %v741 = vadd.f32 %v618, %v694
  %v742 = vadd.f32 %v619, %v696
  %v743 = vadd.f32 %v620, %v735
  %v744 = vadd.f32 %v621, %v737
  %s745 = scalar_lea.vmem %s1, 12
  %v746 = vld [vmem:[%s745] sm:$0x3]
  %s747 = scalar_lea.vmem %s0, 48
  %v748 = vld [vmem:[%s747] sm:$0xff]
  %v750 = vcombine.high %v748, %v748
  %v752 = vunpack.c.l.s4 1983009808
  %v753 = vunpack.c.0.s8 %v752
  %v754 = vlaneseq
  %v755 = vshrl.u32 %v754, 7
  %v756 = vsub.s32 %v753, %v755
  %v757 = vrot.slane %v748, %v756
  %v759 = vunpack.c.l.s4 1983009808
  %v760 = vunpack.c.0.s8 %v759
  %v761 = vlaneseq
  %v762 = vshrl.u32 %v761, 7
  %v763 = vsub.s32 %v760, %v762
  %v764 = vrot.slane %v750, %v763
  %v765 = vcombine.high %v757, %v757
  %v766 = vcombine.high %v764, %v764
  %v768 = vsel %vm39, %v746, 0
  %v771 = vsel %vm43, %v757, 0
  %v774 = vsel %vm43, %v765, 0
  %v777 = vsel %vm43, %v764, 0
  %v780 = vsel %vm43, %v766, 0
  %782 = vmatprep.subr.bf16.mxu0 %v774
  %783 = vmatpush1.bf16.msra.mxu0 %v771
  %784 = vmatprep.subr.bf16.mxu0 0
  %785 = vmatpush1.bf16.msra.mxu0 0
  %786 = vmatprep.subr.bf16.mxu0 0
  %787 = vmatpush1.bf16.msra.mxu0 0
  %788 = vmatprep.subr.bf16.mxu0 0
  %789 = vmatpush1.bf16.msra.mxu0 0
  %790 = vmatprep.subr.bf16.mxu0 0
  %791 = vmatpush1.bf16.msra.mxu0 0
  %792 = vmatprep.subr.bf16.mxu0 0
  %793 = vmatpush1.bf16.msra.mxu0 0
  %794 = vmatprep.subr.bf16.mxu0 0
  %795 = vmatpush1.bf16.msra.mxu0 0
  %796 = vmatprep.subr.bf16.mxu0 0
  %797 = vmatpush1.bf16.msra.mxu0 0
  %798 = vmatprep.subr.bf16.mxu0 0
  %799 = vmatpush1.bf16.msra.mxu0 0
  %800 = vmatprep.subr.bf16.mxu0 0
  %801 = vmatpush1.bf16.msra.mxu0 0
  %802 = vmatprep.subr.bf16.mxu0 0
  %803 = vmatpush1.bf16.msra.mxu0 0
  %804 = vmatprep.subr.bf16.mxu0 0
  %805 = vmatpush1.bf16.msra.mxu0 0
  %806 = vmatprep.subr.bf16.mxu0 0
  %807 = vmatpush1.bf16.msra.mxu0 0
  %808 = vmatprep.subr.bf16.mxu0 0
  %809 = vmatpush1.bf16.msra.mxu0 0
  %810 = vmatprep.subr.bf16.mxu0 0
  %811 = vmatpush1.bf16.msra.mxu0 0
  %812 = vmatprep.subr.bf16.mxu0 0
  %813 = vmatpush1.bf16.msra.mxu0 0
  %814 = vmatprep.mubr.bf16.mxu0 0
  %815 = vmatmul.mubr.bf16.gmra.mrb[0].mxu0 %v768
  %v816 = vpop.f32.mrb[0].mxu0
  %v817 = vadd.f32 0.0, %v816
  %v818 = vpop.f32.mrb[0].mxu0
  %v819 = vadd.f32 0.0, %v818
  %v820 = vpop.f32.mrb[0].mxu0
  %v821 = vpop.f32.mrb[0].mxu0
  %822 = vdwg.mxu0
  %823 = vmatprep.subr.bf16.mxu0 %v780
  %824 = vmatpush1.bf16.msra.mxu0 %v777
  %825 = vmatprep.subr.bf16.mxu0 0
  %826 = vmatpush1.bf16.msra.mxu0 0
  %827 = vmatprep.subr.bf16.mxu0 0
  %828 = vmatpush1.bf16.msra.mxu0 0
  %829 = vmatprep.subr.bf16.mxu0 0
  %830 = vmatpush1.bf16.msra.mxu0 0
  %831 = vmatprep.subr.bf16.mxu0 0
  %832 = vmatpush1.bf16.msra.mxu0 0
  %833 = vmatprep.subr.bf16.mxu0 0
  %834 = vmatpush1.bf16.msra.mxu0 0
  %835 = vmatprep.subr.bf16.mxu0 0
  %836 = vmatpush1.bf16.msra.mxu0 0
  %837 = vmatprep.subr.bf16.mxu0 0
  %838 = vmatpush1.bf16.msra.mxu0 0
  %839 = vmatprep.subr.bf16.mxu0 0
  %840 = vmatpush1.bf16.msra.mxu0 0
  %841 = vmatprep.subr.bf16.mxu0 0
  %842 = vmatpush1.bf16.msra.mxu0 0
  %843 = vmatprep.subr.bf16.mxu0 0
  %844 = vmatpush1.bf16.msra.mxu0 0
  %845 = vmatprep.subr.bf16.mxu0 0
  %846 = vmatpush1.bf16.msra.mxu0 0
  %847 = vmatprep.subr.bf16.mxu0 0
  %848 = vmatpush1.bf16.msra.mxu0 0
  %849 = vmatprep.subr.bf16.mxu0 0
  %850 = vmatpush1.bf16.msra.mxu0 0
  %851 = vmatprep.subr.bf16.mxu0 0
  %852 = vmatpush1.bf16.msra.mxu0 0
  %853 = vmatprep.subr.bf16.mxu0 0
  %854 = vmatpush1.bf16.msra.mxu0 0
  %855 = vmatprep.mubr.bf16.mxu0 0
  %856 = vmatmul.mubr.bf16.gmra.mrb[0].mxu0 %v768
  %v857 = vpop.f32.mrb[0].mxu0
  %v858 = vadd.f32 0.0, %v857
  %v859 = vpop.f32.mrb[0].mxu0
  %v860 = vadd.f32 0.0, %v859
  %v861 = vpop.f32.mrb[0].mxu0
  %v862 = vpop.f32.mrb[0].mxu0
  %863 = vdwg.mxu0
  %v864 = vadd.f32 %v741, %v817
  %v865 = vadd.f32 %v742, %v819
  %v866 = vadd.f32 %v743, %v858
  %v867 = vadd.f32 %v744, %v860
  %s868 = scalar_lea.vmem %s1, 14
  %v869 = vld [vmem:[%s868] sm:$0x3]
  %s870 = scalar_lea.vmem %s0, 56
  %v871 = vld [vmem:[%s870] sm:$0xff]
  %v873 = vcombine.high %v871, %v871
  %v875 = vunpack.c.l.s4 1983009808
  %v876 = vunpack.c.0.s8 %v875
  %v877 = vlaneseq
  %v878 = vshrl.u32 %v877, 7
  %v879 = vsub.s32 %v876, %v878
  %v880 = vrot.slane %v871, %v879
  %v882 = vunpack.c.l.s4 1983009808
  %v883 = vunpack.c.0.s8 %v882
  %v884 = vlaneseq
  %v885 = vshrl.u32 %v884, 7
  %v886 = vsub.s32 %v883, %v885
  %v887 = vrot.slane %v873, %v886
  %v888 = vcombine.high %v880, %v880
  %v889 = vcombine.high %v887, %v887
  %v891 = vsel %vm39, %v869, 0
  %v894 = vsel %vm43, %v880, 0
  %v897 = vsel %vm43, %v888, 0
  %v900 = vsel %vm43, %v887, 0
  %v903 = vsel %vm43, %v889, 0
  %905 = vmatprep.subr.bf16.mxu0 %v897
  %906 = vmatpush1.bf16.msra.mxu0 %v894
  %907 = vmatprep.subr.bf16.mxu0 0
  %908 = vmatpush1.bf16.msra.mxu0 0
  %909 = vmatprep.subr.bf16.mxu0 0
  %910 = vmatpush1.bf16.msra.mxu0 0
  %911 = vmatprep.subr.bf16.mxu0 0
  %912 = vmatpush1.bf16.msra.mxu0 0
  %913 = vmatprep.subr.bf16.mxu0 0
  %914 = vmatpush1.bf16.msra.mxu0 0
  %915 = vmatprep.subr.bf16.mxu0 0
  %916 = vmatpush1.bf16.msra.mxu0 0
  %917 = vmatprep.subr.bf16.mxu0 0
  %918 = vmatpush1.bf16.msra.mxu0 0
  %919 = vmatprep.subr.bf16.mxu0 0
  %920 = vmatpush1.bf16.msra.mxu0 0
  %921 = vmatprep.subr.bf16.mxu0 0
  %922 = vmatpush1.bf16.msra.mxu0 0
  %923 = vmatprep.subr.bf16.mxu0 0
  %924 = vmatpush1.bf16.msra.mxu0 0
  %925 = vmatprep.subr.bf16.mxu0 0
  %926 = vmatpush1.bf16.msra.mxu0 0
  %927 = vmatprep.subr.bf16.mxu0 0
  %928 = vmatpush1.bf16.msra.mxu0 0
  %929 = vmatprep.subr.bf16.mxu0 0
  %930 = vmatpush1.bf16.msra.mxu0 0
  %931 = vmatprep.subr.bf16.mxu0 0
  %932 = vmatpush1.bf16.msra.mxu0 0
  %933 = vmatprep.subr.bf16.mxu0 0
  %934 = vmatpush1.bf16.msra.mxu0 0
  %935 = vmatprep.subr.bf16.mxu0 0
  %936 = vmatpush1.bf16.msra.mxu0 0
  %937 = vmatprep.mubr.bf16.mxu0 0
  %938 = vmatmul.mubr.bf16.gmra.mrb[0].mxu0 %v891
  %v939 = vpop.f32.mrb[0].mxu0
  %v940 = vadd.f32 0.0, %v939
  %v941 = vpop.f32.mrb[0].mxu0
  %v942 = vadd.f32 0.0, %v941
  %v943 = vpop.f32.mrb[0].mxu0
  %v944 = vpop.f32.mrb[0].mxu0
  %945 = vdwg.mxu0
  %946 = vmatprep.subr.bf16.mxu0 %v903
  %947 = vmatpush1.bf16.msra.mxu0 %v900
  %948 = vmatprep.subr.bf16.mxu0 0
  %949 = vmatpush1.bf16.msra.mxu0 0
  %950 = vmatprep.subr.bf16.mxu0 0
  %951 = vmatpush1.bf16.msra.mxu0 0
  %952 = vmatprep.subr.bf16.mxu0 0
  %953 = vmatpush1.bf16.msra.mxu0 0
  %954 = vmatprep.subr.bf16.mxu0 0
  %955 = vmatpush1.bf16.msra.mxu0 0
  %956 = vmatprep.subr.bf16.mxu0 0
  %957 = vmatpush1.bf16.msra.mxu0 0
  %958 = vmatprep.subr.bf16.mxu0 0
  %959 = vmatpush1.bf16.msra.mxu0 0
  %960 = vmatprep.subr.bf16.mxu0 0
  %961 = vmatpush1.bf16.msra.mxu0 0
  %962 = vmatprep.subr.bf16.mxu0 0
  %963 = vmatpush1.bf16.msra.mxu0 0
  %964 = vmatprep.subr.bf16.mxu0 0
  %965 = vmatpush1.bf16.msra.mxu0 0
  %966 = vmatprep.subr.bf16.mxu0 0
  %967 = vmatpush1.bf16.msra.mxu0 0
  %968 = vmatprep.subr.bf16.mxu0 0
  %969 = vmatpush1.bf16.msra.mxu0 0
  %970 = vmatprep.subr.bf16.mxu0 0
  %971 = vmatpush1.bf16.msra.mxu0 0
  %972 = vmatprep.subr.bf16.mxu0 0
  %973 = vmatpush1.bf16.msra.mxu0 0
  %974 = vmatprep.subr.bf16.mxu0 0
  %975 = vmatpush1.bf16.msra.mxu0 0
  %976 = vmatprep.subr.bf16.mxu0 0
  %977 = vmatpush1.bf16.msra.mxu0 0
  %978 = vmatprep.mubr.bf16.mxu0 0
  %979 = vmatmul.mubr.bf16.gmra.mrb[0].mxu0 %v891
  %v980 = vpop.f32.mrb[0].mxu0
  %v981 = vadd.f32 0.0, %v980
  %v982 = vpop.f32.mrb[0].mxu0
  %v983 = vadd.f32 0.0, %v982
  %v984 = vpop.f32.mrb[0].mxu0
  %v985 = vpop.f32.mrb[0].mxu0
  %986 = vdwg.mxu0
  %v987 = vadd.f32 %v864, %v940
  %v988 = vadd.f32 %v865, %v942
  %v989 = vadd.f32 %v866, %v981
  %v990 = vadd.f32 %v867, %v983
  %s991 = scalar_lea.vmem %s1, 16
  %v992 = vld [vmem:[%s991] sm:$0x3]
  %s993 = scalar_lea.vmem %s0, 64
  %v994 = vld [vmem:[%s993] sm:$0xff]
  %v996 = vcombine.high %v994, %v994
  %v998 = vunpack.c.l.s4 1983009808
  %v999 = vunpack.c.0.s8 %v998
  %v1000 = vlaneseq
  %v1001 = vshrl.u32 %v1000, 7
  %v1002 = vsub.s32 %v999, %v1001
  %v1003 = vrot.slane %v994, %v1002
  %v1005 = vunpack.c.l.s4 1983009808
  %v1006 = vunpack.c.0.s8 %v1005
  %v1007 = vlaneseq
  %v1008 = vshrl.u32 %v1007, 7
  %v1009 = vsub.s32 %v1006, %v1008
  %v1010 = vrot.slane %v996, %v1009
  %v1011 = vcombine.high %v1003, %v1003
  %v1012 = vcombine.high %v1010, %v1010
  %v1014 = vsel %vm39, %v992, 0
  %v1017 = vsel %vm43, %v1003, 0
  %v1020 = vsel %vm43, %v1011, 0
  %v1023 = vsel %vm43, %v1010, 0
  %v1026 = vsel %vm43, %v1012, 0
  %1028 = vmatprep.subr.bf16.mxu0 %v1020
  %1029 = vmatpush1.bf16.msra.mxu0 %v1017
  %1030 = vmatprep.subr.bf16.mxu0 0
  %1031 = vmatpush1.bf16.msra.mxu0 0
  %1032 = vmatprep.subr.bf16.mxu0 0
  %1033 = vmatpush1.bf16.msra.mxu0 0
  %1034 = vmatprep.subr.bf16.mxu0 0
  %1035 = vmatpush1.bf16.msra.mxu0 0
  %1036 = vmatprep.subr.bf16.mxu0 0
  %1037 = vmatpush1.bf16.msra.mxu0 0
  %1038 = vmatprep.subr.bf16.mxu0 0
  %1039 = vmatpush1.bf16.msra.mxu0 0
  %1040 = vmatprep.subr.bf16.mxu0 0
  %1041 = vmatpush1.bf16.msra.mxu0 0
  %1042 = vmatprep.subr.bf16.mxu0 0
  %1043 = vmatpush1.bf16.msra.mxu0 0
  %1044 = vmatprep.subr.bf16.mxu0 0
  %1045 = vmatpush1.bf16.msra.mxu0 0
  %1046 = vmatprep.subr.bf16.mxu0 0
  %1047 = vmatpush1.bf16.msra.mxu0 0
  %1048 = vmatprep.subr.bf16.mxu0 0
  %1049 = vmatpush1.bf16.msra.mxu0 0
  %1050 = vmatprep.subr.bf16.mxu0 0
  %1051 = vmatpush1.bf16.msra.mxu0 0
  %1052 = vmatprep.subr.bf16.mxu0 0
  %1053 = vmatpush1.bf16.msra.mxu0 0
  %1054 = vmatprep.subr.bf16.mxu0 0
  %1055 = vmatpush1.bf16.msra.mxu0 0
  %1056 = vmatprep.subr.bf16.mxu0 0
  %1057 = vmatpush1.bf16.msra.mxu0 0
  %1058 = vmatprep.subr.bf16.mxu0 0
  %1059 = vmatpush1.bf16.msra.mxu0 0
  %1060 = vmatprep.mubr.bf16.mxu0 0
  %1061 = vmatmul.mubr.bf16.gmra.mrb[0].mxu0 %v1014
  %v1062 = vpop.f32.mrb[0].mxu0
  %v1063 = vadd.f32 0.0, %v1062
  %v1064 = vpop.f32.mrb[0].mxu0
  %v1065 = vadd.f32 0.0, %v1064
  %v1066 = vpop.f32.mrb[0].mxu0
  %v1067 = vpop.f32.mrb[0].mxu0
  %1068 = vdwg.mxu0
  %1069 = vmatprep.subr.bf16.mxu0 %v1026
  %1070 = vmatpush1.bf16.msra.mxu0 %v1023
  %1071 = vmatprep.subr.bf16.mxu0 0
  %1072 = vmatpush1.bf16.msra.mxu0 0
  %1073 = vmatprep.subr.bf16.mxu0 0
  %1074 = vmatpush1.bf16.msra.mxu0 0
  %1075 = vmatprep.subr.bf16.mxu0 0
  %1076 = vmatpush1.bf16.msra.mxu0 0
  %1077 = vmatprep.subr.bf16.mxu0 0
  %1078 = vmatpush1.bf16.msra.mxu0 0
  %1079 = vmatprep.subr.bf16.mxu0 0
  %1080 = vmatpush1.bf16.msra.mxu0 0
  %1081 = vmatprep.subr.bf16.mxu0 0
  %1082 = vmatpush1.bf16.msra.mxu0 0
  %1083 = vmatprep.subr.bf16.mxu0 0
  %1084 = vmatpush1.bf16.msra.mxu0 0
  %1085 = vmatprep.subr.bf16.mxu0 0
  %1086 = vmatpush1.bf16.msra.mxu0 0
  %1087 = vmatprep.subr.bf16.mxu0 0
  %1088 = vmatpush1.bf16.msra.mxu0 0
  %1089 = vmatprep.subr.bf16.mxu0 0
  %1090 = vmatpush1.bf16.msra.mxu0 0
  %1091 = vmatprep.subr.bf16.mxu0 0
  %1092 = vmatpush1.bf16.msra.mxu0 0
  %1093 = vmatprep.subr.bf16.mxu0 0
  %1094 = vmatpush1.bf16.msra.mxu0 0
  %1095 = vmatprep.subr.bf16.mxu0 0
  %1096 = vmatpush1.bf16.msra.mxu0 0
  %1097 = vmatprep.subr.bf16.mxu0 0
  %1098 = vmatpush1.bf16.msra.mxu0 0
  %1099 = vmatprep.subr.bf16.mxu0 0
  %1100 = vmatpush1.bf16.msra.mxu0 0
  %1101 = vmatprep.mubr.bf16.mxu0 0
  %1102 = vmatmul.mubr.bf16.gmra.mrb[0].mxu0 %v1014
  %v1103 = vpop.f32.mrb[0].mxu0
  %v1104 = vadd.f32 0.0, %v1103
  %v1105 = vpop.f32.mrb[0].mxu0
  %v1106 = vadd.f32 0.0, %v1105
  %v1107 = vpop.f32.mrb[0].mxu0
  %v1108 = vpop.f32.mrb[0].mxu0
  %1109 = vdwg.mxu0
  %v1110 = vadd.f32 %v987, %v1063
  %v1111 = vadd.f32 %v988, %v1065
  %v1112 = vadd.f32 %v989, %v1104
  %v1113 = vadd.f32 %v990, %v1106
  %v1114 = vld [vmem:[%s2] sm:$0xf]
  %1116 = vset.pattern.permute.xlu0 0
  %1117 = vperm.xlu0 %1116, %v1114
  %v1118 = vpop.permute.xlu0 %1117
  %v1120 = vadd.f32 %v1110, %v1118
  %v1121 = vadd.f32 %v1111, %v1118
  %v1122 = vadd.f32 %v1112, %v1118
  %v1123 = vadd.f32 %v1113, %v1118
  %v1124 = vmax.f32 %v1120, 0.0
  %v1125 = vmax.f32 %v1121, 0.0
  %v1126 = vmax.f32 %v1122, 0.0
  %v1127 = vmax.f32 %v1123, 0.0
  %v1128 = vpack.c.bf16 %v1124, %v1124
  %v1129 = vpack.c.bf16 %v1125, %v1125
  %v1130 = vpack.c.bf16 %v1126, %v1126
  %v1131 = vpack.c.bf16 %v1127, %v1127
  %v1136 = vcombine.low %v1128, %v1129
  %v1137 = vcombine.low %v1130, %v1131
  %v1139 = vunpack.c.l.s4 1983009808
  %v1140 = vunpack.c.0.s8 %v1139
  %v1141 = vlaneseq
  %v1142 = vshrl.u32 %v1141, 7
  %v1143 = vsub.s32 %v1140, %v1142
  %v1144 = vrot.slane %v1136, %v1143
  %v1146 = vunpack.c.l.s4 1983009808
  %v1147 = vunpack.c.0.s8 %v1146
  %v1148 = vlaneseq
  %v1149 = vshrl.u32 %v1148, 7
  %v1150 = vsub.s32 %v1147, %v1149
  %v1151 = vrot.slane %v1137, %v1150
  %v1152 = vcombine.low %v1144, %v1151
  %1154 = vst [vmem:[%s3] sm:$0xff] %v1152
  // Predicated region
  $region14: #{unet_forward.16} parent=0 // pred_check
    _
  $region15: #{unet_forward.16} parent=0 // pred_check_branch
    %1156 = sbr.rel (0) target = $region17
  $region16: #{unet_forward.16} parent=0 // pred_region
    _
  $region17: #{unet_forward.16} parent=0 // pred_fallthru
    _
  // Predicated region
  $region18: #{unet_forward.16} parent=0 // pred_check
    _
  $region19: #{unet_forward.16} parent=0 // pred_check_branch
    %1158 = sbr.rel (0) target = $region21
  $region20: #{unet_forward.16} parent=0 // pred_region
    _
  $region21: #{unet_forward.16} parent=0 // pred_fallthru
    _

// kernel: unet_forward.17
$region0: #{unet_forward.17}
  #allocation0 [shape = 'u32[]', space=smem, size = 0x4, offset = 0x4, fixed_abs, tag = 'smem constant byte address 0x4 - core index']
  #allocation1 [shape = 'u32[144,128]{1,0:T(1,128)}', space=vmem, size = 0x12000, scoped, tag = 'internal scratch']
  %s0 = inlined_call_operand.vmem [shape: bf16[4,4,128], index: 0, kind: input, shape index: {}]
  %s1 = inlined_call_operand.vmem [shape: bf16[4,128], index: 1, kind: output, shape index: {}]
  %s2 = sld [smem:[#allocation0]]
  $region14: #{unet_forward.17} parent=0
    _
  %s4 = ssub.s32 1, %s2
  %s5 = scalar_select 0, %s4, %s2
  // Predicated region
  $region2: #{unet_forward.17} parent=0 // pred_check
    _
  $region3: #{unet_forward.17} parent=0 // pred_check_branch
    %7 = sbr.rel (0) target = $region5
  $region4: #{unet_forward.17} parent=0 // pred_region
    _
  $region5: #{unet_forward.17} parent=0 // pred_fallthru
    _
  %v8 = vld [vmem:[%s0] sm:$0x3]
  %s9 = scalar_lea.vmem %s0, 2
  %v10 = vld [vmem:[%s9] sm:$0x3]
  %v11 = vmax.bf16 %v8, %v10
  %s12 = scalar_lea.vmem %s0, 4
  %v13 = vld [vmem:[%s12] sm:$0x3]
  %s14 = scalar_lea.vmem %s0, 6
  %v15 = vld [vmem:[%s14] sm:$0x3]
  %v16 = vmax.bf16 %v13, %v15
  %v17 = vmax.bf16 %v11, %v16
  %18 = vst [vmem:[%s1] sm:$0x3] %v17
  // Predicated region
  $region6: #{unet_forward.17} parent=0 // pred_check
    _
  $region7: #{unet_forward.17} parent=0 // pred_check_branch
    %20 = sbr.rel (0) target = $region9
  $region8: #{unet_forward.17} parent=0 // pred_region
    _
  $region9: #{unet_forward.17} parent=0 // pred_fallthru
    _
  // Predicated region
  $region10: #{unet_forward.17} parent=0 // pred_check
    _
  $region11: #{unet_forward.17} parent=0 // pred_check_branch
    %22 = sbr.rel (0) target = $region13
  $region12: #{unet_forward.17} parent=0 // pred_region
    _
  $region13: #{unet_forward.17} parent=0 // pred_fallthru
    _

// kernel: unet_forward.18
$region0: #{unet_forward.18}
  #allocation0 [shape = 'u32[]', space=smem, size = 0x4, offset = 0x4, fixed_abs, tag = 'smem constant byte address 0x4 - core index']
  #allocation1 [shape = 'u32[144,128]{1,0:T(1,128)}', space=vmem, size = 0x12000, scoped, tag = 'internal scratch']
  %s0 = inlined_call_operand.vmem [shape: bf16[9,4,128], index: 0, kind: input, shape index: {}]
  %s1 = inlined_call_operand.vmem [shape: bf16[9,8,4], index: 1, kind: input, shape index: {}]
  %s2 = inlined_call_operand.vmem [shape: f32[8,1], index: 2, kind: input, shape index: {}]
  %s3 = inlined_call_operand.vmem [shape: bf16[8,128], index: 3, kind: output, shape index: {}]
  %s4 = sld [smem:[#allocation0]]
  $region22: #{unet_forward.18} parent=0
    _
  %s6 = ssub.s32 1, %s4
  %s7 = scalar_select 0, %s6, %s4
  // Predicated region
  $region2: #{unet_forward.18} parent=0 // pred_check
    _
  $region3: #{unet_forward.18} parent=0 // pred_check_branch
    %9 = sbr.rel (0) target = $region5
  $region4: #{unet_forward.18} parent=0 // pred_region
    _
  $region5: #{unet_forward.18} parent=0 // pred_fallthru
    _
  // Predicated region
  $region6: #{unet_forward.18} parent=0 // pred_check
    _
  $region7: #{unet_forward.18} parent=0 // pred_check_branch
    %11 = sbr.rel (0) target = $region9
  $region8: #{unet_forward.18} parent=0 // pred_region
    _
  $region9: #{unet_forward.18} parent=0 // pred_fallthru
    _
  // Predicated region
  $region10: #{unet_forward.18} parent=0 // pred_check
    _
  $region11: #{unet_forward.18} parent=0 // pred_check_branch
    %13 = sbr.rel (0) target = $region13
  $region12: #{unet_forward.18} parent=0 // pred_region
    _
  $region13: #{unet_forward.18} parent=0 // pred_fallthru
    _
  %v15 = vld [vmem:[%s1] sm:$0xf]
  %v16 = vld [vmem:[%s0] sm:$0x3]
  %s17 = scalar_lea.vmem %s1, 4
  %v18 = vld [vmem:[%s17] sm:$0xf]
  %s19 = scalar_lea.vmem %s0, 2
  %v20 = vld [vmem:[%s19] sm:$0x3]
  %vm21 = vcmask 31744
  %v23 = vsel %vm21, %v18, 0
  %vm25 = vcmask 1041408
  %v27 = vsel %vm25, %v20, 0
  %29 = vmatprep.subr.bf16.mxu0 0
  %30 = vmatpush1.bf16.msra.mxu0 %v27
  %31 = vmatprep.subr.bf16.mxu0 0
  %32 = vmatpush1.bf16.msra.mxu0 0
  %33 = vmatprep.subr.bf16.mxu0 0
  %34 = vmatpush1.bf16.msra.mxu0 0
  %35 = vmatprep.subr.bf16.mxu0 0
  %36 = vmatpush1.bf16.msra.mxu0 0
  %37 = vmatprep.subr.bf16.mxu0 0
  %38 = vmatpush1.bf16.msra.mxu0 0
  %39 = vmatprep.subr.bf16.mxu0 0
  %40 = vmatpush1.bf16.msra.mxu0 0
  %41 = vmatprep.subr.bf16.mxu0 0
  %42 = vmatpush1.bf16.msra.mxu0 0
  %43 = vmatprep.subr.bf16.mxu0 0
  %44 = vmatpush1.bf16.msra.mxu0 0
  %45 = vmatprep.subr.bf16.mxu0 0
  %46 = vmatpush1.bf16.msra.mxu0 0
  %47 = vmatprep.subr.bf16.mxu0 0
  %48 = vmatpush1.bf16.msra.mxu0 0
  %49 = vmatprep.subr.bf16.mxu0 0
  %50 = vmatpush1.bf16.msra.mxu0 0
  %51 = vmatprep.subr.bf16.mxu0 0
  %52 = vmatpush1.bf16.msra.mxu0 0
  %53 = vmatprep.subr.bf16.mxu0 0
  %54 = vmatpush1.bf16.msra.mxu0 0
  %55 = vmatprep.subr.bf16.mxu0 0
  %56 = vmatpush1.bf16.msra.mxu0 0
  %57 = vmatprep.subr.bf16.mxu0 0
  %58 = vmatpush1.bf16.msra.mxu0 0
  %59 = vmatprep.subr.bf16.mxu0 0
  %60 = vmatpush1.bf16.msra.mxu0 0
  %61 = vmatprep.mubr.bf16.mxu0 0
  %62 = vmatmul.mubr.bf16.gmra.mrb[0].mxu0 %v23
  %v63 = vpop.f32.mrb[0].mxu0
  %v64 = vadd.f32 0.0, %v63
  %v65 = vpop.f32.mrb[0].mxu0
  %v66 = vpop.f32.mrb[0].mxu0
  %v67 = vpop.f32.mrb[0].mxu0
  %68 = vdwg.mxu0
  %v70 = vsel %vm21, %v15, 0
  %v73 = vsel %vm25, %v16, 0
  %75 = vmatprep.subr.bf16.mxu0 0
  %76 = vmatpush1.bf16.msra.mxu0 %v73
  %77 = vmatprep.subr.bf16.mxu0 0
  %78 = vmatpush1.bf16.msra.mxu0 0
  %79 = vmatprep.subr.bf16.mxu0 0
  %80 = vmatpush1.bf16.msra.mxu0 0
  %81 = vmatprep.subr.bf16.mxu0 0
  %82 = vmatpush1.bf16.msra.mxu0 0
  %83 = vmatprep.subr.bf16.mxu0 0
  %84 = vmatpush1.bf16.msra.mxu0 0
  %85 = vmatprep.subr.bf16.mxu0 0
  %86 = vmatpush1.bf16.msra.mxu0 0
  %87 = vmatprep.subr.bf16.mxu0 0
  %88 = vmatpush1.bf16.msra.mxu0 0
  %89 = vmatprep.subr.bf16.mxu0 0
  %90 = vmatpush1.bf16.msra.mxu0 0
  %91 = vmatprep.subr.bf16.mxu0 0
  %92 = vmatpush1.bf16.msra.mxu0 0
  %93 = vmatprep.subr.bf16.mxu0 0
  %94 = vmatpush1.bf16.msra.mxu0 0
  %95 = vmatprep.subr.bf16.mxu0 0
  %96 = vmatpush1.bf16.msra.mxu0 0
  %97 = vmatprep.subr.bf16.mxu0 0
  %98 = vmatpush1.bf16.msra.mxu0 0
  %99 = vmatprep.subr.bf16.mxu0 0
  %100 = vmatpush1.bf16.msra.mxu0 0
  %101 = vmatprep.subr.bf16.mxu0 0
  %102 = vmatpush1.bf16.msra.mxu0 0
  %103 = vmatprep.subr.bf16.mxu0 0
  %104 = vmatpush1.bf16.msra.mxu0 0
  %105 = vmatprep.subr.bf16.mxu0 0
  %106 = vmatpush1.bf16.msra.mxu0 0
  %107 = vmatprep.mubr.bf16.mxu0 0
  %108 = vmatmul.mubr.bf16.gmra.mrb[0].mxu0 %v70
  %v109 = vpop.f32.mrb[0].mxu0
  %v110 = vadd.f32 %v64, %v109
  %v111 = vpop.f32.mrb[0].mxu0
  %v112 = vpop.f32.mrb[0].mxu0
  %v113 = vpop.f32.mrb[0].mxu0
  %114 = vdwg.mxu0
  %s115 = scalar_lea.vmem %s1, 8
  %v116 = vld [vmem:[%s115] sm:$0xf]
  %s117 = scalar_lea.vmem %s0, 4
  %v118 = vld [vmem:[%s117] sm:$0x3]
  %v120 = vsel %vm21, %v116, 0
  %v123 = vsel %vm25, %v118, 0
  %125 = vmatprep.subr.bf16.mxu0 0
  %126 = vmatpush1.bf16.msra.mxu0 %v123
  %127 = vmatprep.subr.bf16.mxu0 0
  %128 = vmatpush1.bf16.msra.mxu0 0
  %129 = vmatprep.subr.bf16.mxu0 0
  %130 = vmatpush1.bf16.msra.mxu0 0
  %131 = vmatprep.subr.bf16.mxu0 0
  %132 = vmatpush1.bf16.msra.mxu0 0
  %133 = vmatprep.subr.bf16.mxu0 0
  %134 = vmatpush1.bf16.msra.mxu0 0
  %135 = vmatprep.subr.bf16.mxu0 0
  %136 = vmatpush1.bf16.msra.mxu0 0
  %137 = vmatprep.subr.bf16.mxu0 0
  %138 = vmatpush1.bf16.msra.mxu0 0
  %139 = vmatprep.subr.bf16.mxu0 0
  %140 = vmatpush1.bf16.msra.mxu0 0
  %141 = vmatprep.subr.bf16.mxu0 0
  %142 = vmatpush1.bf16.msra.mxu0 0
  %143 = vmatprep.subr.bf16.mxu0 0
  %144 = vmatpush1.bf16.msra.mxu0 0
  %145 = vmatprep.subr.bf16.mxu0 0
  %146 = vmatpush1.bf16.msra.mxu0 0
  %147 = vmatprep.subr.bf16.mxu0 0
  %148 = vmatpush1.bf16.msra.mxu0 0
  %149 = vmatprep.subr.bf16.mxu0 0
  %150 = vmatpush1.bf16.msra.mxu0 0
  %151 = vmatprep.subr.bf16.mxu0 0
  %152 = vmatpush1.bf16.msra.mxu0 0
  %153 = vmatprep.subr.bf16.mxu0 0
  %154 = vmatpush1.bf16.msra.mxu0 0
  %155 = vmatprep.subr.bf16.mxu0 0
  %156 = vmatpush1.bf16.msra.mxu0 0
  %157 = vmatprep.mubr.bf16.mxu0 0
  %158 = vmatmul.mubr.bf16.gmra.mrb[0].mxu0 %v120
  %v159 = vpop.f32.mrb[0].mxu0
  %v160 = vadd.f32 0.0, %v159
  %v161 = vpop.f32.mrb[0].mxu0
  %v162 = vpop.f32.mrb[0].mxu0
  %v163 = vpop.f32.mrb[0].mxu0
  %164 = vdwg.mxu0
  %v165 = vadd.f32 %v110, %v160
  %s166 = scalar_lea.vmem %s1, 12
  %v167 = vld [vmem:[%s166] sm:$0xf]
  %s168 = scalar_lea.vmem %s0, 6
  %v169 = vld [vmem:[%s168] sm:$0x3]
  %v171 = vsel %vm21, %v167, 0
  %v174 = vsel %vm25, %v169, 0
  %176 = vmatprep.subr.bf16.mxu0 0
  %177 = vmatpush1.bf16.msra.mxu0 %v174
  %178 = vmatprep.subr.bf16.mxu0 0
  %179 = vmatpush1.bf16.msra.mxu0 0
  %180 = vmatprep.subr.bf16.mxu0 0
  %181 = vmatpush1.bf16.msra.mxu0 0
  %182 = vmatprep.subr.bf16.mxu0 0
  %183 = vmatpush1.bf16.msra.mxu0 0
  %184 = vmatprep.subr.bf16.mxu0 0
  %185 = vmatpush1.bf16.msra.mxu0 0
  %186 = vmatprep.subr.bf16.mxu0 0
  %187 = vmatpush1.bf16.msra.mxu0 0
  %188 = vmatprep.subr.bf16.mxu0 0
  %189 = vmatpush1.bf16.msra.mxu0 0
  %190 = vmatprep.subr.bf16.mxu0 0
  %191 = vmatpush1.bf16.msra.mxu0 0
  %192 = vmatprep.subr.bf16.mxu0 0
  %193 = vmatpush1.bf16.msra.mxu0 0
  %194 = vmatprep.subr.bf16.mxu0 0
  %195 = vmatpush1.bf16.msra.mxu0 0
  %196 = vmatprep.subr.bf16.mxu0 0
  %197 = vmatpush1.bf16.msra.mxu0 0
  %198 = vmatprep.subr.bf16.mxu0 0
  %199 = vmatpush1.bf16.msra.mxu0 0
  %200 = vmatprep.subr.bf16.mxu0 0
  %201 = vmatpush1.bf16.msra.mxu0 0
  %202 = vmatprep.subr.bf16.mxu0 0
  %203 = vmatpush1.bf16.msra.mxu0 0
  %204 = vmatprep.subr.bf16.mxu0 0
  %205 = vmatpush1.bf16.msra.mxu0 0
  %206 = vmatprep.subr.bf16.mxu0 0
  %207 = vmatpush1.bf16.msra.mxu0 0
  %208 = vmatprep.mubr.bf16.mxu0 0
  %209 = vmatmul.mubr.bf16.gmra.mrb[0].mxu0 %v171
  %v210 = vpop.f32.mrb[0].mxu0
  %v211 = vadd.f32 0.0, %v210
  %v212 = vpop.f32.mrb[0].mxu0
  %v213 = vpop.f32.mrb[0].mxu0
  %v214 = vpop.f32.mrb[0].mxu0
  %215 = vdwg.mxu0
  %v216 = vadd.f32 %v165, %v211
  %s217 = scalar_lea.vmem %s1, 16
  %v218 = vld [vmem:[%s217] sm:$0xf]
  %s219 = scalar_lea.vmem %s0, 8
  %v220 = vld [vmem:[%s219] sm:$0x3]
  %v222 = vsel %vm21, %v218, 0
  %v225 = vsel %vm25, %v220, 0
  %227 = vmatprep.subr.bf16.mxu0 0
  %228 = vmatpush1.bf16.msra.mxu0 %v225
  %229 = vmatprep.subr.bf16.mxu0 0
  %230 = vmatpush1.bf16.msra.mxu0 0
  %231 = vmatprep.subr.bf16.mxu0 0
  %232 = vmatpush1.bf16.msra.mxu0 0
  %233 = vmatprep.subr.bf16.mxu0 0
  %234 = vmatpush1.bf16.msra.mxu0 0
  %235 = vmatprep.subr.bf16.mxu0 0
  %236 = vmatpush1.bf16.msra.mxu0 0
  %237 = vmatprep.subr.bf16.mxu0 0
  %238 = vmatpush1.bf16.msra.mxu0 0
  %239 = vmatprep.subr.bf16.mxu0 0
  %240 = vmatpush1.bf16.msra.mxu0 0
  %241 = vmatprep.subr.bf16.mxu0 0
  %242 = vmatpush1.bf16.msra.mxu0 0
  %243 = vmatprep.subr.bf16.mxu0 0
  %244 = vmatpush1.bf16.msra.mxu0 0
  %245 = vmatprep.subr.bf16.mxu0 0
  %246 = vmatpush1.bf16.msra.mxu0 0
  %247 = vmatprep.subr.bf16.mxu0 0
  %248 = vmatpush1.bf16.msra.mxu0 0
  %249 = vmatprep.subr.bf16.mxu0 0
  %250 = vmatpush1.bf16.msra.mxu0 0
  %251 = vmatprep.subr.bf16.mxu0 0
  %252 = vmatpush1.bf16.msra.mxu0 0
  %253 = vmatprep.subr.bf16.mxu0 0
  %254 = vmatpush1.bf16.msra.mxu0 0
  %255 = vmatprep.subr.bf16.mxu0 0
  %256 = vmatpush1.bf16.msra.mxu0 0
  %257 = vmatprep.subr.bf16.mxu0 0
  %258 = vmatpush1.bf16.msra.mxu0 0
  %259 = vmatprep.mubr.bf16.mxu0 0
  %260 = vmatmul.mubr.bf16.gmra.mrb[0].mxu0 %v222
  %v261 = vpop.f32.mrb[0].mxu0
  %v262 = vadd.f32 0.0, %v261
  %v263 = vpop.f32.mrb[0].mxu0
  %v264 = vpop.f32.mrb[0].mxu0
  %v265 = vpop.f32.mrb[0].mxu0
  %266 = vdwg.mxu0
  %v267 = vadd.f32 %v216, %v262
  %s268 = scalar_lea.vmem %s1, 20
  %v269 = vld [vmem:[%s268] sm:$0xf]
  %s270 = scalar_lea.vmem %s0, 10
  %v271 = vld [vmem:[%s270] sm:$0x3]
  %v273 = vsel %vm21, %v269, 0
  %v276 = vsel %vm25, %v271, 0
  %278 = vmatprep.subr.bf16.mxu0 0
  %279 = vmatpush1.bf16.msra.mxu0 %v276
  %280 = vmatprep.subr.bf16.mxu0 0
  %281 = vmatpush1.bf16.msra.mxu0 0
  %282 = vmatprep.subr.bf16.mxu0 0
  %283 = vmatpush1.bf16.msra.mxu0 0
  %284 = vmatprep.subr.bf16.mxu0 0
  %285 = vmatpush1.bf16.msra.mxu0 0
  %286 = vmatprep.subr.bf16.mxu0 0
  %287 = vmatpush1.bf16.msra.mxu0 0
  %288 = vmatprep.subr.bf16.mxu0 0
  %289 = vmatpush1.bf16.msra.mxu0 0
  %290 = vmatprep.subr.bf16.mxu0 0
  %291 = vmatpush1.bf16.msra.mxu0 0
  %292 = vmatprep.subr.bf16.mxu0 0
  %293 = vmatpush1.bf16.msra.mxu0 0
  %294 = vmatprep.subr.bf16.mxu0 0
  %295 = vmatpush1.bf16.msra.mxu0 0
  %296 = vmatprep.subr.bf16.mxu0 0
  %297 = vmatpush1.bf16.msra.mxu0 0
  %298 = vmatprep.subr.bf16.mxu0 0
  %299 = vmatpush1.bf16.msra.mxu0 0
  %300 = vmatprep.subr.bf16.mxu0 0
  %301 = vmatpush1.bf16.msra.mxu0 0
  %302 = vmatprep.subr.bf16.mxu0 0
  %303 = vmatpush1.bf16.msra.mxu0 0
  %304 = vmatprep.subr.bf16.mxu0 0
  %305 = vmatpush1.bf16.msra.mxu0 0
  %306 = vmatprep.subr.bf16.mxu0 0
  %307 = vmatpush1.bf16.msra.mxu0 0
  %308 = vmatprep.subr.bf16.mxu0 0
  %309 = vmatpush1.bf16.msra.mxu0 0
  %310 = vmatprep.mubr.bf16.mxu0 0
  %311 = vmatmul.mubr.bf16.gmra.mrb[0].mxu0 %v273
  %v312 = vpop.f32.mrb[0].mxu0
  %v313 = vadd.f32 0.0, %v312
  %v314 = vpop.f32.mrb[0].mxu0
  %v315 = vpop.f32.mrb[0].mxu0
  %v316 = vpop.f32.mrb[0].mxu0
  %317 = vdwg.mxu0
  %v318 = vadd.f32 %v267, %v313
  %s319 = scalar_lea.vmem %s1, 24
  %v320 = vld [vmem:[%s319] sm:$0xf]
  %s321 = scalar_lea.vmem %s0, 12
  %v322 = vld [vmem:[%s321] sm:$0x3]
  %v324 = vsel %vm21, %v320, 0
  %v327 = vsel %vm25, %v322, 0
  %329 = vmatprep.subr.bf16.mxu0 0
  %330 = vmatpush1.bf16.msra.mxu0 %v327
  %331 = vmatprep.subr.bf16.mxu0 0
  %332 = vmatpush1.bf16.msra.mxu0 0
  %333 = vmatprep.subr.bf16.mxu0 0
  %334 = vmatpush1.bf16.msra.mxu0 0
  %335 = vmatprep.subr.bf16.mxu0 0
  %336 = vmatpush1.bf16.msra.mxu0 0
  %337 = vmatprep.subr.bf16.mxu0 0
  %338 = vmatpush1.bf16.msra.mxu0 0
  %339 = vmatprep.subr.bf16.mxu0 0
  %340 = vmatpush1.bf16.msra.mxu0 0
  %341 = vmatprep.subr.bf16.mxu0 0
  %342 = vmatpush1.bf16.msra.mxu0 0
  %343 = vmatprep.subr.bf16.mxu0 0
  %344 = vmatpush1.bf16.msra.mxu0 0
  %345 = vmatprep.subr.bf16.mxu0 0
  %346 = vmatpush1.bf16.msra.mxu0 0
  %347 = vmatprep.subr.bf16.mxu0 0
  %348 = vmatpush1.bf16.msra.mxu0 0
  %349 = vmatprep.subr.bf16.mxu0 0
  %350 = vmatpush1.bf16.msra.mxu0 0
  %351 = vmatprep.subr.bf16.mxu0 0
  %352 = vmatpush1.bf16.msra.mxu0 0
  %353 = vmatprep.subr.bf16.mxu0 0
  %354 = vmatpush1.bf16.msra.mxu0 0
  %355 = vmatprep.subr.bf16.mxu0 0
  %356 = vmatpush1.bf16.msra.mxu0 0
  %357 = vmatprep.subr.bf16.mxu0 0
  %358 = vmatpush1.bf16.msra.mxu0 0
  %359 = vmatprep.subr.bf16.mxu0 0
  %360 = vmatpush1.bf16.msra.mxu0 0
  %361 = vmatprep.mubr.bf16.mxu0 0
  %362 = vmatmul.mubr.bf16.gmra.mrb[0].mxu0 %v324
  %v363 = vpop.f32.mrb[0].mxu0
  %v364 = vadd.f32 0.0, %v363
  %v365 = vpop.f32.mrb[0].mxu0
  %v366 = vpop.f32.mrb[0].mxu0
  %v367 = vpop.f32.mrb[0].mxu0
  %368 = vdwg.mxu0
  %v369 = vadd.f32 %v318, %v364
  %s370 = scalar_lea.vmem %s1, 28
  %v371 = vld [vmem:[%s370] sm:$0xf]
  %s372 = scalar_lea.vmem %s0, 14
  %v373 = vld [vmem:[%s372] sm:$0x3]
  %v375 = vsel %vm21, %v371, 0
  %v378 = vsel %vm25, %v373, 0
  %380 = vmatprep.subr.bf16.mxu0 0
  %381 = vmatpush1.bf16.msra.mxu0 %v378
  %382 = vmatprep.subr.bf16.mxu0 0
  %383 = vmatpush1.bf16.msra.mxu0 0
  %384 = vmatprep.subr.bf16.mxu0 0
  %385 = vmatpush1.bf16.msra.mxu0 0
  %386 = vmatprep.subr.bf16.mxu0 0
  %387 = vmatpush1.bf16.msra.mxu0 0
  %388 = vmatprep.subr.bf16.mxu0 0
  %389 = vmatpush1.bf16.msra.mxu0 0
  %390 = vmatprep.subr.bf16.mxu0 0
  %391 = vmatpush1.bf16.msra.mxu0 0
  %392 = vmatprep.subr.bf16.mxu0 0
  %393 = vmatpush1.bf16.msra.mxu0 0
  %394 = vmatprep.subr.bf16.mxu0 0
  %395 = vmatpush1.bf16.msra.mxu0 0
  %396 = vmatprep.subr.bf16.mxu0 0
  %397 = vmatpush1.bf16.msra.mxu0 0
  %398 = vmatprep.subr.bf16.mxu0 0
  %399 = vmatpush1.bf16.msra.mxu0 0
  %400 = vmatprep.subr.bf16.mxu0 0
  %401 = vmatpush1.bf16.msra.mxu0 0
  %402 = vmatprep.subr.bf16.mxu0 0
  %403 = vmatpush1.bf16.msra.mxu0 0
  %404 = vmatprep.subr.bf16.mxu0 0
  %405 = vmatpush1.bf16.msra.mxu0 0
  %406 = vmatprep.subr.bf16.mxu0 0
  %407 = vmatpush1.bf16.msra.mxu0 0
  %408 = vmatprep.subr.bf16.mxu0 0
  %409 = vmatpush1.bf16.msra.mxu0 0
  %410 = vmatprep.subr.bf16.mxu0 0
  %411 = vmatpush1.bf16.msra.mxu0 0
  %412 = vmatprep.mubr.bf16.mxu0 0
  %413 = vmatmul.mubr.bf16.gmra.mrb[0].mxu0 %v375
  %v414 = vpop.f32.mrb[0].mxu0
  %v415 = vadd.f32 0.0, %v414
  %v416 = vpop.f32.mrb[0].mxu0
  %v417 = vpop.f32.mrb[0].mxu0
  %v418 = vpop.f32.mrb[0].mxu0
  %419 = vdwg.mxu0
  %v420 = vadd.f32 %v369, %v415
  %s421 = scalar_lea.vmem %s1, 32
  %v422 = vld [vmem:[%s421] sm:$0xf]
  %s423 = scalar_lea.vmem %s0, 16
  %v424 = vld [vmem:[%s423] sm:$0x3]
  %v426 = vsel %vm21, %v422, 0
  %v429 = vsel %vm25, %v424, 0
  %431 = vmatprep.subr.bf16.mxu0 0
  %432 = vmatpush1.bf16.msra.mxu0 %v429
  %433 = vmatprep.subr.bf16.mxu0 0
  %434 = vmatpush1.bf16.msra.mxu0 0
  %435 = vmatprep.subr.bf16.mxu0 0
  %436 = vmatpush1.bf16.msra.mxu0 0
  %437 = vmatprep.subr.bf16.mxu0 0
  %438 = vmatpush1.bf16.msra.mxu0 0
  %439 = vmatprep.subr.bf16.mxu0 0
  %440 = vmatpush1.bf16.msra.mxu0 0
  %441 = vmatprep.subr.bf16.mxu0 0
  %442 = vmatpush1.bf16.msra.mxu0 0
  %443 = vmatprep.subr.bf16.mxu0 0
  %444 = vmatpush1.bf16.msra.mxu0 0
  %445 = vmatprep.subr.bf16.mxu0 0
  %446 = vmatpush1.bf16.msra.mxu0 0
  %447 = vmatprep.subr.bf16.mxu0 0
  %448 = vmatpush1.bf16.msra.mxu0 0
  %449 = vmatprep.subr.bf16.mxu0 0
  %450 = vmatpush1.bf16.msra.mxu0 0
  %451 = vmatprep.subr.bf16.mxu0 0
  %452 = vmatpush1.bf16.msra.mxu0 0
  %453 = vmatprep.subr.bf16.mxu0 0
  %454 = vmatpush1.bf16.msra.mxu0 0
  %455 = vmatprep.subr.bf16.mxu0 0
  %456 = vmatpush1.bf16.msra.mxu0 0
  %457 = vmatprep.subr.bf16.mxu0 0
  %458 = vmatpush1.bf16.msra.mxu0 0
  %459 = vmatprep.subr.bf16.mxu0 0
  %460 = vmatpush1.bf16.msra.mxu0 0
  %461 = vmatprep.subr.bf16.mxu0 0
  %462 = vmatpush1.bf16.msra.mxu0 0
  %463 = vmatprep.mubr.bf16.mxu0 0
  %464 = vmatmul.mubr.bf16.gmra.mrb[0].mxu0 %v426
  %v465 = vpop.f32.mrb[0].mxu0
  %v466 = vadd.f32 0.0, %v465
  %v467 = vpop.f32.mrb[0].mxu0
  %v468 = vpop.f32.mrb[0].mxu0
  %v469 = vpop.f32.mrb[0].mxu0
  %470 = vdwg.mxu0
  %v471 = vadd.f32 %v420, %v466
  %v472 = vld [vmem:[%s2] sm:$0xff]
  %474 = vset.pattern.permute.xlu0 0
  %475 = vperm.xlu0 %474, %v472
  %v476 = vpop.permute.xlu0 %475
  %v478 = vadd.f32 %v471, %v476
  %v479 = vmax.f32 %v478, 0.0
  %v480 = vpack.c.bf16 %v479, %v479
  %481 = vst [vmem:[%s3] sm:$0xf] %v480
  // Predicated region
  $region14: #{unet_forward.18} parent=0 // pred_check
    _
  $region15: #{unet_forward.18} parent=0 // pred_check_branch
    %483 = sbr.rel (0) target = $region17
  $region16: #{unet_forward.18} parent=0 // pred_region
    _
  $region17: #{unet_forward.18} parent=0 // pred_fallthru
    _
  // Predicated region
  $region18: #{unet_forward.18} parent=0 // pred_check
    _
  $region19: #{unet_forward.18} parent=0 // pred_check_branch
    %485 = sbr.rel (0) target = $region21
  $region20: #{unet_forward.18} parent=0 // pred_region
    _
  $region21: #{unet_forward.18} parent=0 // pred_fallthru
    _

// kernel: unet_forward.20
$region0: #{unet_forward.20}
  #allocation0 [shape = 'u32[]', space=smem, size = 0x4, offset = 0x4, fixed_abs, tag = 'smem constant byte address 0x4 - core index']
  #allocation1 [shape = 'u32[144,128]{1,0:T(1,128)}', space=vmem, size = 0x12000, scoped, tag = 'internal scratch']
  %s0 = inlined_call_operand.vmem [shape: bf16[4,8,32], index: 0, kind: input, shape index: {}]
  %s1 = inlined_call_operand.vmem [shape: bf16[8,32], index: 1, kind: output, shape index: {}]
  %s2 = sld [smem:[#allocation0]]
  $region14: #{unet_forward.20} parent=0
    _
  %s4 = ssub.s32 1, %s2
  %s5 = scalar_select 0, %s4, %s2
  // Predicated region
  $region2: #{unet_forward.20} parent=0 // pred_check
    _
  $region3: #{unet_forward.20} parent=0 // pred_check_branch
    %7 = sbr.rel (0) target = $region5
  $region4: #{unet_forward.20} parent=0 // pred_region
    _
  $region5: #{unet_forward.20} parent=0 // pred_fallthru
    _
  %v8 = vld [vmem:[%s0] sm:$0xf]
  %s9 = scalar_lea.vmem %s0, 4
  %v10 = vld [vmem:[%s9] sm:$0xf]
  %v11 = vmax.bf16 %v8, %v10
  %s12 = scalar_lea.vmem %s0, 8
  %v13 = vld [vmem:[%s12] sm:$0xf]
  %s14 = scalar_lea.vmem %s0, 12
  %v15 = vld [vmem:[%s14] sm:$0xf]
  %v16 = vmax.bf16 %v13, %v15
  %v17 = vmax.bf16 %v11, %v16
  %vm18 = vcmask 257024
  %19 = vst.msk [vmem:[%s1] sm:$0xf] %vm18, %v17
  // Predicated region
  $region6: #{unet_forward.20} parent=0 // pred_check
    _
  $region7: #{unet_forward.20} parent=0 // pred_check_branch
    %21 = sbr.rel (0) target = $region9
  $region8: #{unet_forward.20} parent=0 // pred_region
    _
  $region9: #{unet_forward.20} parent=0 // pred_fallthru
    _
  // Predicated region
  $region10: #{unet_forward.20} parent=0 // pred_check
    _
  $region11: #{unet_forward.20} parent=0 // pred_check_branch
    %23 = sbr.rel (0) target = $region13
  $region12: #{unet_forward.20} parent=0 // pred_region
    _
  $region13: #{unet_forward.20} parent=0 // pred_fallthru
    _

// kernel: unet_forward.19
$region0: #{unet_forward.19}
  #allocation0 [shape = 'u32[]', space=smem, size = 0x4, offset = 0x4, fixed_abs, tag = 'smem constant byte address 0x4 - core index']
  #allocation1 [shape = 'u32[144,128]{1,0:T(1,128)}', space=vmem, size = 0x12000, scoped, tag = 'internal scratch']
  %s0 = inlined_call_operand.vmem [shape: bf16[9,8,128], index: 0, kind: input, shape index: {}]
  %s1 = inlined_call_operand.vmem [shape: bf16[9,8,8], index: 1, kind: input, shape index: {}]
  %s2 = inlined_call_operand.vmem [shape: f32[8,1], index: 2, kind: input, shape index: {}]
  %s3 = inlined_call_operand.vmem [shape: bf16[8,128], index: 3, kind: output, shape index: {}]
  %s4 = sld [smem:[#allocation0]]
  $region22: #{unet_forward.19} parent=0
    _
  %s6 = ssub.s32 1, %s4
  %s7 = scalar_select 0, %s6, %s4
  // Predicated region
  $region2: #{unet_forward.19} parent=0 // pred_check
    _
  $region3: #{unet_forward.19} parent=0 // pred_check_branch
    %9 = sbr.rel (0) target = $region5
  $region4: #{unet_forward.19} parent=0 // pred_region
    _
  $region5: #{unet_forward.19} parent=0 // pred_fallthru
    _
  // Predicated region
  $region6: #{unet_forward.19} parent=0 // pred_check
    _
  $region7: #{unet_forward.19} parent=0 // pred_check_branch
    %11 = sbr.rel (0) target = $region9
  $region8: #{unet_forward.19} parent=0 // pred_region
    _
  $region9: #{unet_forward.19} parent=0 // pred_fallthru
    _
  // Predicated region
  $region10: #{unet_forward.19} parent=0 // pred_check
    _
  $region11: #{unet_forward.19} parent=0 // pred_check_branch
    %13 = sbr.rel (0) target = $region13
  $region12: #{unet_forward.19} parent=0 // pred_region
    _
  $region13: #{unet_forward.19} parent=0 // pred_fallthru
    _
  %v15 = vld [vmem:[%s1] sm:$0xf]
  %v16 = vld [vmem:[%s0] sm:$0xf]
  %s17 = scalar_lea.vmem %s1, 4
  %v18 = vld [vmem:[%s17] sm:$0xf]
  %s19 = scalar_lea.vmem %s0, 4
  %v20 = vld [vmem:[%s19] sm:$0xf]
  %vm21 = vcmask 64512
  %v23 = vsel %vm21, %v18, 0
  %vm25 = vcmask 1043456
  %v27 = vsel %vm25, %v20, 0
  %29 = vmatprep.subr.bf16.mxu0 0
  %30 = vmatpush1.bf16.msra.mxu0 %v27
  %31 = vmatprep.subr.bf16.mxu0 0
  %32 = vmatpush1.bf16.msra.mxu0 0
  %33 = vmatprep.subr.bf16.mxu0 0
  %34 = vmatpush1.bf16.msra.mxu0 0
  %35 = vmatprep.subr.bf16.mxu0 0
  %36 = vmatpush1.bf16.msra.mxu0 0
  %37 = vmatprep.subr.bf16.mxu0 0
  %38 = vmatpush1.bf16.msra.mxu0 0
  %39 = vmatprep.subr.bf16.mxu0 0
  %40 = vmatpush1.bf16.msra.mxu0 0
  %41 = vmatprep.subr.bf16.mxu0 0
  %42 = vmatpush1.bf16.msra.mxu0 0
  %43 = vmatprep.subr.bf16.mxu0 0
  %44 = vmatpush1.bf16.msra.mxu0 0
  %45 = vmatprep.subr.bf16.mxu0 0
  %46 = vmatpush1.bf16.msra.mxu0 0
  %47 = vmatprep.subr.bf16.mxu0 0
  %48 = vmatpush1.bf16.msra.mxu0 0
  %49 = vmatprep.subr.bf16.mxu0 0
  %50 = vmatpush1.bf16.msra.mxu0 0
  %51 = vmatprep.subr.bf16.mxu0 0
  %52 = vmatpush1.bf16.msra.mxu0 0
  %53 = vmatprep.subr.bf16.mxu0 0
  %54 = vmatpush1.bf16.msra.mxu0 0
  %55 = vmatprep.subr.bf16.mxu0 0
  %56 = vmatpush1.bf16.msra.mxu0 0
  %57 = vmatprep.subr.bf16.mxu0 0
  %58 = vmatpush1.bf16.msra.mxu0 0
  %59 = vmatprep.subr.bf16.mxu0 0
  %60 = vmatpush1.bf16.msra.mxu0 0
  %61 = vmatprep.mubr.bf16.mxu0 0
  %62 = vmatmul.mubr.bf16.gmra.mrb[0].mxu0 %v23
  %v63 = vpop.f32.mrb[0].mxu0
  %v64 = vadd.f32 0.0, %v63
  %v65 = vpop.f32.mrb[0].mxu0
  %v66 = vpop.f32.mrb[0].mxu0
  %v67 = vpop.f32.mrb[0].mxu0
  %68 = vdwg.mxu0
  %v70 = vsel %vm21, %v15, 0
  %v73 = vsel %vm25, %v16, 0
  %75 = vmatprep.subr.bf16.mxu0 0
  %76 = vmatpush1.bf16.msra.mxu0 %v73
  %77 = vmatprep.subr.bf16.mxu0 0
  %78 = vmatpush1.bf16.msra.mxu0 0
  %79 = vmatprep.subr.bf16.mxu0 0
  %80 = vmatpush1.bf16.msra.mxu0 0
  %81 = vmatprep.subr.bf16.mxu0 0
  %82 = vmatpush1.bf16.msra.mxu0 0
  %83 = vmatprep.subr.bf16.mxu0 0
  %84 = vmatpush1.bf16.msra.mxu0 0
  %85 = vmatprep.subr.bf16.mxu0 0
  %86 = vmatpush1.bf16.msra.mxu0 0
  %87 = vmatprep.subr.bf16.mxu0 0
  %88 = vmatpush1.bf16.msra.mxu0 0
  %89 = vmatprep.subr.bf16.mxu0 0
  %90 = vmatpush1.bf16.msra.mxu0 0
  %91 = vmatprep.subr.bf16.mxu0 0
  %92 = vmatpush1.bf16.msra.mxu0 0
  %93 = vmatprep.subr.bf16.mxu0 0
  %94 = vmatpush1.bf16.msra.mxu0 0
  %95 = vmatprep.subr.bf16.mxu0 0
  %96 = vmatpush1.bf16.msra.mxu0 0
  %97 = vmatprep.subr.bf16.mxu0 0
  %98 = vmatpush1.bf16.msra.mxu0 0
  %99 = vmatprep.subr.bf16.mxu0 0
  %100 = vmatpush1.bf16.msra.mxu0 0
  %101 = vmatprep.subr.bf16.mxu0 0
  %102 = vmatpush1.bf16.msra.mxu0 0
  %103 = vmatprep.subr.bf16.mxu0 0
  %104 = vmatpush1.bf16.msra.mxu0 0
  %105 = vmatprep.subr.bf16.mxu0 0
  %106 = vmatpush1.bf16.msra.mxu0 0
  %107 = vmatprep.mubr.bf16.mxu0 0
  %108 = vmatmul.mubr.bf16.gmra.mrb[0].mxu0 %v70
  %v109 = vpop.f32.mrb[0].mxu0
  %v110 = vadd.f32 %v64, %v109
  %v111 = vpop.f32.mrb[0].mxu0
  %v112 = vpop.f32.mrb[0].mxu0
  %v113 = vpop.f32.mrb[0].mxu0
  %114 = vdwg.mxu0
  %s115 = scalar_lea.vmem %s1, 8
  %v116 = vld [vmem:[%s115] sm:$0xf]
  %s117 = scalar_lea.vmem %s0, 8
  %v118 = vld [vmem:[%s117] sm:$0xf]
  %v120 = vsel %vm21, %v116, 0
  %v123 = vsel %vm25, %v118, 0
  %125 = vmatprep.subr.bf16.mxu0 0
  %126 = vmatpush1.bf16.msra.mxu0 %v123
  %127 = vmatprep.subr.bf16.mxu0 0
  %128 = vmatpush1.bf16.msra.mxu0 0
  %129 = vmatprep.subr.bf16.mxu0 0
  %130 = vmatpush1.bf16.msra.mxu0 0
  %131 = vmatprep.subr.bf16.mxu0 0
  %132 = vmatpush1.bf16.msra.mxu0 0
  %133 = vmatprep.subr.bf16.mxu0 0
  %134 = vmatpush1.bf16.msra.mxu0 0
  %135 = vmatprep.subr.bf16.mxu0 0
  %136 = vmatpush1.bf16.msra.mxu0 0
  %137 = vmatprep.subr.bf16.mxu0 0
  %138 = vmatpush1.bf16.msra.mxu0 0
  %139 = vmatprep.subr.bf16.mxu0 0
  %140 = vmatpush1.bf16.msra.mxu0 0
  %141 = vmatprep.subr.bf16.mxu0 0
  %142 = vmatpush1.bf16.msra.mxu0 0
  %143 = vmatprep.subr.bf16.mxu0 0
  %144 = vmatpush1.bf16.msra.mxu0 0
  %145 = vmatprep.subr.bf16.mxu0 0
  %146 = vmatpush1.bf16.msra.mxu0 0
  %147 = vmatprep.subr.bf16.mxu0 0
  %148 = vmatpush1.bf16.msra.mxu0 0
  %149 = vmatprep.subr.bf16.mxu0 0
  %150 = vmatpush1.bf16.msra.mxu0 0
  %151 = vmatprep.subr.bf16.mxu0 0
  %152 = vmatpush1.bf16.msra.mxu0 0
  %153 = vmatprep.subr.bf16.mxu0 0
  %154 = vmatpush1.bf16.msra.mxu0 0
  %155 = vmatprep.subr.bf16.mxu0 0
  %156 = vmatpush1.bf16.msra.mxu0 0
  %157 = vmatprep.mubr.bf16.mxu0 0
  %158 = vmatmul.mubr.bf16.gmra.mrb[0].mxu0 %v120
  %v159 = vpop.f32.mrb[0].mxu0
  %v160 = vadd.f32 0.0, %v159
  %v161 = vpop.f32.mrb[0].mxu0
  %v162 = vpop.f32.mrb[0].mxu0
  %v163 = vpop.f32.mrb[0].mxu0
  %164 = vdwg.mxu0
  %v165 = vadd.f32 %v110, %v160
  %s166 = scalar_lea.vmem %s1, 12
  %v167 = vld [vmem:[%s166] sm:$0xf]
  %s168 = scalar_lea.vmem %s0, 12
  %v169 = vld [vmem:[%s168] sm:$0xf]
  %v171 = vsel %vm21, %v167, 0
  %v174 = vsel %vm25, %v169, 0
  %176 = vmatprep.subr.bf16.mxu0 0
  %177 = vmatpush1.bf16.msra.mxu0 %v174
  %178 = vmatprep.subr.bf16.mxu0 0
  %179 = vmatpush1.bf16.msra.mxu0 0
  %180 = vmatprep.subr.bf16.mxu0 0
  %181 = vmatpush1.bf16.msra.mxu0 0
  %182 = vmatprep.subr.bf16.mxu0 0
  %183 = vmatpush1.bf16.msra.mxu0 0
  %184 = vmatprep.subr.bf16.mxu0 0
  %185 = vmatpush1.bf16.msra.mxu0 0
  %186 = vmatprep.subr.bf16.mxu0 0
  %187 = vmatpush1.bf16.msra.mxu0 0
  %188 = vmatprep.subr.bf16.mxu0 0
  %189 = vmatpush1.bf16.msra.mxu0 0
  %190 = vmatprep.subr.bf16.mxu0 0
  %191 = vmatpush1.bf16.msra.mxu0 0
  %192 = vmatprep.subr.bf16.mxu0 0
  %193 = vmatpush1.bf16.msra.mxu0 0
  %194 = vmatprep.subr.bf16.mxu0 0
  %195 = vmatpush1.bf16.msra.mxu0 0
  %196 = vmatprep.subr.bf16.mxu0 0
  %197 = vmatpush1.bf16.msra.mxu0 0
  %198 = vmatprep.subr.bf16.mxu0 0
  %199 = vmatpush1.bf16.msra.mxu0 0
  %200 = vmatprep.subr.bf16.mxu0 0
  %201 = vmatpush1.bf16.msra.mxu0 0
  %202 = vmatprep.subr.bf16.mxu0 0
  %203 = vmatpush1.bf16.msra.mxu0 0
  %204 = vmatprep.subr.bf16.mxu0 0
  %205 = vmatpush1.bf16.msra.mxu0 0
  %206 = vmatprep.subr.bf16.mxu0 0
  %207 = vmatpush1.bf16.msra.mxu0 0
  %208 = vmatprep.mubr.bf16.mxu0 0
  %209 = vmatmul.mubr.bf16.gmra.mrb[0].mxu0 %v171
  %v210 = vpop.f32.mrb[0].mxu0
  %v211 = vadd.f32 0.0, %v210
  %v212 = vpop.f32.mrb[0].mxu0
  %v213 = vpop.f32.mrb[0].mxu0
  %v214 = vpop.f32.mrb[0].mxu0
  %215 = vdwg.mxu0
  %v216 = vadd.f32 %v165, %v211
  %s217 = scalar_lea.vmem %s1, 16
  %v218 = vld [vmem:[%s217] sm:$0xf]
  %s219 = scalar_lea.vmem %s0, 16
  %v220 = vld [vmem:[%s219] sm:$0xf]
  %v222 = vsel %vm21, %v218, 0
  %v225 = vsel %vm25, %v220, 0
  %227 = vmatprep.subr.bf16.mxu0 0
  %228 = vmatpush1.bf16.msra.mxu0 %v225
  %229 = vmatprep.subr.bf16.mxu0 0
  %230 = vmatpush1.bf16.msra.mxu0 0
  %231 = vmatprep.subr.bf16.mxu0 0
  %232 = vmatpush1.bf16.msra.mxu0 0
  %233 = vmatprep.subr.bf16.mxu0 0
  %234 = vmatpush1.bf16.msra.mxu0 0
  %235 = vmatprep.subr.bf16.mxu0 0
  %236 = vmatpush1.bf16.msra.mxu0 0
  %237 = vmatprep.subr.bf16.mxu0 0
  %238 = vmatpush1.bf16.msra.mxu0 0
  %239 = vmatprep.subr.bf16.mxu0 0
  %240 = vmatpush1.bf16.msra.mxu0 0
  %241 = vmatprep.subr.bf16.mxu0 0
  %242 = vmatpush1.bf16.msra.mxu0 0
  %243 = vmatprep.subr.bf16.mxu0 0
  %244 = vmatpush1.bf16.msra.mxu0 0
  %245 = vmatprep.subr.bf16.mxu0 0
  %246 = vmatpush1.bf16.msra.mxu0 0
  %247 = vmatprep.subr.bf16.mxu0 0
  %248 = vmatpush1.bf16.msra.mxu0 0
  %249 = vmatprep.subr.bf16.mxu0 0
  %250 = vmatpush1.bf16.msra.mxu0 0
  %251 = vmatprep.subr.bf16.mxu0 0
  %252 = vmatpush1.bf16.msra.mxu0 0
  %253 = vmatprep.subr.bf16.mxu0 0
  %254 = vmatpush1.bf16.msra.mxu0 0
  %255 = vmatprep.subr.bf16.mxu0 0
  %256 = vmatpush1.bf16.msra.mxu0 0
  %257 = vmatprep.subr.bf16.mxu0 0
  %258 = vmatpush1.bf16.msra.mxu0 0
  %259 = vmatprep.mubr.bf16.mxu0 0
  %260 = vmatmul.mubr.bf16.gmra.mrb[0].mxu0 %v222
  %v261 = vpop.f32.mrb[0].mxu0
  %v262 = vadd.f32 0.0, %v261
  %v263 = vpop.f32.mrb[0].mxu0
  %v264 = vpop.f32.mrb[0].mxu0
  %v265 = vpop.f32.mrb[0].mxu0
  %266 = vdwg.mxu0
  %v267 = vadd.f32 %v216, %v262
  %s268 = scalar_lea.vmem %s1, 20
  %v269 = vld [vmem:[%s268] sm:$0xf]
  %s270 = scalar_lea.vmem %s0, 20
  %v271 = vld [vmem:[%s270] sm:$0xf]
  %v273 = vsel %vm21, %v269, 0
  %v276 = vsel %vm25, %v271, 0
  %278 = vmatprep.subr.bf16.mxu0 0
  %279 = vmatpush1.bf16.msra.mxu0 %v276
  %280 = vmatprep.subr.bf16.mxu0 0
  %281 = vmatpush1.bf16.msra.mxu0 0
  %282 = vmatprep.subr.bf16.mxu0 0
  %283 = vmatpush1.bf16.msra.mxu0 0
  %284 = vmatprep.subr.bf16.mxu0 0
  %285 = vmatpush1.bf16.msra.mxu0 0
  %286 = vmatprep.subr.bf16.mxu0 0
  %287 = vmatpush1.bf16.msra.mxu0 0
  %288 = vmatprep.subr.bf16.mxu0 0
  %289 = vmatpush1.bf16.msra.mxu0 0
  %290 = vmatprep.subr.bf16.mxu0 0
  %291 = vmatpush1.bf16.msra.mxu0 0
  %292 = vmatprep.subr.bf16.mxu0 0
  %293 = vmatpush1.bf16.msra.mxu0 0
  %294 = vmatprep.subr.bf16.mxu0 0
  %295 = vmatpush1.bf16.msra.mxu0 0
  %296 = vmatprep.subr.bf16.mxu0 0
  %297 = vmatpush1.bf16.msra.mxu0 0
  %298 = vmatprep.subr.bf16.mxu0 0
  %299 = vmatpush1.bf16.msra.mxu0 0
  %300 = vmatprep.subr.bf16.mxu0 0
  %301 = vmatpush1.bf16.msra.mxu0 0
  %302 = vmatprep.subr.bf16.mxu0 0
  %303 = vmatpush1.bf16.msra.mxu0 0
  %304 = vmatprep.subr.bf16.mxu0 0
  %305 = vmatpush1.bf16.msra.mxu0 0
  %306 = vmatprep.subr.bf16.mxu0 0
  %307 = vmatpush1.bf16.msra.mxu0 0
  %308 = vmatprep.subr.bf16.mxu0 0
  %309 = vmatpush1.bf16.msra.mxu0 0
  %310 = vmatprep.mubr.bf16.mxu0 0
  %311 = vmatmul.mubr.bf16.gmra.mrb[0].mxu0 %v273
  %v312 = vpop.f32.mrb[0].mxu0
  %v313 = vadd.f32 0.0, %v312
  %v314 = vpop.f32.mrb[0].mxu0
  %v315 = vpop.f32.mrb[0].mxu0
  %v316 = vpop.f32.mrb[0].mxu0
  %317 = vdwg.mxu0
  %v318 = vadd.f32 %v267, %v313
  %s319 = scalar_lea.vmem %s1, 24
  %v320 = vld [vmem:[%s319] sm:$0xf]
  %s321 = scalar_lea.vmem %s0, 24
  %v322 = vld [vmem:[%s321] sm:$0xf]
  %v324 = vsel %vm21, %v320, 0
  %v327 = vsel %vm25, %v322, 0
  %329 = vmatprep.subr.bf16.mxu0 0
  %330 = vmatpush1.bf16.msra.mxu0 %v327
  %331 = vmatprep.subr.bf16.mxu0 0
  %332 = vmatpush1.bf16.msra.mxu0 0
  %333 = vmatprep.subr.bf16.mxu0 0
  %334 = vmatpush1.bf16.msra.mxu0 0
  %335 = vmatprep.subr.bf16.mxu0 0
  %336 = vmatpush1.bf16.msra.mxu0 0
  %337 = vmatprep.subr.bf16.mxu0 0
  %338 = vmatpush1.bf16.msra.mxu0 0
  %339 = vmatprep.subr.bf16.mxu0 0
  %340 = vmatpush1.bf16.msra.mxu0 0
  %341 = vmatprep.subr.bf16.mxu0 0
  %342 = vmatpush1.bf16.msra.mxu0 0
  %343 = vmatprep.subr.bf16.mxu0 0
  %344 = vmatpush1.bf16.msra.mxu0 0
  %345 = vmatprep.subr.bf16.mxu0 0
  %346 = vmatpush1.bf16.msra.mxu0 0
  %347 = vmatprep.subr.bf16.mxu0 0
  %348 = vmatpush1.bf16.msra.mxu0 0
  %349 = vmatprep.subr.bf16.mxu0 0
  %350 = vmatpush1.bf16.msra.mxu0 0
  %351 = vmatprep.subr.bf16.mxu0 0
  %352 = vmatpush1.bf16.msra.mxu0 0
  %353 = vmatprep.subr.bf16.mxu0 0
  %354 = vmatpush1.bf16.msra.mxu0 0
  %355 = vmatprep.subr.bf16.mxu0 0
  %356 = vmatpush1.bf16.msra.mxu0 0
  %357 = vmatprep.subr.bf16.mxu0 0
  %358 = vmatpush1.bf16.msra.mxu0 0
  %359 = vmatprep.subr.bf16.mxu0 0
  %360 = vmatpush1.bf16.msra.mxu0 0
  %361 = vmatprep.mubr.bf16.mxu0 0
  %362 = vmatmul.mubr.bf16.gmra.mrb[0].mxu0 %v324
  %v363 = vpop.f32.mrb[0].mxu0
  %v364 = vadd.f32 0.0, %v363
  %v365 = vpop.f32.mrb[0].mxu0
  %v366 = vpop.f32.mrb[0].mxu0
  %v367 = vpop.f32.mrb[0].mxu0
  %368 = vdwg.mxu0
  %v369 = vadd.f32 %v318, %v364
  %s370 = scalar_lea.vmem %s1, 28
  %v371 = vld [vmem:[%s370] sm:$0xf]
  %s372 = scalar_lea.vmem %s0, 28
  %v373 = vld [vmem:[%s372] sm:$0xf]
  %v375 = vsel %vm21, %v371, 0
  %v378 = vsel %vm25, %v373, 0
  %380 = vmatprep.subr.bf16.mxu0 0
  %381 = vmatpush1.bf16.msra.mxu0 %v378
  %382 = vmatprep.subr.bf16.mxu0 0
  %383 = vmatpush1.bf16.msra.mxu0 0
  %384 = vmatprep.subr.bf16.mxu0 0
  %385 = vmatpush1.bf16.msra.mxu0 0
  %386 = vmatprep.subr.bf16.mxu0 0
  %387 = vmatpush1.bf16.msra.mxu0 0
  %388 = vmatprep.subr.bf16.mxu0 0
  %389 = vmatpush1.bf16.msra.mxu0 0
  %390 = vmatprep.subr.bf16.mxu0 0
  %391 = vmatpush1.bf16.msra.mxu0 0
  %392 = vmatprep.subr.bf16.mxu0 0
  %393 = vmatpush1.bf16.msra.mxu0 0
  %394 = vmatprep.subr.bf16.mxu0 0
  %395 = vmatpush1.bf16.msra.mxu0 0
  %396 = vmatprep.subr.bf16.mxu0 0
  %397 = vmatpush1.bf16.msra.mxu0 0
  %398 = vmatprep.subr.bf16.mxu0 0
  %399 = vmatpush1.bf16.msra.mxu0 0
  %400 = vmatprep.subr.bf16.mxu0 0
  %401 = vmatpush1.bf16.msra.mxu0 0
  %402 = vmatprep.subr.bf16.mxu0 0
  %403 = vmatpush1.bf16.msra.mxu0 0
  %404 = vmatprep.subr.bf16.mxu0 0
  %405 = vmatpush1.bf16.msra.mxu0 0
  %406 = vmatprep.subr.bf16.mxu0 0
  %407 = vmatpush1.bf16.msra.mxu0 0
  %408 = vmatprep.subr.bf16.mxu0 0
  %409 = vmatpush1.bf16.msra.mxu0 0
  %410 = vmatprep.subr.bf16.mxu0 0
  %411 = vmatpush1.bf16.msra.mxu0 0
  %412 = vmatprep.mubr.bf16.mxu0 0
  %413 = vmatmul.mubr.bf16.gmra.mrb[0].mxu0 %v375
  %v414 = vpop.f32.mrb[0].mxu0
  %v415 = vadd.f32 0.0, %v414
  %v416 = vpop.f32.mrb[0].mxu0
  %v417 = vpop.f32.mrb[0].mxu0
  %v418 = vpop.f32.mrb[0].mxu0
  %419 = vdwg.mxu0
  %v420 = vadd.f32 %v369, %v415
  %s421 = scalar_lea.vmem %s1, 32
  %v422 = vld [vmem:[%s421] sm:$0xf]
  %s423 = scalar_lea.vmem %s0, 32
  %v424 = vld [vmem:[%s423] sm:$0xf]
  %v426 = vsel %vm21, %v422, 0
  %v429 = vsel %vm25, %v424, 0
  %431 = vmatprep.subr.bf16.mxu0 0
  %432 = vmatpush1.bf16.msra.mxu0 %v429
  %433 = vmatprep.subr.bf16.mxu0 0
  %434 = vmatpush1.bf16.msra.mxu0 0
  %435 = vmatprep.subr.bf16.mxu0 0
  %436 = vmatpush1.bf16.msra.mxu0 0
  %437 = vmatprep.subr.bf16.mxu0 0
  %438 = vmatpush1.bf16.msra.mxu0 0
  %439 = vmatprep.subr.bf16.mxu0 0
  %440 = vmatpush1.bf16.msra.mxu0 0
  %441 = vmatprep.subr.bf16.mxu0 0
  %442 = vmatpush1.bf16.msra.mxu0 0
  %443 = vmatprep.subr.bf16.mxu0 0
  %444 = vmatpush1.bf16.msra.mxu0 0
  %445 = vmatprep.subr.bf16.mxu0 0
  %446 = vmatpush1.bf16.msra.mxu0 0
  %447 = vmatprep.subr.bf16.mxu0 0
  %448 = vmatpush1.bf16.msra.mxu0 0
  %449 = vmatprep.subr.bf16.mxu0 0
  %450 = vmatpush1.bf16.msra.mxu0 0
  %451 = vmatprep.subr.bf16.mxu0 0
  %452 = vmatpush1.bf16.msra.mxu0 0
  %453 = vmatprep.subr.bf16.mxu0 0
  %454 = vmatpush1.bf16.msra.mxu0 0
  %455 = vmatprep.subr.bf16.mxu0 0
  %456 = vmatpush1.bf16.msra.mxu0 0
  %457 = vmatprep.subr.bf16.mxu0 0
  %458 = vmatpush1.bf16.msra.mxu0 0
  %459 = vmatprep.subr.bf16.mxu0 0
  %460 = vmatpush1.bf16.msra.mxu0 0
  %461 = vmatprep.subr.bf16.mxu0 0
  %462 = vmatpush1.bf16.msra.mxu0 0
  %463 = vmatprep.mubr.bf16.mxu0 0
  %464 = vmatmul.mubr.bf16.gmra.mrb[0].mxu0 %v426
  %v465 = vpop.f32.mrb[0].mxu0
  %v466 = vadd.f32 0.0, %v465
  %v467 = vpop.f32.mrb[0].mxu0
  %v468 = vpop.f32.mrb[0].mxu0
  %v469 = vpop.f32.mrb[0].mxu0
  %470 = vdwg.mxu0
  %v471 = vadd.f32 %v420, %v466
  %v472 = vld [vmem:[%s2] sm:$0xff]
  %474 = vset.pattern.permute.xlu0 0
  %475 = vperm.xlu0 %474, %v472
  %v476 = vpop.permute.xlu0 %475
  %v478 = vadd.f32 %v471, %v476
  %v479 = vmax.f32 %v478, 0.0
  %v480 = vpack.c.bf16 %v479, %v479
  %481 = vst [vmem:[%s3] sm:$0xf] %v480
  // Predicated region
  $region14: #{unet_forward.19} parent=0 // pred_check
    _
  $region15: #{unet_forward.19} parent=0 // pred_check_branch
    %483 = sbr.rel (0) target = $region17
  $region16: #{unet_forward.19} parent=0 // pred_region
    _
  $region17: #{unet_forward.19} parent=0 // pred_fallthru
    _
  // Predicated region
  $region18: #{unet_forward.19} parent=0 // pred_check
    _
  $region19: #{unet_forward.19} parent=0 // pred_check_branch
    %485 = sbr.rel (0) target = $region21
  $region20: #{unet_forward.19} parent=0 // pred_region
    _
  $region21: #{unet_forward.19} parent=0 // pred_fallthru
    _

// kernel: unet_forward.21
$region0: #{unet_forward.21}
  #allocation0 [shape = 'u32[]', space=smem, size = 0x4, offset = 0x4, fixed_abs, tag = 'smem constant byte address 0x4 - core index']
  #allocation1 [shape = 'u32[144,128]{1,0:T(1,128)}', space=vmem, size = 0x12000, scoped, tag = 'internal scratch']
  %s0 = inlined_call_operand.vmem [shape: bf16[9,8,32], index: 0, kind: input, shape index: {}]
  %s1 = inlined_call_operand.vmem [shape: bf16[9,16,8], index: 1, kind: input, shape index: {}]
  %s2 = inlined_call_operand.vmem [shape: f32[16,1], index: 2, kind: input, shape index: {}]
  %s3 = inlined_call_operand.vmem [shape: bf16[16,32], index: 3, kind: output, shape index: {}]
  %s4 = sld [smem:[#allocation0]]
  $region22: #{unet_forward.21} parent=0
    _
  %s6 = ssub.s32 1, %s4
  %s7 = scalar_select 0, %s6, %s4
  // Predicated region
  $region2: #{unet_forward.21} parent=0 // pred_check
    _
  $region3: #{unet_forward.21} parent=0 // pred_check_branch
    %9 = sbr.rel (0) target = $region5
  $region4: #{unet_forward.21} parent=0 // pred_region
    _
  $region5: #{unet_forward.21} parent=0 // pred_fallthru
    _
  // Predicated region
  $region6: #{unet_forward.21} parent=0 // pred_check
    _
  $region7: #{unet_forward.21} parent=0 // pred_check_branch
    %11 = sbr.rel (0) target = $region9
  $region8: #{unet_forward.21} parent=0 // pred_region
    _
  $region9: #{unet_forward.21} parent=0 // pred_fallthru
    _
  // Predicated region
  $region10: #{unet_forward.21} parent=0 // pred_check
    _
  $region11: #{unet_forward.21} parent=0 // pred_check_branch
    %13 = sbr.rel (0) target = $region13
  $region12: #{unet_forward.21} parent=0 // pred_region
    _
  $region13: #{unet_forward.21} parent=0 // pred_fallthru
    _
  %v15 = vld [vmem:[%s1] sm:$0xf]
  %v16 = vld [vmem:[%s1 + $0x4] sm:$0xf]
  %v17 = vld [vmem:[%s0] sm:$0xf]
  %s18 = scalar_lea.vmem %s1, 8
  %v19 = vld [vmem:[%s18] sm:$0xf]
  %v20 = vld [vmem:[%s18 + $0x4] sm:$0xf]
  %s21 = scalar_lea.vmem %s0, 4
  %v22 = vld [vmem:[%s21] sm:$0xf]
  %v25 = vunpack.c.l.b16 %v19
  %v26 = vunpack.c.l.b16 %v20
  %v27 = vpack.c.b16 %v26, %v25
  %vm28 = vcmask 64512
  %v30 = vsel %vm28, %v27, 0
  %vm32 = vcmask 1043456
  %v34 = vsel %vm32, %v22, 0
  %36 = vmatprep.subr.bf16.mxu0 0
  %37 = vmatpush1.bf16.msra.mxu0 %v34
  %38 = vmatprep.subr.bf16.mxu0 0
  %39 = vmatpush1.bf16.msra.mxu0 0
  %40 = vmatprep.subr.bf16.mxu0 0
  %41 = vmatpush1.bf16.msra.mxu0 0
  %42 = vmatprep.subr.bf16.mxu0 0
  %43 = vmatpush1.bf16.msra.mxu0 0
  %44 = vmatprep.subr.bf16.mxu0 0
  %45 = vmatpush1.bf16.msra.mxu0 0
  %46 = vmatprep.subr.bf16.mxu0 0
  %47 = vmatpush1.bf16.msra.mxu0 0
  %48 = vmatprep.subr.bf16.mxu0 0
  %49 = vmatpush1.bf16.msra.mxu0 0
  %50 = vmatprep.subr.bf16.mxu0 0
  %51 = vmatpush1.bf16.msra.mxu0 0
  %52 = vmatprep.subr.bf16.mxu0 0
  %53 = vmatpush1.bf16.msra.mxu0 0
  %54 = vmatprep.subr.bf16.mxu0 0
  %55 = vmatpush1.bf16.msra.mxu0 0
  %56 = vmatprep.subr.bf16.mxu0 0
  %57 = vmatpush1.bf16.msra.mxu0 0
  %58 = vmatprep.subr.bf16.mxu0 0
  %59 = vmatpush1.bf16.msra.mxu0 0
  %60 = vmatprep.subr.bf16.mxu0 0
  %61 = vmatpush1.bf16.msra.mxu0 0
  %62 = vmatprep.subr.bf16.mxu0 0
  %63 = vmatpush1.bf16.msra.mxu0 0
  %64 = vmatprep.subr.bf16.mxu0 0
  %65 = vmatpush1.bf16.msra.mxu0 0
  %66 = vmatprep.subr.bf16.mxu0 0
  %67 = vmatpush1.bf16.msra.mxu0 0
  %68 = vmatprep.mubr.bf16.mxu0 0
  %69 = vmatmul.mubr.bf16.gmra.mrb[0].mxu0 %v30
  %v70 = vpop.f32.mrb[0].mxu0
  %v71 = vadd.f32 0.0, %v70
  %v72 = vpop.f32.mrb[0].mxu0
  %v73 = vpop.f32.mrb[0].mxu0
  %v74 = vadd.f32 0.0, %v73
  %v75 = vpop.f32.mrb[0].mxu0
  %76 = vdwg.mxu0
  %v79 = vunpack.c.l.b16 %v15
  %v80 = vunpack.c.l.b16 %v16
  %v81 = vpack.c.b16 %v80, %v79
  %v83 = vsel %vm28, %v81, 0
  %v86 = vsel %vm32, %v17, 0
  %88 = vmatprep.subr.bf16.mxu0 0
  %89 = vmatpush1.bf16.msra.mxu0 %v86
  %90 = vmatprep.subr.bf16.mxu0 0
  %91 = vmatpush1.bf16.msra.mxu0 0
  %92 = vmatprep.subr.bf16.mxu0 0
  %93 = vmatpush1.bf16.msra.mxu0 0
  %94 = vmatprep.subr.bf16.mxu0 0
  %95 = vmatpush1.bf16.msra.mxu0 0
  %96 = vmatprep.subr.bf16.mxu0 0
  %97 = vmatpush1.bf16.msra.mxu0 0
  %98 = vmatprep.subr.bf16.mxu0 0
  %99 = vmatpush1.bf16.msra.mxu0 0
  %100 = vmatprep.subr.bf16.mxu0 0
  %101 = vmatpush1.bf16.msra.mxu0 0
  %102 = vmatprep.subr.bf16.mxu0 0
  %103 = vmatpush1.bf16.msra.mxu0 0
  %104 = vmatprep.subr.bf16.mxu0 0
  %105 = vmatpush1.bf16.msra.mxu0 0
  %106 = vmatprep.subr.bf16.mxu0 0
  %107 = vmatpush1.bf16.msra.mxu0 0
  %108 = vmatprep.subr.bf16.mxu0 0
  %109 = vmatpush1.bf16.msra.mxu0 0
  %110 = vmatprep.subr.bf16.mxu0 0
  %111 = vmatpush1.bf16.msra.mxu0 0
  %112 = vmatprep.subr.bf16.mxu0 0
  %113 = vmatpush1.bf16.msra.mxu0 0
  %114 = vmatprep.subr.bf16.mxu0 0
  %115 = vmatpush1.bf16.msra.mxu0 0
  %116 = vmatprep.subr.bf16.mxu0 0
  %117 = vmatpush1.bf16.msra.mxu0 0
  %118 = vmatprep.subr.bf16.mxu0 0
  %119 = vmatpush1.bf16.msra.mxu0 0
  %120 = vmatprep.mubr.bf16.mxu0 0
  %121 = vmatmul.mubr.bf16.gmra.mrb[0].mxu0 %v83
  %v122 = vpop.f32.mrb[0].mxu0
  %v123 = vadd.f32 %v71, %v122
  %v124 = vpop.f32.mrb[0].mxu0
  %v125 = vpop.f32.mrb[0].mxu0
  %v126 = vadd.f32 %v74, %v125
  %v127 = vpop.f32.mrb[0].mxu0
  %128 = vdwg.mxu0
  %s129 = scalar_lea.vmem %s1, 16
  %v130 = vld [vmem:[%s129] sm:$0xf]
  %v131 = vld [vmem:[%s129 + $0x4] sm:$0xf]
  %s132 = scalar_lea.vmem %s0, 8
  %v133 = vld [vmem:[%s132] sm:$0xf]
  %v136 = vunpack.c.l.b16 %v130
  %v137 = vunpack.c.l.b16 %v131
  %v138 = vpack.c.b16 %v137, %v136
  %v140 = vsel %vm28, %v138, 0
  %v143 = vsel %vm32, %v133, 0
  %145 = vmatprep.subr.bf16.mxu0 0
  %146 = vmatpush1.bf16.msra.mxu0 %v143
  %147 = vmatprep.subr.bf16.mxu0 0
  %148 = vmatpush1.bf16.msra.mxu0 0
  %149 = vmatprep.subr.bf16.mxu0 0
  %150 = vmatpush1.bf16.msra.mxu0 0
  %151 = vmatprep.subr.bf16.mxu0 0
  %152 = vmatpush1.bf16.msra.mxu0 0
  %153 = vmatprep.subr.bf16.mxu0 0
  %154 = vmatpush1.bf16.msra.mxu0 0
  %155 = vmatprep.subr.bf16.mxu0 0
  %156 = vmatpush1.bf16.msra.mxu0 0
  %157 = vmatprep.subr.bf16.mxu0 0
  %158 = vmatpush1.bf16.msra.mxu0 0
  %159 = vmatprep.subr.bf16.mxu0 0
  %160 = vmatpush1.bf16.msra.mxu0 0
  %161 = vmatprep.subr.bf16.mxu0 0
  %162 = vmatpush1.bf16.msra.mxu0 0
  %163 = vmatprep.subr.bf16.mxu0 0
  %164 = vmatpush1.bf16.msra.mxu0 0
  %165 = vmatprep.subr.bf16.mxu0 0
  %166 = vmatpush1.bf16.msra.mxu0 0
  %167 = vmatprep.subr.bf16.mxu0 0
  %168 = vmatpush1.bf16.msra.mxu0 0
  %169 = vmatprep.subr.bf16.mxu0 0
  %170 = vmatpush1.bf16.msra.mxu0 0
  %171 = vmatprep.subr.bf16.mxu0 0
  %172 = vmatpush1.bf16.msra.mxu0 0
  %173 = vmatprep.subr.bf16.mxu0 0
  %174 = vmatpush1.bf16.msra.mxu0 0
  %175 = vmatprep.subr.bf16.mxu0 0
  %176 = vmatpush1.bf16.msra.mxu0 0
  %177 = vmatprep.mubr.bf16.mxu0 0
  %178 = vmatmul.mubr.bf16.gmra.mrb[0].mxu0 %v140
  %v179 = vpop.f32.mrb[0].mxu0
  %v180 = vadd.f32 0.0, %v179
  %v181 = vpop.f32.mrb[0].mxu0
  %v182 = vpop.f32.mrb[0].mxu0
  %v183 = vadd.f32 0.0, %v182
  %v184 = vpop.f32.mrb[0].mxu0
  %185 = vdwg.mxu0
  %v186 = vadd.f32 %v123, %v180
  %v187 = vadd.f32 %v126, %v183
  %s188 = scalar_lea.vmem %s1, 24
  %v189 = vld [vmem:[%s188] sm:$0xf]
  %v190 = vld [vmem:[%s188 + $0x4] sm:$0xf]
  %s191 = scalar_lea.vmem %s0, 12
  %v192 = vld [vmem:[%s191] sm:$0xf]
  %v195 = vunpack.c.l.b16 %v189
  %v196 = vunpack.c.l.b16 %v190
  %v197 = vpack.c.b16 %v196, %v195
  %v199 = vsel %vm28, %v197, 0
  %v202 = vsel %vm32, %v192, 0
  %204 = vmatprep.subr.bf16.mxu0 0
  %205 = vmatpush1.bf16.msra.mxu0 %v202
  %206 = vmatprep.subr.bf16.mxu0 0
  %207 = vmatpush1.bf16.msra.mxu0 0
  %208 = vmatprep.subr.bf16.mxu0 0
  %209 = vmatpush1.bf16.msra.mxu0 0
  %210 = vmatprep.subr.bf16.mxu0 0
  %211 = vmatpush1.bf16.msra.mxu0 0
  %212 = vmatprep.subr.bf16.mxu0 0
  %213 = vmatpush1.bf16.msra.mxu0 0
  %214 = vmatprep.subr.bf16.mxu0 0
  %215 = vmatpush1.bf16.msra.mxu0 0
  %216 = vmatprep.subr.bf16.mxu0 0
  %217 = vmatpush1.bf16.msra.mxu0 0
  %218 = vmatprep.subr.bf16.mxu0 0
  %219 = vmatpush1.bf16.msra.mxu0 0
  %220 = vmatprep.subr.bf16.mxu0 0
  %221 = vmatpush1.bf16.msra.mxu0 0
  %222 = vmatprep.subr.bf16.mxu0 0
  %223 = vmatpush1.bf16.msra.mxu0 0
  %224 = vmatprep.subr.bf16.mxu0 0
  %225 = vmatpush1.bf16.msra.mxu0 0
  %226 = vmatprep.subr.bf16.mxu0 0
  %227 = vmatpush1.bf16.msra.mxu0 0
  %228 = vmatprep.subr.bf16.mxu0 0
  %229 = vmatpush1.bf16.msra.mxu0 0
  %230 = vmatprep.subr.bf16.mxu0 0
  %231 = vmatpush1.bf16.msra.mxu0 0
  %232 = vmatprep.subr.bf16.mxu0 0
  %233 = vmatpush1.bf16.msra.mxu0 0
  %234 = vmatprep.subr.bf16.mxu0 0
  %235 = vmatpush1.bf16.msra.mxu0 0
  %236 = vmatprep.mubr.bf16.mxu0 0
  %237 = vmatmul.mubr.bf16.gmra.mrb[0].mxu0 %v199
  %v238 = vpop.f32.mrb[0].mxu0
  %v239 = vadd.f32 0.0, %v238
  %v240 = vpop.f32.mrb[0].mxu0
  %v241 = vpop.f32.mrb[0].mxu0
  %v242 = vadd.f32 0.0, %v241
  %v243 = vpop.f32.mrb[0].mxu0
  %244 = vdwg.mxu0
  %v245 = vadd.f32 %v186, %v239
  %v246 = vadd.f32 %v187, %v242
  %s247 = scalar_lea.vmem %s1, 32
  %v248 = vld [vmem:[%s247] sm:$0xf]
  %v249 = vld [vmem:[%s247 + $0x4] sm:$0xf]
  %s250 = scalar_lea.vmem %s0, 16
  %v251 = vld [vmem:[%s250] sm:$0xf]
  %v254 = vunpack.c.l.b16 %v248
  %v255 = vunpack.c.l.b16 %v249
  %v256 = vpack.c.b16 %v255, %v254
  %v258 = vsel %vm28, %v256, 0
  %v261 = vsel %vm32, %v251, 0
  %263 = vmatprep.subr.bf16.mxu0 0
  %264 = vmatpush1.bf16.msra.mxu0 %v261
  %265 = vmatprep.subr.bf16.mxu0 0
  %266 = vmatpush1.bf16.msra.mxu0 0
  %267 = vmatprep.subr.bf16.mxu0 0
  %268 = vmatpush1.bf16.msra.mxu0 0
  %269 = vmatprep.subr.bf16.mxu0 0
  %270 = vmatpush1.bf16.msra.mxu0 0
  %271 = vmatprep.subr.bf16.mxu0 0
  %272 = vmatpush1.bf16.msra.mxu0 0
  %273 = vmatprep.subr.bf16.mxu0 0
  %274 = vmatpush1.bf16.msra.mxu0 0
  %275 = vmatprep.subr.bf16.mxu0 0
  %276 = vmatpush1.bf16.msra.mxu0 0
  %277 = vmatprep.subr.bf16.mxu0 0
  %278 = vmatpush1.bf16.msra.mxu0 0
  %279 = vmatprep.subr.bf16.mxu0 0
  %280 = vmatpush1.bf16.msra.mxu0 0
  %281 = vmatprep.subr.bf16.mxu0 0
  %282 = vmatpush1.bf16.msra.mxu0 0
  %283 = vmatprep.subr.bf16.mxu0 0
  %284 = vmatpush1.bf16.msra.mxu0 0
  %285 = vmatprep.subr.bf16.mxu0 0
  %286 = vmatpush1.bf16.msra.mxu0 0
  %287 = vmatprep.subr.bf16.mxu0 0
  %288 = vmatpush1.bf16.msra.mxu0 0
  %289 = vmatprep.subr.bf16.mxu0 0
  %290 = vmatpush1.bf16.msra.mxu0 0
  %291 = vmatprep.subr.bf16.mxu0 0
  %292 = vmatpush1.bf16.msra.mxu0 0
  %293 = vmatprep.subr.bf16.mxu0 0
  %294 = vmatpush1.bf16.msra.mxu0 0
  %295 = vmatprep.mubr.bf16.mxu0 0
  %296 = vmatmul.mubr.bf16.gmra.mrb[0].mxu0 %v258
  %v297 = vpop.f32.mrb[0].mxu0
  %v298 = vadd.f32 0.0, %v297
  %v299 = vpop.f32.mrb[0].mxu0
  %v300 = vpop.f32.mrb[0].mxu0
  %v301 = vadd.f32 0.0, %v300
  %v302 = vpop.f32.mrb[0].mxu0
  %303 = vdwg.mxu0
  %v304 = vadd.f32 %v245, %v298
  %v305 = vadd.f32 %v246, %v301
  %s306 = scalar_lea.vmem %s1, 40
  %v307 = vld [vmem:[%s306] sm:$0xf]
  %v308 = vld [vmem:[%s306 + $0x4] sm:$0xf]
  %s309 = scalar_lea.vmem %s0, 20
  %v310 = vld [vmem:[%s309] sm:$0xf]
  %v313 = vunpack.c.l.b16 %v307
  %v314 = vunpack.c.l.b16 %v308
  %v315 = vpack.c.b16 %v314, %v313
  %v317 = vsel %vm28, %v315, 0
  %v320 = vsel %vm32, %v310, 0
  %322 = vmatprep.subr.bf16.mxu0 0
  %323 = vmatpush1.bf16.msra.mxu0 %v320
  %324 = vmatprep.subr.bf16.mxu0 0
  %325 = vmatpush1.bf16.msra.mxu0 0
  %326 = vmatprep.subr.bf16.mxu0 0
  %327 = vmatpush1.bf16.msra.mxu0 0
  %328 = vmatprep.subr.bf16.mxu0 0
  %329 = vmatpush1.bf16.msra.mxu0 0
  %330 = vmatprep.subr.bf16.mxu0 0
  %331 = vmatpush1.bf16.msra.mxu0 0
  %332 = vmatprep.subr.bf16.mxu0 0
  %333 = vmatpush1.bf16.msra.mxu0 0
  %334 = vmatprep.subr.bf16.mxu0 0
  %335 = vmatpush1.bf16.msra.mxu0 0
  %336 = vmatprep.subr.bf16.mxu0 0
  %337 = vmatpush1.bf16.msra.mxu0 0
  %338 = vmatprep.subr.bf16.mxu0 0
  %339 = vmatpush1.bf16.msra.mxu0 0
  %340 = vmatprep.subr.bf16.mxu0 0
  %341 = vmatpush1.bf16.msra.mxu0 0
  %342 = vmatprep.subr.bf16.mxu0 0
  %343 = vmatpush1.bf16.msra.mxu0 0
  %344 = vmatprep.subr.bf16.mxu0 0
  %345 = vmatpush1.bf16.msra.mxu0 0
  %346 = vmatprep.subr.bf16.mxu0 0
  %347 = vmatpush1.bf16.msra.mxu0 0
  %348 = vmatprep.subr.bf16.mxu0 0
  %349 = vmatpush1.bf16.msra.mxu0 0
  %350 = vmatprep.subr.bf16.mxu0 0
  %351 = vmatpush1.bf16.msra.mxu0 0
  %352 = vmatprep.subr.bf16.mxu0 0
  %353 = vmatpush1.bf16.msra.mxu0 0
  %354 = vmatprep.mubr.bf16.mxu0 0
  %355 = vmatmul.mubr.bf16.gmra.mrb[0].mxu0 %v317
  %v356 = vpop.f32.mrb[0].mxu0
  %v357 = vadd.f32 0.0, %v356
  %v358 = vpop.f32.mrb[0].mxu0
  %v359 = vpop.f32.mrb[0].mxu0
  %v360 = vadd.f32 0.0, %v359
  %v361 = vpop.f32.mrb[0].mxu0
  %362 = vdwg.mxu0
  %v363 = vadd.f32 %v304, %v357
  %v364 = vadd.f32 %v305, %v360
  %s365 = scalar_lea.vmem %s1, 48
  %v366 = vld [vmem:[%s365] sm:$0xf]
  %v367 = vld [vmem:[%s365 + $0x4] sm:$0xf]
  %s368 = scalar_lea.vmem %s0, 24
  %v369 = vld [vmem:[%s368] sm:$0xf]
  %v372 = vunpack.c.l.b16 %v366
  %v373 = vunpack.c.l.b16 %v367
  %v374 = vpack.c.b16 %v373, %v372
  %v376 = vsel %vm28, %v374, 0
  %v379 = vsel %vm32, %v369, 0
  %381 = vmatprep.subr.bf16.mxu0 0
  %382 = vmatpush1.bf16.msra.mxu0 %v379
  %383 = vmatprep.subr.bf16.mxu0 0
  %384 = vmatpush1.bf16.msra.mxu0 0
  %385 = vmatprep.subr.bf16.mxu0 0
  %386 = vmatpush1.bf16.msra.mxu0 0
  %387 = vmatprep.subr.bf16.mxu0 0
  %388 = vmatpush1.bf16.msra.mxu0 0
  %389 = vmatprep.subr.bf16.mxu0 0
  %390 = vmatpush1.bf16.msra.mxu0 0
  %391 = vmatprep.subr.bf16.mxu0 0
  %392 = vmatpush1.bf16.msra.mxu0 0
  %393 = vmatprep.subr.bf16.mxu0 0
  %394 = vmatpush1.bf16.msra.mxu0 0
  %395 = vmatprep.subr.bf16.mxu0 0
  %396 = vmatpush1.bf16.msra.mxu0 0
  %397 = vmatprep.subr.bf16.mxu0 0
  %398 = vmatpush1.bf16.msra.mxu0 0
  %399 = vmatprep.subr.bf16.mxu0 0
  %400 = vmatpush1.bf16.msra.mxu0 0
  %401 = vmatprep.subr.bf16.mxu0 0
  %402 = vmatpush1.bf16.msra.mxu0 0
  %403 = vmatprep.subr.bf16.mxu0 0
  %404 = vmatpush1.bf16.msra.mxu0 0
  %405 = vmatprep.subr.bf16.mxu0 0
  %406 = vmatpush1.bf16.msra.mxu0 0
  %407 = vmatprep.subr.bf16.mxu0 0
  %408 = vmatpush1.bf16.msra.mxu0 0
  %409 = vmatprep.subr.bf16.mxu0 0
  %410 = vmatpush1.bf16.msra.mxu0 0
  %411 = vmatprep.subr.bf16.mxu0 0
  %412 = vmatpush1.bf16.msra.mxu0 0
  %413 = vmatprep.mubr.bf16.mxu0 0
  %414 = vmatmul.mubr.bf16.gmra.mrb[0].mxu0 %v376
  %v415 = vpop.f32.mrb[0].mxu0
  %v416 = vadd.f32 0.0, %v415
  %v417 = vpop.f32.mrb[0].mxu0
  %v418 = vpop.f32.mrb[0].mxu0
  %v419 = vadd.f32 0.0, %v418
  %v420 = vpop.f32.mrb[0].mxu0
  %421 = vdwg.mxu0
  %v422 = vadd.f32 %v363, %v416
  %v423 = vadd.f32 %v364, %v419
  %s424 = scalar_lea.vmem %s1, 56
  %v425 = vld [vmem:[%s424] sm:$0xf]
  %v426 = vld [vmem:[%s424 + $0x4] sm:$0xf]
  %s427 = scalar_lea.vmem %s0, 28
  %v428 = vld [vmem:[%s427] sm:$0xf]
  %v431 = vunpack.c.l.b16 %v425
  %v432 = vunpack.c.l.b16 %v426
  %v433 = vpack.c.b16 %v432, %v431
  %v435 = vsel %vm28, %v433, 0
  %v438 = vsel %vm32, %v428, 0
  %440 = vmatprep.subr.bf16.mxu0 0
  %441 = vmatpush1.bf16.msra.mxu0 %v438
  %442 = vmatprep.subr.bf16.mxu0 0
  %443 = vmatpush1.bf16.msra.mxu0 0
  %444 = vmatprep.subr.bf16.mxu0 0
  %445 = vmatpush1.bf16.msra.mxu0 0
  %446 = vmatprep.subr.bf16.mxu0 0
  %447 = vmatpush1.bf16.msra.mxu0 0
  %448 = vmatprep.subr.bf16.mxu0 0
  %449 = vmatpush1.bf16.msra.mxu0 0
  %450 = vmatprep.subr.bf16.mxu0 0
  %451 = vmatpush1.bf16.msra.mxu0 0
  %452 = vmatprep.subr.bf16.mxu0 0
  %453 = vmatpush1.bf16.msra.mxu0 0
  %454 = vmatprep.subr.bf16.mxu0 0
  %455 = vmatpush1.bf16.msra.mxu0 0
  %456 = vmatprep.subr.bf16.mxu0 0
  %457 = vmatpush1.bf16.msra.mxu0 0
  %458 = vmatprep.subr.bf16.mxu0 0
  %459 = vmatpush1.bf16.msra.mxu0 0
  %460 = vmatprep.subr.bf16.mxu0 0
  %461 = vmatpush1.bf16.msra.mxu0 0
  %462 = vmatprep.subr.bf16.mxu0 0
  %463 = vmatpush1.bf16.msra.mxu0 0
  %464 = vmatprep.subr.bf16.mxu0 0
  %465 = vmatpush1.bf16.msra.mxu0 0
  %466 = vmatprep.subr.bf16.mxu0 0
  %467 = vmatpush1.bf16.msra.mxu0 0
  %468 = vmatprep.subr.bf16.mxu0 0
  %469 = vmatpush1.bf16.msra.mxu0 0
  %470 = vmatprep.subr.bf16.mxu0 0
  %471 = vmatpush1.bf16.msra.mxu0 0
  %472 = vmatprep.mubr.bf16.mxu0 0
  %473 = vmatmul.mubr.bf16.gmra.mrb[0].mxu0 %v435
  %v474 = vpop.f32.mrb[0].mxu0
  %v475 = vadd.f32 0.0, %v474
  %v476 = vpop.f32.mrb[0].mxu0
  %v477 = vpop.f32.mrb[0].mxu0
  %v478 = vadd.f32 0.0, %v477
  %v479 = vpop.f32.mrb[0].mxu0
  %480 = vdwg.mxu0
  %v481 = vadd.f32 %v422, %v475
  %v482 = vadd.f32 %v423, %v478
  %s483 = scalar_lea.vmem %s1, 64
  %v484 = vld [vmem:[%s483] sm:$0xf]
  %v485 = vld [vmem:[%s483 + $0x4] sm:$0xf]
  %s486 = scalar_lea.vmem %s0, 32
  %v487 = vld [vmem:[%s486] sm:$0xf]
  %v490 = vunpack.c.l.b16 %v484
  %v491 = vunpack.c.l.b16 %v485
  %v492 = vpack.c.b16 %v491, %v490
  %v494 = vsel %vm28, %v492, 0
  %v497 = vsel %vm32, %v487, 0
  %499 = vmatprep.subr.bf16.mxu0 0
  %500 = vmatpush1.bf16.msra.mxu0 %v497
  %501 = vmatprep.subr.bf16.mxu0 0
  %502 = vmatpush1.bf16.msra.mxu0 0
  %503 = vmatprep.subr.bf16.mxu0 0
  %504 = vmatpush1.bf16.msra.mxu0 0
  %505 = vmatprep.subr.bf16.mxu0 0
  %506 = vmatpush1.bf16.msra.mxu0 0
  %507 = vmatprep.subr.bf16.mxu0 0
  %508 = vmatpush1.bf16.msra.mxu0 0
  %509 = vmatprep.subr.bf16.mxu0 0
  %510 = vmatpush1.bf16.msra.mxu0 0
  %511 = vmatprep.subr.bf16.mxu0 0
  %512 = vmatpush1.bf16.msra.mxu0 0
  %513 = vmatprep.subr.bf16.mxu0 0
  %514 = vmatpush1.bf16.msra.mxu0 0
  %515 = vmatprep.subr.bf16.mxu0 0
  %516 = vmatpush1.bf16.msra.mxu0 0
  %517 = vmatprep.subr.bf16.mxu0 0
  %518 = vmatpush1.bf16.msra.mxu0 0
  %519 = vmatprep.subr.bf16.mxu0 0
  %520 = vmatpush1.bf16.msra.mxu0 0
  %521 = vmatprep.subr.bf16.mxu0 0
  %522 = vmatpush1.bf16.msra.mxu0 0
  %523 = vmatprep.subr.bf16.mxu0 0
  %524 = vmatpush1.bf16.msra.mxu0 0
  %525 = vmatprep.subr.bf16.mxu0 0
  %526 = vmatpush1.bf16.msra.mxu0 0
  %527 = vmatprep.subr.bf16.mxu0 0
  %528 = vmatpush1.bf16.msra.mxu0 0
  %529 = vmatprep.subr.bf16.mxu0 0
  %530 = vmatpush1.bf16.msra.mxu0 0
  %531 = vmatprep.mubr.bf16.mxu0 0
  %532 = vmatmul.mubr.bf16.gmra.mrb[0].mxu0 %v494
  %v533 = vpop.f32.mrb[0].mxu0
  %v534 = vadd.f32 0.0, %v533
  %v535 = vpop.f32.mrb[0].mxu0
  %v536 = vpop.f32.mrb[0].mxu0
  %v537 = vadd.f32 0.0, %v536
  %v538 = vpop.f32.mrb[0].mxu0
  %539 = vdwg.mxu0
  %v540 = vadd.f32 %v481, %v534
  %v541 = vadd.f32 %v482, %v537
  %v542 = vld [vmem:[%s2] sm:$0xff]
  %v543 = vld [vmem:[%s2 + $0x8] sm:$0xff]
  %545 = vset.pattern.permute.xlu0 0
  %546 = vperm.xlu0 %545, %v542
  %v547 = vpop.permute.xlu0 %546
  %550 = vset.pattern.permute.xlu0 0
  %551 = vperm.xlu0 %550, %v543
  %v552 = vpop.permute.xlu0 %551
  %v554 = vadd.f32 %v540, %v547
  %v555 = vadd.f32 %v541, %v552
  %v556 = vmax.f32 %v554, 0.0
  %v557 = vmax.f32 %v555, 0.0
  %v558 = vpack.c.bf16 %v557, %v556
  %v560 = vunpack.c.l.b16 %v558
  %v561 = vunpack.c.h.b16 %v558
  %v562 = vpack.c.b16 %v560, %v560
  %v563 = vpack.c.b16 %v561, %v561
  %vm566 = vcmask 257024
  %567 = vst.msk [vmem:[%s3] sm:$0xf] %vm566, %v562
  %568 = vst.msk [vmem:[%s3 + $0x4] sm:$0xf] %vm566, %v563
  // Predicated region
  $region14: #{unet_forward.21} parent=0 // pred_check
    _
  $region15: #{unet_forward.21} parent=0 // pred_check_branch
    %570 = sbr.rel (0) target = $region17
  $region16: #{unet_forward.21} parent=0 // pred_region
    _
  $region17: #{unet_forward.21} parent=0 // pred_fallthru
    _
  // Predicated region
  $region18: #{unet_forward.21} parent=0 // pred_check
    _
  $region19: #{unet_forward.21} parent=0 // pred_check_branch
    %572 = sbr.rel (0) target = $region21
  $region20: #{unet_forward.21} parent=0 // pred_region
    _
  $region21: #{unet_forward.21} parent=0 // pred_fallthru
    _

// kernel: unet_forward.23
$region0: #{unet_forward.23}
  #allocation0 [shape = 'u32[]', space=smem, size = 0x4, offset = 0x4, fixed_abs, tag = 'smem constant byte address 0x4 - core index']
  #allocation1 [shape = 'u32[144,128]{1,0:T(1,128)}', space=vmem, size = 0x12000, scoped, tag = 'internal scratch']
  %s0 = inlined_call_operand.vmem [shape: bf16[1,16,32], index: 0, kind: input, shape index: {}]
  %s1 = inlined_call_operand.vmem [shape: bf16[1,32,16], index: 1, kind: input, shape index: {}]
  %s2 = inlined_call_operand.vmem [shape: f32[32,1], index: 2, kind: input, shape index: {}]
  %s3 = inlined_call_operand.vmem [shape: bf16[32,32], index: 3, kind: output, shape index: {}]
  %s4 = sld [smem:[#allocation0]]
  $region22: #{unet_forward.23} parent=0
    _
  %s6 = ssub.s32 1, %s4
  %s7 = scalar_select 0, %s6, %s4
  // Predicated region
  $region2: #{unet_forward.23} parent=0 // pred_check
    _
  $region3: #{unet_forward.23} parent=0 // pred_check_branch
    %9 = sbr.rel (0) target = $region5
  $region4: #{unet_forward.23} parent=0 // pred_region
    _
  $region5: #{unet_forward.23} parent=0 // pred_fallthru
    _
  // Predicated region
  $region6: #{unet_forward.23} parent=0 // pred_check
    _
  $region7: #{unet_forward.23} parent=0 // pred_check_branch
    %11 = sbr.rel (0) target = $region9
  $region8: #{unet_forward.23} parent=0 // pred_region
    _
  $region9: #{unet_forward.23} parent=0 // pred_fallthru
    _
  // Predicated region
  $region10: #{unet_forward.23} parent=0 // pred_check
    _
  $region11: #{unet_forward.23} parent=0 // pred_check_branch
    %13 = sbr.rel (0) target = $region13
  $region12: #{unet_forward.23} parent=0 // pred_region
    _
  $region13: #{unet_forward.23} parent=0 // pred_fallthru
    _
  %v15 = vld [vmem:[%s1] sm:$0xf]
  %v16 = vld [vmem:[%s1 + $0x4] sm:$0xf]
  %v17 = vld [vmem:[%s1 + $0x8] sm:$0xf]
  %v18 = vld [vmem:[%s1 + $0xc] sm:$0xf]
  %v19 = vld [vmem:[%s0] sm:$0xf]
  %v20 = vld [vmem:[%s0 + $0x4] sm:$0xf]
  %v21 = vld [vmem:[%s2] sm:$0xff]
  %v22 = vld [vmem:[%s2 + $0x8] sm:$0xff]
  %v23 = vld [vmem:[%s2 + $0x10] sm:$0xff]
  %v24 = vld [vmem:[%s2 + $0x18] sm:$0xff]
  %26 = vset.pattern.permute.xlu0 0
  %27 = vperm.xlu0 %26, %v21
  %v28 = vpop.permute.xlu0 %27
  %31 = vset.pattern.permute.xlu0 0
  %32 = vperm.xlu0 %31, %v22
  %v33 = vpop.permute.xlu0 %32
  %36 = vset.pattern.permute.xlu0 0
  %37 = vperm.xlu0 %36, %v23
  %v38 = vpop.permute.xlu0 %37
  %41 = vset.pattern.permute.xlu0 0
  %42 = vperm.xlu0 %41, %v24
  %v43 = vpop.permute.xlu0 %42
  %v49 = vunpack.c.l.b16 %v15
  %v50 = vunpack.c.l.b16 %v16
  %v51 = vunpack.c.l.b16 %v17
  %v52 = vunpack.c.l.b16 %v18
  %v53 = vpack.c.b16 %v50, %v49
  %v54 = vpack.c.b16 %v52, %v51
  %v57 = vunpack.c.l.b16 %v19
  %v58 = vunpack.c.l.b16 %v20
  %v59 = vpack.c.b16 %v58, %v57
  %vm61 = vcmask 130048
  %v63 = vsel %vm61, %v53, 0
  %v66 = vsel %vm61, %v54, 0
  %68 = vmatprep.subr.bf16.mxu0 0
  %69 = vmatpush1.bf16.msra.mxu0 %v59
  %70 = vmatprep.subr.bf16.mxu0 0
  %71 = vmatpush1.bf16.msra.mxu0 0
  %72 = vmatprep.subr.bf16.mxu0 0
  %73 = vmatpush1.bf16.msra.mxu0 0
  %74 = vmatprep.subr.bf16.mxu0 0
  %75 = vmatpush1.bf16.msra.mxu0 0
  %76 = vmatprep.subr.bf16.mxu0 0
  %77 = vmatpush1.bf16.msra.mxu0 0
  %78 = vmatprep.subr.bf16.mxu0 0
  %79 = vmatpush1.bf16.msra.mxu0 0
  %80 = vmatprep.subr.bf16.mxu0 0
  %81 = vmatpush1.bf16.msra.mxu0 0
  %82 = vmatprep.subr.bf16.mxu0 0
  %83 = vmatpush1.bf16.msra.mxu0 0
  %84 = vmatprep.subr.bf16.mxu0 0
  %85 = vmatpush1.bf16.msra.mxu0 0
  %86 = vmatprep.subr.bf16.mxu0 0
  %87 = vmatpush1.bf16.msra.mxu0 0
  %88 = vmatprep.subr.bf16.mxu0 0
  %89 = vmatpush1.bf16.msra.mxu0 0
  %90 = vmatprep.subr.bf16.mxu0 0
  %91 = vmatpush1.bf16.msra.mxu0 0
  %92 = vmatprep.subr.bf16.mxu0 0
  %93 = vmatpush1.bf16.msra.mxu0 0
  %94 = vmatprep.subr.bf16.mxu0 0
  %95 = vmatpush1.bf16.msra.mxu0 0
  %96 = vmatprep.subr.bf16.mxu0 0
  %97 = vmatpush1.bf16.msra.mxu0 0
  %98 = vmatprep.subr.bf16.mxu0 0
  %99 = vmatpush1.bf16.msra.mxu0 0
  %100 = vmatprep.mubr.bf16.mxu0 0
  %101 = vmatmul.mubr.bf16.gmra.mrb[0].mxu0 %v63
  %v102 = vpop.f32.mrb[0].mxu0
  %v103 = vadd.f32 %v28, %v102
  %v104 = vpop.f32.mrb[0].mxu0
  %v105 = vpop.f32.mrb[0].mxu0
  %v106 = vadd.f32 %v33, %v105
  %v107 = vpop.f32.mrb[0].mxu0
  %108 = vmatprep.mubr.bf16.mxu0 0
  %109 = vmatmul.mubr.bf16.gmra.mrb[0].mxu0 %v66
  %v110 = vpop.f32.mrb[0].mxu0
  %v111 = vadd.f32 %v38, %v110
  %v112 = vpop.f32.mrb[0].mxu0
  %v113 = vpop.f32.mrb[0].mxu0
  %v114 = vadd.f32 %v43, %v113
  %v115 = vpop.f32.mrb[0].mxu0
  %116 = vdwg.mxu0
  %v117 = vpack.c.bf16 %v106, %v103
  %v118 = vpack.c.bf16 %v114, %v111
  %v121 = vunpack.c.l.b16 %v117
  %v122 = vunpack.c.h.b16 %v117
  %v123 = vunpack.c.l.b16 %v118
  %v124 = vunpack.c.h.b16 %v118
  %v125 = vpack.c.b16 %v121, %v121
  %v126 = vpack.c.b16 %v122, %v122
  %v127 = vpack.c.b16 %v123, %v123
  %v128 = vpack.c.b16 %v124, %v124
  %vm133 = vcmask 257024
  %134 = vst.msk [vmem:[%s3] sm:$0xf] %vm133, %v125
  %135 = vst.msk [vmem:[%s3 + $0x4] sm:$0xf] %vm133, %v126
  %136 = vst.msk [vmem:[%s3 + $0x8] sm:$0xf] %vm133, %v127
  %137 = vst.msk [vmem:[%s3 + $0xc] sm:$0xf] %vm133, %v128
  // Predicated region
  $region14: #{unet_forward.23} parent=0 // pred_check
    _
  $region15: #{unet_forward.23} parent=0 // pred_check_branch
    %139 = sbr.rel (0) target = $region17
  $region16: #{unet_forward.23} parent=0 // pred_region
    _
  $region17: #{unet_forward.23} parent=0 // pred_fallthru
    _
  // Predicated region
  $region18: #{unet_forward.23} parent=0 // pred_check
    _
  $region19: #{unet_forward.23} parent=0 // pred_check_branch
    %141 = sbr.rel (0) target = $region21
  $region20: #{unet_forward.23} parent=0 // pred_region
    _
  $region21: #{unet_forward.23} parent=0 // pred_fallthru
    _

// kernel: unet_forward.22
$region0: #{unet_forward.22}
  #allocation0 [shape = 'u32[]', space=smem, size = 0x4, offset = 0x4, fixed_abs, tag = 'smem constant byte address 0x4 - core index']
  #allocation1 [shape = 'u32[144,128]{1,0:T(1,128)}', space=vmem, size = 0x12000, scoped, tag = 'internal scratch']
  %s0 = inlined_call_operand.vmem [shape: bf16[9,16,32], index: 0, kind: input, shape index: {}]
  %s1 = inlined_call_operand.vmem [shape: bf16[9,16,16], index: 1, kind: input, shape index: {}]
  %s2 = inlined_call_operand.vmem [shape: f32[16,1], index: 2, kind: input, shape index: {}]
  %s3 = inlined_call_operand.vmem [shape: bf16[16,32], index: 3, kind: output, shape index: {}]
  %s4 = sld [smem:[#allocation0]]
  $region22: #{unet_forward.22} parent=0
    _
  %s6 = ssub.s32 1, %s4
  %s7 = scalar_select 0, %s6, %s4
  // Predicated region
  $region2: #{unet_forward.22} parent=0 // pred_check
    _
  $region3: #{unet_forward.22} parent=0 // pred_check_branch
    %9 = sbr.rel (0) target = $region5
  $region4: #{unet_forward.22} parent=0 // pred_region
    _
  $region5: #{unet_forward.22} parent=0 // pred_fallthru
    _
  // Predicated region
  $region6: #{unet_forward.22} parent=0 // pred_check
    _
  $region7: #{unet_forward.22} parent=0 // pred_check_branch
    %11 = sbr.rel (0) target = $region9
  $region8: #{unet_forward.22} parent=0 // pred_region
    _
  $region9: #{unet_forward.22} parent=0 // pred_fallthru
    _
  // Predicated region
  $region10: #{unet_forward.22} parent=0 // pred_check
    _
  $region11: #{unet_forward.22} parent=0 // pred_check_branch
    %13 = sbr.rel (0) target = $region13
  $region12: #{unet_forward.22} parent=0 // pred_region
    _
  $region13: #{unet_forward.22} parent=0 // pred_fallthru
    _
  %v15 = vld [vmem:[%s1] sm:$0xf]
  %v16 = vld [vmem:[%s1 + $0x4] sm:$0xf]
  %v17 = vld [vmem:[%s0] sm:$0xf]
  %v18 = vld [vmem:[%s0 + $0x4] sm:$0xf]
  %s19 = scalar_lea.vmem %s1, 8
  %v20 = vld [vmem:[%s19] sm:$0xf]
  %v21 = vld [vmem:[%s19 + $0x4] sm:$0xf]
  %s22 = scalar_lea.vmem %s0, 8
  %v23 = vld [vmem:[%s22] sm:$0xf]
  %v24 = vld [vmem:[%s22 + $0x4] sm:$0xf]
  %v27 = vunpack.c.l.b16 %v20
  %v28 = vunpack.c.l.b16 %v21
  %v29 = vpack.c.b16 %v28, %v27
  %v32 = vunpack.c.l.b16 %v23
  %v33 = vunpack.c.l.b16 %v24
  %v34 = vpack.c.b16 %v33, %v32
  %vm36 = vcmask 130048
  %v38 = vsel %vm36, %v29, 0
  %40 = vmatprep.subr.bf16.mxu0 0
  %41 = vmatpush1.bf16.msra.mxu0 %v34
  %42 = vmatprep.subr.bf16.mxu0 0
  %43 = vmatpush1.bf16.msra.mxu0 0
  %44 = vmatprep.subr.bf16.mxu0 0
  %45 = vmatpush1.bf16.msra.mxu0 0
  %46 = vmatprep.subr.bf16.mxu0 0
  %47 = vmatpush1.bf16.msra.mxu0 0
  %48 = vmatprep.subr.bf16.mxu0 0
  %49 = vmatpush1.bf16.msra.mxu0 0
  %50 = vmatprep.subr.bf16.mxu0 0
  %51 = vmatpush1.bf16.msra.mxu0 0
  %52 = vmatprep.subr.bf16.mxu0 0
  %53 = vmatpush1.bf16.msra.mxu0 0
  %54 = vmatprep.subr.bf16.mxu0 0
  %55 = vmatpush1.bf16.msra.mxu0 0
  %56 = vmatprep.subr.bf16.mxu0 0
  %57 = vmatpush1.bf16.msra.mxu0 0
  %58 = vmatprep.subr.bf16.mxu0 0
  %59 = vmatpush1.bf16.msra.mxu0 0
  %60 = vmatprep.subr.bf16.mxu0 0
  %61 = vmatpush1.bf16.msra.mxu0 0
  %62 = vmatprep.subr.bf16.mxu0 0
  %63 = vmatpush1.bf16.msra.mxu0 0
  %64 = vmatprep.subr.bf16.mxu0 0
  %65 = vmatpush1.bf16.msra.mxu0 0
  %66 = vmatprep.subr.bf16.mxu0 0
  %67 = vmatpush1.bf16.msra.mxu0 0
  %68 = vmatprep.subr.bf16.mxu0 0
  %69 = vmatpush1.bf16.msra.mxu0 0
  %70 = vmatprep.subr.bf16.mxu0 0
  %71 = vmatpush1.bf16.msra.mxu0 0
  %72 = vmatprep.mubr.bf16.mxu0 0
  %73 = vmatmul.mubr.bf16.gmra.mrb[0].mxu0 %v38
  %v74 = vpop.f32.mrb[0].mxu0
  %v75 = vadd.f32 0.0, %v74
  %v76 = vpop.f32.mrb[0].mxu0
  %v77 = vpop.f32.mrb[0].mxu0
  %v78 = vadd.f32 0.0, %v77
  %v79 = vpop.f32.mrb[0].mxu0
  %80 = vdwg.mxu0
  %v83 = vunpack.c.l.b16 %v15
  %v84 = vunpack.c.l.b16 %v16
  %v85 = vpack.c.b16 %v84, %v83
  %v88 = vunpack.c.l.b16 %v17
  %v89 = vunpack.c.l.b16 %v18
  %v90 = vpack.c.b16 %v89, %v88
  %v93 = vsel %vm36, %v85, 0
  %95 = vmatprep.subr.bf16.mxu0 0
  %96 = vmatpush1.bf16.msra.mxu0 %v90
  %97 = vmatprep.subr.bf16.mxu0 0
  %98 = vmatpush1.bf16.msra.mxu0 0
  %99 = vmatprep.subr.bf16.mxu0 0
  %100 = vmatpush1.bf16.msra.mxu0 0
  %101 = vmatprep.subr.bf16.mxu0 0
  %102 = vmatpush1.bf16.msra.mxu0 0
  %103 = vmatprep.subr.bf16.mxu0 0
  %104 = vmatpush1.bf16.msra.mxu0 0
  %105 = vmatprep.subr.bf16.mxu0 0
  %106 = vmatpush1.bf16.msra.mxu0 0
  %107 = vmatprep.subr.bf16.mxu0 0
  %108 = vmatpush1.bf16.msra.mxu0 0
  %109 = vmatprep.subr.bf16.mxu0 0
  %110 = vmatpush1.bf16.msra.mxu0 0
  %111 = vmatprep.subr.bf16.mxu0 0
  %112 = vmatpush1.bf16.msra.mxu0 0
  %113 = vmatprep.subr.bf16.mxu0 0
  %114 = vmatpush1.bf16.msra.mxu0 0
  %115 = vmatprep.subr.bf16.mxu0 0
  %116 = vmatpush1.bf16.msra.mxu0 0
  %117 = vmatprep.subr.bf16.mxu0 0
  %118 = vmatpush1.bf16.msra.mxu0 0
  %119 = vmatprep.subr.bf16.mxu0 0
  %120 = vmatpush1.bf16.msra.mxu0 0
  %121 = vmatprep.subr.bf16.mxu0 0
  %122 = vmatpush1.bf16.msra.mxu0 0
  %123 = vmatprep.subr.bf16.mxu0 0
  %124 = vmatpush1.bf16.msra.mxu0 0
  %125 = vmatprep.subr.bf16.mxu0 0
  %126 = vmatpush1.bf16.msra.mxu0 0
  %127 = vmatprep.mubr.bf16.mxu0 0
  %128 = vmatmul.mubr.bf16.gmra.mrb[0].mxu0 %v93
  %v129 = vpop.f32.mrb[0].mxu0
  %v130 = vadd.f32 %v75, %v129
  %v131 = vpop.f32.mrb[0].mxu0
  %v132 = vpop.f32.mrb[0].mxu0
  %v133 = vadd.f32 %v78, %v132
  %v134 = vpop.f32.mrb[0].mxu0
  %135 = vdwg.mxu0
  %s136 = scalar_lea.vmem %s1, 16
  %v137 = vld [vmem:[%s136] sm:$0xf]
  %v138 = vld [vmem:[%s136 + $0x4] sm:$0xf]
  %s139 = scalar_lea.vmem %s0, 16
  %v140 = vld [vmem:[%s139] sm:$0xf]
  %v141 = vld [vmem:[%s139 + $0x4] sm:$0xf]
  %v144 = vunpack.c.l.b16 %v137
  %v145 = vunpack.c.l.b16 %v138
  %v146 = vpack.c.b16 %v145, %v144
  %v149 = vunpack.c.l.b16 %v140
  %v150 = vunpack.c.l.b16 %v141
  %v151 = vpack.c.b16 %v150, %v149
  %v154 = vsel %vm36, %v146, 0
  %156 = vmatprep.subr.bf16.mxu0 0
  %157 = vmatpush1.bf16.msra.mxu0 %v151
  %158 = vmatprep.subr.bf16.mxu0 0
  %159 = vmatpush1.bf16.msra.mxu0 0
  %160 = vmatprep.subr.bf16.mxu0 0
  %161 = vmatpush1.bf16.msra.mxu0 0
  %162 = vmatprep.subr.bf16.mxu0 0
  %163 = vmatpush1.bf16.msra.mxu0 0
  %164 = vmatprep.subr.bf16.mxu0 0
  %165 = vmatpush1.bf16.msra.mxu0 0
  %166 = vmatprep.subr.bf16.mxu0 0
  %167 = vmatpush1.bf16.msra.mxu0 0
  %168 = vmatprep.subr.bf16.mxu0 0
  %169 = vmatpush1.bf16.msra.mxu0 0
  %170 = vmatprep.subr.bf16.mxu0 0
  %171 = vmatpush1.bf16.msra.mxu0 0
  %172 = vmatprep.subr.bf16.mxu0 0
  %173 = vmatpush1.bf16.msra.mxu0 0
  %174 = vmatprep.subr.bf16.mxu0 0
  %175 = vmatpush1.bf16.msra.mxu0 0
  %176 = vmatprep.subr.bf16.mxu0 0
  %177 = vmatpush1.bf16.msra.mxu0 0
  %178 = vmatprep.subr.bf16.mxu0 0
  %179 = vmatpush1.bf16.msra.mxu0 0
  %180 = vmatprep.subr.bf16.mxu0 0
  %181 = vmatpush1.bf16.msra.mxu0 0
  %182 = vmatprep.subr.bf16.mxu0 0
  %183 = vmatpush1.bf16.msra.mxu0 0
  %184 = vmatprep.subr.bf16.mxu0 0
  %185 = vmatpush1.bf16.msra.mxu0 0
  %186 = vmatprep.subr.bf16.mxu0 0
  %187 = vmatpush1.bf16.msra.mxu0 0
  %188 = vmatprep.mubr.bf16.mxu0 0
  %189 = vmatmul.mubr.bf16.gmra.mrb[0].mxu0 %v154
  %v190 = vpop.f32.mrb[0].mxu0
  %v191 = vadd.f32 0.0, %v190
  %v192 = vpop.f32.mrb[0].mxu0
  %v193 = vpop.f32.mrb[0].mxu0
  %v194 = vadd.f32 0.0, %v193
  %v195 = vpop.f32.mrb[0].mxu0
  %196 = vdwg.mxu0
  %v197 = vadd.f32 %v130, %v191
  %v198 = vadd.f32 %v133, %v194
  %s199 = scalar_lea.vmem %s1, 24
  %v200 = vld [vmem:[%s199] sm:$0xf]
  %v201 = vld [vmem:[%s199 + $0x4] sm:$0xf]
  %s202 = scalar_lea.vmem %s0, 24
  %v203 = vld [vmem:[%s202] sm:$0xf]
  %v204 = vld [vmem:[%s202 + $0x4] sm:$0xf]
  %v207 = vunpack.c.l.b16 %v200
  %v208 = vunpack.c.l.b16 %v201
  %v209 = vpack.c.b16 %v208, %v207
  %v212 = vunpack.c.l.b16 %v203
  %v213 = vunpack.c.l.b16 %v204
  %v214 = vpack.c.b16 %v213, %v212
  %v217 = vsel %vm36, %v209, 0
  %219 = vmatprep.subr.bf16.mxu0 0
  %220 = vmatpush1.bf16.msra.mxu0 %v214
  %221 = vmatprep.subr.bf16.mxu0 0
  %222 = vmatpush1.bf16.msra.mxu0 0
  %223 = vmatprep.subr.bf16.mxu0 0
  %224 = vmatpush1.bf16.msra.mxu0 0
  %225 = vmatprep.subr.bf16.mxu0 0
  %226 = vmatpush1.bf16.msra.mxu0 0
  %227 = vmatprep.subr.bf16.mxu0 0
  %228 = vmatpush1.bf16.msra.mxu0 0
  %229 = vmatprep.subr.bf16.mxu0 0
  %230 = vmatpush1.bf16.msra.mxu0 0
  %231 = vmatprep.subr.bf16.mxu0 0
  %232 = vmatpush1.bf16.msra.mxu0 0
  %233 = vmatprep.subr.bf16.mxu0 0
  %234 = vmatpush1.bf16.msra.mxu0 0
  %235 = vmatprep.subr.bf16.mxu0 0
  %236 = vmatpush1.bf16.msra.mxu0 0
  %237 = vmatprep.subr.bf16.mxu0 0
  %238 = vmatpush1.bf16.msra.mxu0 0
  %239 = vmatprep.subr.bf16.mxu0 0
  %240 = vmatpush1.bf16.msra.mxu0 0
  %241 = vmatprep.subr.bf16.mxu0 0
  %242 = vmatpush1.bf16.msra.mxu0 0
  %243 = vmatprep.subr.bf16.mxu0 0
  %244 = vmatpush1.bf16.msra.mxu0 0
  %245 = vmatprep.subr.bf16.mxu0 0
  %246 = vmatpush1.bf16.msra.mxu0 0
  %247 = vmatprep.subr.bf16.mxu0 0
  %248 = vmatpush1.bf16.msra.mxu0 0
  %249 = vmatprep.subr.bf16.mxu0 0
  %250 = vmatpush1.bf16.msra.mxu0 0
  %251 = vmatprep.mubr.bf16.mxu0 0
  %252 = vmatmul.mubr.bf16.gmra.mrb[0].mxu0 %v217
  %v253 = vpop.f32.mrb[0].mxu0
  %v254 = vadd.f32 0.0, %v253
  %v255 = vpop.f32.mrb[0].mxu0
  %v256 = vpop.f32.mrb[0].mxu0
  %v257 = vadd.f32 0.0, %v256
  %v258 = vpop.f32.mrb[0].mxu0
  %259 = vdwg.mxu0
  %v260 = vadd.f32 %v197, %v254
  %v261 = vadd.f32 %v198, %v257
  %s262 = scalar_lea.vmem %s1, 32
  %v263 = vld [vmem:[%s262] sm:$0xf]
  %v264 = vld [vmem:[%s262 + $0x4] sm:$0xf]
  %s265 = scalar_lea.vmem %s0, 32
  %v266 = vld [vmem:[%s265] sm:$0xf]
  %v267 = vld [vmem:[%s265 + $0x4] sm:$0xf]
  %v270 = vunpack.c.l.b16 %v263
  %v271 = vunpack.c.l.b16 %v264
  %v272 = vpack.c.b16 %v271, %v270
  %v275 = vunpack.c.l.b16 %v266
  %v276 = vunpack.c.l.b16 %v267
  %v277 = vpack.c.b16 %v276, %v275
  %v280 = vsel %vm36, %v272, 0
  %282 = vmatprep.subr.bf16.mxu0 0
  %283 = vmatpush1.bf16.msra.mxu0 %v277
  %284 = vmatprep.subr.bf16.mxu0 0
  %285 = vmatpush1.bf16.msra.mxu0 0
  %286 = vmatprep.subr.bf16.mxu0 0
  %287 = vmatpush1.bf16.msra.mxu0 0
  %288 = vmatprep.subr.bf16.mxu0 0
  %289 = vmatpush1.bf16.msra.mxu0 0
  %290 = vmatprep.subr.bf16.mxu0 0
  %291 = vmatpush1.bf16.msra.mxu0 0
  %292 = vmatprep.subr.bf16.mxu0 0
  %293 = vmatpush1.bf16.msra.mxu0 0
  %294 = vmatprep.subr.bf16.mxu0 0
  %295 = vmatpush1.bf16.msra.mxu0 0
  %296 = vmatprep.subr.bf16.mxu0 0
  %297 = vmatpush1.bf16.msra.mxu0 0
  %298 = vmatprep.subr.bf16.mxu0 0
  %299 = vmatpush1.bf16.msra.mxu0 0
  %300 = vmatprep.subr.bf16.mxu0 0
  %301 = vmatpush1.bf16.msra.mxu0 0
  %302 = vmatprep.subr.bf16.mxu0 0
  %303 = vmatpush1.bf16.msra.mxu0 0
  %304 = vmatprep.subr.bf16.mxu0 0
  %305 = vmatpush1.bf16.msra.mxu0 0
  %306 = vmatprep.subr.bf16.mxu0 0
  %307 = vmatpush1.bf16.msra.mxu0 0
  %308 = vmatprep.subr.bf16.mxu0 0
  %309 = vmatpush1.bf16.msra.mxu0 0
  %310 = vmatprep.subr.bf16.mxu0 0
  %311 = vmatpush1.bf16.msra.mxu0 0
  %312 = vmatprep.subr.bf16.mxu0 0
  %313 = vmatpush1.bf16.msra.mxu0 0
  %314 = vmatprep.mubr.bf16.mxu0 0
  %315 = vmatmul.mubr.bf16.gmra.mrb[0].mxu0 %v280
  %v316 = vpop.f32.mrb[0].mxu0
  %v317 = vadd.f32 0.0, %v316
  %v318 = vpop.f32.mrb[0].mxu0
  %v319 = vpop.f32.mrb[0].mxu0
  %v320 = vadd.f32 0.0, %v319
  %v321 = vpop.f32.mrb[0].mxu0
  %322 = vdwg.mxu0
  %v323 = vadd.f32 %v260, %v317
  %v324 = vadd.f32 %v261, %v320
  %s325 = scalar_lea.vmem %s1, 40
  %v326 = vld [vmem:[%s325] sm:$0xf]
  %v327 = vld [vmem:[%s325 + $0x4] sm:$0xf]
  %s328 = scalar_lea.vmem %s0, 40
  %v329 = vld [vmem:[%s328] sm:$0xf]
  %v330 = vld [vmem:[%s328 + $0x4] sm:$0xf]
  %v333 = vunpack.c.l.b16 %v326
  %v334 = vunpack.c.l.b16 %v327
  %v335 = vpack.c.b16 %v334, %v333
  %v338 = vunpack.c.l.b16 %v329
  %v339 = vunpack.c.l.b16 %v330
  %v340 = vpack.c.b16 %v339, %v338
  %v343 = vsel %vm36, %v335, 0
  %345 = vmatprep.subr.bf16.mxu0 0
  %346 = vmatpush1.bf16.msra.mxu0 %v340
  %347 = vmatprep.subr.bf16.mxu0 0
  %348 = vmatpush1.bf16.msra.mxu0 0
  %349 = vmatprep.subr.bf16.mxu0 0
  %350 = vmatpush1.bf16.msra.mxu0 0
  %351 = vmatprep.subr.bf16.mxu0 0
  %352 = vmatpush1.bf16.msra.mxu0 0
  %353 = vmatprep.subr.bf16.mxu0 0
  %354 = vmatpush1.bf16.msra.mxu0 0
  %355 = vmatprep.subr.bf16.mxu0 0
  %356 = vmatpush1.bf16.msra.mxu0 0
  %357 = vmatprep.subr.bf16.mxu0 0
  %358 = vmatpush1.bf16.msra.mxu0 0
  %359 = vmatprep.subr.bf16.mxu0 0
  %360 = vmatpush1.bf16.msra.mxu0 0
  %361 = vmatprep.subr.bf16.mxu0 0
  %362 = vmatpush1.bf16.msra.mxu0 0
  %363 = vmatprep.subr.bf16.mxu0 0
  %364 = vmatpush1.bf16.msra.mxu0 0
  %365 = vmatprep.subr.bf16.mxu0 0
  %366 = vmatpush1.bf16.msra.mxu0 0
  %367 = vmatprep.subr.bf16.mxu0 0
  %368 = vmatpush1.bf16.msra.mxu0 0
  %369 = vmatprep.subr.bf16.mxu0 0
  %370 = vmatpush1.bf16.msra.mxu0 0
  %371 = vmatprep.subr.bf16.mxu0 0
  %372 = vmatpush1.bf16.msra.mxu0 0
  %373 = vmatprep.subr.bf16.mxu0 0
  %374 = vmatpush1.bf16.msra.mxu0 0
  %375 = vmatprep.subr.bf16.mxu0 0
  %376 = vmatpush1.bf16.msra.mxu0 0
  %377 = vmatprep.mubr.bf16.mxu0 0
  %378 = vmatmul.mubr.bf16.gmra.mrb[0].mxu0 %v343
  %v379 = vpop.f32.mrb[0].mxu0
  %v380 = vadd.f32 0.0, %v379
  %v381 = vpop.f32.mrb[0].mxu0
  %v382 = vpop.f32.mrb[0].mxu0
  %v383 = vadd.f32 0.0, %v382
  %v384 = vpop.f32.mrb[0].mxu0
  %385 = vdwg.mxu0
  %v386 = vadd.f32 %v323, %v380
  %v387 = vadd.f32 %v324, %v383
  %s388 = scalar_lea.vmem %s1, 48
  %v389 = vld [vmem:[%s388] sm:$0xf]
  %v390 = vld [vmem:[%s388 + $0x4] sm:$0xf]
  %s391 = scalar_lea.vmem %s0, 48
  %v392 = vld [vmem:[%s391] sm:$0xf]
  %v393 = vld [vmem:[%s391 + $0x4] sm:$0xf]
  %v396 = vunpack.c.l.b16 %v389
  %v397 = vunpack.c.l.b16 %v390
  %v398 = vpack.c.b16 %v397, %v396
  %v401 = vunpack.c.l.b16 %v392
  %v402 = vunpack.c.l.b16 %v393
  %v403 = vpack.c.b16 %v402, %v401
  %v406 = vsel %vm36, %v398, 0
  %408 = vmatprep.subr.bf16.mxu0 0
  %409 = vmatpush1.bf16.msra.mxu0 %v403
  %410 = vmatprep.subr.bf16.mxu0 0
  %411 = vmatpush1.bf16.msra.mxu0 0
  %412 = vmatprep.subr.bf16.mxu0 0
  %413 = vmatpush1.bf16.msra.mxu0 0
  %414 = vmatprep.subr.bf16.mxu0 0
  %415 = vmatpush1.bf16.msra.mxu0 0
  %416 = vmatprep.subr.bf16.mxu0 0
  %417 = vmatpush1.bf16.msra.mxu0 0
  %418 = vmatprep.subr.bf16.mxu0 0
  %419 = vmatpush1.bf16.msra.mxu0 0
  %420 = vmatprep.subr.bf16.mxu0 0
  %421 = vmatpush1.bf16.msra.mxu0 0
  %422 = vmatprep.subr.bf16.mxu0 0
  %423 = vmatpush1.bf16.msra.mxu0 0
  %424 = vmatprep.subr.bf16.mxu0 0
  %425 = vmatpush1.bf16.msra.mxu0 0
  %426 = vmatprep.subr.bf16.mxu0 0
  %427 = vmatpush1.bf16.msra.mxu0 0
  %428 = vmatprep.subr.bf16.mxu0 0
  %429 = vmatpush1.bf16.msra.mxu0 0
  %430 = vmatprep.subr.bf16.mxu0 0
  %431 = vmatpush1.bf16.msra.mxu0 0
  %432 = vmatprep.subr.bf16.mxu0 0
  %433 = vmatpush1.bf16.msra.mxu0 0
  %434 = vmatprep.subr.bf16.mxu0 0
  %435 = vmatpush1.bf16.msra.mxu0 0
  %436 = vmatprep.subr.bf16.mxu0 0
  %437 = vmatpush1.bf16.msra.mxu0 0
  %438 = vmatprep.subr.bf16.mxu0 0
  %439 = vmatpush1.bf16.msra.mxu0 0
  %440 = vmatprep.mubr.bf16.mxu0 0
  %441 = vmatmul.mubr.bf16.gmra.mrb[0].mxu0 %v406
  %v442 = vpop.f32.mrb[0].mxu0
  %v443 = vadd.f32 0.0, %v442
  %v444 = vpop.f32.mrb[0].mxu0
  %v445 = vpop.f32.mrb[0].mxu0
  %v446 = vadd.f32 0.0, %v445
  %v447 = vpop.f32.mrb[0].mxu0
  %448 = vdwg.mxu0
  %v449 = vadd.f32 %v386, %v443
  %v450 = vadd.f32 %v387, %v446
  %s451 = scalar_lea.vmem %s1, 56
  %v452 = vld [vmem:[%s451] sm:$0xf]
  %v453 = vld [vmem:[%s451 + $0x4] sm:$0xf]
  %s454 = scalar_lea.vmem %s0, 56
  %v455 = vld [vmem:[%s454] sm:$0xf]
  %v456 = vld [vmem:[%s454 + $0x4] sm:$0xf]
  %v459 = vunpack.c.l.b16 %v452
  %v460 = vunpack.c.l.b16 %v453
  %v461 = vpack.c.b16 %v460, %v459
  %v464 = vunpack.c.l.b16 %v455
  %v465 = vunpack.c.l.b16 %v456
  %v466 = vpack.c.b16 %v465, %v464
  %v469 = vsel %vm36, %v461, 0
  %471 = vmatprep.subr.bf16.mxu0 0
  %472 = vmatpush1.bf16.msra.mxu0 %v466
  %473 = vmatprep.subr.bf16.mxu0 0
  %474 = vmatpush1.bf16.msra.mxu0 0
  %475 = vmatprep.subr.bf16.mxu0 0
  %476 = vmatpush1.bf16.msra.mxu0 0
  %477 = vmatprep.subr.bf16.mxu0 0
  %478 = vmatpush1.bf16.msra.mxu0 0
  %479 = vmatprep.subr.bf16.mxu0 0
  %480 = vmatpush1.bf16.msra.mxu0 0
  %481 = vmatprep.subr.bf16.mxu0 0
  %482 = vmatpush1.bf16.msra.mxu0 0
  %483 = vmatprep.subr.bf16.mxu0 0
  %484 = vmatpush1.bf16.msra.mxu0 0
  %485 = vmatprep.subr.bf16.mxu0 0
  %486 = vmatpush1.bf16.msra.mxu0 0
  %487 = vmatprep.subr.bf16.mxu0 0
  %488 = vmatpush1.bf16.msra.mxu0 0
  %489 = vmatprep.subr.bf16.mxu0 0
  %490 = vmatpush1.bf16.msra.mxu0 0
  %491 = vmatprep.subr.bf16.mxu0 0
  %492 = vmatpush1.bf16.msra.mxu0 0
  %493 = vmatprep.subr.bf16.mxu0 0
  %494 = vmatpush1.bf16.msra.mxu0 0
  %495 = vmatprep.subr.bf16.mxu0 0
  %496 = vmatpush1.bf16.msra.mxu0 0
  %497 = vmatprep.subr.bf16.mxu0 0
  %498 = vmatpush1.bf16.msra.mxu0 0
  %499 = vmatprep.subr.bf16.mxu0 0
  %500 = vmatpush1.bf16.msra.mxu0 0
  %501 = vmatprep.subr.bf16.mxu0 0
  %502 = vmatpush1.bf16.msra.mxu0 0
  %503 = vmatprep.mubr.bf16.mxu0 0
  %504 = vmatmul.mubr.bf16.gmra.mrb[0].mxu0 %v469
  %v505 = vpop.f32.mrb[0].mxu0
  %v506 = vadd.f32 0.0, %v505
  %v507 = vpop.f32.mrb[0].mxu0
  %v508 = vpop.f32.mrb[0].mxu0
  %v509 = vadd.f32 0.0, %v508
  %v510 = vpop.f32.mrb[0].mxu0
  %511 = vdwg.mxu0
  %v512 = vadd.f32 %v449, %v506
  %v513 = vadd.f32 %v450, %v509
  %s514 = scalar_lea.vmem %s1, 64
  %v515 = vld [vmem:[%s514] sm:$0xf]
  %v516 = vld [vmem:[%s514 + $0x4] sm:$0xf]
  %s517 = scalar_lea.vmem %s0, 64
  %v518 = vld [vmem:[%s517] sm:$0xf]
  %v519 = vld [vmem:[%s517 + $0x4] sm:$0xf]
  %v522 = vunpack.c.l.b16 %v515
  %v523 = vunpack.c.l.b16 %v516
  %v524 = vpack.c.b16 %v523, %v522
  %v527 = vunpack.c.l.b16 %v518
  %v528 = vunpack.c.l.b16 %v519
  %v529 = vpack.c.b16 %v528, %v527
  %v532 = vsel %vm36, %v524, 0
  %534 = vmatprep.subr.bf16.mxu0 0
  %535 = vmatpush1.bf16.msra.mxu0 %v529
  %536 = vmatprep.subr.bf16.mxu0 0
  %537 = vmatpush1.bf16.msra.mxu0 0
  %538 = vmatprep.subr.bf16.mxu0 0
  %539 = vmatpush1.bf16.msra.mxu0 0
  %540 = vmatprep.subr.bf16.mxu0 0
  %541 = vmatpush1.bf16.msra.mxu0 0
  %542 = vmatprep.subr.bf16.mxu0 0
  %543 = vmatpush1.bf16.msra.mxu0 0
  %544 = vmatprep.subr.bf16.mxu0 0
  %545 = vmatpush1.bf16.msra.mxu0 0
  %546 = vmatprep.subr.bf16.mxu0 0
  %547 = vmatpush1.bf16.msra.mxu0 0
  %548 = vmatprep.subr.bf16.mxu0 0
  %549 = vmatpush1.bf16.msra.mxu0 0
  %550 = vmatprep.subr.bf16.mxu0 0
  %551 = vmatpush1.bf16.msra.mxu0 0
  %552 = vmatprep.subr.bf16.mxu0 0
  %553 = vmatpush1.bf16.msra.mxu0 0
  %554 = vmatprep.subr.bf16.mxu0 0
  %555 = vmatpush1.bf16.msra.mxu0 0
  %556 = vmatprep.subr.bf16.mxu0 0
  %557 = vmatpush1.bf16.msra.mxu0 0
  %558 = vmatprep.subr.bf16.mxu0 0
  %559 = vmatpush1.bf16.msra.mxu0 0
  %560 = vmatprep.subr.bf16.mxu0 0
  %561 = vmatpush1.bf16.msra.mxu0 0
  %562 = vmatprep.subr.bf16.mxu0 0
  %563 = vmatpush1.bf16.msra.mxu0 0
  %564 = vmatprep.subr.bf16.mxu0 0
  %565 = vmatpush1.bf16.msra.mxu0 0
  %566 = vmatprep.mubr.bf16.mxu0 0
  %567 = vmatmul.mubr.bf16.gmra.mrb[0].mxu0 %v532
  %v568 = vpop.f32.mrb[0].mxu0
  %v569 = vadd.f32 0.0, %v568
  %v570 = vpop.f32.mrb[0].mxu0
  %v571 = vpop.f32.mrb[0].mxu0
  %v572 = vadd.f32 0.0, %v571
  %v573 = vpop.f32.mrb[0].mxu0
  %574 = vdwg.mxu0
  %v575 = vadd.f32 %v512, %v569
  %v576 = vadd.f32 %v513, %v572
  %v577 = vld [vmem:[%s2] sm:$0xff]
  %v578 = vld [vmem:[%s2 + $0x8] sm:$0xff]
  %580 = vset.pattern.permute.xlu0 0
  %581 = vperm.xlu0 %580, %v577
  %v582 = vpop.permute.xlu0 %581
  %585 = vset.pattern.permute.xlu0 0
  %586 = vperm.xlu0 %585, %v578
  %v587 = vpop.permute.xlu0 %586
  %v589 = vadd.f32 %v575, %v582
  %v590 = vadd.f32 %v576, %v587
  %v591 = vmax.f32 %v589, 0.0
  %v592 = vmax.f32 %v590, 0.0
  %v593 = vpack.c.bf16 %v592, %v591
  %v595 = vunpack.c.l.b16 %v593
  %v596 = vunpack.c.h.b16 %v593
  %v597 = vpack.c.b16 %v595, %v595
  %v598 = vpack.c.b16 %v596, %v596
  %vm601 = vcmask 257024
  %602 = vst.msk [vmem:[%s3] sm:$0xf] %vm601, %v597
  %603 = vst.msk [vmem:[%s3 + $0x4] sm:$0xf] %vm601, %v598
  // Predicated region
  $region14: #{unet_forward.22} parent=0 // pred_check
    _
  $region15: #{unet_forward.22} parent=0 // pred_check_branch
    %605 = sbr.rel (0) target = $region17
  $region16: #{unet_forward.22} parent=0 // pred_region
    _
  $region17: #{unet_forward.22} parent=0 // pred_fallthru
    _
  // Predicated region
  $region18: #{unet_forward.22} parent=0 // pred_check
    _
  $region19: #{unet_forward.22} parent=0 // pred_check_branch
    %607 = sbr.rel (0) target = $region21
  $region20: #{unet_forward.22} parent=0 // pred_region
    _
  $region21: #{unet_forward.22} parent=0 // pred_fallthru
    _

// kernel: unet_forward.26
$region0: #{unet_forward.26}
  #allocation0 [shape = 'u32[]', space=smem, size = 0x4, offset = 0x4, fixed_abs, tag = 'smem constant byte address 0x4 - core index']
  #allocation1 [shape = 'u32[144,128]{1,0:T(1,128)}', space=vmem, size = 0x12000, scoped, tag = 'internal scratch']
  %s0 = inlined_call_operand.vmem [shape: bf16[1,8,128], index: 0, kind: input, shape index: {}]
  %s1 = inlined_call_operand.vmem [shape: bf16[1,16,8], index: 1, kind: input, shape index: {}]
  %s2 = inlined_call_operand.vmem [shape: f32[16,1], index: 2, kind: input, shape index: {}]
  %s3 = inlined_call_operand.vmem [shape: bf16[16,128], index: 3, kind: output, shape index: {}]
  %s4 = sld [smem:[#allocation0]]
  $region22: #{unet_forward.26} parent=0
    _
  %s6 = ssub.s32 1, %s4
  %s7 = scalar_select 0, %s6, %s4
  // Predicated region
  $region2: #{unet_forward.26} parent=0 // pred_check
    _
  $region3: #{unet_forward.26} parent=0 // pred_check_branch
    %9 = sbr.rel (0) target = $region5
  $region4: #{unet_forward.26} parent=0 // pred_region
    _
  $region5: #{unet_forward.26} parent=0 // pred_fallthru
    _
  // Predicated region
  $region6: #{unet_forward.26} parent=0 // pred_check
    _
  $region7: #{unet_forward.26} parent=0 // pred_check_branch
    %11 = sbr.rel (0) target = $region9
  $region8: #{unet_forward.26} parent=0 // pred_region
    _
  $region9: #{unet_forward.26} parent=0 // pred_fallthru
    _
  // Predicated region
  $region10: #{unet_forward.26} parent=0 // pred_check
    _
  $region11: #{unet_forward.26} parent=0 // pred_check_branch
    %13 = sbr.rel (0) target = $region13
  $region12: #{unet_forward.26} parent=0 // pred_region
    _
  $region13: #{unet_forward.26} parent=0 // pred_fallthru
    _
  %v15 = vld [vmem:[%s1] sm:$0xf]
  %v16 = vld [vmem:[%s1 + $0x4] sm:$0xf]
  %v17 = vld [vmem:[%s0] sm:$0xf]
  %v18 = vld [vmem:[%s2] sm:$0xff]
  %v19 = vld [vmem:[%s2 + $0x8] sm:$0xff]
  %21 = vset.pattern.permute.xlu0 0
  %22 = vperm.xlu0 %21, %v18
  %v23 = vpop.permute.xlu0 %22
  %26 = vset.pattern.permute.xlu0 0
  %27 = vperm.xlu0 %26, %v19
  %v28 = vpop.permute.xlu0 %27
  %v32 = vunpack.c.l.b16 %v15
  %v33 = vunpack.c.l.b16 %v16
  %v34 = vpack.c.b16 %v33, %v32
  %vm35 = vcmask 64512
  %v37 = vsel %vm35, %v34, 0
  %vm39 = vcmask 1043456
  %v41 = vsel %vm39, %v17, 0
  %43 = vmatprep.subr.bf16.mxu0 0
  %44 = vmatpush1.bf16.msra.mxu0 %v41
  %45 = vmatprep.subr.bf16.mxu0 0
  %46 = vmatpush1.bf16.msra.mxu0 0
  %47 = vmatprep.subr.bf16.mxu0 0
  %48 = vmatpush1.bf16.msra.mxu0 0
  %49 = vmatprep.subr.bf16.mxu0 0
  %50 = vmatpush1.bf16.msra.mxu0 0
  %51 = vmatprep.subr.bf16.mxu0 0
  %52 = vmatpush1.bf16.msra.mxu0 0
  %53 = vmatprep.subr.bf16.mxu0 0
  %54 = vmatpush1.bf16.msra.mxu0 0
  %55 = vmatprep.subr.bf16.mxu0 0
  %56 = vmatpush1.bf16.msra.mxu0 0
  %57 = vmatprep.subr.bf16.mxu0 0
  %58 = vmatpush1.bf16.msra.mxu0 0
  %59 = vmatprep.subr.bf16.mxu0 0
  %60 = vmatpush1.bf16.msra.mxu0 0
  %61 = vmatprep.subr.bf16.mxu0 0
  %62 = vmatpush1.bf16.msra.mxu0 0
  %63 = vmatprep.subr.bf16.mxu0 0
  %64 = vmatpush1.bf16.msra.mxu0 0
  %65 = vmatprep.subr.bf16.mxu0 0
  %66 = vmatpush1.bf16.msra.mxu0 0
  %67 = vmatprep.subr.bf16.mxu0 0
  %68 = vmatpush1.bf16.msra.mxu0 0
  %69 = vmatprep.subr.bf16.mxu0 0
  %70 = vmatpush1.bf16.msra.mxu0 0
  %71 = vmatprep.subr.bf16.mxu0 0
  %72 = vmatpush1.bf16.msra.mxu0 0
  %73 = vmatprep.subr.bf16.mxu0 0
  %74 = vmatpush1.bf16.msra.mxu0 0
  %75 = vmatprep.mubr.bf16.mxu0 0
  %76 = vmatmul.mubr.bf16.gmra.mrb[0].mxu0 %v37
  %v77 = vpop.f32.mrb[0].mxu0
  %v78 = vadd.f32 %v23, %v77
  %v79 = vpop.f32.mrb[0].mxu0
  %v80 = vpop.f32.mrb[0].mxu0
  %v81 = vadd.f32 %v28, %v80
  %v82 = vpop.f32.mrb[0].mxu0
  %83 = vdwg.mxu0
  %v84 = vpack.c.bf16 %v81, %v78
  %v86 = vunpack.c.l.b16 %v84
  %v87 = vunpack.c.h.b16 %v84
  %v88 = vpack.c.b16 %v86, %v86
  %v89 = vpack.c.b16 %v87, %v87
  %92 = vst [vmem:[%s3] sm:$0xf] %v88
  %93 = vst [vmem:[%s3 + $0x4] sm:$0xf] %v89
  // Predicated region
  $region14: #{unet_forward.26} parent=0 // pred_check
    _
  $region15: #{unet_forward.26} parent=0 // pred_check_branch
    %95 = sbr.rel (0) target = $region17
  $region16: #{unet_forward.26} parent=0 // pred_region
    _
  $region17: #{unet_forward.26} parent=0 // pred_fallthru
    _
  // Predicated region
  $region18: #{unet_forward.26} parent=0 // pred_check
    _
  $region19: #{unet_forward.26} parent=0 // pred_check_branch
    %97 = sbr.rel (0) target = $region21
  $region20: #{unet_forward.26} parent=0 // pred_region
    _
  $region21: #{unet_forward.26} parent=0 // pred_fallthru
    _

// kernel: unet_forward.24
$region0: #{unet_forward.24}
  #allocation0 [shape = 'u32[]', space=smem, size = 0x4, offset = 0x4, fixed_abs, tag = 'smem constant byte address 0x4 - core index']
  #allocation1 [shape = 'u32[144,128]{1,0:T(1,128)}', space=vmem, size = 0x12000, scoped, tag = 'internal scratch']
  %s0 = inlined_call_operand.vmem [shape: bf16[9,16,128], index: 0, kind: input, shape index: {}]
  %s1 = inlined_call_operand.vmem [shape: bf16[9,8,16], index: 1, kind: input, shape index: {}]
  %s2 = inlined_call_operand.vmem [shape: f32[8,1], index: 2, kind: input, shape index: {}]
  %s3 = inlined_call_operand.vmem [shape: bf16[8,128], index: 3, kind: output, shape index: {}]
  %s4 = sld [smem:[#allocation0]]
  $region22: #{unet_forward.24} parent=0
    _
  %s6 = ssub.s32 1, %s4
  %s7 = scalar_select 0, %s6, %s4
  // Predicated region
  $region2: #{unet_forward.24} parent=0 // pred_check
    _
  $region3: #{unet_forward.24} parent=0 // pred_check_branch
    %9 = sbr.rel (0) target = $region5
  $region4: #{unet_forward.24} parent=0 // pred_region
    _
  $region5: #{unet_forward.24} parent=0 // pred_fallthru
    _
  // Predicated region
  $region6: #{unet_forward.24} parent=0 // pred_check
    _
  $region7: #{unet_forward.24} parent=0 // pred_check_branch
    %11 = sbr.rel (0) target = $region9
  $region8: #{unet_forward.24} parent=0 // pred_region
    _
  $region9: #{unet_forward.24} parent=0 // pred_fallthru
    _
  // Predicated region
  $region10: #{unet_forward.24} parent=0 // pred_check
    _
  $region11: #{unet_forward.24} parent=0 // pred_check_branch
    %13 = sbr.rel (0) target = $region13
  $region12: #{unet_forward.24} parent=0 // pred_region
    _
  $region13: #{unet_forward.24} parent=0 // pred_fallthru
    _
  %v15 = vld [vmem:[%s1] sm:$0xf]
  %v16 = vld [vmem:[%s0] sm:$0xf]
  %v17 = vld [vmem:[%s0 + $0x4] sm:$0xf]
  %s18 = scalar_lea.vmem %s1, 4
  %v19 = vld [vmem:[%s18] sm:$0xf]
  %s20 = scalar_lea.vmem %s0, 8
  %v21 = vld [vmem:[%s20] sm:$0xf]
  %v22 = vld [vmem:[%s20 + $0x4] sm:$0xf]
  %v25 = vunpack.c.l.b16 %v21
  %v26 = vunpack.c.l.b16 %v22
  %v27 = vpack.c.b16 %v26, %v25
  %vm29 = vcmask 130048
  %v31 = vsel %vm29, %v19, 0
  %33 = vmatprep.subr.bf16.mxu0 0
  %34 = vmatpush1.bf16.msra.mxu0 %v27
  %35 = vmatprep.subr.bf16.mxu0 0
  %36 = vmatpush1.bf16.msra.mxu0 0
  %37 = vmatprep.subr.bf16.mxu0 0
  %38 = vmatpush1.bf16.msra.mxu0 0
  %39 = vmatprep.subr.bf16.mxu0 0
  %40 = vmatpush1.bf16.msra.mxu0 0
  %41 = vmatprep.subr.bf16.mxu0 0
  %42 = vmatpush1.bf16.msra.mxu0 0
  %43 = vmatprep.subr.bf16.mxu0 0
  %44 = vmatpush1.bf16.msra.mxu0 0
  %45 = vmatprep.subr.bf16.mxu0 0
  %46 = vmatpush1.bf16.msra.mxu0 0
  %47 = vmatprep.subr.bf16.mxu0 0
  %48 = vmatpush1.bf16.msra.mxu0 0
  %49 = vmatprep.subr.bf16.mxu0 0
  %50 = vmatpush1.bf16.msra.mxu0 0
  %51 = vmatprep.subr.bf16.mxu0 0
  %52 = vmatpush1.bf16.msra.mxu0 0
  %53 = vmatprep.subr.bf16.mxu0 0
  %54 = vmatpush1.bf16.msra.mxu0 0
  %55 = vmatprep.subr.bf16.mxu0 0
  %56 = vmatpush1.bf16.msra.mxu0 0
  %57 = vmatprep.subr.bf16.mxu0 0
  %58 = vmatpush1.bf16.msra.mxu0 0
  %59 = vmatprep.subr.bf16.mxu0 0
  %60 = vmatpush1.bf16.msra.mxu0 0
  %61 = vmatprep.subr.bf16.mxu0 0
  %62 = vmatpush1.bf16.msra.mxu0 0
  %63 = vmatprep.subr.bf16.mxu0 0
  %64 = vmatpush1.bf16.msra.mxu0 0
  %65 = vmatprep.mubr.bf16.mxu0 0
  %66 = vmatmul.mubr.bf16.gmra.mrb[0].mxu0 %v31
  %v67 = vpop.f32.mrb[0].mxu0
  %v68 = vadd.f32 0.0, %v67
  %v69 = vpop.f32.mrb[0].mxu0
  %v70 = vpop.f32.mrb[0].mxu0
  %v71 = vpop.f32.mrb[0].mxu0
  %72 = vdwg.mxu0
  %v75 = vunpack.c.l.b16 %v16
  %v76 = vunpack.c.l.b16 %v17
  %v77 = vpack.c.b16 %v76, %v75
  %v80 = vsel %vm29, %v15, 0
  %82 = vmatprep.subr.bf16.mxu0 0
  %83 = vmatpush1.bf16.msra.mxu0 %v77
  %84 = vmatprep.subr.bf16.mxu0 0
  %85 = vmatpush1.bf16.msra.mxu0 0
  %86 = vmatprep.subr.bf16.mxu0 0
  %87 = vmatpush1.bf16.msra.mxu0 0
  %88 = vmatprep.subr.bf16.mxu0 0
  %89 = vmatpush1.bf16.msra.mxu0 0
  %90 = vmatprep.subr.bf16.mxu0 0
  %91 = vmatpush1.bf16.msra.mxu0 0
  %92 = vmatprep.subr.bf16.mxu0 0
  %93 = vmatpush1.bf16.msra.mxu0 0
  %94 = vmatprep.subr.bf16.mxu0 0
  %95 = vmatpush1.bf16.msra.mxu0 0
  %96 = vmatprep.subr.bf16.mxu0 0
  %97 = vmatpush1.bf16.msra.mxu0 0
  %98 = vmatprep.subr.bf16.mxu0 0
  %99 = vmatpush1.bf16.msra.mxu0 0
  %100 = vmatprep.subr.bf16.mxu0 0
  %101 = vmatpush1.bf16.msra.mxu0 0
  %102 = vmatprep.subr.bf16.mxu0 0
  %103 = vmatpush1.bf16.msra.mxu0 0
  %104 = vmatprep.subr.bf16.mxu0 0
  %105 = vmatpush1.bf16.msra.mxu0 0
  %106 = vmatprep.subr.bf16.mxu0 0
  %107 = vmatpush1.bf16.msra.mxu0 0
  %108 = vmatprep.subr.bf16.mxu0 0
  %109 = vmatpush1.bf16.msra.mxu0 0
  %110 = vmatprep.subr.bf16.mxu0 0
  %111 = vmatpush1.bf16.msra.mxu0 0
  %112 = vmatprep.subr.bf16.mxu0 0
  %113 = vmatpush1.bf16.msra.mxu0 0
  %114 = vmatprep.mubr.bf16.mxu0 0
  %115 = vmatmul.mubr.bf16.gmra.mrb[0].mxu0 %v80
  %v116 = vpop.f32.mrb[0].mxu0
  %v117 = vadd.f32 %v68, %v116
  %v118 = vpop.f32.mrb[0].mxu0
  %v119 = vpop.f32.mrb[0].mxu0
  %v120 = vpop.f32.mrb[0].mxu0
  %121 = vdwg.mxu0
  %s122 = scalar_lea.vmem %s1, 8
  %v123 = vld [vmem:[%s122] sm:$0xf]
  %s124 = scalar_lea.vmem %s0, 16
  %v125 = vld [vmem:[%s124] sm:$0xf]
  %v126 = vld [vmem:[%s124 + $0x4] sm:$0xf]
  %v129 = vunpack.c.l.b16 %v125
  %v130 = vunpack.c.l.b16 %v126
  %v131 = vpack.c.b16 %v130, %v129
  %v134 = vsel %vm29, %v123, 0
  %136 = vmatprep.subr.bf16.mxu0 0
  %137 = vmatpush1.bf16.msra.mxu0 %v131
  %138 = vmatprep.subr.bf16.mxu0 0
  %139 = vmatpush1.bf16.msra.mxu0 0
  %140 = vmatprep.subr.bf16.mxu0 0
  %141 = vmatpush1.bf16.msra.mxu0 0
  %142 = vmatprep.subr.bf16.mxu0 0
  %143 = vmatpush1.bf16.msra.mxu0 0
  %144 = vmatprep.subr.bf16.mxu0 0
  %145 = vmatpush1.bf16.msra.mxu0 0
  %146 = vmatprep.subr.bf16.mxu0 0
  %147 = vmatpush1.bf16.msra.mxu0 0
  %148 = vmatprep.subr.bf16.mxu0 0
  %149 = vmatpush1.bf16.msra.mxu0 0
  %150 = vmatprep.subr.bf16.mxu0 0
  %151 = vmatpush1.bf16.msra.mxu0 0
  %152 = vmatprep.subr.bf16.mxu0 0
  %153 = vmatpush1.bf16.msra.mxu0 0
  %154 = vmatprep.subr.bf16.mxu0 0
  %155 = vmatpush1.bf16.msra.mxu0 0
  %156 = vmatprep.subr.bf16.mxu0 0
  %157 = vmatpush1.bf16.msra.mxu0 0
  %158 = vmatprep.subr.bf16.mxu0 0
  %159 = vmatpush1.bf16.msra.mxu0 0
  %160 = vmatprep.subr.bf16.mxu0 0
  %161 = vmatpush1.bf16.msra.mxu0 0
  %162 = vmatprep.subr.bf16.mxu0 0
  %163 = vmatpush1.bf16.msra.mxu0 0
  %164 = vmatprep.subr.bf16.mxu0 0
  %165 = vmatpush1.bf16.msra.mxu0 0
  %166 = vmatprep.subr.bf16.mxu0 0
  %167 = vmatpush1.bf16.msra.mxu0 0
  %168 = vmatprep.mubr.bf16.mxu0 0
  %169 = vmatmul.mubr.bf16.gmra.mrb[0].mxu0 %v134
  %v170 = vpop.f32.mrb[0].mxu0
  %v171 = vadd.f32 0.0, %v170
  %v172 = vpop.f32.mrb[0].mxu0
  %v173 = vpop.f32.mrb[0].mxu0
  %v174 = vpop.f32.mrb[0].mxu0
  %175 = vdwg.mxu0
  %v176 = vadd.f32 %v117, %v171
  %s177 = scalar_lea.vmem %s1, 12
  %v178 = vld [vmem:[%s177] sm:$0xf]
  %s179 = scalar_lea.vmem %s0, 24
  %v180 = vld [vmem:[%s179] sm:$0xf]
  %v181 = vld [vmem:[%s179 + $0x4] sm:$0xf]
  %v184 = vunpack.c.l.b16 %v180
  %v185 = vunpack.c.l.b16 %v181
  %v186 = vpack.c.b16 %v185, %v184
  %v189 = vsel %vm29, %v178, 0
  %191 = vmatprep.subr.bf16.mxu0 0
  %192 = vmatpush1.bf16.msra.mxu0 %v186
  %193 = vmatprep.subr.bf16.mxu0 0
  %194 = vmatpush1.bf16.msra.mxu0 0
  %195 = vmatprep.subr.bf16.mxu0 0
  %196 = vmatpush1.bf16.msra.mxu0 0
  %197 = vmatprep.subr.bf16.mxu0 0
  %198 = vmatpush1.bf16.msra.mxu0 0
  %199 = vmatprep.subr.bf16.mxu0 0
  %200 = vmatpush1.bf16.msra.mxu0 0
  %201 = vmatprep.subr.bf16.mxu0 0
  %202 = vmatpush1.bf16.msra.mxu0 0
  %203 = vmatprep.subr.bf16.mxu0 0
  %204 = vmatpush1.bf16.msra.mxu0 0
  %205 = vmatprep.subr.bf16.mxu0 0
  %206 = vmatpush1.bf16.msra.mxu0 0
  %207 = vmatprep.subr.bf16.mxu0 0
  %208 = vmatpush1.bf16.msra.mxu0 0
  %209 = vmatprep.subr.bf16.mxu0 0
  %210 = vmatpush1.bf16.msra.mxu0 0
  %211 = vmatprep.subr.bf16.mxu0 0
  %212 = vmatpush1.bf16.msra.mxu0 0
  %213 = vmatprep.subr.bf16.mxu0 0
  %214 = vmatpush1.bf16.msra.mxu0 0
  %215 = vmatprep.subr.bf16.mxu0 0
  %216 = vmatpush1.bf16.msra.mxu0 0
  %217 = vmatprep.subr.bf16.mxu0 0
  %218 = vmatpush1.bf16.msra.mxu0 0
  %219 = vmatprep.subr.bf16.mxu0 0
  %220 = vmatpush1.bf16.msra.mxu0 0
  %221 = vmatprep.subr.bf16.mxu0 0
  %222 = vmatpush1.bf16.msra.mxu0 0
  %223 = vmatprep.mubr.bf16.mxu0 0
  %224 = vmatmul.mubr.bf16.gmra.mrb[0].mxu0 %v189
  %v225 = vpop.f32.mrb[0].mxu0
  %v226 = vadd.f32 0.0, %v225
  %v227 = vpop.f32.mrb[0].mxu0
  %v228 = vpop.f32.mrb[0].mxu0
  %v229 = vpop.f32.mrb[0].mxu0
  %230 = vdwg.mxu0
  %v231 = vadd.f32 %v176, %v226
  %s232 = scalar_lea.vmem %s1, 16
  %v233 = vld [vmem:[%s232] sm:$0xf]
  %s234 = scalar_lea.vmem %s0, 32
  %v235 = vld [vmem:[%s234] sm:$0xf]
  %v236 = vld [vmem:[%s234 + $0x4] sm:$0xf]
  %v239 = vunpack.c.l.b16 %v235
  %v240 = vunpack.c.l.b16 %v236
  %v241 = vpack.c.b16 %v240, %v239
  %v244 = vsel %vm29, %v233, 0
  %246 = vmatprep.subr.bf16.mxu0 0
  %247 = vmatpush1.bf16.msra.mxu0 %v241
  %248 = vmatprep.subr.bf16.mxu0 0
  %249 = vmatpush1.bf16.msra.mxu0 0
  %250 = vmatprep.subr.bf16.mxu0 0
  %251 = vmatpush1.bf16.msra.mxu0 0
  %252 = vmatprep.subr.bf16.mxu0 0
  %253 = vmatpush1.bf16.msra.mxu0 0
  %254 = vmatprep.subr.bf16.mxu0 0
  %255 = vmatpush1.bf16.msra.mxu0 0
  %256 = vmatprep.subr.bf16.mxu0 0
  %257 = vmatpush1.bf16.msra.mxu0 0
  %258 = vmatprep.subr.bf16.mxu0 0
  %259 = vmatpush1.bf16.msra.mxu0 0
  %260 = vmatprep.subr.bf16.mxu0 0
  %261 = vmatpush1.bf16.msra.mxu0 0
  %262 = vmatprep.subr.bf16.mxu0 0
  %263 = vmatpush1.bf16.msra.mxu0 0
  %264 = vmatprep.subr.bf16.mxu0 0
  %265 = vmatpush1.bf16.msra.mxu0 0
  %266 = vmatprep.subr.bf16.mxu0 0
  %267 = vmatpush1.bf16.msra.mxu0 0
  %268 = vmatprep.subr.bf16.mxu0 0
  %269 = vmatpush1.bf16.msra.mxu0 0
  %270 = vmatprep.subr.bf16.mxu0 0
  %271 = vmatpush1.bf16.msra.mxu0 0
  %272 = vmatprep.subr.bf16.mxu0 0
  %273 = vmatpush1.bf16.msra.mxu0 0
  %274 = vmatprep.subr.bf16.mxu0 0
  %275 = vmatpush1.bf16.msra.mxu0 0
  %276 = vmatprep.subr.bf16.mxu0 0
  %277 = vmatpush1.bf16.msra.mxu0 0
  %278 = vmatprep.mubr.bf16.mxu0 0
  %279 = vmatmul.mubr.bf16.gmra.mrb[0].mxu0 %v244
  %v280 = vpop.f32.mrb[0].mxu0
  %v281 = vadd.f32 0.0, %v280
  %v282 = vpop.f32.mrb[0].mxu0
  %v283 = vpop.f32.mrb[0].mxu0
  %v284 = vpop.f32.mrb[0].mxu0
  %285 = vdwg.mxu0
  %v286 = vadd.f32 %v231, %v281
  %s287 = scalar_lea.vmem %s1, 20
  %v288 = vld [vmem:[%s287] sm:$0xf]
  %s289 = scalar_lea.vmem %s0, 40
  %v290 = vld [vmem:[%s289] sm:$0xf]
  %v291 = vld [vmem:[%s289 + $0x4] sm:$0xf]
  %v294 = vunpack.c.l.b16 %v290
  %v295 = vunpack.c.l.b16 %v291
  %v296 = vpack.c.b16 %v295, %v294
  %v299 = vsel %vm29, %v288, 0
  %301 = vmatprep.subr.bf16.mxu0 0
  %302 = vmatpush1.bf16.msra.mxu0 %v296
  %303 = vmatprep.subr.bf16.mxu0 0
  %304 = vmatpush1.bf16.msra.mxu0 0
  %305 = vmatprep.subr.bf16.mxu0 0
  %306 = vmatpush1.bf16.msra.mxu0 0
  %307 = vmatprep.subr.bf16.mxu0 0
  %308 = vmatpush1.bf16.msra.mxu0 0
  %309 = vmatprep.subr.bf16.mxu0 0
  %310 = vmatpush1.bf16.msra.mxu0 0
  %311 = vmatprep.subr.bf16.mxu0 0
  %312 = vmatpush1.bf16.msra.mxu0 0
  %313 = vmatprep.subr.bf16.mxu0 0
  %314 = vmatpush1.bf16.msra.mxu0 0
  %315 = vmatprep.subr.bf16.mxu0 0
  %316 = vmatpush1.bf16.msra.mxu0 0
  %317 = vmatprep.subr.bf16.mxu0 0
  %318 = vmatpush1.bf16.msra.mxu0 0
  %319 = vmatprep.subr.bf16.mxu0 0
  %320 = vmatpush1.bf16.msra.mxu0 0
  %321 = vmatprep.subr.bf16.mxu0 0
  %322 = vmatpush1.bf16.msra.mxu0 0
  %323 = vmatprep.subr.bf16.mxu0 0
  %324 = vmatpush1.bf16.msra.mxu0 0
  %325 = vmatprep.subr.bf16.mxu0 0
  %326 = vmatpush1.bf16.msra.mxu0 0
  %327 = vmatprep.subr.bf16.mxu0 0
  %328 = vmatpush1.bf16.msra.mxu0 0
  %329 = vmatprep.subr.bf16.mxu0 0
  %330 = vmatpush1.bf16.msra.mxu0 0
  %331 = vmatprep.subr.bf16.mxu0 0
  %332 = vmatpush1.bf16.msra.mxu0 0
  %333 = vmatprep.mubr.bf16.mxu0 0
  %334 = vmatmul.mubr.bf16.gmra.mrb[0].mxu0 %v299
  %v335 = vpop.f32.mrb[0].mxu0
  %v336 = vadd.f32 0.0, %v335
  %v337 = vpop.f32.mrb[0].mxu0
  %v338 = vpop.f32.mrb[0].mxu0
  %v339 = vpop.f32.mrb[0].mxu0
  %340 = vdwg.mxu0
  %v341 = vadd.f32 %v286, %v336
  %s342 = scalar_lea.vmem %s1, 24
  %v343 = vld [vmem:[%s342] sm:$0xf]
  %s344 = scalar_lea.vmem %s0, 48
  %v345 = vld [vmem:[%s344] sm:$0xf]
  %v346 = vld [vmem:[%s344 + $0x4] sm:$0xf]
  %v349 = vunpack.c.l.b16 %v345
  %v350 = vunpack.c.l.b16 %v346
  %v351 = vpack.c.b16 %v350, %v349
  %v354 = vsel %vm29, %v343, 0
  %356 = vmatprep.subr.bf16.mxu0 0
  %357 = vmatpush1.bf16.msra.mxu0 %v351
  %358 = vmatprep.subr.bf16.mxu0 0
  %359 = vmatpush1.bf16.msra.mxu0 0
  %360 = vmatprep.subr.bf16.mxu0 0
  %361 = vmatpush1.bf16.msra.mxu0 0
  %362 = vmatprep.subr.bf16.mxu0 0
  %363 = vmatpush1.bf16.msra.mxu0 0
  %364 = vmatprep.subr.bf16.mxu0 0
  %365 = vmatpush1.bf16.msra.mxu0 0
  %366 = vmatprep.subr.bf16.mxu0 0
  %367 = vmatpush1.bf16.msra.mxu0 0
  %368 = vmatprep.subr.bf16.mxu0 0
  %369 = vmatpush1.bf16.msra.mxu0 0
  %370 = vmatprep.subr.bf16.mxu0 0
  %371 = vmatpush1.bf16.msra.mxu0 0
  %372 = vmatprep.subr.bf16.mxu0 0
  %373 = vmatpush1.bf16.msra.mxu0 0
  %374 = vmatprep.subr.bf16.mxu0 0
  %375 = vmatpush1.bf16.msra.mxu0 0
  %376 = vmatprep.subr.bf16.mxu0 0
  %377 = vmatpush1.bf16.msra.mxu0 0
  %378 = vmatprep.subr.bf16.mxu0 0
  %379 = vmatpush1.bf16.msra.mxu0 0
  %380 = vmatprep.subr.bf16.mxu0 0
  %381 = vmatpush1.bf16.msra.mxu0 0
  %382 = vmatprep.subr.bf16.mxu0 0
  %383 = vmatpush1.bf16.msra.mxu0 0
  %384 = vmatprep.subr.bf16.mxu0 0
  %385 = vmatpush1.bf16.msra.mxu0 0
  %386 = vmatprep.subr.bf16.mxu0 0
  %387 = vmatpush1.bf16.msra.mxu0 0
  %388 = vmatprep.mubr.bf16.mxu0 0
  %389 = vmatmul.mubr.bf16.gmra.mrb[0].mxu0 %v354
  %v390 = vpop.f32.mrb[0].mxu0
  %v391 = vadd.f32 0.0, %v390
  %v392 = vpop.f32.mrb[0].mxu0
  %v393 = vpop.f32.mrb[0].mxu0
  %v394 = vpop.f32.mrb[0].mxu0
  %395 = vdwg.mxu0
  %v396 = vadd.f32 %v341, %v391
  %s397 = scalar_lea.vmem %s1, 28
  %v398 = vld [vmem:[%s397] sm:$0xf]
  %s399 = scalar_lea.vmem %s0, 56
  %v400 = vld [vmem:[%s399] sm:$0xf]
  %v401 = vld [vmem:[%s399 + $0x4] sm:$0xf]
  %v404 = vunpack.c.l.b16 %v400
  %v405 = vunpack.c.l.b16 %v401
  %v406 = vpack.c.b16 %v405, %v404
  %v409 = vsel %vm29, %v398, 0
  %411 = vmatprep.subr.bf16.mxu0 0
  %412 = vmatpush1.bf16.msra.mxu0 %v406
  %413 = vmatprep.subr.bf16.mxu0 0
  %414 = vmatpush1.bf16.msra.mxu0 0
  %415 = vmatprep.subr.bf16.mxu0 0
  %416 = vmatpush1.bf16.msra.mxu0 0
  %417 = vmatprep.subr.bf16.mxu0 0
  %418 = vmatpush1.bf16.msra.mxu0 0
  %419 = vmatprep.subr.bf16.mxu0 0
  %420 = vmatpush1.bf16.msra.mxu0 0
  %421 = vmatprep.subr.bf16.mxu0 0
  %422 = vmatpush1.bf16.msra.mxu0 0
  %423 = vmatprep.subr.bf16.mxu0 0
  %424 = vmatpush1.bf16.msra.mxu0 0
  %425 = vmatprep.subr.bf16.mxu0 0
  %426 = vmatpush1.bf16.msra.mxu0 0
  %427 = vmatprep.subr.bf16.mxu0 0
  %428 = vmatpush1.bf16.msra.mxu0 0
  %429 = vmatprep.subr.bf16.mxu0 0
  %430 = vmatpush1.bf16.msra.mxu0 0
  %431 = vmatprep.subr.bf16.mxu0 0
  %432 = vmatpush1.bf16.msra.mxu0 0
  %433 = vmatprep.subr.bf16.mxu0 0
  %434 = vmatpush1.bf16.msra.mxu0 0
  %435 = vmatprep.subr.bf16.mxu0 0
  %436 = vmatpush1.bf16.msra.mxu0 0
  %437 = vmatprep.subr.bf16.mxu0 0
  %438 = vmatpush1.bf16.msra.mxu0 0
  %439 = vmatprep.subr.bf16.mxu0 0
  %440 = vmatpush1.bf16.msra.mxu0 0
  %441 = vmatprep.subr.bf16.mxu0 0
  %442 = vmatpush1.bf16.msra.mxu0 0
  %443 = vmatprep.mubr.bf16.mxu0 0
  %444 = vmatmul.mubr.bf16.gmra.mrb[0].mxu0 %v409
  %v445 = vpop.f32.mrb[0].mxu0
  %v446 = vadd.f32 0.0, %v445
  %v447 = vpop.f32.mrb[0].mxu0
  %v448 = vpop.f32.mrb[0].mxu0
  %v449 = vpop.f32.mrb[0].mxu0
  %450 = vdwg.mxu0
  %v451 = vadd.f32 %v396, %v446
  %s452 = scalar_lea.vmem %s1, 32
  %v453 = vld [vmem:[%s452] sm:$0xf]
  %s454 = scalar_lea.vmem %s0, 64
  %v455 = vld [vmem:[%s454] sm:$0xf]
  %v456 = vld [vmem:[%s454 + $0x4] sm:$0xf]
  %v459 = vunpack.c.l.b16 %v455
  %v460 = vunpack.c.l.b16 %v456
  %v461 = vpack.c.b16 %v460, %v459
  %v464 = vsel %vm29, %v453, 0
  %466 = vmatprep.subr.bf16.mxu0 0
  %467 = vmatpush1.bf16.msra.mxu0 %v461
  %468 = vmatprep.subr.bf16.mxu0 0
  %469 = vmatpush1.bf16.msra.mxu0 0
  %470 = vmatprep.subr.bf16.mxu0 0
  %471 = vmatpush1.bf16.msra.mxu0 0
  %472 = vmatprep.subr.bf16.mxu0 0
  %473 = vmatpush1.bf16.msra.mxu0 0
  %474 = vmatprep.subr.bf16.mxu0 0
  %475 = vmatpush1.bf16.msra.mxu0 0
  %476 = vmatprep.subr.bf16.mxu0 0
  %477 = vmatpush1.bf16.msra.mxu0 0
  %478 = vmatprep.subr.bf16.mxu0 0
  %479 = vmatpush1.bf16.msra.mxu0 0
  %480 = vmatprep.subr.bf16.mxu0 0
  %481 = vmatpush1.bf16.msra.mxu0 0
  %482 = vmatprep.subr.bf16.mxu0 0
  %483 = vmatpush1.bf16.msra.mxu0 0
  %484 = vmatprep.subr.bf16.mxu0 0
  %485 = vmatpush1.bf16.msra.mxu0 0
  %486 = vmatprep.subr.bf16.mxu0 0
  %487 = vmatpush1.bf16.msra.mxu0 0
  %488 = vmatprep.subr.bf16.mxu0 0
  %489 = vmatpush1.bf16.msra.mxu0 0
  %490 = vmatprep.subr.bf16.mxu0 0
  %491 = vmatpush1.bf16.msra.mxu0 0
  %492 = vmatprep.subr.bf16.mxu0 0
  %493 = vmatpush1.bf16.msra.mxu0 0
  %494 = vmatprep.subr.bf16.mxu0 0
  %495 = vmatpush1.bf16.msra.mxu0 0
  %496 = vmatprep.subr.bf16.mxu0 0
  %497 = vmatpush1.bf16.msra.mxu0 0
  %498 = vmatprep.mubr.bf16.mxu0 0
  %499 = vmatmul.mubr.bf16.gmra.mrb[0].mxu0 %v464
  %v500 = vpop.f32.mrb[0].mxu0
  %v501 = vadd.f32 0.0, %v500
  %v502 = vpop.f32.mrb[0].mxu0
  %v503 = vpop.f32.mrb[0].mxu0
  %v504 = vpop.f32.mrb[0].mxu0
  %505 = vdwg.mxu0
  %v506 = vadd.f32 %v451, %v501
  %v507 = vld [vmem:[%s2] sm:$0xff]
  %509 = vset.pattern.permute.xlu0 0
  %510 = vperm.xlu0 %509, %v507
  %v511 = vpop.permute.xlu0 %510
  %v513 = vadd.f32 %v506, %v511
  %v514 = vmax.f32 %v513, 0.0
  %v515 = vpack.c.bf16 %v514, %v514
  %516 = vst [vmem:[%s3] sm:$0xf] %v515
  // Predicated region
  $region14: #{unet_forward.24} parent=0 // pred_check
    _
  $region15: #{unet_forward.24} parent=0 // pred_check_branch
    %518 = sbr.rel (0) target = $region17
  $region16: #{unet_forward.24} parent=0 // pred_region
    _
  $region17: #{unet_forward.24} parent=0 // pred_fallthru
    _
  // Predicated region
  $region18: #{unet_forward.24} parent=0 // pred_check
    _
  $region19: #{unet_forward.24} parent=0 // pred_check_branch
    %520 = sbr.rel (0) target = $region21
  $region20: #{unet_forward.24} parent=0 // pred_region
    _
  $region21: #{unet_forward.24} parent=0 // pred_fallthru
    _

// kernel: unet_forward.29
$region0: #{unet_forward.29}
  #allocation0 [shape = 'u32[]', space=smem, size = 0x4, offset = 0x4, fixed_abs, tag = 'smem constant byte address 0x4 - core index']
  #allocation1 [shape = 'u32[144,128]{1,0:T(1,128)}', space=vmem, size = 0x12000, scoped, tag = 'internal scratch']
  %s0 = inlined_call_operand.vmem [shape: bf16[1,4,512], index: 0, kind: input, shape index: {}]
  %s1 = inlined_call_operand.vmem [shape: bf16[1,2,4], index: 1, kind: input, shape index: {}]
  %s2 = inlined_call_operand.vmem [shape: f32[2,1], index: 2, kind: input, shape index: {}]
  %s3 = inlined_call_operand.vmem [shape: f32[2,512], index: 3, kind: output, shape index: {}]
  %s4 = sld [smem:[#allocation0]]
  $region22: #{unet_forward.29} parent=0
    _
  %s6 = ssub.s32 1, %s4
  %s7 = scalar_select 0, %s6, %s4
  // Predicated region
  $region2: #{unet_forward.29} parent=0 // pred_check
    _
  $region3: #{unet_forward.29} parent=0 // pred_check_branch
    %9 = sbr.rel (0) target = $region5
  $region4: #{unet_forward.29} parent=0 // pred_region
    _
  $region5: #{unet_forward.29} parent=0 // pred_fallthru
    _
  // Predicated region
  $region6: #{unet_forward.29} parent=0 // pred_check
    _
  $region7: #{unet_forward.29} parent=0 // pred_check_branch
    %11 = sbr.rel (0) target = $region9
  $region8: #{unet_forward.29} parent=0 // pred_region
    _
  $region9: #{unet_forward.29} parent=0 // pred_fallthru
    _
  // Predicated region
  $region10: #{unet_forward.29} parent=0 // pred_check
    _
  $region11: #{unet_forward.29} parent=0 // pred_check_branch
    %13 = sbr.rel (0) target = $region13
  $region12: #{unet_forward.29} parent=0 // pred_region
    _
  $region13: #{unet_forward.29} parent=0 // pred_fallthru
    _
  %v15 = vld [vmem:[%s1] sm:$0x1]
  %v16 = vld [vmem:[%s0] sm:$0xff]
  %v17 = vld [vmem:[%s2] sm:$0x3]
  %19 = vset.pattern.permute.xlu0 0
  %20 = vperm.xlu0 %19, %v17
  %v21 = vpop.permute.xlu0 %20
  %v24 = vcombine.high %v16, %v16
  %v26 = vunpack.c.l.s4 1983009808
  %v27 = vunpack.c.0.s8 %v26
  %v28 = vlaneseq
  %v29 = vshrl.u32 %v28, 7
  %v30 = vsub.s32 %v27, %v29
  %v31 = vrot.slane %v16, %v30
  %v33 = vunpack.c.l.s4 1983009808
  %v34 = vunpack.c.0.s8 %v33
  %v35 = vlaneseq
  %v36 = vshrl.u32 %v35, 7
  %v37 = vsub.s32 %v34, %v36
  %v38 = vrot.slane %v24, %v37
  %v39 = vcombine.high %v31, %v31
  %v40 = vcombine.high %v38, %v38
  %vm41 = vcmask 31744
  %v43 = vsel %vm41, %v15, 0
  %vm45 = vcmask 1041408
  %v47 = vsel %vm45, %v31, 0
  %v50 = vsel %vm45, %v39, 0
  %v53 = vsel %vm45, %v38, 0
  %v56 = vsel %vm45, %v40, 0
  %58 = vmatprep.subr.bf16.mxu0 %v50
  %59 = vmatpush1.bf16.msra.mxu0 %v47
  %60 = vmatprep.subr.bf16.mxu0 0
  %61 = vmatpush1.bf16.msra.mxu0 0
  %62 = vmatprep.subr.bf16.mxu0 0
  %63 = vmatpush1.bf16.msra.mxu0 0
  %64 = vmatprep.subr.bf16.mxu0 0
  %65 = vmatpush1.bf16.msra.mxu0 0
  %66 = vmatprep.subr.bf16.mxu0 0
  %67 = vmatpush1.bf16.msra.mxu0 0
  %68 = vmatprep.subr.bf16.mxu0 0
  %69 = vmatpush1.bf16.msra.mxu0 0
  %70 = vmatprep.subr.bf16.mxu0 0
  %71 = vmatpush1.bf16.msra.mxu0 0
  %72 = vmatprep.subr.bf16.mxu0 0
  %73 = vmatpush1.bf16.msra.mxu0 0
  %74 = vmatprep.subr.bf16.mxu0 0
  %75 = vmatpush1.bf16.msra.mxu0 0
  %76 = vmatprep.subr.bf16.mxu0 0
  %77 = vmatpush1.bf16.msra.mxu0 0
  %78 = vmatprep.subr.bf16.mxu0 0
  %79 = vmatpush1.bf16.msra.mxu0 0
  %80 = vmatprep.subr.bf16.mxu0 0
  %81 = vmatpush1.bf16.msra.mxu0 0
  %82 = vmatprep.subr.bf16.mxu0 0
  %83 = vmatpush1.bf16.msra.mxu0 0
  %84 = vmatprep.subr.bf16.mxu0 0
  %85 = vmatpush1.bf16.msra.mxu0 0
  %86 = vmatprep.subr.bf16.mxu0 0
  %87 = vmatpush1.bf16.msra.mxu0 0
  %88 = vmatprep.subr.bf16.mxu0 0
  %89 = vmatpush1.bf16.msra.mxu0 0
  %90 = vmatprep.mubr.bf16.mxu0 0
  %91 = vmatmul.mubr.bf16.gmra.mrb[0].mxu0 %v43
  %v92 = vpop.f32.mrb[0].mxu0
  %v93 = vadd.f32 %v21, %v92
  %v94 = vpop.f32.mrb[0].mxu0
  %v95 = vadd.f32 %v21, %v94
  %v96 = vpop.f32.mrb[0].mxu0
  %v97 = vpop.f32.mrb[0].mxu0
  %98 = vdwg.mxu0
  %99 = vmatprep.subr.bf16.mxu0 %v56
  %100 = vmatpush1.bf16.msra.mxu0 %v53
  %101 = vmatprep.subr.bf16.mxu0 0
  %102 = vmatpush1.bf16.msra.mxu0 0
  %103 = vmatprep.subr.bf16.mxu0 0
  %104 = vmatpush1.bf16.msra.mxu0 0
  %105 = vmatprep.subr.bf16.mxu0 0
  %106 = vmatpush1.bf16.msra.mxu0 0
  %107 = vmatprep.subr.bf16.mxu0 0
  %108 = vmatpush1.bf16.msra.mxu0 0
  %109 = vmatprep.subr.bf16.mxu0 0
  %110 = vmatpush1.bf16.msra.mxu0 0
  %111 = vmatprep.subr.bf16.mxu0 0
  %112 = vmatpush1.bf16.msra.mxu0 0
  %113 = vmatprep.subr.bf16.mxu0 0
  %114 = vmatpush1.bf16.msra.mxu0 0
  %115 = vmatprep.subr.bf16.mxu0 0
  %116 = vmatpush1.bf16.msra.mxu0 0
  %117 = vmatprep.subr.bf16.mxu0 0
  %118 = vmatpush1.bf16.msra.mxu0 0
  %119 = vmatprep.subr.bf16.mxu0 0
  %120 = vmatpush1.bf16.msra.mxu0 0
  %121 = vmatprep.subr.bf16.mxu0 0
  %122 = vmatpush1.bf16.msra.mxu0 0
  %123 = vmatprep.subr.bf16.mxu0 0
  %124 = vmatpush1.bf16.msra.mxu0 0
  %125 = vmatprep.subr.bf16.mxu0 0
  %126 = vmatpush1.bf16.msra.mxu0 0
  %127 = vmatprep.subr.bf16.mxu0 0
  %128 = vmatpush1.bf16.msra.mxu0 0
  %129 = vmatprep.subr.bf16.mxu0 0
  %130 = vmatpush1.bf16.msra.mxu0 0
  %131 = vmatprep.mubr.bf16.mxu0 0
  %132 = vmatmul.mubr.bf16.gmra.mrb[0].mxu0 %v43
  %v133 = vpop.f32.mrb[0].mxu0
  %v134 = vadd.f32 %v21, %v133
  %v135 = vpop.f32.mrb[0].mxu0
  %v136 = vadd.f32 %v21, %v135
  %v137 = vpop.f32.mrb[0].mxu0
  %v138 = vpop.f32.mrb[0].mxu0
  %139 = vdwg.mxu0
  %v144 = vcombine.low %v93, %v95
  %v145 = vcombine.low %v134, %v136
  %v147 = vunpack.c.l.s4 1983009808
  %v148 = vunpack.c.0.s8 %v147
  %v149 = vlaneseq
  %v150 = vshrl.u32 %v149, 7
  %v151 = vsub.s32 %v148, %v150
  %v152 = vrot.slane %v144, %v151
  %v154 = vunpack.c.l.s4 1983009808
  %v155 = vunpack.c.0.s8 %v154
  %v156 = vlaneseq
  %v157 = vshrl.u32 %v156, 7
  %v158 = vsub.s32 %v155, %v157
  %v159 = vrot.slane %v145, %v158
  %v160 = vcombine.low %v152, %v159
  %162 = vst [vmem:[%s3] sm:$0xff] %v160
  // Predicated region
  $region14: #{unet_forward.29} parent=0 // pred_check
    _
  $region15: #{unet_forward.29} parent=0 // pred_check_branch
    %164 = sbr.rel (0) target = $region17
  $region16: #{unet_forward.29} parent=0 // pred_region
    _
  $region17: #{unet_forward.29} parent=0 // pred_fallthru
    _
  // Predicated region
  $region18: #{unet_forward.29} parent=0 // pred_check
    _
  $region19: #{unet_forward.29} parent=0 // pred_check_branch
    %166 = sbr.rel (0) target = $region21
  $region20: #{unet_forward.29} parent=0 // pred_region
    _
  $region21: #{unet_forward.29} parent=0 // pred_fallthru
    _

// kernel: unet_forward.27
$region0: #{unet_forward.27}
  #allocation0 [shape = 'u32[]', space=smem, size = 0x4, offset = 0x4, fixed_abs, tag = 'smem constant byte address 0x4 - core index']
  #allocation1 [shape = 'u32[144,128]{1,0:T(1,128)}', space=vmem, size = 0x12000, scoped, tag = 'internal scratch']
  %s0 = inlined_call_operand.vmem [shape: bf16[9,8,512], index: 0, kind: input, shape index: {}]
  %s1 = inlined_call_operand.vmem [shape: bf16[9,4,8], index: 1, kind: input, shape index: {}]
  %s2 = inlined_call_operand.vmem [shape: f32[4,1], index: 2, kind: input, shape index: {}]
  %s3 = inlined_call_operand.vmem [shape: bf16[4,512], index: 3, kind: output, shape index: {}]
  %s4 = sld [smem:[#allocation0]]
  $region22: #{unet_forward.27} parent=0
    _
  %s6 = ssub.s32 1, %s4
  %s7 = scalar_select 0, %s6, %s4
  // Predicated region
  $region2: #{unet_forward.27} parent=0 // pred_check
    _
  $region3: #{unet_forward.27} parent=0 // pred_check_branch
    %9 = sbr.rel (0) target = $region5
  $region4: #{unet_forward.27} parent=0 // pred_region
    _
  $region5: #{unet_forward.27} parent=0 // pred_fallthru
    _
  // Predicated region
  $region6: #{unet_forward.27} parent=0 // pred_check
    _
  $region7: #{unet_forward.27} parent=0 // pred_check_branch
    %11 = sbr.rel (0) target = $region9
  $region8: #{unet_forward.27} parent=0 // pred_region
    _
  $region9: #{unet_forward.27} parent=0 // pred_fallthru
    _
  // Predicated region
  $region10: #{unet_forward.27} parent=0 // pred_check
    _
  $region11: #{unet_forward.27} parent=0 // pred_check_branch
    %13 = sbr.rel (0) target = $region13
  $region12: #{unet_forward.27} parent=0 // pred_region
    _
  $region13: #{unet_forward.27} parent=0 // pred_fallthru
    _
  %v15 = vld [vmem:[%s1] sm:$0x3]
  %v16 = vld [vmem:[%s0] sm:$0xff]
  %v17 = vld [vmem:[%s0 + $0x8] sm:$0xff]
  %s18 = scalar_lea.vmem %s1, 2
  %v19 = vld [vmem:[%s18] sm:$0x3]
  %s20 = scalar_lea.vmem %s0, 16
  %v21 = vld [vmem:[%s20] sm:$0xff]
  %v22 = vld [vmem:[%s20 + $0x8] sm:$0xff]
  %v25 = vunpack.c.l.b16 %v21
  %v26 = vunpack.c.h.b16 %v21
  %v27 = vunpack.c.l.b16 %v22
  %v28 = vunpack.c.h.b16 %v22
  %v29 = vpack.c.b16 %v25, %v25
  %v30 = vpack.c.b16 %v26, %v26
  %v31 = vpack.c.b16 %v27, %v27
  %v32 = vpack.c.b16 %v28, %v28
  %vm33 = vcmask 64512
  %v35 = vsel %vm33, %v19, 0
  %vm37 = vcmask 1043456
  %v39 = vsel %vm37, %v29, 0
  %v42 = vsel %vm37, %v30, 0
  %v45 = vsel %vm37, %v31, 0
  %v48 = vsel %vm37, %v32, 0
  %50 = vmatprep.subr.bf16.mxu0 %v42
  %51 = vmatpush1.bf16.msra.mxu0 %v39
  %52 = vmatprep.subr.bf16.mxu0 0
  %53 = vmatpush1.bf16.msra.mxu0 0
  %54 = vmatprep.subr.bf16.mxu0 0
  %55 = vmatpush1.bf16.msra.mxu0 0
  %56 = vmatprep.subr.bf16.mxu0 0
  %57 = vmatpush1.bf16.msra.mxu0 0
  %58 = vmatprep.subr.bf16.mxu0 0
  %59 = vmatpush1.bf16.msra.mxu0 0
  %60 = vmatprep.subr.bf16.mxu0 0
  %61 = vmatpush1.bf16.msra.mxu0 0
  %62 = vmatprep.subr.bf16.mxu0 0
  %63 = vmatpush1.bf16.msra.mxu0 0
  %64 = vmatprep.subr.bf16.mxu0 0
  %65 = vmatpush1.bf16.msra.mxu0 0
  %66 = vmatprep.subr.bf16.mxu0 0
  %67 = vmatpush1.bf16.msra.mxu0 0
  %68 = vmatprep.subr.bf16.mxu0 0
  %69 = vmatpush1.bf16.msra.mxu0 0
  %70 = vmatprep.subr.bf16.mxu0 0
  %71 = vmatpush1.bf16.msra.mxu0 0
  %72 = vmatprep.subr.bf16.mxu0 0
  %73 = vmatpush1.bf16.msra.mxu0 0
  %74 = vmatprep.subr.bf16.mxu0 0
  %75 = vmatpush1.bf16.msra.mxu0 0
  %76 = vmatprep.subr.bf16.mxu0 0
  %77 = vmatpush1.bf16.msra.mxu0 0
  %78 = vmatprep.subr.bf16.mxu0 0
  %79 = vmatpush1.bf16.msra.mxu0 0
  %80 = vmatprep.subr.bf16.mxu0 0
  %81 = vmatpush1.bf16.msra.mxu0 0
  %82 = vmatprep.mubr.bf16.mxu0 0
  %83 = vmatmul.mubr.bf16.gmra.mrb[0].mxu0 %v35
  %v84 = vpop.f32.mrb[0].mxu0
  %v85 = vadd.f32 0.0, %v84
  %v86 = vpop.f32.mrb[0].mxu0
  %v87 = vadd.f32 0.0, %v86
  %v88 = vpop.f32.mrb[0].mxu0
  %v89 = vpop.f32.mrb[0].mxu0
  %90 = vdwg.mxu0
  %91 = vmatprep.subr.bf16.mxu0 %v48
  %92 = vmatpush1.bf16.msra.mxu0 %v45
  %93 = vmatprep.subr.bf16.mxu0 0
  %94 = vmatpush1.bf16.msra.mxu0 0
  %95 = vmatprep.subr.bf16.mxu0 0
  %96 = vmatpush1.bf16.msra.mxu0 0
  %97 = vmatprep.subr.bf16.mxu0 0
  %98 = vmatpush1.bf16.msra.mxu0 0
  %99 = vmatprep.subr.bf16.mxu0 0
  %100 = vmatpush1.bf16.msra.mxu0 0
  %101 = vmatprep.subr.bf16.mxu0 0
  %102 = vmatpush1.bf16.msra.mxu0 0
  %103 = vmatprep.subr.bf16.mxu0 0
  %104 = vmatpush1.bf16.msra.mxu0 0
  %105 = vmatprep.subr.bf16.mxu0 0
  %106 = vmatpush1.bf16.msra.mxu0 0
  %107 = vmatprep.subr.bf16.mxu0 0
  %108 = vmatpush1.bf16.msra.mxu0 0
  %109 = vmatprep.subr.bf16.mxu0 0
  %110 = vmatpush1.bf16.msra.mxu0 0
  %111 = vmatprep.subr.bf16.mxu0 0
  %112 = vmatpush1.bf16.msra.mxu0 0
  %113 = vmatprep.subr.bf16.mxu0 0
  %114 = vmatpush1.bf16.msra.mxu0 0
  %115 = vmatprep.subr.bf16.mxu0 0
  %116 = vmatpush1.bf16.msra.mxu0 0
  %117 = vmatprep.subr.bf16.mxu0 0
  %118 = vmatpush1.bf16.msra.mxu0 0
  %119 = vmatprep.subr.bf16.mxu0 0
  %120 = vmatpush1.bf16.msra.mxu0 0
  %121 = vmatprep.subr.bf16.mxu0 0
  %122 = vmatpush1.bf16.msra.mxu0 0
  %123 = vmatprep.mubr.bf16.mxu0 0
  %124 = vmatmul.mubr.bf16.gmra.mrb[0].mxu0 %v35
  %v125 = vpop.f32.mrb[0].mxu0
  %v126 = vadd.f32 0.0, %v125
  %v127 = vpop.f32.mrb[0].mxu0
  %v128 = vadd.f32 0.0, %v127
  %v129 = vpop.f32.mrb[0].mxu0
  %v130 = vpop.f32.mrb[0].mxu0
  %131 = vdwg.mxu0
  %v134 = vunpack.c.l.b16 %v16
  %v135 = vunpack.c.h.b16 %v16
  %v136 = vunpack.c.l.b16 %v17
  %v137 = vunpack.c.h.b16 %v17
  %v138 = vpack.c.b16 %v134, %v134
  %v139 = vpack.c.b16 %v135, %v135
  %v140 = vpack.c.b16 %v136, %v136
  %v141 = vpack.c.b16 %v137, %v137
  %v143 = vsel %vm33, %v15, 0
  %v146 = vsel %vm37, %v138, 0
  %v149 = vsel %vm37, %v139, 0
  %v152 = vsel %vm37, %v140, 0
  %v155 = vsel %vm37, %v141, 0
  %157 = vmatprep.subr.bf16.mxu0 %v149
  %158 = vmatpush1.bf16.msra.mxu0 %v146
  %159 = vmatprep.subr.bf16.mxu0 0
  %160 = vmatpush1.bf16.msra.mxu0 0
  %161 = vmatprep.subr.bf16.mxu0 0
  %162 = vmatpush1.bf16.msra.mxu0 0
  %163 = vmatprep.subr.bf16.mxu0 0
  %164 = vmatpush1.bf16.msra.mxu0 0
  %165 = vmatprep.subr.bf16.mxu0 0
  %166 = vmatpush1.bf16.msra.mxu0 0
  %167 = vmatprep.subr.bf16.mxu0 0
  %168 = vmatpush1.bf16.msra.mxu0 0
  %169 = vmatprep.subr.bf16.mxu0 0
  %170 = vmatpush1.bf16.msra.mxu0 0
  %171 = vmatprep.subr.bf16.mxu0 0
  %172 = vmatpush1.bf16.msra.mxu0 0
  %173 = vmatprep.subr.bf16.mxu0 0
  %174 = vmatpush1.bf16.msra.mxu0 0
  %175 = vmatprep.subr.bf16.mxu0 0
  %176 = vmatpush1.bf16.msra.mxu0 0
  %177 = vmatprep.subr.bf16.mxu0 0
  %178 = vmatpush1.bf16.msra.mxu0 0
  %179 = vmatprep.subr.bf16.mxu0 0
  %180 = vmatpush1.bf16.msra.mxu0 0
  %181 = vmatprep.subr.bf16.mxu0 0
  %182 = vmatpush1.bf16.msra.mxu0 0
  %183 = vmatprep.subr.bf16.mxu0 0
  %184 = vmatpush1.bf16.msra.mxu0 0
  %185 = vmatprep.subr.bf16.mxu0 0
  %186 = vmatpush1.bf16.msra.mxu0 0
  %187 = vmatprep.subr.bf16.mxu0 0
  %188 = vmatpush1.bf16.msra.mxu0 0
  %189 = vmatprep.mubr.bf16.mxu0 0
  %190 = vmatmul.mubr.bf16.gmra.mrb[0].mxu0 %v143
  %v191 = vpop.f32.mrb[0].mxu0
  %v192 = vadd.f32 %v85, %v191
  %v193 = vpop.f32.mrb[0].mxu0
  %v194 = vadd.f32 %v87, %v193
  %v195 = vpop.f32.mrb[0].mxu0
  %v196 = vpop.f32.mrb[0].mxu0
  %197 = vdwg.mxu0
  %198 = vmatprep.subr.bf16.mxu0 %v155
  %199 = vmatpush1.bf16.msra.mxu0 %v152
  %200 = vmatprep.subr.bf16.mxu0 0
  %201 = vmatpush1.bf16.msra.mxu0 0
  %202 = vmatprep.subr.bf16.mxu0 0
  %203 = vmatpush1.bf16.msra.mxu0 0
  %204 = vmatprep.subr.bf16.mxu0 0
  %205 = vmatpush1.bf16.msra.mxu0 0
  %206 = vmatprep.subr.bf16.mxu0 0
  %207 = vmatpush1.bf16.msra.mxu0 0
  %208 = vmatprep.subr.bf16.mxu0 0
  %209 = vmatpush1.bf16.msra.mxu0 0
  %210 = vmatprep.subr.bf16.mxu0 0
  %211 = vmatpush1.bf16.msra.mxu0 0
  %212 = vmatprep.subr.bf16.mxu0 0
  %213 = vmatpush1.bf16.msra.mxu0 0
  %214 = vmatprep.subr.bf16.mxu0 0
  %215 = vmatpush1.bf16.msra.mxu0 0
  %216 = vmatprep.subr.bf16.mxu0 0
  %217 = vmatpush1.bf16.msra.mxu0 0
  %218 = vmatprep.subr.bf16.mxu0 0
  %219 = vmatpush1.bf16.msra.mxu0 0
  %220 = vmatprep.subr.bf16.mxu0 0
  %221 = vmatpush1.bf16.msra.mxu0 0
  %222 = vmatprep.subr.bf16.mxu0 0
  %223 = vmatpush1.bf16.msra.mxu0 0
  %224 = vmatprep.subr.bf16.mxu0 0
  %225 = vmatpush1.bf16.msra.mxu0 0
  %226 = vmatprep.subr.bf16.mxu0 0
  %227 = vmatpush1.bf16.msra.mxu0 0
  %228 = vmatprep.subr.bf16.mxu0 0
  %229 = vmatpush1.bf16.msra.mxu0 0
  %230 = vmatprep.mubr.bf16.mxu0 0
  %231 = vmatmul.mubr.bf16.gmra.mrb[0].mxu0 %v143
  %v232 = vpop.f32.mrb[0].mxu0
  %v233 = vadd.f32 %v126, %v232
  %v234 = vpop.f32.mrb[0].mxu0
  %v235 = vadd.f32 %v128, %v234
  %v236 = vpop.f32.mrb[0].mxu0
  %v237 = vpop.f32.mrb[0].mxu0
  %238 = vdwg.mxu0
  %s239 = scalar_lea.vmem %s1, 4
  %v240 = vld [vmem:[%s239] sm:$0x3]
  %s241 = scalar_lea.vmem %s0, 32
  %v242 = vld [vmem:[%s241] sm:$0xff]
  %v243 = vld [vmem:[%s241 + $0x8] sm:$0xff]
  %v246 = vunpack.c.l.b16 %v242
  %v247 = vunpack.c.h.b16 %v242
  %v248 = vunpack.c.l.b16 %v243
  %v249 = vunpack.c.h.b16 %v243
  %v250 = vpack.c.b16 %v246, %v246
  %v251 = vpack.c.b16 %v247, %v247
  %v252 = vpack.c.b16 %v248, %v248
  %v253 = vpack.c.b16 %v249, %v249
  %v255 = vsel %vm33, %v240, 0
  %v258 = vsel %vm37, %v250, 0
  %v261 = vsel %vm37, %v251, 0
  %v264 = vsel %vm37, %v252, 0
  %v267 = vsel %vm37, %v253, 0
  %269 = vmatprep.subr.bf16.mxu0 %v261
  %270 = vmatpush1.bf16.msra.mxu0 %v258
  %271 = vmatprep.subr.bf16.mxu0 0
  %272 = vmatpush1.bf16.msra.mxu0 0
  %273 = vmatprep.subr.bf16.mxu0 0
  %274 = vmatpush1.bf16.msra.mxu0 0
  %275 = vmatprep.subr.bf16.mxu0 0
  %276 = vmatpush1.bf16.msra.mxu0 0
  %277 = vmatprep.subr.bf16.mxu0 0
  %278 = vmatpush1.bf16.msra.mxu0 0
  %279 = vmatprep.subr.bf16.mxu0 0
  %280 = vmatpush1.bf16.msra.mxu0 0
  %281 = vmatprep.subr.bf16.mxu0 0
  %282 = vmatpush1.bf16.msra.mxu0 0
  %283 = vmatprep.subr.bf16.mxu0 0
  %284 = vmatpush1.bf16.msra.mxu0 0
  %285 = vmatprep.subr.bf16.mxu0 0
  %286 = vmatpush1.bf16.msra.mxu0 0
  %287 = vmatprep.subr.bf16.mxu0 0
  %288 = vmatpush1.bf16.msra.mxu0 0
  %289 = vmatprep.subr.bf16.mxu0 0
  %290 = vmatpush1.bf16.msra.mxu0 0
  %291 = vmatprep.subr.bf16.mxu0 0
  %292 = vmatpush1.bf16.msra.mxu0 0
  %293 = vmatprep.subr.bf16.mxu0 0
  %294 = vmatpush1.bf16.msra.mxu0 0
  %295 = vmatprep.subr.bf16.mxu0 0
  %296 = vmatpush1.bf16.msra.mxu0 0
  %297 = vmatprep.subr.bf16.mxu0 0
  %298 = vmatpush1.bf16.msra.mxu0 0
  %299 = vmatprep.subr.bf16.mxu0 0
  %300 = vmatpush1.bf16.msra.mxu0 0
  %301 = vmatprep.mubr.bf16.mxu0 0
  %302 = vmatmul.mubr.bf16.gmra.mrb[0].mxu0 %v255
  %v303 = vpop.f32.mrb[0].mxu0
  %v304 = vadd.f32 0.0, %v303
  %v305 = vpop.f32.mrb[0].mxu0
  %v306 = vadd.f32 0.0, %v305
  %v307 = vpop.f32.mrb[0].mxu0
  %v308 = vpop.f32.mrb[0].mxu0
  %309 = vdwg.mxu0
  %310 = vmatprep.subr.bf16.mxu0 %v267
  %311 = vmatpush1.bf16.msra.mxu0 %v264
  %312 = vmatprep.subr.bf16.mxu0 0
  %313 = vmatpush1.bf16.msra.mxu0 0
  %314 = vmatprep.subr.bf16.mxu0 0
  %315 = vmatpush1.bf16.msra.mxu0 0
  %316 = vmatprep.subr.bf16.mxu0 0
  %317 = vmatpush1.bf16.msra.mxu0 0
  %318 = vmatprep.subr.bf16.mxu0 0
  %319 = vmatpush1.bf16.msra.mxu0 0
  %320 = vmatprep.subr.bf16.mxu0 0
  %321 = vmatpush1.bf16.msra.mxu0 0
  %322 = vmatprep.subr.bf16.mxu0 0
  %323 = vmatpush1.bf16.msra.mxu0 0
  %324 = vmatprep.subr.bf16.mxu0 0
  %325 = vmatpush1.bf16.msra.mxu0 0
  %326 = vmatprep.subr.bf16.mxu0 0
  %327 = vmatpush1.bf16.msra.mxu0 0
  %328 = vmatprep.subr.bf16.mxu0 0
  %329 = vmatpush1.bf16.msra.mxu0 0
  %330 = vmatprep.subr.bf16.mxu0 0
  %331 = vmatpush1.bf16.msra.mxu0 0
  %332 = vmatprep.subr.bf16.mxu0 0
  %333 = vmatpush1.bf16.msra.mxu0 0
  %334 = vmatprep.subr.bf16.mxu0 0
  %335 = vmatpush1.bf16.msra.mxu0 0
  %336 = vmatprep.subr.bf16.mxu0 0
  %337 = vmatpush1.bf16.msra.mxu0 0
  %338 = vmatprep.subr.bf16.mxu0 0
  %339 = vmatpush1.bf16.msra.mxu0 0
  %340 = vmatprep.subr.bf16.mxu0 0
  %341 = vmatpush1.bf16.msra.mxu0 0
  %342 = vmatprep.mubr.bf16.mxu0 0
  %343 = vmatmul.mubr.bf16.gmra.mrb[0].mxu0 %v255
  %v344 = vpop.f32.mrb[0].mxu0
  %v345 = vadd.f32 0.0, %v344
  %v346 = vpop.f32.mrb[0].mxu0
  %v347 = vadd.f32 0.0, %v346
  %v348 = vpop.f32.mrb[0].mxu0
  %v349 = vpop.f32.mrb[0].mxu0
  %350 = vdwg.mxu0
  %v351 = vadd.f32 %v192, %v304
  %v352 = vadd.f32 %v194, %v306
  %v353 = vadd.f32 %v233, %v345
  %v354 = vadd.f32 %v235, %v347
  %s355 = scalar_lea.vmem %s1, 6
  %v356 = vld [vmem:[%s355] sm:$0x3]
  %s357 = scalar_lea.vmem %s0, 48
  %v358 = vld [vmem:[%s357] sm:$0xff]
  %v359 = vld [vmem:[%s357 + $0x8] sm:$0xff]
  %v362 = vunpack.c.l.b16 %v358
  %v363 = vunpack.c.h.b16 %v358
  %v364 = vunpack.c.l.b16 %v359
  %v365 = vunpack.c.h.b16 %v359
  %v366 = vpack.c.b16 %v362, %v362
  %v367 = vpack.c.b16 %v363, %v363
  %v368 = vpack.c.b16 %v364, %v364
  %v369 = vpack.c.b16 %v365, %v365
  %v371 = vsel %vm33, %v356, 0
  %v374 = vsel %vm37, %v366, 0
  %v377 = vsel %vm37, %v367, 0
  %v380 = vsel %vm37, %v368, 0
  %v383 = vsel %vm37, %v369, 0
  %385 = vmatprep.subr.bf16.mxu0 %v377
  %386 = vmatpush1.bf16.msra.mxu0 %v374
  %387 = vmatprep.subr.bf16.mxu0 0
  %388 = vmatpush1.bf16.msra.mxu0 0
  %389 = vmatprep.subr.bf16.mxu0 0
  %390 = vmatpush1.bf16.msra.mxu0 0
  %391 = vmatprep.subr.bf16.mxu0 0
  %392 = vmatpush1.bf16.msra.mxu0 0
  %393 = vmatprep.subr.bf16.mxu0 0
  %394 = vmatpush1.bf16.msra.mxu0 0
  %395 = vmatprep.subr.bf16.mxu0 0
  %396 = vmatpush1.bf16.msra.mxu0 0
  %397 = vmatprep.subr.bf16.mxu0 0
  %398 = vmatpush1.bf16.msra.mxu0 0
  %399 = vmatprep.subr.bf16.mxu0 0
  %400 = vmatpush1.bf16.msra.mxu0 0
  %401 = vmatprep.subr.bf16.mxu0 0
  %402 = vmatpush1.bf16.msra.mxu0 0
  %403 = vmatprep.subr.bf16.mxu0 0
  %404 = vmatpush1.bf16.msra.mxu0 0
  %405 = vmatprep.subr.bf16.mxu0 0
  %406 = vmatpush1.bf16.msra.mxu0 0
  %407 = vmatprep.subr.bf16.mxu0 0
  %408 = vmatpush1.bf16.msra.mxu0 0
  %409 = vmatprep.subr.bf16.mxu0 0
  %410 = vmatpush1.bf16.msra.mxu0 0
  %411 = vmatprep.subr.bf16.mxu0 0
  %412 = vmatpush1.bf16.msra.mxu0 0
  %413 = vmatprep.subr.bf16.mxu0 0
  %414 = vmatpush1.bf16.msra.mxu0 0
  %415 = vmatprep.subr.bf16.mxu0 0
  %416 = vmatpush1.bf16.msra.mxu0 0
  %417 = vmatprep.mubr.bf16.mxu0 0
  %418 = vmatmul.mubr.bf16.gmra.mrb[0].mxu0 %v371
  %v419 = vpop.f32.mrb[0].mxu0
  %v420 = vadd.f32 0.0, %v419
  %v421 = vpop.f32.mrb[0].mxu0
  %v422 = vadd.f32 0.0, %v421
  %v423 = vpop.f32.mrb[0].mxu0
  %v424 = vpop.f32.mrb[0].mxu0
  %425 = vdwg.mxu0
  %426 = vmatprep.subr.bf16.mxu0 %v383
  %427 = vmatpush1.bf16.msra.mxu0 %v380
  %428 = vmatprep.subr.bf16.mxu0 0
  %429 = vmatpush1.bf16.msra.mxu0 0
  %430 = vmatprep.subr.bf16.mxu0 0
  %431 = vmatpush1.bf16.msra.mxu0 0
  %432 = vmatprep.subr.bf16.mxu0 0
  %433 = vmatpush1.bf16.msra.mxu0 0
  %434 = vmatprep.subr.bf16.mxu0 0
  %435 = vmatpush1.bf16.msra.mxu0 0
  %436 = vmatprep.subr.bf16.mxu0 0
  %437 = vmatpush1.bf16.msra.mxu0 0
  %438 = vmatprep.subr.bf16.mxu0 0
  %439 = vmatpush1.bf16.msra.mxu0 0
  %440 = vmatprep.subr.bf16.mxu0 0
  %441 = vmatpush1.bf16.msra.mxu0 0
  %442 = vmatprep.subr.bf16.mxu0 0
  %443 = vmatpush1.bf16.msra.mxu0 0
  %444 = vmatprep.subr.bf16.mxu0 0
  %445 = vmatpush1.bf16.msra.mxu0 0
  %446 = vmatprep.subr.bf16.mxu0 0
  %447 = vmatpush1.bf16.msra.mxu0 0
  %448 = vmatprep.subr.bf16.mxu0 0
  %449 = vmatpush1.bf16.msra.mxu0 0
  %450 = vmatprep.subr.bf16.mxu0 0
  %451 = vmatpush1.bf16.msra.mxu0 0
  %452 = vmatprep.subr.bf16.mxu0 0
  %453 = vmatpush1.bf16.msra.mxu0 0
  %454 = vmatprep.subr.bf16.mxu0 0
  %455 = vmatpush1.bf16.msra.mxu0 0
  %456 = vmatprep.subr.bf16.mxu0 0
  %457 = vmatpush1.bf16.msra.mxu0 0
  %458 = vmatprep.mubr.bf16.mxu0 0
  %459 = vmatmul.mubr.bf16.gmra.mrb[0].mxu0 %v371
  %v460 = vpop.f32.mrb[0].mxu0
  %v461 = vadd.f32 0.0, %v460
  %v462 = vpop.f32.mrb[0].mxu0
  %v463 = vadd.f32 0.0, %v462
  %v464 = vpop.f32.mrb[0].mxu0
  %v465 = vpop.f32.mrb[0].mxu0
  %466 = vdwg.mxu0
  %v467 = vadd.f32 %v351, %v420
  %v468 = vadd.f32 %v352, %v422
  %v469 = vadd.f32 %v353, %v461
  %v470 = vadd.f32 %v354, %v463
  %s471 = scalar_lea.vmem %s1, 8
  %v472 = vld [vmem:[%s471] sm:$0x3]
  %s473 = scalar_lea.vmem %s0, 64
  %v474 = vld [vmem:[%s473] sm:$0xff]
  %v475 = vld [vmem:[%s473 + $0x8] sm:$0xff]
  %v478 = vunpack.c.l.b16 %v474
  %v479 = vunpack.c.h.b16 %v474
  %v480 = vunpack.c.l.b16 %v475
  %v481 = vunpack.c.h.b16 %v475
  %v482 = vpack.c.b16 %v478, %v478
  %v483 = vpack.c.b16 %v479, %v479
  %v484 = vpack.c.b16 %v480, %v480
  %v485 = vpack.c.b16 %v481, %v481
  %v487 = vsel %vm33, %v472, 0
  %v490 = vsel %vm37, %v482, 0
  %v493 = vsel %vm37, %v483, 0
  %v496 = vsel %vm37, %v484, 0
  %v499 = vsel %vm37, %v485, 0
  %501 = vmatprep.subr.bf16.mxu0 %v493
  %502 = vmatpush1.bf16.msra.mxu0 %v490
  %503 = vmatprep.subr.bf16.mxu0 0
  %504 = vmatpush1.bf16.msra.mxu0 0
  %505 = vmatprep.subr.bf16.mxu0 0
  %506 = vmatpush1.bf16.msra.mxu0 0
  %507 = vmatprep.subr.bf16.mxu0 0
  %508 = vmatpush1.bf16.msra.mxu0 0
  %509 = vmatprep.subr.bf16.mxu0 0
  %510 = vmatpush1.bf16.msra.mxu0 0
  %511 = vmatprep.subr.bf16.mxu0 0
  %512 = vmatpush1.bf16.msra.mxu0 0
  %513 = vmatprep.subr.bf16.mxu0 0
  %514 = vmatpush1.bf16.msra.mxu0 0
  %515 = vmatprep.subr.bf16.mxu0 0
  %516 = vmatpush1.bf16.msra.mxu0 0
  %517 = vmatprep.subr.bf16.mxu0 0
  %518 = vmatpush1.bf16.msra.mxu0 0
  %519 = vmatprep.subr.bf16.mxu0 0
  %520 = vmatpush1.bf16.msra.mxu0 0
  %521 = vmatprep.subr.bf16.mxu0 0
  %522 = vmatpush1.bf16.msra.mxu0 0
  %523 = vmatprep.subr.bf16.mxu0 0
  %524 = vmatpush1.bf16.msra.mxu0 0
  %525 = vmatprep.subr.bf16.mxu0 0
  %526 = vmatpush1.bf16.msra.mxu0 0
  %527 = vmatprep.subr.bf16.mxu0 0
  %528 = vmatpush1.bf16.msra.mxu0 0
  %529 = vmatprep.subr.bf16.mxu0 0
  %530 = vmatpush1.bf16.msra.mxu0 0
  %531 = vmatprep.subr.bf16.mxu0 0
  %532 = vmatpush1.bf16.msra.mxu0 0
  %533 = vmatprep.mubr.bf16.mxu0 0
  %534 = vmatmul.mubr.bf16.gmra.mrb[0].mxu0 %v487
  %v535 = vpop.f32.mrb[0].mxu0
  %v536 = vadd.f32 0.0, %v535
  %v537 = vpop.f32.mrb[0].mxu0
  %v538 = vadd.f32 0.0, %v537
  %v539 = vpop.f32.mrb[0].mxu0
  %v540 = vpop.f32.mrb[0].mxu0
  %541 = vdwg.mxu0
  %542 = vmatprep.subr.bf16.mxu0 %v499
  %543 = vmatpush1.bf16.msra.mxu0 %v496
  %544 = vmatprep.subr.bf16.mxu0 0
  %545 = vmatpush1.bf16.msra.mxu0 0
  %546 = vmatprep.subr.bf16.mxu0 0
  %547 = vmatpush1.bf16.msra.mxu0 0
  %548 = vmatprep.subr.bf16.mxu0 0
  %549 = vmatpush1.bf16.msra.mxu0 0
  %550 = vmatprep.subr.bf16.mxu0 0
  %551 = vmatpush1.bf16.msra.mxu0 0
  %552 = vmatprep.subr.bf16.mxu0 0
  %553 = vmatpush1.bf16.msra.mxu0 0
  %554 = vmatprep.subr.bf16.mxu0 0
  %555 = vmatpush1.bf16.msra.mxu0 0
  %556 = vmatprep.subr.bf16.mxu0 0
  %557 = vmatpush1.bf16.msra.mxu0 0
  %558 = vmatprep.subr.bf16.mxu0 0
  %559 = vmatpush1.bf16.msra.mxu0 0
  %560 = vmatprep.subr.bf16.mxu0 0
  %561 = vmatpush1.bf16.msra.mxu0 0
  %562 = vmatprep.subr.bf16.mxu0 0
  %563 = vmatpush1.bf16.msra.mxu0 0
  %564 = vmatprep.subr.bf16.mxu0 0
  %565 = vmatpush1.bf16.msra.mxu0 0
  %566 = vmatprep.subr.bf16.mxu0 0
  %567 = vmatpush1.bf16.msra.mxu0 0
  %568 = vmatprep.subr.bf16.mxu0 0
  %569 = vmatpush1.bf16.msra.mxu0 0
  %570 = vmatprep.subr.bf16.mxu0 0
  %571 = vmatpush1.bf16.msra.mxu0 0
  %572 = vmatprep.subr.bf16.mxu0 0
  %573 = vmatpush1.bf16.msra.mxu0 0
  %574 = vmatprep.mubr.bf16.mxu0 0
  %575 = vmatmul.mubr.bf16.gmra.mrb[0].mxu0 %v487
  %v576 = vpop.f32.mrb[0].mxu0
  %v577 = vadd.f32 0.0, %v576
  %v578 = vpop.f32.mrb[0].mxu0
  %v579 = vadd.f32 0.0, %v578
  %v580 = vpop.f32.mrb[0].mxu0
  %v581 = vpop.f32.mrb[0].mxu0
  %582 = vdwg.mxu0
  %v583 = vadd.f32 %v467, %v536
  %v584 = vadd.f32 %v468, %v538
  %v585 = vadd.f32 %v469, %v577
  %v586 = vadd.f32 %v470, %v579
  %s587 = scalar_lea.vmem %s1, 10
  %v588 = vld [vmem:[%s587] sm:$0x3]
  %s589 = scalar_lea.vmem %s0, 80
  %v590 = vld [vmem:[%s589] sm:$0xff]
  %v591 = vld [vmem:[%s589 + $0x8] sm:$0xff]
  %v594 = vunpack.c.l.b16 %v590
  %v595 = vunpack.c.h.b16 %v590
  %v596 = vunpack.c.l.b16 %v591
  %v597 = vunpack.c.h.b16 %v591
  %v598 = vpack.c.b16 %v594, %v594
  %v599 = vpack.c.b16 %v595, %v595
  %v600 = vpack.c.b16 %v596, %v596
  %v601 = vpack.c.b16 %v597, %v597
  %v603 = vsel %vm33, %v588, 0
  %v606 = vsel %vm37, %v598, 0
  %v609 = vsel %vm37, %v599, 0
  %v612 = vsel %vm37, %v600, 0
  %v615 = vsel %vm37, %v601, 0
  %617 = vmatprep.subr.bf16.mxu0 %v609
  %618 = vmatpush1.bf16.msra.mxu0 %v606
  %619 = vmatprep.subr.bf16.mxu0 0
  %620 = vmatpush1.bf16.msra.mxu0 0
  %621 = vmatprep.subr.bf16.mxu0 0
  %622 = vmatpush1.bf16.msra.mxu0 0
  %623 = vmatprep.subr.bf16.mxu0 0
  %624 = vmatpush1.bf16.msra.mxu0 0
  %625 = vmatprep.subr.bf16.mxu0 0
  %626 = vmatpush1.bf16.msra.mxu0 0
  %627 = vmatprep.subr.bf16.mxu0 0
  %628 = vmatpush1.bf16.msra.mxu0 0
  %629 = vmatprep.subr.bf16.mxu0 0
  %630 = vmatpush1.bf16.msra.mxu0 0
  %631 = vmatprep.subr.bf16.mxu0 0
  %632 = vmatpush1.bf16.msra.mxu0 0
  %633 = vmatprep.subr.bf16.mxu0 0
  %634 = vmatpush1.bf16.msra.mxu0 0
  %635 = vmatprep.subr.bf16.mxu0 0
  %636 = vmatpush1.bf16.msra.mxu0 0
  %637 = vmatprep.subr.bf16.mxu0 0
  %638 = vmatpush1.bf16.msra.mxu0 0
  %639 = vmatprep.subr.bf16.mxu0 0
  %640 = vmatpush1.bf16.msra.mxu0 0
  %641 = vmatprep.subr.bf16.mxu0 0
  %642 = vmatpush1.bf16.msra.mxu0 0
  %643 = vmatprep.subr.bf16.mxu0 0
  %644 = vmatpush1.bf16.msra.mxu0 0
  %645 = vmatprep.subr.bf16.mxu0 0
  %646 = vmatpush1.bf16.msra.mxu0 0
  %647 = vmatprep.subr.bf16.mxu0 0
  %648 = vmatpush1.bf16.msra.mxu0 0
  %649 = vmatprep.mubr.bf16.mxu0 0
  %650 = vmatmul.mubr.bf16.gmra.mrb[0].mxu0 %v603
  %v651 = vpop.f32.mrb[0].mxu0
  %v652 = vadd.f32 0.0, %v651
  %v653 = vpop.f32.mrb[0].mxu0
  %v654 = vadd.f32 0.0, %v653
  %v655 = vpop.f32.mrb[0].mxu0
  %v656 = vpop.f32.mrb[0].mxu0
  %657 = vdwg.mxu0
  %658 = vmatprep.subr.bf16.mxu0 %v615
  %659 = vmatpush1.bf16.msra.mxu0 %v612
  %660 = vmatprep.subr.bf16.mxu0 0
  %661 = vmatpush1.bf16.msra.mxu0 0
  %662 = vmatprep.subr.bf16.mxu0 0
  %663 = vmatpush1.bf16.msra.mxu0 0
  %664 = vmatprep.subr.bf16.mxu0 0
  %665 = vmatpush1.bf16.msra.mxu0 0
  %666 = vmatprep.subr.bf16.mxu0 0
  %667 = vmatpush1.bf16.msra.mxu0 0
  %668 = vmatprep.subr.bf16.mxu0 0
  %669 = vmatpush1.bf16.msra.mxu0 0
  %670 = vmatprep.subr.bf16.mxu0 0
  %671 = vmatpush1.bf16.msra.mxu0 0
  %672 = vmatprep.subr.bf16.mxu0 0
  %673 = vmatpush1.bf16.msra.mxu0 0
  %674 = vmatprep.subr.bf16.mxu0 0
  %675 = vmatpush1.bf16.msra.mxu0 0
  %676 = vmatprep.subr.bf16.mxu0 0
  %677 = vmatpush1.bf16.msra.mxu0 0
  %678 = vmatprep.subr.bf16.mxu0 0
  %679 = vmatpush1.bf16.msra.mxu0 0
  %680 = vmatprep.subr.bf16.mxu0 0
  %681 = vmatpush1.bf16.msra.mxu0 0
  %682 = vmatprep.subr.bf16.mxu0 0
  %683 = vmatpush1.bf16.msra.mxu0 0
  %684 = vmatprep.subr.bf16.mxu0 0
  %685 = vmatpush1.bf16.msra.mxu0 0
  %686 = vmatprep.subr.bf16.mxu0 0
  %687 = vmatpush1.bf16.msra.mxu0 0
  %688 = vmatprep.subr.bf16.mxu0 0
  %689 = vmatpush1.bf16.msra.mxu0 0
  %690 = vmatprep.mubr.bf16.mxu0 0
  %691 = vmatmul.mubr.bf16.gmra.mrb[0].mxu0 %v603
  %v692 = vpop.f32.mrb[0].mxu0
  %v693 = vadd.f32 0.0, %v692
  %v694 = vpop.f32.mrb[0].mxu0
  %v695 = vadd.f32 0.0, %v694
  %v696 = vpop.f32.mrb[0].mxu0
  %v697 = vpop.f32.mrb[0].mxu0
  %698 = vdwg.mxu0
  %v699 = vadd.f32 %v583, %v652
  %v700 = vadd.f32 %v584, %v654
  %v701 = vadd.f32 %v585, %v693
  %v702 = vadd.f32 %v586, %v695
  %s703 = scalar_lea.vmem %s1, 12
  %v704 = vld [vmem:[%s703] sm:$0x3]
  %s705 = scalar_lea.vmem %s0, 96
  %v706 = vld [vmem:[%s705] sm:$0xff]
  %v707 = vld [vmem:[%s705 + $0x8] sm:$0xff]
  %v710 = vunpack.c.l.b16 %v706
  %v711 = vunpack.c.h.b16 %v706
  %v712 = vunpack.c.l.b16 %v707
  %v713 = vunpack.c.h.b16 %v707
  %v714 = vpack.c.b16 %v710, %v710
  %v715 = vpack.c.b16 %v711, %v711
  %v716 = vpack.c.b16 %v712, %v712
  %v717 = vpack.c.b16 %v713, %v713
  %v719 = vsel %vm33, %v704, 0
  %v722 = vsel %vm37, %v714, 0
  %v725 = vsel %vm37, %v715, 0
  %v728 = vsel %vm37, %v716, 0
  %v731 = vsel %vm37, %v717, 0
  %733 = vmatprep.subr.bf16.mxu0 %v725
  %734 = vmatpush1.bf16.msra.mxu0 %v722
  %735 = vmatprep.subr.bf16.mxu0 0
  %736 = vmatpush1.bf16.msra.mxu0 0
  %737 = vmatprep.subr.bf16.mxu0 0
  %738 = vmatpush1.bf16.msra.mxu0 0
  %739 = vmatprep.subr.bf16.mxu0 0
  %740 = vmatpush1.bf16.msra.mxu0 0
  %741 = vmatprep.subr.bf16.mxu0 0
  %742 = vmatpush1.bf16.msra.mxu0 0
  %743 = vmatprep.subr.bf16.mxu0 0
  %744 = vmatpush1.bf16.msra.mxu0 0
  %745 = vmatprep.subr.bf16.mxu0 0
  %746 = vmatpush1.bf16.msra.mxu0 0
  %747 = vmatprep.subr.bf16.mxu0 0
  %748 = vmatpush1.bf16.msra.mxu0 0
  %749 = vmatprep.subr.bf16.mxu0 0
  %750 = vmatpush1.bf16.msra.mxu0 0
  %751 = vmatprep.subr.bf16.mxu0 0
  %752 = vmatpush1.bf16.msra.mxu0 0
  %753 = vmatprep.subr.bf16.mxu0 0
  %754 = vmatpush1.bf16.msra.mxu0 0
  %755 = vmatprep.subr.bf16.mxu0 0
  %756 = vmatpush1.bf16.msra.mxu0 0
  %757 = vmatprep.subr.bf16.mxu0 0
  %758 = vmatpush1.bf16.msra.mxu0 0
  %759 = vmatprep.subr.bf16.mxu0 0
  %760 = vmatpush1.bf16.msra.mxu0 0
  %761 = vmatprep.subr.bf16.mxu0 0
  %762 = vmatpush1.bf16.msra.mxu0 0
  %763 = vmatprep.subr.bf16.mxu0 0
  %764 = vmatpush1.bf16.msra.mxu0 0
  %765 = vmatprep.mubr.bf16.mxu0 0
  %766 = vmatmul.mubr.bf16.gmra.mrb[0].mxu0 %v719
  %v767 = vpop.f32.mrb[0].mxu0
  %v768 = vadd.f32 0.0, %v767
  %v769 = vpop.f32.mrb[0].mxu0
  %v770 = vadd.f32 0.0, %v769
  %v771 = vpop.f32.mrb[0].mxu0
  %v772 = vpop.f32.mrb[0].mxu0
  %773 = vdwg.mxu0
  %774 = vmatprep.subr.bf16.mxu0 %v731
  %775 = vmatpush1.bf16.msra.mxu0 %v728
  %776 = vmatprep.subr.bf16.mxu0 0
  %777 = vmatpush1.bf16.msra.mxu0 0
  %778 = vmatprep.subr.bf16.mxu0 0
  %779 = vmatpush1.bf16.msra.mxu0 0
  %780 = vmatprep.subr.bf16.mxu0 0
  %781 = vmatpush1.bf16.msra.mxu0 0
  %782 = vmatprep.subr.bf16.mxu0 0
  %783 = vmatpush1.bf16.msra.mxu0 0
  %784 = vmatprep.subr.bf16.mxu0 0
  %785 = vmatpush1.bf16.msra.mxu0 0
  %786 = vmatprep.subr.bf16.mxu0 0
  %787 = vmatpush1.bf16.msra.mxu0 0
  %788 = vmatprep.subr.bf16.mxu0 0
  %789 = vmatpush1.bf16.msra.mxu0 0
  %790 = vmatprep.subr.bf16.mxu0 0
  %791 = vmatpush1.bf16.msra.mxu0 0
  %792 = vmatprep.subr.bf16.mxu0 0
  %793 = vmatpush1.bf16.msra.mxu0 0
  %794 = vmatprep.subr.bf16.mxu0 0
  %795 = vmatpush1.bf16.msra.mxu0 0
  %796 = vmatprep.subr.bf16.mxu0 0
  %797 = vmatpush1.bf16.msra.mxu0 0
  %798 = vmatprep.subr.bf16.mxu0 0
  %799 = vmatpush1.bf16.msra.mxu0 0
  %800 = vmatprep.subr.bf16.mxu0 0
  %801 = vmatpush1.bf16.msra.mxu0 0
  %802 = vmatprep.subr.bf16.mxu0 0
  %803 = vmatpush1.bf16.msra.mxu0 0
  %804 = vmatprep.subr.bf16.mxu0 0
  %805 = vmatpush1.bf16.msra.mxu0 0
  %806 = vmatprep.mubr.bf16.mxu0 0
  %807 = vmatmul.mubr.bf16.gmra.mrb[0].mxu0 %v719
  %v808 = vpop.f32.mrb[0].mxu0
  %v809 = vadd.f32 0.0, %v808
  %v810 = vpop.f32.mrb[0].mxu0
  %v811 = vadd.f32 0.0, %v810
  %v812 = vpop.f32.mrb[0].mxu0
  %v813 = vpop.f32.mrb[0].mxu0
  %814 = vdwg.mxu0
  %v815 = vadd.f32 %v699, %v768
  %v816 = vadd.f32 %v700, %v770
  %v817 = vadd.f32 %v701, %v809
  %v818 = vadd.f32 %v702, %v811
  %s819 = scalar_lea.vmem %s1, 14
  %v820 = vld [vmem:[%s819] sm:$0x3]
  %s821 = scalar_lea.vmem %s0, 112
  %v822 = vld [vmem:[%s821] sm:$0xff]
  %v823 = vld [vmem:[%s821 + $0x8] sm:$0xff]
  %v826 = vunpack.c.l.b16 %v822
  %v827 = vunpack.c.h.b16 %v822
  %v828 = vunpack.c.l.b16 %v823
  %v829 = vunpack.c.h.b16 %v823
  %v830 = vpack.c.b16 %v826, %v826
  %v831 = vpack.c.b16 %v827, %v827
  %v832 = vpack.c.b16 %v828, %v828
  %v833 = vpack.c.b16 %v829, %v829
  %v835 = vsel %vm33, %v820, 0
  %v838 = vsel %vm37, %v830, 0
  %v841 = vsel %vm37, %v831, 0
  %v844 = vsel %vm37, %v832, 0
  %v847 = vsel %vm37, %v833, 0
  %849 = vmatprep.subr.bf16.mxu0 %v841
  %850 = vmatpush1.bf16.msra.mxu0 %v838
  %851 = vmatprep.subr.bf16.mxu0 0
  %852 = vmatpush1.bf16.msra.mxu0 0
  %853 = vmatprep.subr.bf16.mxu0 0
  %854 = vmatpush1.bf16.msra.mxu0 0
  %855 = vmatprep.subr.bf16.mxu0 0
  %856 = vmatpush1.bf16.msra.mxu0 0
  %857 = vmatprep.subr.bf16.mxu0 0
  %858 = vmatpush1.bf16.msra.mxu0 0
  %859 = vmatprep.subr.bf16.mxu0 0
  %860 = vmatpush1.bf16.msra.mxu0 0
  %861 = vmatprep.subr.bf16.mxu0 0
  %862 = vmatpush1.bf16.msra.mxu0 0
  %863 = vmatprep.subr.bf16.mxu0 0
  %864 = vmatpush1.bf16.msra.mxu0 0
  %865 = vmatprep.subr.bf16.mxu0 0
  %866 = vmatpush1.bf16.msra.mxu0 0
  %867 = vmatprep.subr.bf16.mxu0 0
  %868 = vmatpush1.bf16.msra.mxu0 0
  %869 = vmatprep.subr.bf16.mxu0 0
  %870 = vmatpush1.bf16.msra.mxu0 0
  %871 = vmatprep.subr.bf16.mxu0 0
  %872 = vmatpush1.bf16.msra.mxu0 0
  %873 = vmatprep.subr.bf16.mxu0 0
  %874 = vmatpush1.bf16.msra.mxu0 0
  %875 = vmatprep.subr.bf16.mxu0 0
  %876 = vmatpush1.bf16.msra.mxu0 0
  %877 = vmatprep.subr.bf16.mxu0 0
  %878 = vmatpush1.bf16.msra.mxu0 0
  %879 = vmatprep.subr.bf16.mxu0 0
  %880 = vmatpush1.bf16.msra.mxu0 0
  %881 = vmatprep.mubr.bf16.mxu0 0
  %882 = vmatmul.mubr.bf16.gmra.mrb[0].mxu0 %v835
  %v883 = vpop.f32.mrb[0].mxu0
  %v884 = vadd.f32 0.0, %v883
  %v885 = vpop.f32.mrb[0].mxu0
  %v886 = vadd.f32 0.0, %v885
  %v887 = vpop.f32.mrb[0].mxu0
  %v888 = vpop.f32.mrb[0].mxu0
  %889 = vdwg.mxu0
  %890 = vmatprep.subr.bf16.mxu0 %v847
  %891 = vmatpush1.bf16.msra.mxu0 %v844
  %892 = vmatprep.subr.bf16.mxu0 0
  %893 = vmatpush1.bf16.msra.mxu0 0
  %894 = vmatprep.subr.bf16.mxu0 0
  %895 = vmatpush1.bf16.msra.mxu0 0
  %896 = vmatprep.subr.bf16.mxu0 0
  %897 = vmatpush1.bf16.msra.mxu0 0
  %898 = vmatprep.subr.bf16.mxu0 0
  %899 = vmatpush1.bf16.msra.mxu0 0
  %900 = vmatprep.subr.bf16.mxu0 0
  %901 = vmatpush1.bf16.msra.mxu0 0
  %902 = vmatprep.subr.bf16.mxu0 0
  %903 = vmatpush1.bf16.msra.mxu0 0
  %904 = vmatprep.subr.bf16.mxu0 0
  %905 = vmatpush1.bf16.msra.mxu0 0
  %906 = vmatprep.subr.bf16.mxu0 0
  %907 = vmatpush1.bf16.msra.mxu0 0
  %908 = vmatprep.subr.bf16.mxu0 0
  %909 = vmatpush1.bf16.msra.mxu0 0
  %910 = vmatprep.subr.bf16.mxu0 0
  %911 = vmatpush1.bf16.msra.mxu0 0
  %912 = vmatprep.subr.bf16.mxu0 0
  %913 = vmatpush1.bf16.msra.mxu0 0
  %914 = vmatprep.subr.bf16.mxu0 0
  %915 = vmatpush1.bf16.msra.mxu0 0
  %916 = vmatprep.subr.bf16.mxu0 0
  %917 = vmatpush1.bf16.msra.mxu0 0
  %918 = vmatprep.subr.bf16.mxu0 0
  %919 = vmatpush1.bf16.msra.mxu0 0
  %920 = vmatprep.subr.bf16.mxu0 0
  %921 = vmatpush1.bf16.msra.mxu0 0
  %922 = vmatprep.mubr.bf16.mxu0 0
  %923 = vmatmul.mubr.bf16.gmra.mrb[0].mxu0 %v835
  %v924 = vpop.f32.mrb[0].mxu0
  %v925 = vadd.f32 0.0, %v924
  %v926 = vpop.f32.mrb[0].mxu0
  %v927 = vadd.f32 0.0, %v926
  %v928 = vpop.f32.mrb[0].mxu0
  %v929 = vpop.f32.mrb[0].mxu0
  %930 = vdwg.mxu0
  %v931 = vadd.f32 %v815, %v884
  %v932 = vadd.f32 %v816, %v886
  %v933 = vadd.f32 %v817, %v925
  %v934 = vadd.f32 %v818, %v927
  %s935 = scalar_lea.vmem %s1, 16
  %v936 = vld [vmem:[%s935] sm:$0x3]
  %s937 = scalar_lea.vmem %s0, 128
  %v938 = vld [vmem:[%s937] sm:$0xff]
  %v939 = vld [vmem:[%s937 + $0x8] sm:$0xff]
  %v942 = vunpack.c.l.b16 %v938
  %v943 = vunpack.c.h.b16 %v938
  %v944 = vunpack.c.l.b16 %v939
  %v945 = vunpack.c.h.b16 %v939
  %v946 = vpack.c.b16 %v942, %v942
  %v947 = vpack.c.b16 %v943, %v943
  %v948 = vpack.c.b16 %v944, %v944
  %v949 = vpack.c.b16 %v945, %v945
  %v951 = vsel %vm33, %v936, 0
  %v954 = vsel %vm37, %v946, 0
  %v957 = vsel %vm37, %v947, 0
  %v960 = vsel %vm37, %v948, 0
  %v963 = vsel %vm37, %v949, 0
  %965 = vmatprep.subr.bf16.mxu0 %v957
  %966 = vmatpush1.bf16.msra.mxu0 %v954
  %967 = vmatprep.subr.bf16.mxu0 0
  %968 = vmatpush1.bf16.msra.mxu0 0
  %969 = vmatprep.subr.bf16.mxu0 0
  %970 = vmatpush1.bf16.msra.mxu0 0
  %971 = vmatprep.subr.bf16.mxu0 0
  %972 = vmatpush1.bf16.msra.mxu0 0
  %973 = vmatprep.subr.bf16.mxu0 0
  %974 = vmatpush1.bf16.msra.mxu0 0
  %975 = vmatprep.subr.bf16.mxu0 0
  %976 = vmatpush1.bf16.msra.mxu0 0
  %977 = vmatprep.subr.bf16.mxu0 0
  %978 = vmatpush1.bf16.msra.mxu0 0
  %979 = vmatprep.subr.bf16.mxu0 0
  %980 = vmatpush1.bf16.msra.mxu0 0
  %981 = vmatprep.subr.bf16.mxu0 0
  %982 = vmatpush1.bf16.msra.mxu0 0
  %983 = vmatprep.subr.bf16.mxu0 0
  %984 = vmatpush1.bf16.msra.mxu0 0
  %985 = vmatprep.subr.bf16.mxu0 0
  %986 = vmatpush1.bf16.msra.mxu0 0
  %987 = vmatprep.subr.bf16.mxu0 0
  %988 = vmatpush1.bf16.msra.mxu0 0
  %989 = vmatprep.subr.bf16.mxu0 0
  %990 = vmatpush1.bf16.msra.mxu0 0
  %991 = vmatprep.subr.bf16.mxu0 0
  %992 = vmatpush1.bf16.msra.mxu0 0
  %993 = vmatprep.subr.bf16.mxu0 0
  %994 = vmatpush1.bf16.msra.mxu0 0
  %995 = vmatprep.subr.bf16.mxu0 0
  %996 = vmatpush1.bf16.msra.mxu0 0
  %997 = vmatprep.mubr.bf16.mxu0 0
  %998 = vmatmul.mubr.bf16.gmra.mrb[0].mxu0 %v951
  %v999 = vpop.f32.mrb[0].mxu0
  %v1000 = vadd.f32 0.0, %v999
  %v1001 = vpop.f32.mrb[0].mxu0
  %v1002 = vadd.f32 0.0, %v1001
  %v1003 = vpop.f32.mrb[0].mxu0
  %v1004 = vpop.f32.mrb[0].mxu0
  %1005 = vdwg.mxu0
  %1006 = vmatprep.subr.bf16.mxu0 %v963
  %1007 = vmatpush1.bf16.msra.mxu0 %v960
  %1008 = vmatprep.subr.bf16.mxu0 0
  %1009 = vmatpush1.bf16.msra.mxu0 0
  %1010 = vmatprep.subr.bf16.mxu0 0
  %1011 = vmatpush1.bf16.msra.mxu0 0
  %1012 = vmatprep.subr.bf16.mxu0 0
  %1013 = vmatpush1.bf16.msra.mxu0 0
  %1014 = vmatprep.subr.bf16.mxu0 0
  %1015 = vmatpush1.bf16.msra.mxu0 0
  %1016 = vmatprep.subr.bf16.mxu0 0
  %1017 = vmatpush1.bf16.msra.mxu0 0
  %1018 = vmatprep.subr.bf16.mxu0 0
  %1019 = vmatpush1.bf16.msra.mxu0 0
  %1020 = vmatprep.subr.bf16.mxu0 0
  %1021 = vmatpush1.bf16.msra.mxu0 0
  %1022 = vmatprep.subr.bf16.mxu0 0
  %1023 = vmatpush1.bf16.msra.mxu0 0
  %1024 = vmatprep.subr.bf16.mxu0 0
  %1025 = vmatpush1.bf16.msra.mxu0 0
  %1026 = vmatprep.subr.bf16.mxu0 0
  %1027 = vmatpush1.bf16.msra.mxu0 0
  %1028 = vmatprep.subr.bf16.mxu0 0
  %1029 = vmatpush1.bf16.msra.mxu0 0
  %1030 = vmatprep.subr.bf16.mxu0 0
  %1031 = vmatpush1.bf16.msra.mxu0 0
  %1032 = vmatprep.subr.bf16.mxu0 0
  %1033 = vmatpush1.bf16.msra.mxu0 0
  %1034 = vmatprep.subr.bf16.mxu0 0
  %1035 = vmatpush1.bf16.msra.mxu0 0
  %1036 = vmatprep.subr.bf16.mxu0 0
  %1037 = vmatpush1.bf16.msra.mxu0 0
  %1038 = vmatprep.mubr.bf16.mxu0 0
  %1039 = vmatmul.mubr.bf16.gmra.mrb[0].mxu0 %v951
  %v1040 = vpop.f32.mrb[0].mxu0
  %v1041 = vadd.f32 0.0, %v1040
  %v1042 = vpop.f32.mrb[0].mxu0
  %v1043 = vadd.f32 0.0, %v1042
  %v1044 = vpop.f32.mrb[0].mxu0
  %v1045 = vpop.f32.mrb[0].mxu0
  %1046 = vdwg.mxu0
  %v1047 = vadd.f32 %v931, %v1000
  %v1048 = vadd.f32 %v932, %v1002
  %v1049 = vadd.f32 %v933, %v1041
  %v1050 = vadd.f32 %v934, %v1043
  %v1051 = vld [vmem:[%s2] sm:$0xf]
  %1053 = vset.pattern.permute.xlu0 0
  %1054 = vperm.xlu0 %1053, %v1051
  %v1055 = vpop.permute.xlu0 %1054
  %v1057 = vadd.f32 %v1047, %v1055
  %v1058 = vadd.f32 %v1048, %v1055
  %v1059 = vadd.f32 %v1049, %v1055
  %v1060 = vadd.f32 %v1050, %v1055
  %v1061 = vmax.f32 %v1057, 0.0
  %v1062 = vmax.f32 %v1058, 0.0
  %v1063 = vmax.f32 %v1059, 0.0
  %v1064 = vmax.f32 %v1060, 0.0
  %v1065 = vpack.c.bf16 %v1061, %v1061
  %v1066 = vpack.c.bf16 %v1062, %v1062
  %v1067 = vpack.c.bf16 %v1063, %v1063
  %v1068 = vpack.c.bf16 %v1064, %v1064
  %v1073 = vcombine.low %v1065, %v1066
  %v1074 = vcombine.low %v1067, %v1068
  %v1076 = vunpack.c.l.s4 1983009808
  %v1077 = vunpack.c.0.s8 %v1076
  %v1078 = vlaneseq
  %v1079 = vshrl.u32 %v1078, 7
  %v1080 = vsub.s32 %v1077, %v1079
  %v1081 = vrot.slane %v1073, %v1080
  %v1083 = vunpack.c.l.s4 1983009808
  %v1084 = vunpack.c.0.s8 %v1083
  %v1085 = vlaneseq
  %v1086 = vshrl.u32 %v1085, 7
  %v1087 = vsub.s32 %v1084, %v1086
  %v1088 = vrot.slane %v1074, %v1087
  %v1089 = vcombine.low %v1081, %v1088
  %1091 = vst [vmem:[%s3] sm:$0xff] %v1089
  // Predicated region
  $region14: #{unet_forward.27} parent=0 // pred_check
    _
  $region15: #{unet_forward.27} parent=0 // pred_check_branch
    %1093 = sbr.rel (0) target = $region17
  $region16: #{unet_forward.27} parent=0 // pred_region
    _
  $region17: #{unet_forward.27} parent=0 // pred_fallthru
    _
  // Predicated region
  $region18: #{unet_forward.27} parent=0 // pred_check
    _
  $region19: #{unet_forward.27} parent=0 // pred_check_branch
    %1095 = sbr.rel (0) target = $region21
  $region20: #{unet_forward.27} parent=0 // pred_region
    _
  $region21: #{unet_forward.27} parent=0 // pred_fallthru
    _

</llo_original>
